<compile_context>
chip_gen: v7x
topology: tpu7x:2x2x1
jax: 0.10.0
libtpu: 0.0.40
codegen_flags: <defaults>
</compile_context>

<pallas_src>
import functools

import jax
import jax.numpy as jnp
from jax import lax
from jax.experimental import pallas as pl
from jax.experimental.pallas import tpu as pltpu

_BN_EPS = 1e-5
_LANE = 128
_TILE_BYTE_TARGET = 8 * 1024 * 1024      # per-tile VMEM working-set target
_MIN_GRID_STEPS = 4                      # >= 4 steps: 2 TCs x double buffer
_MIN_PALLAS_POSITIONS = 512              # below this, fall back to plain XLA
_ACT_DTYPE = jnp.bfloat16                # HBM activation dtype (f32 accum)


def _round_up(n, m):
    return (n + m - 1) // m * m


@functools.lru_cache(maxsize=None)
def _vmem_limit_bytes():
    """Generation-aware scoped-VMEM limit: half the physical VMEM, <= 64 MiB
    (128 MiB v5e/v6e parts -> 64 MiB; 64 MiB v7x parts -> 32 MiB)."""
    try:
        cap = int(pltpu.get_tpu_info().vmem_capacity_bytes)
    except Exception:                     # query unavailable -> safe default
        cap = 64 * 1024 * 1024
    return max(16 * 1024 * 1024, min(64 * 1024 * 1024, cap // 2))


def _tile_budget_bytes():
    return min(_TILE_BYTE_TARGET, _vmem_limit_bytes() // 3)


def _pick_segments_per_tile(num_segments, seg_bytes, budget):
    """Largest whole-segment tile under `budget` that still leaves
    min(num_segments, _MIN_GRID_STEPS) grid steps.  Returns 0 when even a
    single segment does not fit -- the caller then falls back to plain XLA
    instead of silently exceeding the VMEM limit."""
    min_steps = min(num_segments, _MIN_GRID_STEPS)
    best = 0
    for d in range(1, num_segments + 1):
        if num_segments % d:
            continue
        if d * seg_bytes > budget or num_segments // d < min_steps:
            break
        best = d
    return best


# ------------------------------ Pallas kernels ------------------------------

def _conv_bn_relu_kernel(w_ref, b_ref, x_ref, o_ref, stage_ref, *,
                         offsets, c_in, n_valid):
    """Fused multi-tap Conv3d + folded-BatchNorm + ReLU on one lane tile.

    w_ref     : (C_out, K*C_in) f32   tap-major weight matrix, BN scale folded
    b_ref     : (C_out, 1)      f32   folded BN shift
    x_ref     : (C_in, T)       bf16  zero-padded, flattened input tile
    o_ref     : (C_out, T)      bf16  output tile (same flat layout)
    stage_ref : (K*C_in, T)     f32   VMEM staging block (im2col in VMEM)

    The K taps are lane-shifted views of the SAME VMEM-resident input tile;
    they are packed into `stage_ref` and contracted with a single MXU matmul
    (contraction depth K*C_in), so the f32 accumulator is produced in one pass
    rather than K accumulate-through-VMEM round trips.

    Lanes >= n_valid of `stage_ref` are deliberately left stale (their taps
    would read past the tile), so the matching output lanes hold garbage.
    This is safe ONLY because those lanes always land in the per-segment
    halo / lane padding, which the wrapper slices away before any use; keep
    that invariant if the layout ever changes.
    """
    for k, off in enumerate(offsets):            # static unroll, K <= 12
        stage_ref[k * c_in:(k + 1) * c_in, :n_valid] = (
            x_ref[:, off:off + n_valid].astype(jnp.float32))
    acc = jnp.dot(w_ref[...], stage_ref[...],
                  preferred_element_type=jnp.float32)
    # Full, unmasked lane-dense store; no tail zero-fill (see docstring).
    o_ref[...] = jnp.maximum(acc + b_ref[...], 0.0).astype(o_ref.dtype)


def _pointwise_bn_relu_kernel(w_ref, b_ref, x_ref, o_ref):
    """1x1x1 Conv + folded BN + ReLU: one MXU matmul over the lane tile."""
    acc = jnp.dot(w_ref[...], x_ref[...], preferred_element_type=jnp.float32)
    o_ref[...] = jnp.maximum(acc + b_ref[...], 0.0).astype(o_ref.dtype)


def _conv_call(w_mat, shift, flat, num_segments, seg_lanes, offsets,
               segs_per_tile):
    c_out, kc = w_mat.shape
    c_in = flat.shape[0]
    tile = segs_per_tile * seg_lanes
    n_valid = tile - max(offsets)
    total = num_segments * seg_lanes
    kernel = functools.partial(_conv_bn_relu_kernel, offsets=tuple(offsets),
                               c_in=c_in, n_valid=n_valid)
    return pl.pallas_call(
        kernel,
        out_shape=jax.ShapeDtypeStruct((c_out, total), _ACT_DTYPE),
        grid=(num_segments // segs_per_tile,),
        in_specs=[
            pl.BlockSpec((c_out, kc), lambda i: (0, 0)),
            pl.BlockSpec((c_out, 1), lambda i: (0, 0)),
            pl.BlockSpec((c_in, tile), lambda i: (0, i)),
        ],
        out_specs=pl.BlockSpec((c_out, tile), lambda i: (0, i)),
        scratch_shapes=[pltpu.VMEM((kc, tile), jnp.float32)],
        compiler_params=pltpu.CompilerParams(
            dimension_semantics=("parallel",),
            vmem_limit_bytes=_vmem_limit_bytes()),
    )(w_mat, shift, flat)


def _pointwise_call(w_mat, shift, flat, tile):
    c_out, c_in = w_mat.shape
    total = flat.shape[1]
    return pl.pallas_call(
        _pointwise_bn_relu_kernel,
        out_shape=jax.ShapeDtypeStruct((c_out, total), _ACT_DTYPE),
        grid=(total // tile,),
        in_specs=[
            pl.BlockSpec((c_out, c_in), lambda i: (0, 0)),
            pl.BlockSpec((c_out, 1), lambda i: (0, 0)),
            pl.BlockSpec((c_in, tile), lambda i: (0, i)),
        ],
        out_specs=pl.BlockSpec((c_out, tile), lambda i: (0, i)),
        compiler_params=pltpu.CompilerParams(
            dimension_semantics=("parallel",),
            vmem_limit_bytes=_vmem_limit_bytes()),
    )(w_mat, shift, flat)


# --------------------------------- layers ----------------------------------

def _conv_bn_relu_xla(w, shift, a):
    """Plain-XLA fallback: tiny tensors (launch overhead dominates) or
    segments that do not fit the per-tile VMEM budget."""
    c_out, c_in = w.shape[:2]
    kz, ky, kx = w.shape[2:]
    _, B, Z, Y, X = a.shape
    pz, py, px = (kz - 1) // 2, (ky - 1) // 2, (kx - 1) // 2
    ap = jnp.pad(a.astype(jnp.float32),
                 ((0, 0), (0, 0), (pz, pz), (py, py), (px, px)))
    acc = jnp.zeros((c_out, B, Z, Y, X), jnp.float32)
    for dz in range(kz):
        for dy in range(ky):
            for dx in range(kx):
                xs = lax.slice(ap, (0, 0, dz, dy, dx),
                               (c_in, B, dz + Z, dy + Y, dx + X))
                acc = acc + jnp.einsum('oi,ibzyx->obzyx',
                                       w[:, :, dz, dy, dx], xs)
    acc = acc + shift.reshape(c_out, 1, 1, 1, 1)
    return jnp.maximum(acc, 0.0).astype(_ACT_DTYPE)


def fused_conv_branches(params, a):
    """Runs conv_xy (1x3x3) and/or conv_z (3x1x1) of one _AddConvAndPool stage
    with a SINGLE pallas_call (the input activation is read from HBM once).

    a: (C_in, B, Z, Y, X) bf16  ->  (C_xy + C_z, B, Z, Y, X) bf16 (unpooled),
    channels ordered [xy, z] to match torch.cat([conv_xy(x), conv_z(x)]).
    """
    has_xy = "conv_xy" in params
    has_z = "conv_z" in params
    if not (has_xy or has_z):
        return None
    c_in, B, Z, Y, X = a.shape
    n_pos = B * Z * Y * X

    w_xy = params["conv_xy"]["w"] if has_xy else None
    w_z = params["conv_z"]["w"] if has_z else None
    c_xy = w_xy.shape[0] if has_xy else 0
    c_z = w_z.shape[0] if has_z else 0
    c_out = c_xy + c_z

    # Shared padded layout: union of the paddings the branches need.
    pz = 1 if has_z else 0
    pyx = 1 if has_xy else 0
    Zp, Yp, Xp = Z + 2 * pz, Y + 2 * pyx, X + 2 * pyx

    # Segment = padded z-plane when there are no z taps (more grid steps),
    # else one whole padded volume per batch element (z taps cross planes).
    if has_z:
        seg, num_segments = Zp * Yp * Xp, B
    else:
        seg, num_segments = Yp * Xp, B * Z
    seg_lanes = _round_up(seg, _LANE)

    # Tap offsets in the flat layout.  Corner convention: output lane p of a
    # segment corresponds to padded coordinate (z, y, x) == ORIGINAL (z, y, x),
    # so the valid output window of both branches is [:Z, :Y, :X].
    offsets = []
    if has_xy:
        base = pz * Yp * Xp
        offsets += [base + dy * Xp + dx for dy in range(3) for dx in range(3)]
    if has_z:
        offsets += [dz * Yp * Xp + pyx * Xp + pyx for dz in range(3)]
    k_total = len(offsets)

    # Per-segment VMEM footprint: double-buffered bf16 in/out + f32 staging.
    seg_bytes = seg_lanes * (4 * (c_in + c_out) + 4 * k_total * c_in)
    segs_per_tile = _pick_segments_per_tile(num_segments, seg_bytes,
                                            _tile_budget_bytes())
    if n_pos < _MIN_PALLAS_POSITIONS or segs_per_tile == 0:
        # TODO(synk): for clinical-size volumes (one padded volume > budget),
        # tile along z with a 2-plane halo instead of falling back to XLA.
        outs = []
        if has_xy:
            outs.append(_conv_bn_relu_xla(w_xy, params["conv_xy"]["shift"], a))
        if has_z:
            outs.append(_conv_bn_relu_xla(w_z, params["conv_z"]["shift"], a))
        return jnp.concatenate(outs, axis=0) if len(outs) > 1 else outs[0]

    # Host-side weight packing: one (c_out, K_total*c_in) tap-major matrix
    # (BN scale already folded into w), zero blocks where a branch has no tap.
    blocks = []
    if has_xy:
        wm = w_xy.transpose(0, 2, 3, 4, 1).reshape(c_xy, 9 * c_in)
        if has_z:
            wm = jnp.concatenate(
                [wm, jnp.zeros((c_xy, 3 * c_in), wm.dtype)], axis=1)
        blocks.append(wm)
    if has_z:
        wm = w_z.transpose(0, 2, 3, 4, 1).reshape(c_z, 3 * c_in)
        if has_xy:
            wm = jnp.concatenate(
                [jnp.zeros((c_z, 9 * c_in), wm.dtype), wm], axis=1)
        blocks.append(wm)
    w_mat = (jnp.concatenate(blocks, axis=0) if len(blocks) > 1
             else blocks[0]).astype(jnp.float32)
    shifts = []
    if has_xy:
        shifts.append(params["conv_xy"]["shift"])
    if has_z:
        shifts.append(params["conv_z"]["shift"])
    shift = jnp.concatenate(shifts).reshape(c_out, 1).astype(jnp.float32)

    # Build the shared padded flat input ONCE (single HBM read for both
    # branches inside the kernel).
    # TODO(synk): keep activations in this padded flat layout between layers
    # to remove the remaining host-side pad / slice passes entirely.
    ap = jnp.pad(a, ((0, 0), (0, 0), (pz, pz), (pyx, pyx), (pyx, pyx)))
    flat = ap.reshape(c_in, num_segments, seg)
    if seg_lanes != seg:
        flat = jnp.pad(flat, ((0, 0), (0, 0), (0, seg_lanes - seg)))
    flat = flat.reshape(c_in, num_segments * seg_lanes)

    out = _conv_call(w_mat, shift, flat, num_segments, seg_lanes, offsets,
                     segs_per_tile)
    # Valid-window extraction (also discards the stale lanes past n_valid --
    # see the kernel docstring invariant).
    if has_z:
        out = out.reshape(c_out, B, seg_lanes)[:, :, :seg]
        out = out.reshape(c_out, B, Zp, Yp, Xp)[:, :, :Z, :Y, :X]
    else:
        out = out.reshape(c_out, B, Z, seg_lanes)[:, :, :, :seg]
        out = out.reshape(c_out, B, Z, Yp, Xp)[:, :, :, :Y, :X]
    return out


def pointwise_layer(params, a):
    """1x1x1 Conv + BatchNorm (folded) + ReLU (the 'shrink' layers)."""
    w, shift = params["w"], params["shift"]
    c_out, c_in = w.shape[:2]
    _, B, Z, Y, X = a.shape
    n_pos = B * Z * Y * X
    if n_pos < _MIN_PALLAS_POSITIONS:
        return _conv_bn_relu_xla(w, shift, a)
    total = _round_up(n_pos, _LANE)
    num_segments = total // _LANE
    seg_bytes = _LANE * 4 * (c_in + c_out)        # double-buffered bf16 in/out
    segs = _pick_segments_per_tile(num_segments, seg_bytes, _tile_budget_bytes())
    if segs == 0:
        return _conv_bn_relu_xla(w, shift, a)
    flat = a.reshape(c_in, n_pos)
    if total != n_pos:
        flat = jnp.pad(flat, ((0, 0), (0, total - n_pos)))
    w_mat = w.reshape(c_out, c_in).astype(_ACT_DTYPE)
    shift2 = shift.reshape(c_out, 1).astype(jnp.float32)
    out = _pointwise_call(w_mat, shift2, flat, segs * _LANE)
    return out[:, :n_pos].reshape(c_out, B, Z, Y, X)


def maxpool3d(a, kernel):
    """MaxPool3d, stride == kernel_size (floors trailing remainder, like
    PyTorch).  Plain JAX slice + reshape + max."""
    kz, ky, kx = kernel
    C, B, Z, Y, X = a.shape
    Zo, Yo, Xo = Z // kz, Y // ky, X // kx
    a = a[:, :, :Zo * kz, :Yo * ky, :Xo * kx]
    a = a.reshape(C, B, Zo, kz, Yo, ky, Xo, kx)
    return a.max(axis=(3, 5, 7))


# ------------------------------- model glue --------------------------------

def init_basic_layer(key, c_in, c_out, kernel_size):
    kz, ky, kx = kernel_size
    w = jax.random.normal(key, (c_out, c_in, kz, ky, kx), jnp.float32) * 0.1
    # BatchNorm3d (eval mode, PyTorch defaults): gamma=1, beta=0, mean=0, var=1.
    gamma = jnp.ones((c_out,), jnp.float32)
    beta = jnp.zeros((c_out,), jnp.float32)
    mean = jnp.zeros((c_out,), jnp.float32)
    var = jnp.ones((c_out,), jnp.float32)
    scale = gamma / jnp.sqrt(var + _BN_EPS)
    shift = beta - mean * scale
    # Fold BN scale into the conv weights: scale*(W.x) == (scale*W).x exactly.
    return {"w": w * scale.reshape(c_out, 1, 1, 1, 1), "shift": shift}


def init_add_conv_and_pool(key, in_channels, num_xy, num_z):
    params = {}
    k_xy, k_z = jax.random.split(key)
    if num_xy > 0:
        params["conv_xy"] = init_basic_layer(k_xy, in_channels, num_xy, (1, 3, 3))
    if num_z > 0:
        params["conv_z"] = init_basic_layer(k_z, in_channels, num_z, (3, 1, 1))
    return params, in_channels + num_xy + num_z


def add_conv_and_pool(params, a, pool_kernel):
    conv_out = fused_conv_branches(params, a)
    if conv_out is None:
        return a
    # Pool(identity) ++ Pool(branches) == Pool(identity ++ branches): max-pool
    # is per-channel, so concatenate once and pool once.
    # TODO(synk): fold MaxPool3d into the conv-kernel epilogue (needs in-kernel
    # strided lane compaction of the flat layout) so the un-pooled activation
    # never round-trips through HBM.
    out = jnp.concatenate([a, conv_out], axis=0)
    if pool_kernel is not None:
        out = maxpool3d(out, pool_kernel)
    return out


def init_conv_pool_and_shrink(key, in_channels, num_xy, num_z, shrink_factor):
    k1, k2 = jax.random.split(key)
    conv_params, conv_out = init_add_conv_and_pool(k1, in_channels, num_xy, num_z)
    out_channels = int(conv_out * shrink_factor)
    shrink = init_basic_layer(k2, conv_out, out_channels, (1, 1, 1))
    return {"conv": conv_params, "shrink": shrink}, out_channels


def conv_pool_and_shrink(params, a):
    a = add_conv_and_pool(params["conv"], a, (2, 2, 2))
    return pointwise_layer(params["shrink"], a)


def init_segmentation_encoder(key, in_channels):
    ks = jax.random.split(key, 6)
    p = {}
    p["conv1"], c = init_add_conv_and_pool(ks[0], in_channels, 2, 0)
    p["group1"], c = init_conv_pool_and_shrink(ks[1], c, 4, 2, 0.5)
    p["group2"], c = init_conv_pool_and_shrink(ks[2], c, 4, 2, 0.5)
    p["group3"], c = init_conv_pool_and_shrink(ks[3], c, 4, 2, 0.5)
    p["conv2"], c = init_add_conv_and_pool(ks[4], c, 6, 3)
    out_channels = c // 2
    p["shrink2"] = init_basic_layer(ks[5], c, out_channels, (1, 1, 1))
    return p, out_channels


def segmentation_encoder(params, x):
    """x: (B, C, Z, Y, X) float32 (PyTorch NCDHW) -> (B, C_out, Z', Y', X') f32."""
    a = x.astype(_ACT_DTYPE).transpose(1, 0, 2, 3, 4)   # (C, B, Z, Y, X)
    a = add_conv_and_pool(params["conv1"], a, (1, 2, 2))
    a = conv_pool_and_shrink(params["group1"], a)
    a = conv_pool_and_shrink(params["group2"], a)
    a = conv_pool_and_shrink(params["group3"], a)
    a = add_conv_and_pool(params["conv2"], a, None)
    a = pointwise_layer(params["shrink2"], a)
    return a.transpose(1, 0, 2, 3, 4).astype(jnp.float32)


if __name__ == "__main__":
    key = jax.random.PRNGKey(0)
    pkey, xkey = jax.random.split(key)
    in_channels = 4
    params, out_channels = init_segmentation_encoder(pkey, in_channels)
    # (B, C, Z, Y, X): Z divisible by 8, Y/X by 16 (four pooling stages).
    x = jax.random.uniform(xkey, (2, in_channels, 8, 32, 32), dtype=jnp.float32)

    fwd = jax.jit(segmentation_encoder)
    out = jax.block_until_ready(fwd(params, x))
    assert out.shape == (2, out_channels, 1, 2, 2), out.shape
    assert out.dtype == jnp.float32
    assert bool(jnp.isfinite(out).all())
    print("KERNEL_OK")
</pallas_src>

<mosaic_0001>
module attributes {stable_mosaic.version = 11 : i64} {
  func.func @_conv_bn_relu_kernel(%arg0: i32, %arg1: memref<2x36xf32, #tpu.memory_space<vmem>>, %arg2: memref<2x1xf32, #tpu.memory_space<vmem>>, %arg3: memref<4x5120xbf16, #tpu.memory_space<vmem>>, %arg4: memref<2x5120xbf16, #tpu.memory_space<vmem>>, %arg5: memref<36x5120xf32, #tpu.memory_space<vmem>>) attributes {dimension_semantics = [#tpu.dimension_semantics<parallel>], iteration_bounds = array<i64: 4>, scalar_prefetch = 0 : i64, scratch_operands = 1 : i64, tpu.core_type = #tpu.core_type<tc>, window_params = [{pipeline_mode = #tpu.pipeline_mode<synchronous>, transform_indices = @transform_0, window_bounds = array<i64: 2, 36>}, {pipeline_mode = #tpu.pipeline_mode<synchronous>, transform_indices = @transform_1, window_bounds = array<i64: 2, 1>}, {transform_indices = @transform_2, window_bounds = array<i64: 4, 5120>}, {transform_indices = @transform_3, window_bounds = array<i64: 2, 5120>}]} {
    %c0 = arith.constant 0 : index
    %c0_0 = arith.constant 0 : index
    %0 = vector.load %arg3[%c0, %c0_0] : memref<4x5120xbf16, #tpu.memory_space<vmem>>, vector<4x5050xbf16>
    %1 = arith.extf %0 : vector<4x5050xbf16> to vector<4x5050xf32>
    %c0_1 = arith.constant 0 : index
    %c0_2 = arith.constant 0 : index
    %2 = vector.load %arg5[%c0_1, %c0_2] : memref<36x5120xf32, #tpu.memory_space<vmem>>, vector<4x5050xf32>
    tpu.vector_store %arg5[%c0_1, %c0_2], %1 {strides = array<i32>} : memref<36x5120xf32, #tpu.memory_space<vmem>>, vector<4x5050xf32>,
    %c0_3 = arith.constant 0 : index
    %c1 = arith.constant 1 : index
    %3 = vector.load %arg3[%c0_3, %c1] : memref<4x5120xbf16, #tpu.memory_space<vmem>>, vector<4x5050xbf16>
    %4 = arith.extf %3 : vector<4x5050xbf16> to vector<4x5050xf32>
    %c4 = arith.constant 4 : index
    %c0_4 = arith.constant 0 : index
    %5 = vector.load %arg5[%c4, %c0_4] : memref<36x5120xf32, #tpu.memory_space<vmem>>, vector<4x5050xf32>
    tpu.vector_store %arg5[%c4, %c0_4], %4 {strides = array<i32>} : memref<36x5120xf32, #tpu.memory_space<vmem>>, vector<4x5050xf32>,
    %c0_5 = arith.constant 0 : index
    %c2 = arith.constant 2 : index
    %6 = vector.load %arg3[%c0_5, %c2] : memref<4x5120xbf16, #tpu.memory_space<vmem>>, vector<4x5050xbf16>
    %7 = arith.extf %6 : vector<4x5050xbf16> to vector<4x5050xf32>
    %c8 = arith.constant 8 : index
    %c0_6 = arith.constant 0 : index
    %8 = vector.load %arg5[%c8, %c0_6] : memref<36x5120xf32, #tpu.memory_space<vmem>>, vector<4x5050xf32>
    tpu.vector_store %arg5[%c8, %c0_6], %7 {strides = array<i32>} : memref<36x5120xf32, #tpu.memory_space<vmem>>, vector<4x5050xf32>,
    %c0_7 = arith.constant 0 : index
    %c34 = arith.constant 34 : index
    %9 = vector.load %arg3[%c0_7, %c34] : memref<4x5120xbf16, #tpu.memory_space<vmem>>, vector<4x5050xbf16>
    %10 = arith.extf %9 : vector<4x5050xbf16> to vector<4x5050xf32>
    %c12 = arith.constant 12 : index
    %c0_8 = arith.constant 0 : index
    %11 = vector.load %arg5[%c12, %c0_8] : memref<36x5120xf32, #tpu.memory_space<vmem>>, vector<4x5050xf32>
    tpu.vector_store %arg5[%c12, %c0_8], %10 {strides = array<i32>} : memref<36x5120xf32, #tpu.memory_space<vmem>>, vector<4x5050xf32>,
    %c0_9 = arith.constant 0 : index
    %c35 = arith.constant 35 : index
    %12 = vector.load %arg3[%c0_9, %c35] : memref<4x5120xbf16, #tpu.memory_space<vmem>>, vector<4x5050xbf16>
    %13 = arith.extf %12 : vector<4x5050xbf16> to vector<4x5050xf32>
    %c16 = arith.constant 16 : index
    %c0_10 = arith.constant 0 : index
    %14 = vector.load %arg5[%c16, %c0_10] : memref<36x5120xf32, #tpu.memory_space<vmem>>, vector<4x5050xf32>
    tpu.vector_store %arg5[%c16, %c0_10], %13 {strides = array<i32>} : memref<36x5120xf32, #tpu.memory_space<vmem>>, vector<4x5050xf32>,
    %c0_11 = arith.constant 0 : index
    %c36 = arith.constant 36 : index
    %15 = vector.load %arg3[%c0_11, %c36] : memref<4x5120xbf16, #tpu.memory_space<vmem>>, vector<4x5050xbf16>
    %16 = arith.extf %15 : vector<4x5050xbf16> to vector<4x5050xf32>
    %c20 = arith.constant 20 : index
    %c0_12 = arith.constant 0 : index
    %17 = vector.load %arg5[%c20, %c0_12] : memref<36x5120xf32, #tpu.memory_space<vmem>>, vector<4x5050xf32>
    tpu.vector_store %arg5[%c20, %c0_12], %16 {strides = array<i32>} : memref<36x5120xf32, #tpu.memory_space<vmem>>, vector<4x5050xf32>,
    %c0_13 = arith.constant 0 : index
    %c68 = arith.constant 68 : index
    %18 = vector.load %arg3[%c0_13, %c68] : memref<4x5120xbf16, #tpu.memory_space<vmem>>, vector<4x5050xbf16>
    %19 = arith.extf %18 : vector<4x5050xbf16> to vector<4x5050xf32>
    %c24 = arith.constant 24 : index
    %c0_14 = arith.constant 0 : index
    %20 = vector.load %arg5[%c24, %c0_14] : memref<36x5120xf32, #tpu.memory_space<vmem>>, vector<4x5050xf32>
    tpu.vector_store %arg5[%c24, %c0_14], %19 {strides = array<i32>} : memref<36x5120xf32, #tpu.memory_space<vmem>>, vector<4x5050xf32>,
    %c0_15 = arith.constant 0 : index
    %c69 = arith.constant 69 : index
    %21 = vector.load %arg3[%c0_15, %c69] : memref<4x5120xbf16, #tpu.memory_space<vmem>>, vector<4x5050xbf16>
    %22 = arith.extf %21 : vector<4x5050xbf16> to vector<4x5050xf32>
    %c28 = arith.constant 28 : index
    %c0_16 = arith.constant 0 : index
    %23 = vector.load %arg5[%c28, %c0_16] : memref<36x5120xf32, #tpu.memory_space<vmem>>, vector<4x5050xf32>
    tpu.vector_store %arg5[%c28, %c0_16], %22 {strides = array<i32>} : memref<36x5120xf32, #tpu.memory_space<vmem>>, vector<4x5050xf32>,
    %c0_17 = arith.constant 0 : index
    %c70 = arith.constant 70 : index
    %24 = vector.load %arg3[%c0_17, %c70] : memref<4x5120xbf16, #tpu.memory_space<vmem>>, vector<4x5050xbf16>
    %25 = arith.extf %24 : vector<4x5050xbf16> to vector<4x5050xf32>
    %c32 = arith.constant 32 : index
    %c0_18 = arith.constant 0 : index
    %26 = vector.load %arg5[%c32, %c0_18] : memref<36x5120xf32, #tpu.memory_space<vmem>>, vector<4x5050xf32>
    tpu.vector_store %arg5[%c32, %c0_18], %25 {strides = array<i32>} : memref<36x5120xf32, #tpu.memory_space<vmem>>, vector<4x5050xf32>,
    %c0_19 = arith.constant 0 : index
    %c0_20 = arith.constant 0 : index
    %27 = vector.load %arg1[%c0_19, %c0_20] : memref<2x36xf32, #tpu.memory_space<vmem>>, vector<2x36xf32>
    %c0_21 = arith.constant 0 : index
    %c0_22 = arith.constant 0 : index
    %28 = vector.load %arg5[%c0_21, %c0_22] : memref<36x5120xf32, #tpu.memory_space<vmem>>, vector<36x5120xf32>
    %cst = arith.constant dense<0.000000e+00> : vector<2x5120xf32>
    %29 = tpu.matmul %27, %28, %cst {dimension_numbers = #tpu.dot_dimension_numbers<[1], [0], [0], [1], [0, 0, 1, 1], [], []>} : vector<2x36xf32>, vector<36x5120xf32>, vector<2x5120xf32> -> vector<2x5120xf32>
    %c0_23 = arith.constant 0 : index
    %c0_24 = arith.constant 0 : index
    %30 = vector.load %arg2[%c0_23, %c0_24] : memref<2x1xf32, #tpu.memory_space<vmem>>, vector<2x1xf32>
    %31 = vector.broadcast %30 : vector<2x1xf32> to vector<2x5120xf32>
    %32 = arith.addf %29, %31 : vector<2x5120xf32>
    %cst_25 = arith.constant 0.000000e+00 : f32
    %33 = vector.broadcast %cst_25 : f32 to vector<2x5120xf32>
    %34 = arith.maximumf %32, %33 : vector<2x5120xf32>
    %35 = arith.truncf %34 : vector<2x5120xf32> to vector<2x5120xbf16>
    %c0_26 = arith.constant 0 : index
    %c0_27 = arith.constant 0 : index
    %36 = vector.load %arg4[%c0_26, %c0_27] : memref<2x5120xbf16, #tpu.memory_space<vmem>>, vector<2x5120xbf16>
    tpu.vector_store %arg4[%c0_26, %c0_27], %35 {strides = array<i32>} : memref<2x5120xbf16, #tpu.memory_space<vmem>>, vector<2x5120xbf16>,
    return
  }
  func.func @transform_0(%arg0: i32) -> (i32, i32) {
    %c0_i32 = arith.constant 0 : i32
    %c0_i32_0 = arith.constant 0 : i32
    %c0_i32_1 = arith.constant 0 : i32
    return %c0_i32, %c0_i32_0 : i32, i32
  }
  func.func @transform_1(%arg0: i32) -> (i32, i32) {
    %c0_i32 = arith.constant 0 : i32
    %c0_i32_0 = arith.constant 0 : i32
    %c0_i32_1 = arith.constant 0 : i32
    return %c0_i32, %c0_i32_0 : i32, i32
  }
  func.func @transform_2(%arg0: i32) -> (i32, i32) {
    %c0_i32 = arith.constant 0 : i32
    %c0_i32_0 = arith.constant 0 : i32
    return %c0_i32, %arg0 : i32, i32
  }
  func.func @transform_3(%arg0: i32) -> (i32, i32) {
    %c0_i32 = arith.constant 0 : i32
    %c0_i32_0 = arith.constant 0 : i32
    return %c0_i32, %arg0 : i32, i32
  }
}

module attributes {stable_mosaic.version = 11 : i64} {
  func.func @_conv_bn_relu_kernel(%arg0: i32, %arg1: memref<6x72xf32, #tpu.memory_space<vmem>>, %arg2: memref<6x1xf32, #tpu.memory_space<vmem>>, %arg3: memref<6x3328xbf16, #tpu.memory_space<vmem>>, %arg4: memref<6x3328xbf16, #tpu.memory_space<vmem>>, %arg5: memref<72x3328xf32, #tpu.memory_space<vmem>>) attributes {dimension_semantics = [#tpu.dimension_semantics<parallel>], iteration_bounds = array<i64: 2>, scalar_prefetch = 0 : i64, scratch_operands = 1 : i64, tpu.core_type = #tpu.core_type<tc>, window_params = [{pipeline_mode = #tpu.pipeline_mode<synchronous>, transform_indices = @transform_0, window_bounds = array<i64: 6, 72>}, {pipeline_mode = #tpu.pipeline_mode<synchronous>, transform_indices = @transform_1, window_bounds = array<i64: 6, 1>}, {transform_indices = @transform_2, window_bounds = array<i64: 6, 3328>}, {transform_indices = @transform_3, window_bounds = array<i64: 6, 3328>}]} {
    %c0 = arith.constant 0 : index
    %c324 = arith.constant 324 : index
    %0 = vector.load %arg3[%c0, %c324] : memref<6x3328xbf16, #tpu.memory_space<vmem>>, vector<6x2661xbf16>
    %1 = arith.extf %0 : vector<6x2661xbf16> to vector<6x2661xf32>
    %c0_0 = arith.constant 0 : index
    %c0_1 = arith.constant 0 : index
    %2 = vector.load %arg5[%c0_0, %c0_1] : memref<72x3328xf32, #tpu.memory_space<vmem>>, vector<6x2661xf32>
    tpu.vector_store %arg5[%c0_0, %c0_1], %1 {strides = array<i32>} : memref<72x3328xf32, #tpu.memory_space<vmem>>, vector<6x2661xf32>,
    %c0_2 = arith.constant 0 : index
    %c325 = arith.constant 325 : index
    %3 = vector.load %arg3[%c0_2, %c325] : memref<6x3328xbf16, #tpu.memory_space<vmem>>, vector<6x2661xbf16>
    %4 = arith.extf %3 : vector<6x2661xbf16> to vector<6x2661xf32>
    %c6 = arith.constant 6 : index
    %c0_3 = arith.constant 0 : index
    %5 = vector.load %arg5[%c6, %c0_3] : memref<72x3328xf32, #tpu.memory_space<vmem>>, vector<6x2661xf32>
    tpu.vector_store %arg5[%c6, %c0_3], %4 {strides = array<i32>} : memref<72x3328xf32, #tpu.memory_space<vmem>>, vector<6x2661xf32>,
    %c0_4 = arith.constant 0 : index
    %c326 = arith.constant 326 : index
    %6 = vector.load %arg3[%c0_4, %c326] : memref<6x3328xbf16, #tpu.memory_space<vmem>>, vector<6x2661xbf16>
    %7 = arith.extf %6 : vector<6x2661xbf16> to vector<6x2661xf32>
    %c12 = arith.constant 12 : index
    %c0_5 = arith.constant 0 : index
    %8 = vector.load %arg5[%c12, %c0_5] : memref<72x3328xf32, #tpu.memory_space<vmem>>, vector<6x2661xf32>
    tpu.vector_store %arg5[%c12, %c0_5], %7 {strides = array<i32>} : memref<72x3328xf32, #tpu.memory_space<vmem>>, vector<6x2661xf32>,
    %c0_6 = arith.constant 0 : index
    %c342 = arith.constant 342 : index
    %9 = vector.load %arg3[%c0_6, %c342] : memref<6x3328xbf16, #tpu.memory_space<vmem>>, vector<6x2661xbf16>
    %10 = arith.extf %9 : vector<6x2661xbf16> to vector<6x2661xf32>
    %c18 = arith.constant 18 : index
    %c0_7 = arith.constant 0 : index
    %11 = vector.load %arg5[%c18, %c0_7] : memref<72x3328xf32, #tpu.memory_space<vmem>>, vector<6x2661xf32>
    tpu.vector_store %arg5[%c18, %c0_7], %10 {strides = array<i32>} : memref<72x3328xf32, #tpu.memory_space<vmem>>, vector<6x2661xf32>,
    %c0_8 = arith.constant 0 : index
    %c343 = arith.constant 343 : index
    %12 = vector.load %arg3[%c0_8, %c343] : memref<6x3328xbf16, #tpu.memory_space<vmem>>, vector<6x2661xbf16>
    %13 = arith.extf %12 : vector<6x2661xbf16> to vector<6x2661xf32>
    %c24 = arith.constant 24 : index
    %c0_9 = arith.constant 0 : index
    %14 = vector.load %arg5[%c24, %c0_9] : memref<72x3328xf32, #tpu.memory_space<vmem>>, vector<6x2661xf32>
    tpu.vector_store %arg5[%c24, %c0_9], %13 {strides = array<i32>} : memref<72x3328xf32, #tpu.memory_space<vmem>>, vector<6x2661xf32>,
    %c0_10 = arith.constant 0 : index
    %c344 = arith.constant 344 : index
    %15 = vector.load %arg3[%c0_10, %c344] : memref<6x3328xbf16, #tpu.memory_space<vmem>>, vector<6x2661xbf16>
    %16 = arith.extf %15 : vector<6x2661xbf16> to vector<6x2661xf32>
    %c30 = arith.constant 30 : index
    %c0_11 = arith.constant 0 : index
    %17 = vector.load %arg5[%c30, %c0_11] : memref<72x3328xf32, #tpu.memory_space<vmem>>, vector<6x2661xf32>
    tpu.vector_store %arg5[%c30, %c0_11], %16 {strides = array<i32>} : memref<72x3328xf32, #tpu.memory_space<vmem>>, vector<6x2661xf32>,
    %c0_12 = arith.constant 0 : index
    %c360 = arith.constant 360 : index
    %18 = vector.load %arg3[%c0_12, %c360] : memref<6x3328xbf16, #tpu.memory_space<vmem>>, vector<6x2661xbf16>
    %19 = arith.extf %18 : vector<6x2661xbf16> to vector<6x2661xf32>
    %c36 = arith.constant 36 : index
    %c0_13 = arith.constant 0 : index
    %20 = vector.load %arg5[%c36, %c0_13] : memref<72x3328xf32, #tpu.memory_space<vmem>>, vector<6x2661xf32>
    tpu.vector_store %arg5[%c36, %c0_13], %19 {strides = array<i32>} : memref<72x3328xf32, #tpu.memory_space<vmem>>, vector<6x2661xf32>,
    %c0_14 = arith.constant 0 : index
    %c361 = arith.constant 361 : index
    %21 = vector.load %arg3[%c0_14, %c361] : memref<6x3328xbf16, #tpu.memory_space<vmem>>, vector<6x2661xbf16>
    %22 = arith.extf %21 : vector<6x2661xbf16> to vector<6x2661xf32>
    %c42 = arith.constant 42 : index
    %c0_15 = arith.constant 0 : index
    %23 = vector.load %arg5[%c42, %c0_15] : memref<72x3328xf32, #tpu.memory_space<vmem>>, vector<6x2661xf32>
    tpu.vector_store %arg5[%c42, %c0_15], %22 {strides = array<i32>} : memref<72x3328xf32, #tpu.memory_space<vmem>>, vector<6x2661xf32>,
    %c0_16 = arith.constant 0 : index
    %c362 = arith.constant 362 : index
    %24 = vector.load %arg3[%c0_16, %c362] : memref<6x3328xbf16, #tpu.memory_space<vmem>>, vector<6x2661xbf16>
    %25 = arith.extf %24 : vector<6x2661xbf16> to vector<6x2661xf32>
    %c48 = arith.constant 48 : index
    %c0_17 = arith.constant 0 : index
    %26 = vector.load %arg5[%c48, %c0_17] : memref<72x3328xf32, #tpu.memory_space<vmem>>, vector<6x2661xf32>
    tpu.vector_store %arg5[%c48, %c0_17], %25 {strides = array<i32>} : memref<72x3328xf32, #tpu.memory_space<vmem>>, vector<6x2661xf32>,
    %c0_18 = arith.constant 0 : index
    %c19 = arith.constant 19 : index
    %27 = vector.load %arg3[%c0_18, %c19] : memref<6x3328xbf16, #tpu.memory_space<vmem>>, vector<6x2661xbf16>
    %28 = arith.extf %27 : vector<6x2661xbf16> to vector<6x2661xf32>
    %c54 = arith.constant 54 : index
    %c0_19 = arith.constant 0 : index
    %29 = vector.load %arg5[%c54, %c0_19] : memref<72x3328xf32, #tpu.memory_space<vmem>>, vector<6x2661xf32>
    tpu.vector_store %arg5[%c54, %c0_19], %28 {strides = array<i32>} : memref<72x3328xf32, #tpu.memory_space<vmem>>, vector<6x2661xf32>,
    %c0_20 = arith.constant 0 : index
    %c343_21 = arith.constant 343 : index
    %30 = vector.load %arg3[%c0_20, %c343_21] : memref<6x3328xbf16, #tpu.memory_space<vmem>>, vector<6x2661xbf16>
    %31 = arith.extf %30 : vector<6x2661xbf16> to vector<6x2661xf32>
    %c60 = arith.constant 60 : index
    %c0_22 = arith.constant 0 : index
    %32 = vector.load %arg5[%c60, %c0_22] : memref<72x3328xf32, #tpu.memory_space<vmem>>, vector<6x2661xf32>
    tpu.vector_store %arg5[%c60, %c0_22], %31 {strides = array<i32>} : memref<72x3328xf32, #tpu.memory_space<vmem>>, vector<6x2661xf32>,
    %c0_23 = arith.constant 0 : index
    %c667 = arith.constant 667 : index
    %33 = vector.load %arg3[%c0_23, %c667] : memref<6x3328xbf16, #tpu.memory_space<vmem>>, vector<6x2661xbf16>
    %34 = arith.extf %33 : vector<6x2661xbf16> to vector<6x2661xf32>
    %c66 = arith.constant 66 : index
    %c0_24 = arith.constant 0 : index
    %35 = vector.load %arg5[%c66, %c0_24] : memref<72x3328xf32, #tpu.memory_space<vmem>>, vector<6x2661xf32>
    tpu.vector_store %arg5[%c66, %c0_24], %34 {strides = array<i32>} : memref<72x3328xf32, #tpu.memory_space<vmem>>, vector<6x2661xf32>,
    %c0_25 = arith.constant 0 : index
    %c0_26 = arith.constant 0 : index
    %36 = vector.load %arg1[%c0_25, %c0_26] : memref<6x72xf32, #tpu.memory_space<vmem>>, vector<6x72xf32>
    %c0_27 = arith.constant 0 : index
    %c0_28 = arith.constant 0 : index
    %37 = vector.load %arg5[%c0_27, %c0_28] : memref<72x3328xf32, #tpu.memory_space<vmem>>, vector<72x3328xf32>
    %cst = arith.constant dense<0.000000e+00> : vector<6x3328xf32>
    %38 = tpu.matmul %36, %37, %cst {dimension_numbers = #tpu.dot_dimension_numbers<[1], [0], [0], [1], [0, 0, 1, 1], [], []>} : vector<6x72xf32>, vector<72x3328xf32>, vector<6x3328xf32> -> vector<6x3328xf32>
    %c0_29 = arith.constant 0 : index
    %c0_30 = arith.constant 0 : index
    %39 = vector.load %arg2[%c0_29, %c0_30] : memref<6x1xf32, #tpu.memory_space<vmem>>, vector<6x1xf32>
    %40 = vector.broadcast %39 : vector<6x1xf32> to vector<6x3328xf32>
    %41 = arith.addf %38, %40 : vector<6x3328xf32>
    %cst_31 = arith.constant 0.000000e+00 : f32
    %42 = vector.broadcast %cst_31 : f32 to vector<6x3328xf32>
    %43 = arith.maximumf %41, %42 : vector<6x3328xf32>
    %44 = arith.truncf %43 : vector<6x3328xf32> to vector<6x3328xbf16>
    %c0_32 = arith.constant 0 : index
    %c0_33 = arith.constant 0 : index
    %45 = vector.load %arg4[%c0_32, %c0_33] : memref<6x3328xbf16, #tpu.memory_space<vmem>>, vector<6x3328xbf16>
    tpu.vector_store %arg4[%c0_32, %c0_33], %44 {strides = array<i32>} : memref<6x3328xbf16, #tpu.memory_space<vmem>>, vector<6x3328xbf16>,
    return
  }
  func.func @transform_0(%arg0: i32) -> (i32, i32) {
    %c0_i32 = arith.constant 0 : i32
    %c0_i32_0 = arith.constant 0 : i32
    %c0_i32_1 = arith.constant 0 : i32
    return %c0_i32, %c0_i32_0 : i32, i32
  }
  func.func @transform_1(%arg0: i32) -> (i32, i32) {
    %c0_i32 = arith.constant 0 : i32
    %c0_i32_0 = arith.constant 0 : i32
    %c0_i32_1 = arith.constant 0 : i32
    return %c0_i32, %c0_i32_0 : i32, i32
  }
  func.func @transform_2(%arg0: i32) -> (i32, i32) {
    %c0_i32 = arith.constant 0 : i32
    %c0_i32_0 = arith.constant 0 : i32
    return %c0_i32, %arg0 : i32, i32
  }
  func.func @transform_3(%arg0: i32) -> (i32, i32) {
    %c0_i32 = arith.constant 0 : i32
    %c0_i32_0 = arith.constant 0 : i32
    return %c0_i32, %arg0 : i32, i32
  }
}

module attributes {stable_mosaic.version = 11 : i64} {
  func.func @_pointwise_bn_relu_kernel(%arg0: i32, %arg1: memref<6x12xbf16, #tpu.memory_space<vmem>>, %arg2: memref<6x1xf32, #tpu.memory_space<vmem>>, %arg3: memref<12x128xbf16, #tpu.memory_space<vmem>>, %arg4: memref<6x128xbf16, #tpu.memory_space<vmem>>) attributes {dimension_semantics = [#tpu.dimension_semantics<parallel>], iteration_bounds = array<i64: 4>, scalar_prefetch = 0 : i64, scratch_operands = 0 : i64, tpu.core_type = #tpu.core_type<tc>, window_params = [{pipeline_mode = #tpu.pipeline_mode<synchronous>, transform_indices = @transform_0, window_bounds = array<i64: 6, 12>}, {pipeline_mode = #tpu.pipeline_mode<synchronous>, transform_indices = @transform_1, window_bounds = array<i64: 6, 1>}, {transform_indices = @transform_2, window_bounds = array<i64: 12, 128>}, {transform_indices = @transform_3, window_bounds = array<i64: 6, 128>}]} {
    %c0 = arith.constant 0 : index
    %c0_0 = arith.constant 0 : index
    %0 = vector.load %arg1[%c0, %c0_0] : memref<6x12xbf16, #tpu.memory_space<vmem>>, vector<6x12xbf16>
    %c0_1 = arith.constant 0 : index
    %c0_2 = arith.constant 0 : index
    %1 = vector.load %arg3[%c0_1, %c0_2] : memref<12x128xbf16, #tpu.memory_space<vmem>>, vector<12x128xbf16>
    %cst = arith.constant dense<0.000000e+00> : vector<6x128xf32>
    %2 = tpu.matmul %0, %1, %cst {dimension_numbers = #tpu.dot_dimension_numbers<[1], [0], [0], [1], [0, 0, 1, 1], [], []>} : vector<6x12xbf16>, vector<12x128xbf16>, vector<6x128xf32> -> vector<6x128xf32>
    %c0_3 = arith.constant 0 : index
    %c0_4 = arith.constant 0 : index
    %3 = vector.load %arg2[%c0_3, %c0_4] : memref<6x1xf32, #tpu.memory_space<vmem>>, vector<6x1xf32>
    %4 = vector.broadcast %3 : vector<6x1xf32> to vector<6x128xf32>
    %5 = arith.addf %2, %4 : vector<6x128xf32>
    %cst_5 = arith.constant 0.000000e+00 : f32
    %6 = vector.broadcast %cst_5 : f32 to vector<6x128xf32>
    %7 = arith.maximumf %5, %6 : vector<6x128xf32>
    %8 = arith.truncf %7 : vector<6x128xf32> to vector<6x128xbf16>
    %c0_6 = arith.constant 0 : index
    %c0_7 = arith.constant 0 : index
    %9 = vector.load %arg4[%c0_6, %c0_7] : memref<6x128xbf16, #tpu.memory_space<vmem>>, vector<6x128xbf16>
    tpu.vector_store %arg4[%c0_6, %c0_7], %8 {strides = array<i32>} : memref<6x128xbf16, #tpu.memory_space<vmem>>, vector<6x128xbf16>,
    return
  }
  func.func @transform_0(%arg0: i32) -> (i32, i32) {
    %c0_i32 = arith.constant 0 : i32
    %c0_i32_0 = arith.constant 0 : i32
    %c0_i32_1 = arith.constant 0 : i32
    return %c0_i32, %c0_i32_0 : i32, i32
  }
  func.func @transform_1(%arg0: i32) -> (i32, i32) {
    %c0_i32 = arith.constant 0 : i32
    %c0_i32_0 = arith.constant 0 : i32
    %c0_i32_1 = arith.constant 0 : i32
    return %c0_i32, %c0_i32_0 : i32, i32
  }
  func.func @transform_2(%arg0: i32) -> (i32, i32) {
    %c0_i32 = arith.constant 0 : i32
    %c0_i32_0 = arith.constant 0 : i32
    return %c0_i32, %arg0 : i32, i32
  }
  func.func @transform_3(%arg0: i32) -> (i32, i32) {
    %c0_i32 = arith.constant 0 : i32
    %c0_i32_0 = arith.constant 0 : i32
    return %c0_i32, %arg0 : i32, i32
  }
}

module attributes {stable_mosaic.version = 11 : i64} {
  func.func @_conv_bn_relu_kernel(%arg0: i32, %arg1: memref<6x72xf32, #tpu.memory_space<vmem>>, %arg2: memref<6x1xf32, #tpu.memory_space<vmem>>, %arg3: memref<6x640xbf16, #tpu.memory_space<vmem>>, %arg4: memref<6x640xbf16, #tpu.memory_space<vmem>>, %arg5: memref<72x640xf32, #tpu.memory_space<vmem>>) attributes {dimension_semantics = [#tpu.dimension_semantics<parallel>], iteration_bounds = array<i64: 2>, scalar_prefetch = 0 : i64, scratch_operands = 1 : i64, tpu.core_type = #tpu.core_type<tc>, window_params = [{pipeline_mode = #tpu.pipeline_mode<synchronous>, transform_indices = @transform_0, window_bounds = array<i64: 6, 72>}, {pipeline_mode = #tpu.pipeline_mode<synchronous>, transform_indices = @transform_1, window_bounds = array<i64: 6, 1>}, {transform_indices = @transform_2, window_bounds = array<i64: 6, 640>}, {transform_indices = @transform_3, window_bounds = array<i64: 6, 640>}]} {
    %c0 = arith.constant 0 : index
    %c100 = arith.constant 100 : index
    %0 = vector.load %arg3[%c0, %c100] : memref<6x640xbf16, #tpu.memory_space<vmem>>, vector<6x429xbf16>
    %1 = arith.extf %0 : vector<6x429xbf16> to vector<6x429xf32>
    %c0_0 = arith.constant 0 : index
    %c0_1 = arith.constant 0 : index
    %2 = vector.load %arg5[%c0_0, %c0_1] : memref<72x640xf32, #tpu.memory_space<vmem>>, vector<6x429xf32>
    tpu.vector_store %arg5[%c0_0, %c0_1], %1 {strides = array<i32>} : memref<72x640xf32, #tpu.memory_space<vmem>>, vector<6x429xf32>,
    %c0_2 = arith.constant 0 : index
    %c101 = arith.constant 101 : index
    %3 = vector.load %arg3[%c0_2, %c101] : memref<6x640xbf16, #tpu.memory_space<vmem>>, vector<6x429xbf16>
    %4 = arith.extf %3 : vector<6x429xbf16> to vector<6x429xf32>
    %c6 = arith.constant 6 : index
    %c0_3 = arith.constant 0 : index
    %5 = vector.load %arg5[%c6, %c0_3] : memref<72x640xf32, #tpu.memory_space<vmem>>, vector<6x429xf32>
    tpu.vector_store %arg5[%c6, %c0_3], %4 {strides = array<i32>} : memref<72x640xf32, #tpu.memory_space<vmem>>, vector<6x429xf32>,
    %c0_4 = arith.constant 0 : index
    %c102 = arith.constant 102 : index
    %6 = vector.load %arg3[%c0_4, %c102] : memref<6x640xbf16, #tpu.memory_space<vmem>>, vector<6x429xbf16>
    %7 = arith.extf %6 : vector<6x429xbf16> to vector<6x429xf32>
    %c12 = arith.constant 12 : index
    %c0_5 = arith.constant 0 : index
    %8 = vector.load %arg5[%c12, %c0_5] : memref<72x640xf32, #tpu.memory_space<vmem>>, vector<6x429xf32>
    tpu.vector_store %arg5[%c12, %c0_5], %7 {strides = array<i32>} : memref<72x640xf32, #tpu.memory_space<vmem>>, vector<6x429xf32>,
    %c0_6 = arith.constant 0 : index
    %c110 = arith.constant 110 : index
    %9 = vector.load %arg3[%c0_6, %c110] : memref<6x640xbf16, #tpu.memory_space<vmem>>, vector<6x429xbf16>
    %10 = arith.extf %9 : vector<6x429xbf16> to vector<6x429xf32>
    %c18 = arith.constant 18 : index
    %c0_7 = arith.constant 0 : index
    %11 = vector.load %arg5[%c18, %c0_7] : memref<72x640xf32, #tpu.memory_space<vmem>>, vector<6x429xf32>
    tpu.vector_store %arg5[%c18, %c0_7], %10 {strides = array<i32>} : memref<72x640xf32, #tpu.memory_space<vmem>>, vector<6x429xf32>,
    %c0_8 = arith.constant 0 : index
    %c111 = arith.constant 111 : index
    %12 = vector.load %arg3[%c0_8, %c111] : memref<6x640xbf16, #tpu.memory_space<vmem>>, vector<6x429xbf16>
    %13 = arith.extf %12 : vector<6x429xbf16> to vector<6x429xf32>
    %c24 = arith.constant 24 : index
    %c0_9 = arith.constant 0 : index
    %14 = vector.load %arg5[%c24, %c0_9] : memref<72x640xf32, #tpu.memory_space<vmem>>, vector<6x429xf32>
    tpu.vector_store %arg5[%c24, %c0_9], %13 {strides = array<i32>} : memref<72x640xf32, #tpu.memory_space<vmem>>, vector<6x429xf32>,
    %c0_10 = arith.constant 0 : index
    %c112 = arith.constant 112 : index
    %15 = vector.load %arg3[%c0_10, %c112] : memref<6x640xbf16, #tpu.memory_space<vmem>>, vector<6x429xbf16>
    %16 = arith.extf %15 : vector<6x429xbf16> to vector<6x429xf32>
    %c30 = arith.constant 30 : index
    %c0_11 = arith.constant 0 : index
    %17 = vector.load %arg5[%c30, %c0_11] : memref<72x640xf32, #tpu.memory_space<vmem>>, vector<6x429xf32>
    tpu.vector_store %arg5[%c30, %c0_11], %16 {strides = array<i32>} : memref<72x640xf32, #tpu.memory_space<vmem>>, vector<6x429xf32>,
    %c0_12 = arith.constant 0 : index
    %c120 = arith.constant 120 : index
    %18 = vector.load %arg3[%c0_12, %c120] : memref<6x640xbf16, #tpu.memory_space<vmem>>, vector<6x429xbf16>
    %19 = arith.extf %18 : vector<6x429xbf16> to vector<6x429xf32>
    %c36 = arith.constant 36 : index
    %c0_13 = arith.constant 0 : index
    %20 = vector.load %arg5[%c36, %c0_13] : memref<72x640xf32, #tpu.memory_space<vmem>>, vector<6x429xf32>
    tpu.vector_store %arg5[%c36, %c0_13], %19 {strides = array<i32>} : memref<72x640xf32, #tpu.memory_space<vmem>>, vector<6x429xf32>,
    %c0_14 = arith.constant 0 : index
    %c121 = arith.constant 121 : index
    %21 = vector.load %arg3[%c0_14, %c121] : memref<6x640xbf16, #tpu.memory_space<vmem>>, vector<6x429xbf16>
    %22 = arith.extf %21 : vector<6x429xbf16> to vector<6x429xf32>
    %c42 = arith.constant 42 : index
    %c0_15 = arith.constant 0 : index
    %23 = vector.load %arg5[%c42, %c0_15] : memref<72x640xf32, #tpu.memory_space<vmem>>, vector<6x429xf32>
    tpu.vector_store %arg5[%c42, %c0_15], %22 {strides = array<i32>} : memref<72x640xf32, #tpu.memory_space<vmem>>, vector<6x429xf32>,
    %c0_16 = arith.constant 0 : index
    %c122 = arith.constant 122 : index
    %24 = vector.load %arg3[%c0_16, %c122] : memref<6x640xbf16, #tpu.memory_space<vmem>>, vector<6x429xbf16>
    %25 = arith.extf %24 : vector<6x429xbf16> to vector<6x429xf32>
    %c48 = arith.constant 48 : index
    %c0_17 = arith.constant 0 : index
    %26 = vector.load %arg5[%c48, %c0_17] : memref<72x640xf32, #tpu.memory_space<vmem>>, vector<6x429xf32>
    tpu.vector_store %arg5[%c48, %c0_17], %25 {strides = array<i32>} : memref<72x640xf32, #tpu.memory_space<vmem>>, vector<6x429xf32>,
    %c0_18 = arith.constant 0 : index
    %c11 = arith.constant 11 : index
    %27 = vector.load %arg3[%c0_18, %c11] : memref<6x640xbf16, #tpu.memory_space<vmem>>, vector<6x429xbf16>
    %28 = arith.extf %27 : vector<6x429xbf16> to vector<6x429xf32>
    %c54 = arith.constant 54 : index
    %c0_19 = arith.constant 0 : index
    %29 = vector.load %arg5[%c54, %c0_19] : memref<72x640xf32, #tpu.memory_space<vmem>>, vector<6x429xf32>
    tpu.vector_store %arg5[%c54, %c0_19], %28 {strides = array<i32>} : memref<72x640xf32, #tpu.memory_space<vmem>>, vector<6x429xf32>,
    %c0_20 = arith.constant 0 : index
    %c111_21 = arith.constant 111 : index
    %30 = vector.load %arg3[%c0_20, %c111_21] : memref<6x640xbf16, #tpu.memory_space<vmem>>, vector<6x429xbf16>
    %31 = arith.extf %30 : vector<6x429xbf16> to vector<6x429xf32>
    %c60 = arith.constant 60 : index
    %c0_22 = arith.constant 0 : index
    %32 = vector.load %arg5[%c60, %c0_22] : memref<72x640xf32, #tpu.memory_space<vmem>>, vector<6x429xf32>
    tpu.vector_store %arg5[%c60, %c0_22], %31 {strides = array<i32>} : memref<72x640xf32, #tpu.memory_space<vmem>>, vector<6x429xf32>,
    %c0_23 = arith.constant 0 : index
    %c211 = arith.constant 211 : index
    %33 = vector.load %arg3[%c0_23, %c211] : memref<6x640xbf16, #tpu.memory_space<vmem>>, vector<6x429xbf16>
    %34 = arith.extf %33 : vector<6x429xbf16> to vector<6x429xf32>
    %c66 = arith.constant 66 : index
    %c0_24 = arith.constant 0 : index
    %35 = vector.load %arg5[%c66, %c0_24] : memref<72x640xf32, #tpu.memory_space<vmem>>, vector<6x429xf32>
    tpu.vector_store %arg5[%c66, %c0_24], %34 {strides = array<i32>} : memref<72x640xf32, #tpu.memory_space<vmem>>, vector<6x429xf32>,
    %c0_25 = arith.constant 0 : index
    %c0_26 = arith.constant 0 : index
    %36 = vector.load %arg1[%c0_25, %c0_26] : memref<6x72xf32, #tpu.memory_space<vmem>>, vector<6x72xf32>
    %c0_27 = arith.constant 0 : index
    %c0_28 = arith.constant 0 : index
    %37 = vector.load %arg5[%c0_27, %c0_28] : memref<72x640xf32, #tpu.memory_space<vmem>>, vector<72x640xf32>
    %cst = arith.constant dense<0.000000e+00> : vector<6x640xf32>
    %38 = tpu.matmul %36, %37, %cst {dimension_numbers = #tpu.dot_dimension_numbers<[1], [0], [0], [1], [0, 0, 1, 1], [], []>} : vector<6x72xf32>, vector<72x640xf32>, vector<6x640xf32> -> vector<6x640xf32>
    %c0_29 = arith.constant 0 : index
    %c0_30 = arith.constant 0 : index
    %39 = vector.load %arg2[%c0_29, %c0_30] : memref<6x1xf32, #tpu.memory_space<vmem>>, vector<6x1xf32>
    %40 = vector.broadcast %39 : vector<6x1xf32> to vector<6x640xf32>
    %41 = arith.addf %38, %40 : vector<6x640xf32>
    %cst_31 = arith.constant 0.000000e+00 : f32
    %42 = vector.broadcast %cst_31 : f32 to vector<6x640xf32>
    %43 = arith.maximumf %41, %42 : vector<6x640xf32>
    %44 = arith.truncf %43 : vector<6x640xf32> to vector<6x640xbf16>
    %c0_32 = arith.constant 0 : index
    %c0_33 = arith.constant 0 : index
    %45 = vector.load %arg4[%c0_32, %c0_33] : memref<6x640xbf16, #tpu.memory_space<vmem>>, vector<6x640xbf16>
    tpu.vector_store %arg4[%c0_32, %c0_33], %44 {strides = array<i32>} : memref<6x640xbf16, #tpu.memory_space<vmem>>, vector<6x640xbf16>,
    return
  }
  func.func @transform_0(%arg0: i32) -> (i32, i32) {
    %c0_i32 = arith.constant 0 : i32
    %c0_i32_0 = arith.constant 0 : i32
    %c0_i32_1 = arith.constant 0 : i32
    return %c0_i32, %c0_i32_0 : i32, i32
  }
  func.func @transform_1(%arg0: i32) -> (i32, i32) {
    %c0_i32 = arith.constant 0 : i32
    %c0_i32_0 = arith.constant 0 : i32
    %c0_i32_1 = arith.constant 0 : i32
    return %c0_i32, %c0_i32_0 : i32, i32
  }
  func.func @transform_2(%arg0: i32) -> (i32, i32) {
    %c0_i32 = arith.constant 0 : i32
    %c0_i32_0 = arith.constant 0 : i32
    return %c0_i32, %arg0 : i32, i32
  }
  func.func @transform_3(%arg0: i32) -> (i32, i32) {
    %c0_i32 = arith.constant 0 : i32
    %c0_i32_0 = arith.constant 0 : i32
    return %c0_i32, %arg0 : i32, i32
  }
}

</mosaic_0001>

<llo_original>
// kernel: segmentation_encoder.4
$region0: #{segmentation_encoder.4}
  #allocation0 [shape = 'u32[]', space=smem, size = 0x4, offset = 0x4, fixed_abs, tag = 'smem constant byte address 0x4 - core index']
  #allocation1 [shape = 'u32[144,128]{1,0:T(1,128)}', space=vmem, size = 0x12000, scoped, tag = 'internal scratch']
  #allocation2 [shape = 'f32[36,5120]{1,0:T(8,128)}', space=vmem, size = 0xc8000, scoped, tag = 'scratch operand']
  %s0 = inlined_call_operand.vmem [shape: f32[2,36], index: 0, kind: input, shape index: {}]
  %s1 = inlined_call_operand.vmem [shape: f32[2,1], index: 1, kind: input, shape index: {}]
  %s2 = inlined_call_operand.vmem [shape: bf16[4,20480], index: 2, kind: input, shape index: {}]
  %s3 = inlined_call_operand.vmem [shape: bf16[2,20480], index: 3, kind: output, shape index: {}]
  %s4 = sld [smem:[#allocation0]]
  $region45: #{segmentation_encoder.4} parent=0
    _
  %s6 = ssub.s32 1, %s4
  %s7 = scalar_select 0, %s6, %s4
  loop: start=0, step=1, limit=6
  $region2: #{segmentation_encoder.4} parent=0 // loop_pre_header
    _
  $region3: #{segmentation_encoder.4} parent=0 // loop_header
    %s9 = sphi 0, %s13
    %p10 = scmp.ge.s32.totalorder %s9, 6
    %s17 = sphi 0, %s17
    %s19 = sphi 0, %s17
    %s20 = sphi 0, %s19
    %s34 = sphi 0, %s20
    %s38 = sphi 0, %s38
    %s40 = sphi 0, %s38
    %s41 = sphi 0, %s40
    %s55 = sphi 0, %s41
    %s61 = sphi 0, %s63
    %s64 = sphi 0, %s61
    %s65 = sphi 0, %s64
    %s81 = sphi 0, %s65
    %s87 = sphi 0, %s89
    %s90 = sphi 0, %s87
    %s91 = sphi 0, %s90
    %s107 = sphi 0, %s91
  $region4: #{segmentation_encoder.4} parent=0 // loop_header_branch
    %12 = sbr.rel (%p10) target = $region8
  $region5: #{segmentation_encoder.4} parent=0 // loop_body
    %s14 = ssub.s32 %s9, 1
    %s15 = ssub.s32 %s9, 2
    %s16 = sadd.s32 %s9, 1
    %s18 = sadd.s32 %s17, 1
    %p21 = scmp.eq.s32.totalorder %s9, 3
    %p22 = scmp.ne.s32.totalorder %s17, %s19
    %p23 = scmp.eq.s32.totalorder %s9, 0
    %p24 = por %p22, %p23
    %p25 = scmp.ne.s32.totalorder %s17, %s19
    %p26 = scmp.eq.s32.totalorder %s14, 3
    %p27 = por %p25, %p26
    %p28 = scmp.ne.s32.totalorder %s19, %s20
    %p29 = scmp.eq.s32.totalorder %s14, 0
    %p30 = por %p28, %p29
    %p31 = scmp.ne.s32.totalorder %s19, %s20
    %p32 = scmp.eq.s32.totalorder %s15, 3
    %p33 = por %p31, %p32
    %p35 = scmp.ne.s32.totalorder %s20, %s34
    %p36 = scmp.eq.s32.totalorder %s15, 0
    %p37 = por %p35, %p36
    %s39 = sadd.s32 %s38, 1
    %p42 = scmp.eq.s32.totalorder %s9, 3
    %p43 = scmp.ne.s32.totalorder %s38, %s40
    %p44 = scmp.eq.s32.totalorder %s9, 0
    %p45 = por %p43, %p44
    %p46 = scmp.ne.s32.totalorder %s38, %s40
    %p47 = scmp.eq.s32.totalorder %s14, 3
    %p48 = por %p46, %p47
    %p49 = scmp.ne.s32.totalorder %s40, %s41
    %p50 = scmp.eq.s32.totalorder %s14, 0
    %p51 = por %p49, %p50
    %p52 = scmp.ne.s32.totalorder %s40, %s41
    %p53 = scmp.eq.s32.totalorder %s15, 3
    %p54 = por %p52, %p53
    %p56 = scmp.ne.s32.totalorder %s41, %s55
    %p57 = scmp.eq.s32.totalorder %s15, 0
    %p58 = por %p56, %p57
    %s59 = ssub.s32 %s9, %s16
    %p60 = scmp.eq.s32.totalorder %s59, 0
    %s62 = sadd.s32 %s61, 1
    %s63 = scalar_select %p60, %s61, %s62
    %p66 = pneg %p60
    %p67 = scmp.eq.s32.totalorder %s9, 3
    %p68 = por %p66, %p67
    %p69 = scmp.ne.s32.totalorder %s61, %s64
    %p70 = scmp.eq.s32.totalorder %s9, 0
    %p71 = por %p69, %p70
    %p72 = scmp.ne.s32.totalorder %s61, %s64
    %p73 = scmp.eq.s32.totalorder %s14, 3
    %p74 = por %p72, %p73
    %p75 = scmp.ne.s32.totalorder %s64, %s65
    %p76 = scmp.eq.s32.totalorder %s14, 0
    %p77 = por %p75, %p76
    %p78 = scmp.ne.s32.totalorder %s64, %s65
    %p79 = scmp.eq.s32.totalorder %s15, 3
    %p80 = por %p78, %p79
    %p82 = scmp.ne.s32.totalorder %s65, %s81
    %p83 = scmp.eq.s32.totalorder %s15, 0
    %p84 = por %p82, %p83
    %s85 = ssub.s32 %s9, %s16
    %p86 = scmp.eq.s32.totalorder %s85, 0
    %s88 = sadd.s32 %s87, 1
    %s89 = scalar_select %p86, %s87, %s88
    %p92 = pneg %p86
    %p93 = scmp.eq.s32.totalorder %s9, 3
    %p94 = por %p92, %p93
    %p95 = scmp.ne.s32.totalorder %s87, %s90
    %p96 = scmp.eq.s32.totalorder %s9, 0
    %p97 = por %p95, %p96
    %p98 = scmp.ne.s32.totalorder %s87, %s90
    %p99 = scmp.eq.s32.totalorder %s14, 3
    %p100 = por %p98, %p99
    %p101 = scmp.ne.s32.totalorder %s90, %s91
    %p102 = scmp.eq.s32.totalorder %s14, 0
    %p103 = por %p101, %p102
    %p104 = scmp.ne.s32.totalorder %s90, %s91
    %p105 = scmp.eq.s32.totalorder %s15, 3
    %p106 = por %p104, %p105
    %p108 = scmp.ne.s32.totalorder %s91, %s107
    %p109 = scmp.eq.s32.totalorder %s15, 0
    %p110 = por %p108, %p109
    %p111 = scmp.le.s32.totalorder 1, %s9
    %p112 = scmp.lt.s32.totalorder %s9, 5
    %p113 = pnand %p111, %p112
    %p114 = pneg %p113
    // Predicated region
    $region9: #{segmentation_encoder.4} parent=5 // pred_check
      _
    $region10: #{segmentation_encoder.4} parent=5 // pred_check_branch
      %116 = sbr.rel (%p113) target = $region12
    $region11: #{segmentation_encoder.4} parent=5 // pred_region
      %s117 = ssub.s32 %s9, 1
      // Predicated region
      $region13: #{segmentation_encoder.4} parent=11 // pred_check
        %p118 = pneg %p30
      $region14: #{segmentation_encoder.4} parent=11 // pred_check_branch
        %120 = sbr.rel (%p118) target = $region16
      $region15: #{segmentation_encoder.4} parent=11 // pred_region
        _
      $region16: #{segmentation_encoder.4} parent=11 // pred_fallthru
        _
      // Predicated region
      $region17: #{segmentation_encoder.4} parent=11 // pred_check
        %p121 = pneg %p51
      $region18: #{segmentation_encoder.4} parent=11 // pred_check_branch
        %123 = sbr.rel (%p121) target = $region20
      $region19: #{segmentation_encoder.4} parent=11 // pred_region
        _
      $region20: #{segmentation_encoder.4} parent=11 // pred_fallthru
        _
    $region12: #{segmentation_encoder.4} parent=5 // pred_fallthru
      _
    %p124 = scmp.lt.s32.totalorder %s9, 4
    // Predicated region
    $region21: #{segmentation_encoder.4} parent=5 // pred_check
      %p125 = pneg %p124
    $region22: #{segmentation_encoder.4} parent=5 // pred_check_branch
      %127 = sbr.rel (%p125) target = $region24
    $region23: #{segmentation_encoder.4} parent=5 // pred_region
      // Predicated region
      $region25: #{segmentation_encoder.4} parent=23 // pred_check
        %p128 = pneg %p71
      $region26: #{segmentation_encoder.4} parent=23 // pred_check_branch
        %130 = sbr.rel (%p128) target = $region28
      $region27: #{segmentation_encoder.4} parent=23 // pred_region
        %s131 = smul.u32 40, %s9
        %p132 = scmp.lt.s32.totalorder %s131, 159
        %s133 = scalar_select %p132, %s131, 159
        %s134 = smul.addr %s133, 2
        %s135 = scalar_lea.vmem %s2, %s134
        %s136 = smul.u32 40, %s9
      $region28: #{segmentation_encoder.4} parent=23 // pred_fallthru
        _
    $region24: #{segmentation_encoder.4} parent=5 // pred_fallthru
      _
    %p137 = scmp.le.s32.totalorder 1, %s9
    %p138 = scmp.lt.s32.totalorder %s9, 5
    %p139 = pnand %p137, %p138
    %p140 = pneg %p139
    // Predicated region
    $region29: #{segmentation_encoder.4} parent=5 // pred_check
      _
    $region30: #{segmentation_encoder.4} parent=5 // pred_check_branch
      %142 = sbr.rel (%p139) target = $region32
    $region31: #{segmentation_encoder.4} parent=5 // pred_region
      %s143 = ssub.s32 %s9, 1
      %p144 = pneg %p30
      %p145 = pneg %p27
      %p146 = pneg %p51
      %p147 = pneg %p48
      %s148 = smul.u32 40, %s14
      %p149 = scmp.lt.s32.totalorder %s148, 159
      %s150 = scalar_select %p149, %s148, 159
      %s151 = smul.addr %s150, 2
      %s152 = scalar_lea.vmem %s2, %s151
      %p153 = pneg %p77
      %p154 = pneg %p74
      %p155 = pneg %p103
      %p156 = pneg %p100
      %s157 = smul.u32 40, %s14
      %p158 = scmp.lt.s32.totalorder %s157, 159
      %s159 = scalar_select %p158, %s157, 159
      %s160 = scalar_lea.vmem %s3, %s159
      %s161 = smul.u32 40, %s14
      %p162 = scmp.lt.s32.totalorder %s161, 159
      %s163 = scalar_select %p162, %s161, 159
      %s164 = smul.addr %s163, 2
      %s165 = scalar_lea.vmem %s2, %s164
      %s166 = smul.u32 40, %s14
      %s167 = smul.u32 40, %s14
      %p168 = scmp.lt.s32.totalorder %s167, 159
      %s169 = scalar_select %p168, %s167, 159
      %s170 = scalar_lea.vmem %s3, %s169
      %s171 = smul.u32 40, %s14
      %v172 = vld [vmem:[%s165] sm:$0xff]
      %v173 = vld [vmem:[%s165 + $0x8] sm:$0xff]
      %v174 = vld [vmem:[%s165 + $0x10] sm:$0xff]
      %v175 = vld [vmem:[%s165 + $0x18] sm:$0xff]
      %v176 = vld [vmem:[%s165 + $0x20] sm:$0xff]
      %v177 = vld [vmem:[%s165 + $0x28] sm:$0xff]
      %v178 = vld [vmem:[%s165 + $0x30] sm:$0xff]
      %v179 = vld [vmem:[%s165 + $0x38] sm:$0xff]
      %v180 = vld [vmem:[%s165 + $0x40] sm:$0xff]
      %v181 = vld [vmem:[%s165 + $0x48] sm:$0xff]
      %v182 = vunpack.c.l.bf16 %v172
      %v183 = vunpack.c.h.bf16 %v172
      %v184 = vunpack.c.l.bf16 %v173
      %v185 = vunpack.c.h.bf16 %v173
      %v186 = vunpack.c.l.bf16 %v174
      %v187 = vunpack.c.h.bf16 %v174
      %v188 = vunpack.c.l.bf16 %v175
      %v189 = vunpack.c.h.bf16 %v175
      %v190 = vunpack.c.l.bf16 %v176
      %v191 = vunpack.c.h.bf16 %v176
      %v192 = vunpack.c.l.bf16 %v177
      %v193 = vunpack.c.h.bf16 %v177
      %v194 = vunpack.c.l.bf16 %v178
      %v195 = vunpack.c.h.bf16 %v178
      %v196 = vunpack.c.l.bf16 %v179
      %v197 = vunpack.c.h.bf16 %v179
      %v198 = vunpack.c.l.bf16 %v180
      %v199 = vunpack.c.h.bf16 %v180
      %v200 = vunpack.c.l.bf16 %v181
      %v201 = vunpack.c.h.bf16 %v181
      %v222 = vcombine.high %v182, %v182
      %v223 = vcombine.high %v183, %v183
      %v224 = vcombine.high %v184, %v184
      %v225 = vcombine.high %v185, %v185
      %v226 = vcombine.high %v186, %v186
      %v227 = vcombine.high %v187, %v187
      %v228 = vcombine.high %v188, %v188
      %v229 = vcombine.high %v189, %v189
      %v230 = vcombine.high %v190, %v190
      %v231 = vcombine.high %v191, %v191
      %v232 = vcombine.high %v192, %v192
      %v233 = vcombine.high %v193, %v193
      %v234 = vcombine.high %v194, %v194
      %v235 = vcombine.high %v195, %v195
      %v236 = vcombine.high %v196, %v196
      %v237 = vcombine.high %v197, %v197
      %v238 = vcombine.high %v198, %v198
      %v239 = vcombine.high %v199, %v199
      %v240 = vcombine.high %v200, %v200
      %v241 = vcombine.high %v201, %v201
      %262 = vst [vmem:[#allocation2] sm:$0xf] %v182
      %263 = vst [vmem:[#allocation2 + $0x8] sm:$0xf] %v222
      %264 = vst [vmem:[#allocation2 + $0x10] sm:$0xf] %v183
      %265 = vst [vmem:[#allocation2 + $0x18] sm:$0xf] %v223
      %266 = vst [vmem:[#allocation2 + $0x20] sm:$0xf] %v184
      %267 = vst [vmem:[#allocation2 + $0x28] sm:$0xf] %v224
      %268 = vst [vmem:[#allocation2 + $0x30] sm:$0xf] %v185
      %269 = vst [vmem:[#allocation2 + $0x38] sm:$0xf] %v225
      %270 = vst [vmem:[#allocation2 + $0x40] sm:$0xf] %v186
      %271 = vst [vmem:[#allocation2 + $0x48] sm:$0xf] %v226
      %272 = vst [vmem:[#allocation2 + $0x50] sm:$0xf] %v187
      %273 = vst [vmem:[#allocation2 + $0x58] sm:$0xf] %v227
      %274 = vst [vmem:[#allocation2 + $0x60] sm:$0xf] %v188
      %275 = vst [vmem:[#allocation2 + $0x68] sm:$0xf] %v228
      %276 = vst [vmem:[#allocation2 + $0x70] sm:$0xf] %v189
      %277 = vst [vmem:[#allocation2 + $0x78] sm:$0xf] %v229
      %278 = vst [vmem:[#allocation2 + $0x80] sm:$0xf] %v190
      %279 = vst [vmem:[#allocation2 + $0x88] sm:$0xf] %v230
      %280 = vst [vmem:[#allocation2 + $0x90] sm:$0xf] %v191
      %281 = vst [vmem:[#allocation2 + $0x98] sm:$0xf] %v231
      %282 = vst [vmem:[#allocation2 + $0xa0] sm:$0xf] %v192
      %283 = vst [vmem:[#allocation2 + $0xa8] sm:$0xf] %v232
      %284 = vst [vmem:[#allocation2 + $0xb0] sm:$0xf] %v193
      %285 = vst [vmem:[#allocation2 + $0xb8] sm:$0xf] %v233
      %286 = vst [vmem:[#allocation2 + $0xc0] sm:$0xf] %v194
      %287 = vst [vmem:[#allocation2 + $0xc8] sm:$0xf] %v234
      %288 = vst [vmem:[#allocation2 + $0xd0] sm:$0xf] %v195
      %289 = vst [vmem:[#allocation2 + $0xd8] sm:$0xf] %v235
      %290 = vst [vmem:[#allocation2 + $0xe0] sm:$0xf] %v196
      %291 = vst [vmem:[#allocation2 + $0xe8] sm:$0xf] %v236
      %292 = vst [vmem:[#allocation2 + $0xf0] sm:$0xf] %v197
      %293 = vst [vmem:[#allocation2 + $0xf8] sm:$0xf] %v237
      %294 = vst [vmem:[#allocation2 + $0x100] sm:$0xf] %v198
      %295 = vst [vmem:[#allocation2 + $0x108] sm:$0xf] %v238
      %296 = vst [vmem:[#allocation2 + $0x110] sm:$0xf] %v199
      %297 = vst [vmem:[#allocation2 + $0x118] sm:$0xf] %v239
      %298 = vst [vmem:[#allocation2 + $0x120] sm:$0xf] %v200
      %299 = vst [vmem:[#allocation2 + $0x128] sm:$0xf] %v240
      %300 = vst [vmem:[#allocation2 + $0x130] sm:$0xf] %v201
      %vm301 = vcmask 470016
      %302 = vst.msk [vmem:[#allocation2 + $0x138] sm:$0xf] %vm301, %v241
      %v303 = vld [vmem:[%s165] sm:$0xff]
      %v304 = vld [vmem:[%s165 + $0x8] sm:$0xff]
      %v305 = vld [vmem:[%s165 + $0x10] sm:$0xff]
      %v306 = vld [vmem:[%s165 + $0x18] sm:$0xff]
      %v307 = vld [vmem:[%s165 + $0x20] sm:$0xff]
      %v308 = vld [vmem:[%s165 + $0x28] sm:$0xff]
      %v309 = vld [vmem:[%s165 + $0x30] sm:$0xff]
      %v310 = vld [vmem:[%s165 + $0x38] sm:$0xff]
      %v311 = vld [vmem:[%s165 + $0x40] sm:$0xff]
      %v312 = vld [vmem:[%s165 + $0x48] sm:$0xff]
      %v313 = vunpack.c.l.bf16 %v303
      %v314 = vunpack.c.h.bf16 %v303
      %v315 = vunpack.c.l.bf16 %v304
      %v316 = vunpack.c.h.bf16 %v304
      %v317 = vunpack.c.l.bf16 %v305
      %v318 = vunpack.c.h.bf16 %v305
      %v319 = vunpack.c.l.bf16 %v306
      %v320 = vunpack.c.h.bf16 %v306
      %v321 = vunpack.c.l.bf16 %v307
      %v322 = vunpack.c.h.bf16 %v307
      %v323 = vunpack.c.l.bf16 %v308
      %v324 = vunpack.c.h.bf16 %v308
      %v325 = vunpack.c.l.bf16 %v309
      %v326 = vunpack.c.h.bf16 %v309
      %v327 = vunpack.c.l.bf16 %v310
      %v328 = vunpack.c.h.bf16 %v310
      %v329 = vunpack.c.l.bf16 %v311
      %v330 = vunpack.c.h.bf16 %v311
      %v331 = vunpack.c.l.bf16 %v312
      %v332 = vunpack.c.h.bf16 %v312
      %v353 = vcombine.low %v313, %v313
      %v354 = vcombine.low %v314, %v314
      %v355 = vcombine.low %v315, %v315
      %v356 = vcombine.low %v316, %v316
      %v357 = vcombine.low %v317, %v317
      %v358 = vcombine.low %v318, %v318
      %v359 = vcombine.low %v319, %v319
      %v360 = vcombine.low %v320, %v320
      %v361 = vcombine.low %v321, %v321
      %v362 = vcombine.low %v322, %v322
      %v363 = vcombine.low %v323, %v323
      %v364 = vcombine.low %v324, %v324
      %v365 = vcombine.low %v325, %v325
      %v366 = vcombine.low %v326, %v326
      %v367 = vcombine.low %v327, %v327
      %v368 = vcombine.low %v328, %v328
      %v369 = vcombine.low %v329, %v329
      %v370 = vcombine.low %v330, %v330
      %v371 = vcombine.low %v331, %v331
      %v372 = vcombine.low %v332, %v332
      %373 = vrot.lane.b32.xlu0 %v353, 127
      %v374 = vpop.permute.xlu0 %373
      %375 = vrot.lane.b32.xlu0 %v313, 127
      %v376 = vpop.permute.xlu0 %375
      %377 = vrot.lane.b32.xlu0 %v354, 127
      %v378 = vpop.permute.xlu0 %377
      %379 = vrot.lane.b32.xlu0 %v314, 127
      %v380 = vpop.permute.xlu0 %379
      %381 = vrot.lane.b32.xlu0 %v355, 127
      %v382 = vpop.permute.xlu0 %381
      %383 = vrot.lane.b32.xlu0 %v315, 127
      %v384 = vpop.permute.xlu0 %383
      %385 = vrot.lane.b32.xlu0 %v356, 127
      %v386 = vpop.permute.xlu0 %385
      %387 = vrot.lane.b32.xlu0 %v316, 127
      %v388 = vpop.permute.xlu0 %387
      %389 = vrot.lane.b32.xlu0 %v357, 127
      %v390 = vpop.permute.xlu0 %389
      %391 = vrot.lane.b32.xlu0 %v317, 127
      %v392 = vpop.permute.xlu0 %391
      %393 = vrot.lane.b32.xlu0 %v358, 127
      %v394 = vpop.permute.xlu0 %393
      %395 = vrot.lane.b32.xlu0 %v318, 127
      %v396 = vpop.permute.xlu0 %395
      %397 = vrot.lane.b32.xlu0 %v359, 127
      %v398 = vpop.permute.xlu0 %397
      %399 = vrot.lane.b32.xlu0 %v319, 127
      %v400 = vpop.permute.xlu0 %399
      %401 = vrot.lane.b32.xlu0 %v360, 127
      %v402 = vpop.permute.xlu0 %401
      %403 = vrot.lane.b32.xlu0 %v320, 127
      %v404 = vpop.permute.xlu0 %403
      %405 = vrot.lane.b32.xlu0 %v361, 127
      %v406 = vpop.permute.xlu0 %405
      %407 = vrot.lane.b32.xlu0 %v321, 127
      %v408 = vpop.permute.xlu0 %407
      %409 = vrot.lane.b32.xlu0 %v362, 127
      %v410 = vpop.permute.xlu0 %409
      %411 = vrot.lane.b32.xlu0 %v322, 127
      %v412 = vpop.permute.xlu0 %411
      %413 = vrot.lane.b32.xlu0 %v363, 127
      %v414 = vpop.permute.xlu0 %413
      %415 = vrot.lane.b32.xlu0 %v323, 127
      %v416 = vpop.permute.xlu0 %415
      %417 = vrot.lane.b32.xlu0 %v364, 127
      %v418 = vpop.permute.xlu0 %417
      %419 = vrot.lane.b32.xlu0 %v324, 127
      %v420 = vpop.permute.xlu0 %419
      %421 = vrot.lane.b32.xlu0 %v365, 127
      %v422 = vpop.permute.xlu0 %421
      %423 = vrot.lane.b32.xlu0 %v325, 127
      %v424 = vpop.permute.xlu0 %423
      %425 = vrot.lane.b32.xlu0 %v366, 127
      %v426 = vpop.permute.xlu0 %425
      %427 = vrot.lane.b32.xlu0 %v326, 127
      %v428 = vpop.permute.xlu0 %427
      %429 = vrot.lane.b32.xlu0 %v367, 127
      %v430 = vpop.permute.xlu0 %429
      %431 = vrot.lane.b32.xlu0 %v327, 127
      %v432 = vpop.permute.xlu0 %431
      %433 = vrot.lane.b32.xlu0 %v368, 127
      %v434 = vpop.permute.xlu0 %433
      %435 = vrot.lane.b32.xlu0 %v328, 127
      %v436 = vpop.permute.xlu0 %435
      %437 = vrot.lane.b32.xlu0 %v369, 127
      %v438 = vpop.permute.xlu0 %437
      %439 = vrot.lane.b32.xlu0 %v329, 127
      %v440 = vpop.permute.xlu0 %439
      %441 = vrot.lane.b32.xlu0 %v370, 127
      %v442 = vpop.permute.xlu0 %441
      %443 = vrot.lane.b32.xlu0 %v330, 127
      %v444 = vpop.permute.xlu0 %443
      %445 = vrot.lane.b32.xlu0 %v371, 127
      %v446 = vpop.permute.xlu0 %445
      %447 = vrot.lane.b32.xlu0 %v331, 127
      %v448 = vpop.permute.xlu0 %447
      %449 = vrot.lane.b32.xlu0 %v372, 127
      %v450 = vpop.permute.xlu0 %449
      %451 = vrot.lane.b32.xlu0 %v332, 127
      %v452 = vpop.permute.xlu0 %451
      %vm453 = vcmask 1039360
      %v454 = vsel %vm453, %v374, %v376
      %v455 = vsel %vm453, %v376, %v378
      %v456 = vsel %vm453, %v378, %v380
      %v457 = vsel %vm453, %v380, %v382
      %v458 = vsel %vm453, %v382, %v384
      %v459 = vsel %vm453, %v384, %v386
      %v460 = vsel %vm453, %v386, %v388
      %v461 = vsel %vm453, %v388, %v390
      %v462 = vsel %vm453, %v390, %v392
      %v463 = vsel %vm453, %v392, %v394
      %v464 = vsel %vm453, %v394, %v396
      %v465 = vsel %vm453, %v396, %v398
      %v466 = vsel %vm453, %v398, %v400
      %v467 = vsel %vm453, %v400, %v402
      %v468 = vsel %vm453, %v402, %v404
      %v469 = vsel %vm453, %v404, %v406
      %v470 = vsel %vm453, %v406, %v408
      %v471 = vsel %vm453, %v408, %v410
      %v472 = vsel %vm453, %v410, %v412
      %v473 = vsel %vm453, %v412, %v414
      %v474 = vsel %vm453, %v414, %v416
      %v475 = vsel %vm453, %v416, %v418
      %v476 = vsel %vm453, %v418, %v420
      %v477 = vsel %vm453, %v420, %v422
      %v478 = vsel %vm453, %v422, %v424
      %v479 = vsel %vm453, %v424, %v426
      %v480 = vsel %vm453, %v426, %v428
      %v481 = vsel %vm453, %v428, %v430
      %v482 = vsel %vm453, %v430, %v432
      %v483 = vsel %vm453, %v432, %v434
      %v484 = vsel %vm453, %v434, %v436
      %v485 = vsel %vm453, %v436, %v438
      %v486 = vsel %vm453, %v438, %v440
      %v487 = vsel %vm453, %v440, %v442
      %v488 = vsel %vm453, %v442, %v444
      %v489 = vsel %vm453, %v444, %v446
      %v490 = vsel %vm453, %v446, %v448
      %v491 = vsel %vm453, %v448, %v450
      %v492 = vsel %vm453, %v450, %v452
      %533 = vst [vmem:[#allocation2] sm:$0xf0] %v454
      %534 = vst [vmem:[#allocation2 + $0x8] sm:$0xf0] %v455
      %535 = vst [vmem:[#allocation2 + $0x10] sm:$0xf0] %v456
      %536 = vst [vmem:[#allocation2 + $0x18] sm:$0xf0] %v457
      %537 = vst [vmem:[#allocation2 + $0x20] sm:$0xf0] %v458
      %538 = vst [vmem:[#allocation2 + $0x28] sm:$0xf0] %v459
      %539 = vst [vmem:[#allocation2 + $0x30] sm:$0xf0] %v460
      %540 = vst [vmem:[#allocation2 + $0x38] sm:$0xf0] %v461
      %541 = vst [vmem:[#allocation2 + $0x40] sm:$0xf0] %v462
      %542 = vst [vmem:[#allocation2 + $0x48] sm:$0xf0] %v463
      %543 = vst [vmem:[#allocation2 + $0x50] sm:$0xf0] %v464
      %544 = vst [vmem:[#allocation2 + $0x58] sm:$0xf0] %v465
      %545 = vst [vmem:[#allocation2 + $0x60] sm:$0xf0] %v466
      %546 = vst [vmem:[#allocation2 + $0x68] sm:$0xf0] %v467
      %547 = vst [vmem:[#allocation2 + $0x70] sm:$0xf0] %v468
      %548 = vst [vmem:[#allocation2 + $0x78] sm:$0xf0] %v469
      %549 = vst [vmem:[#allocation2 + $0x80] sm:$0xf0] %v470
      %550 = vst [vmem:[#allocation2 + $0x88] sm:$0xf0] %v471
      %551 = vst [vmem:[#allocation2 + $0x90] sm:$0xf0] %v472
      %552 = vst [vmem:[#allocation2 + $0x98] sm:$0xf0] %v473
      %553 = vst [vmem:[#allocation2 + $0xa0] sm:$0xf0] %v474
      %554 = vst [vmem:[#allocation2 + $0xa8] sm:$0xf0] %v475
      %555 = vst [vmem:[#allocation2 + $0xb0] sm:$0xf0] %v476
      %556 = vst [vmem:[#allocation2 + $0xb8] sm:$0xf0] %v477
      %557 = vst [vmem:[#allocation2 + $0xc0] sm:$0xf0] %v478
      %558 = vst [vmem:[#allocation2 + $0xc8] sm:$0xf0] %v479
      %559 = vst [vmem:[#allocation2 + $0xd0] sm:$0xf0] %v480
      %560 = vst [vmem:[#allocation2 + $0xd8] sm:$0xf0] %v481
      %561 = vst [vmem:[#allocation2 + $0xe0] sm:$0xf0] %v482
      %562 = vst [vmem:[#allocation2 + $0xe8] sm:$0xf0] %v483
      %563 = vst [vmem:[#allocation2 + $0xf0] sm:$0xf0] %v484
      %564 = vst [vmem:[#allocation2 + $0xf8] sm:$0xf0] %v485
      %565 = vst [vmem:[#allocation2 + $0x100] sm:$0xf0] %v486
      %566 = vst [vmem:[#allocation2 + $0x108] sm:$0xf0] %v487
      %567 = vst [vmem:[#allocation2 + $0x110] sm:$0xf0] %v488
      %568 = vst [vmem:[#allocation2 + $0x118] sm:$0xf0] %v489
      %569 = vst [vmem:[#allocation2 + $0x120] sm:$0xf0] %v490
      %570 = vst [vmem:[#allocation2 + $0x128] sm:$0xf0] %v491
      %571 = vst [vmem:[#allocation2 + $0x130] sm:$0xf0] %v492
      %vm572 = vcmask 474116
      %573 = vst.msk [vmem:[#allocation2 + $0x138] sm:$0xf0] %vm572, %v452
      %v574 = vld [vmem:[%s165] sm:$0xff]
      %v575 = vld [vmem:[%s165 + $0x8] sm:$0xff]
      %v576 = vld [vmem:[%s165 + $0x10] sm:$0xff]
      %v577 = vld [vmem:[%s165 + $0x18] sm:$0xff]
      %v578 = vld [vmem:[%s165 + $0x20] sm:$0xff]
      %v579 = vld [vmem:[%s165 + $0x28] sm:$0xff]
      %v580 = vld [vmem:[%s165 + $0x30] sm:$0xff]
      %v581 = vld [vmem:[%s165 + $0x38] sm:$0xff]
      %v582 = vld [vmem:[%s165 + $0x40] sm:$0xff]
      %v583 = vld [vmem:[%s165 + $0x48] sm:$0xff]
      %v584 = vunpack.c.l.bf16 %v574
      %v585 = vunpack.c.h.bf16 %v574
      %v586 = vunpack.c.l.bf16 %v575
      %v587 = vunpack.c.h.bf16 %v575
      %v588 = vunpack.c.l.bf16 %v576
      %v589 = vunpack.c.h.bf16 %v576
      %v590 = vunpack.c.l.bf16 %v577
      %v591 = vunpack.c.h.bf16 %v577
      %v592 = vunpack.c.l.bf16 %v578
      %v593 = vunpack.c.h.bf16 %v578
      %v594 = vunpack.c.l.bf16 %v579
      %v595 = vunpack.c.h.bf16 %v579
      %v596 = vunpack.c.l.bf16 %v580
      %v597 = vunpack.c.h.bf16 %v580
      %v598 = vunpack.c.l.bf16 %v581
      %v599 = vunpack.c.h.bf16 %v581
      %v600 = vunpack.c.l.bf16 %v582
      %v601 = vunpack.c.h.bf16 %v582
      %v602 = vunpack.c.l.bf16 %v583
      %v603 = vunpack.c.h.bf16 %v583
      %v624 = vcombine.high %v584, %v584
      %v625 = vcombine.high %v585, %v585
      %v626 = vcombine.high %v586, %v586
      %v627 = vcombine.high %v587, %v587
      %v628 = vcombine.high %v588, %v588
      %v629 = vcombine.high %v589, %v589
      %v630 = vcombine.high %v590, %v590
      %v631 = vcombine.high %v591, %v591
      %v632 = vcombine.high %v592, %v592
      %v633 = vcombine.high %v593, %v593
      %v634 = vcombine.high %v594, %v594
      %v635 = vcombine.high %v595, %v595
      %v636 = vcombine.high %v596, %v596
      %v637 = vcombine.high %v597, %v597
      %v638 = vcombine.high %v598, %v598
      %v639 = vcombine.high %v599, %v599
      %v640 = vcombine.high %v600, %v600
      %v641 = vcombine.high %v601, %v601
      %v642 = vcombine.high %v602, %v602
      %v643 = vcombine.high %v603, %v603
      %644 = vrot.lane.b32.xlu0 %v584, 126
      %v645 = vpop.permute.xlu0 %644
      %646 = vrot.lane.b32.xlu0 %v624, 126
      %v647 = vpop.permute.xlu0 %646
      %648 = vrot.lane.b32.xlu0 %v585, 126
      %v649 = vpop.permute.xlu0 %648
      %650 = vrot.lane.b32.xlu0 %v625, 126
      %v651 = vpop.permute.xlu0 %650
      %652 = vrot.lane.b32.xlu0 %v586, 126
      %v653 = vpop.permute.xlu0 %652
      %654 = vrot.lane.b32.xlu0 %v626, 126
      %v655 = vpop.permute.xlu0 %654
      %656 = vrot.lane.b32.xlu0 %v587, 126
      %v657 = vpop.permute.xlu0 %656
      %658 = vrot.lane.b32.xlu0 %v627, 126
      %v659 = vpop.permute.xlu0 %658
      %660 = vrot.lane.b32.xlu0 %v588, 126
      %v661 = vpop.permute.xlu0 %660
      %662 = vrot.lane.b32.xlu0 %v628, 126
      %v663 = vpop.permute.xlu0 %662
      %664 = vrot.lane.b32.xlu0 %v589, 126
      %v665 = vpop.permute.xlu0 %664
      %666 = vrot.lane.b32.xlu0 %v629, 126
      %v667 = vpop.permute.xlu0 %666
      %668 = vrot.lane.b32.xlu0 %v590, 126
      %v669 = vpop.permute.xlu0 %668
      %670 = vrot.lane.b32.xlu0 %v630, 126
      %v671 = vpop.permute.xlu0 %670
      %672 = vrot.lane.b32.xlu0 %v591, 126
      %v673 = vpop.permute.xlu0 %672
      %674 = vrot.lane.b32.xlu0 %v631, 126
      %v675 = vpop.permute.xlu0 %674
      %676 = vrot.lane.b32.xlu0 %v592, 126
      %v677 = vpop.permute.xlu0 %676
      %678 = vrot.lane.b32.xlu0 %v632, 126
      %v679 = vpop.permute.xlu0 %678
      %680 = vrot.lane.b32.xlu0 %v593, 126
      %v681 = vpop.permute.xlu0 %680
      %682 = vrot.lane.b32.xlu0 %v633, 126
      %v683 = vpop.permute.xlu0 %682
      %684 = vrot.lane.b32.xlu0 %v594, 126
      %v685 = vpop.permute.xlu0 %684
      %686 = vrot.lane.b32.xlu0 %v634, 126
      %v687 = vpop.permute.xlu0 %686
      %688 = vrot.lane.b32.xlu0 %v595, 126
      %v689 = vpop.permute.xlu0 %688
      %690 = vrot.lane.b32.xlu0 %v635, 126
      %v691 = vpop.permute.xlu0 %690
      %692 = vrot.lane.b32.xlu0 %v596, 126
      %v693 = vpop.permute.xlu0 %692
      %694 = vrot.lane.b32.xlu0 %v636, 126
      %v695 = vpop.permute.xlu0 %694
      %696 = vrot.lane.b32.xlu0 %v597, 126
      %v697 = vpop.permute.xlu0 %696
      %698 = vrot.lane.b32.xlu0 %v637, 126
      %v699 = vpop.permute.xlu0 %698
      %700 = vrot.lane.b32.xlu0 %v598, 126
      %v701 = vpop.permute.xlu0 %700
      %702 = vrot.lane.b32.xlu0 %v638, 126
      %v703 = vpop.permute.xlu0 %702
      %704 = vrot.lane.b32.xlu0 %v599, 126
      %v705 = vpop.permute.xlu0 %704
      %706 = vrot.lane.b32.xlu0 %v639, 126
      %v707 = vpop.permute.xlu0 %706
      %708 = vrot.lane.b32.xlu0 %v600, 126
      %v709 = vpop.permute.xlu0 %708
      %710 = vrot.lane.b32.xlu0 %v640, 126
      %v711 = vpop.permute.xlu0 %710
      %712 = vrot.lane.b32.xlu0 %v601, 126
      %v713 = vpop.permute.xlu0 %712
      %714 = vrot.lane.b32.xlu0 %v641, 126
      %v715 = vpop.permute.xlu0 %714
      %716 = vrot.lane.b32.xlu0 %v602, 126
      %v717 = vpop.permute.xlu0 %716
      %718 = vrot.lane.b32.xlu0 %v642, 126
      %v719 = vpop.permute.xlu0 %718
      %720 = vrot.lane.b32.xlu0 %v603, 126
      %v721 = vpop.permute.xlu0 %720
      %722 = vrot.lane.b32.xlu0 %v643, 126
      %v723 = vpop.permute.xlu0 %722
      %vm724 = vcmask 1031168
      %v725 = vsel %vm724, %v645, %v647
      %v726 = vsel %vm724, %v647, %v649
      %v727 = vsel %vm724, %v649, %v651
      %v728 = vsel %vm724, %v651, %v653
      %v729 = vsel %vm724, %v653, %v655
      %v730 = vsel %vm724, %v655, %v657
      %v731 = vsel %vm724, %v657, %v659
      %v732 = vsel %vm724, %v659, %v661
      %v733 = vsel %vm724, %v661, %v663
      %v734 = vsel %vm724, %v663, %v665
      %v735 = vsel %vm724, %v665, %v667
      %v736 = vsel %vm724, %v667, %v669
      %v737 = vsel %vm724, %v669, %v671
      %v738 = vsel %vm724, %v671, %v673
      %v739 = vsel %vm724, %v673, %v675
      %v740 = vsel %vm724, %v675, %v677
      %v741 = vsel %vm724, %v677, %v679
      %v742 = vsel %vm724, %v679, %v681
      %v743 = vsel %vm724, %v681, %v683
      %v744 = vsel %vm724, %v683, %v685
      %v745 = vsel %vm724, %v685, %v687
      %v746 = vsel %vm724, %v687, %v689
      %v747 = vsel %vm724, %v689, %v691
      %v748 = vsel %vm724, %v691, %v693
      %v749 = vsel %vm724, %v693, %v695
      %v750 = vsel %vm724, %v695, %v697
      %v751 = vsel %vm724, %v697, %v699
      %v752 = vsel %vm724, %v699, %v701
      %v753 = vsel %vm724, %v701, %v703
      %v754 = vsel %vm724, %v703, %v705
      %v755 = vsel %vm724, %v705, %v707
      %v756 = vsel %vm724, %v707, %v709
      %v757 = vsel %vm724, %v709, %v711
      %v758 = vsel %vm724, %v711, %v713
      %v759 = vsel %vm724, %v713, %v715
      %v760 = vsel %vm724, %v715, %v717
      %v761 = vsel %vm724, %v717, %v719
      %v762 = vsel %vm724, %v719, %v721
      %v763 = vsel %vm724, %v721, %v723
      %804 = vst [vmem:[#allocation2 + $0x140] sm:$0xf] %v725
      %805 = vst [vmem:[#allocation2 + $0x148] sm:$0xf] %v726
      %806 = vst [vmem:[#allocation2 + $0x150] sm:$0xf] %v727
      %807 = vst [vmem:[#allocation2 + $0x158] sm:$0xf] %v728
      %808 = vst [vmem:[#allocation2 + $0x160] sm:$0xf] %v729
      %809 = vst [vmem:[#allocation2 + $0x168] sm:$0xf] %v730
      %810 = vst [vmem:[#allocation2 + $0x170] sm:$0xf] %v731
      %811 = vst [vmem:[#allocation2 + $0x178] sm:$0xf] %v732
      %812 = vst [vmem:[#allocation2 + $0x180] sm:$0xf] %v733
      %813 = vst [vmem:[#allocation2 + $0x188] sm:$0xf] %v734
      %814 = vst [vmem:[#allocation2 + $0x190] sm:$0xf] %v735
      %815 = vst [vmem:[#allocation2 + $0x198] sm:$0xf] %v736
      %816 = vst [vmem:[#allocation2 + $0x1a0] sm:$0xf] %v737
      %817 = vst [vmem:[#allocation2 + $0x1a8] sm:$0xf] %v738
      %818 = vst [vmem:[#allocation2 + $0x1b0] sm:$0xf] %v739
      %819 = vst [vmem:[#allocation2 + $0x1b8] sm:$0xf] %v740
      %820 = vst [vmem:[#allocation2 + $0x1c0] sm:$0xf] %v741
      %821 = vst [vmem:[#allocation2 + $0x1c8] sm:$0xf] %v742
      %822 = vst [vmem:[#allocation2 + $0x1d0] sm:$0xf] %v743
      %823 = vst [vmem:[#allocation2 + $0x1d8] sm:$0xf] %v744
      %824 = vst [vmem:[#allocation2 + $0x1e0] sm:$0xf] %v745
      %825 = vst [vmem:[#allocation2 + $0x1e8] sm:$0xf] %v746
      %826 = vst [vmem:[#allocation2 + $0x1f0] sm:$0xf] %v747
      %827 = vst [vmem:[#allocation2 + $0x1f8] sm:$0xf] %v748
      %828 = vst [vmem:[#allocation2 + $0x200] sm:$0xf] %v749
      %829 = vst [vmem:[#allocation2 + $0x208] sm:$0xf] %v750
      %830 = vst [vmem:[#allocation2 + $0x210] sm:$0xf] %v751
      %831 = vst [vmem:[#allocation2 + $0x218] sm:$0xf] %v752
      %832 = vst [vmem:[#allocation2 + $0x220] sm:$0xf] %v753
      %833 = vst [vmem:[#allocation2 + $0x228] sm:$0xf] %v754
      %834 = vst [vmem:[#allocation2 + $0x230] sm:$0xf] %v755
      %835 = vst [vmem:[#allocation2 + $0x238] sm:$0xf] %v756
      %836 = vst [vmem:[#allocation2 + $0x240] sm:$0xf] %v757
      %837 = vst [vmem:[#allocation2 + $0x248] sm:$0xf] %v758
      %838 = vst [vmem:[#allocation2 + $0x250] sm:$0xf] %v759
      %839 = vst [vmem:[#allocation2 + $0x258] sm:$0xf] %v760
      %840 = vst [vmem:[#allocation2 + $0x260] sm:$0xf] %v761
      %841 = vst [vmem:[#allocation2 + $0x268] sm:$0xf] %v762
      %842 = vst [vmem:[#allocation2 + $0x270] sm:$0xf] %v763
      %843 = vst.msk [vmem:[#allocation2 + $0x278] sm:$0xf] %vm301, %v723
      %v844 = vld [vmem:[%s165] sm:$0xff]
      %v845 = vld [vmem:[%s165 + $0x8] sm:$0xff]
      %v846 = vld [vmem:[%s165 + $0x10] sm:$0xff]
      %v847 = vld [vmem:[%s165 + $0x18] sm:$0xff]
      %v848 = vld [vmem:[%s165 + $0x20] sm:$0xff]
      %v849 = vld [vmem:[%s165 + $0x28] sm:$0xff]
      %v850 = vld [vmem:[%s165 + $0x30] sm:$0xff]
      %v851 = vld [vmem:[%s165 + $0x38] sm:$0xff]
      %v852 = vld [vmem:[%s165 + $0x40] sm:$0xff]
      %v853 = vld [vmem:[%s165 + $0x48] sm:$0xff]
      %v854 = vunpack.c.l.bf16 %v844
      %v855 = vunpack.c.h.bf16 %v844
      %v856 = vunpack.c.l.bf16 %v845
      %v857 = vunpack.c.h.bf16 %v845
      %v858 = vunpack.c.l.bf16 %v846
      %v859 = vunpack.c.h.bf16 %v846
      %v860 = vunpack.c.l.bf16 %v847
      %v861 = vunpack.c.h.bf16 %v847
      %v862 = vunpack.c.l.bf16 %v848
      %v863 = vunpack.c.h.bf16 %v848
      %v864 = vunpack.c.l.bf16 %v849
      %v865 = vunpack.c.h.bf16 %v849
      %v866 = vunpack.c.l.bf16 %v850
      %v867 = vunpack.c.h.bf16 %v850
      %v868 = vunpack.c.l.bf16 %v851
      %v869 = vunpack.c.h.bf16 %v851
      %v870 = vunpack.c.l.bf16 %v852
      %v871 = vunpack.c.h.bf16 %v852
      %v872 = vunpack.c.l.bf16 %v853
      %v873 = vunpack.c.h.bf16 %v853
      %v894 = vcombine.low %v854, %v854
      %v895 = vcombine.low %v855, %v855
      %v896 = vcombine.low %v856, %v856
      %v897 = vcombine.low %v857, %v857
      %v898 = vcombine.low %v858, %v858
      %v899 = vcombine.low %v859, %v859
      %v900 = vcombine.low %v860, %v860
      %v901 = vcombine.low %v861, %v861
      %v902 = vcombine.low %v862, %v862
      %v903 = vcombine.low %v863, %v863
      %v904 = vcombine.low %v864, %v864
      %v905 = vcombine.low %v865, %v865
      %v906 = vcombine.low %v866, %v866
      %v907 = vcombine.low %v867, %v867
      %v908 = vcombine.low %v868, %v868
      %v909 = vcombine.low %v869, %v869
      %v910 = vcombine.low %v870, %v870
      %v911 = vcombine.low %v871, %v871
      %v912 = vcombine.low %v872, %v872
      %v913 = vcombine.low %v873, %v873
      %914 = vrot.lane.b32.xlu0 %v894, 94
      %v915 = vpop.permute.xlu0 %914
      %916 = vrot.lane.b32.xlu0 %v854, 94
      %v917 = vpop.permute.xlu0 %916
      %918 = vrot.lane.b32.xlu0 %v895, 94
      %v919 = vpop.permute.xlu0 %918
      %920 = vrot.lane.b32.xlu0 %v855, 94
      %v921 = vpop.permute.xlu0 %920
      %922 = vrot.lane.b32.xlu0 %v896, 94
      %v923 = vpop.permute.xlu0 %922
      %924 = vrot.lane.b32.xlu0 %v856, 94
      %v925 = vpop.permute.xlu0 %924
      %926 = vrot.lane.b32.xlu0 %v897, 94
      %v927 = vpop.permute.xlu0 %926
      %928 = vrot.lane.b32.xlu0 %v857, 94
      %v929 = vpop.permute.xlu0 %928
      %930 = vrot.lane.b32.xlu0 %v898, 94
      %v931 = vpop.permute.xlu0 %930
      %932 = vrot.lane.b32.xlu0 %v858, 94
      %v933 = vpop.permute.xlu0 %932
      %934 = vrot.lane.b32.xlu0 %v899, 94
      %v935 = vpop.permute.xlu0 %934
      %936 = vrot.lane.b32.xlu0 %v859, 94
      %v937 = vpop.permute.xlu0 %936
      %938 = vrot.lane.b32.xlu0 %v900, 94
      %v939 = vpop.permute.xlu0 %938
      %940 = vrot.lane.b32.xlu0 %v860, 94
      %v941 = vpop.permute.xlu0 %940
      %942 = vrot.lane.b32.xlu0 %v901, 94
      %v943 = vpop.permute.xlu0 %942
      %944 = vrot.lane.b32.xlu0 %v861, 94
      %v945 = vpop.permute.xlu0 %944
      %946 = vrot.lane.b32.xlu0 %v902, 94
      %v947 = vpop.permute.xlu0 %946
      %948 = vrot.lane.b32.xlu0 %v862, 94
      %v949 = vpop.permute.xlu0 %948
      %950 = vrot.lane.b32.xlu0 %v903, 94
      %v951 = vpop.permute.xlu0 %950
      %952 = vrot.lane.b32.xlu0 %v863, 94
      %v953 = vpop.permute.xlu0 %952
      %954 = vrot.lane.b32.xlu0 %v904, 94
      %v955 = vpop.permute.xlu0 %954
      %956 = vrot.lane.b32.xlu0 %v864, 94
      %v957 = vpop.permute.xlu0 %956
      %958 = vrot.lane.b32.xlu0 %v905, 94
      %v959 = vpop.permute.xlu0 %958
      %960 = vrot.lane.b32.xlu0 %v865, 94
      %v961 = vpop.permute.xlu0 %960
      %962 = vrot.lane.b32.xlu0 %v906, 94
      %v963 = vpop.permute.xlu0 %962
      %964 = vrot.lane.b32.xlu0 %v866, 94
      %v965 = vpop.permute.xlu0 %964
      %966 = vrot.lane.b32.xlu0 %v907, 94
      %v967 = vpop.permute.xlu0 %966
      %968 = vrot.lane.b32.xlu0 %v867, 94
      %v969 = vpop.permute.xlu0 %968
      %970 = vrot.lane.b32.xlu0 %v908, 94
      %v971 = vpop.permute.xlu0 %970
      %972 = vrot.lane.b32.xlu0 %v868, 94
      %v973 = vpop.permute.xlu0 %972
      %974 = vrot.lane.b32.xlu0 %v909, 94
      %v975 = vpop.permute.xlu0 %974
      %976 = vrot.lane.b32.xlu0 %v869, 94
      %v977 = vpop.permute.xlu0 %976
      %978 = vrot.lane.b32.xlu0 %v910, 94
      %v979 = vpop.permute.xlu0 %978
      %980 = vrot.lane.b32.xlu0 %v870, 94
      %v981 = vpop.permute.xlu0 %980
      %982 = vrot.lane.b32.xlu0 %v911, 94
      %v983 = vpop.permute.xlu0 %982
      %984 = vrot.lane.b32.xlu0 %v871, 94
      %v985 = vpop.permute.xlu0 %984
      %986 = vrot.lane.b32.xlu0 %v912, 94
      %v987 = vpop.permute.xlu0 %986
      %988 = vrot.lane.b32.xlu0 %v872, 94
      %v989 = vpop.permute.xlu0 %988
      %990 = vrot.lane.b32.xlu0 %v913, 94
      %v991 = vpop.permute.xlu0 %990
      %992 = vrot.lane.b32.xlu0 %v873, 94
      %v993 = vpop.permute.xlu0 %992
      %vm994 = vcmask 769024
      %v995 = vsel %vm994, %v915, %v917
      %v996 = vsel %vm994, %v917, %v919
      %v997 = vsel %vm994, %v919, %v921
      %v998 = vsel %vm994, %v921, %v923
      %v999 = vsel %vm994, %v923, %v925
      %v1000 = vsel %vm994, %v925, %v927
      %v1001 = vsel %vm994, %v927, %v929
      %v1002 = vsel %vm994, %v929, %v931
      %v1003 = vsel %vm994, %v931, %v933
      %v1004 = vsel %vm994, %v933, %v935
      %v1005 = vsel %vm994, %v935, %v937
      %v1006 = vsel %vm994, %v937, %v939
      %v1007 = vsel %vm994, %v939, %v941
      %v1008 = vsel %vm994, %v941, %v943
      %v1009 = vsel %vm994, %v943, %v945
      %v1010 = vsel %vm994, %v945, %v947
      %v1011 = vsel %vm994, %v947, %v949
      %v1012 = vsel %vm994, %v949, %v951
      %v1013 = vsel %vm994, %v951, %v953
      %v1014 = vsel %vm994, %v953, %v955
      %v1015 = vsel %vm994, %v955, %v957
      %v1016 = vsel %vm994, %v957, %v959
      %v1017 = vsel %vm994, %v959, %v961
      %v1018 = vsel %vm994, %v961, %v963
      %v1019 = vsel %vm994, %v963, %v965
      %v1020 = vsel %vm994, %v965, %v967
      %v1021 = vsel %vm994, %v967, %v969
      %v1022 = vsel %vm994, %v969, %v971
      %v1023 = vsel %vm994, %v971, %v973
      %v1024 = vsel %vm994, %v973, %v975
      %v1025 = vsel %vm994, %v975, %v977
      %v1026 = vsel %vm994, %v977, %v979
      %v1027 = vsel %vm994, %v979, %v981
      %v1028 = vsel %vm994, %v981, %v983
      %v1029 = vsel %vm994, %v983, %v985
      %v1030 = vsel %vm994, %v985, %v987
      %v1031 = vsel %vm994, %v987, %v989
      %v1032 = vsel %vm994, %v989, %v991
      %v1033 = vsel %vm994, %v991, %v993
      %1074 = vst [vmem:[#allocation2 + $0x140] sm:$0xf0] %v995
      %1075 = vst [vmem:[#allocation2 + $0x148] sm:$0xf0] %v996
      %1076 = vst [vmem:[#allocation2 + $0x150] sm:$0xf0] %v997
      %1077 = vst [vmem:[#allocation2 + $0x158] sm:$0xf0] %v998
      %1078 = vst [vmem:[#allocation2 + $0x160] sm:$0xf0] %v999
      %1079 = vst [vmem:[#allocation2 + $0x168] sm:$0xf0] %v1000
      %1080 = vst [vmem:[#allocation2 + $0x170] sm:$0xf0] %v1001
      %1081 = vst [vmem:[#allocation2 + $0x178] sm:$0xf0] %v1002
      %1082 = vst [vmem:[#allocation2 + $0x180] sm:$0xf0] %v1003
      %1083 = vst [vmem:[#allocation2 + $0x188] sm:$0xf0] %v1004
      %1084 = vst [vmem:[#allocation2 + $0x190] sm:$0xf0] %v1005
      %1085 = vst [vmem:[#allocation2 + $0x198] sm:$0xf0] %v1006
      %1086 = vst [vmem:[#allocation2 + $0x1a0] sm:$0xf0] %v1007
      %1087 = vst [vmem:[#allocation2 + $0x1a8] sm:$0xf0] %v1008
      %1088 = vst [vmem:[#allocation2 + $0x1b0] sm:$0xf0] %v1009
      %1089 = vst [vmem:[#allocation2 + $0x1b8] sm:$0xf0] %v1010
      %1090 = vst [vmem:[#allocation2 + $0x1c0] sm:$0xf0] %v1011
      %1091 = vst [vmem:[#allocation2 + $0x1c8] sm:$0xf0] %v1012
      %1092 = vst [vmem:[#allocation2 + $0x1d0] sm:$0xf0] %v1013
      %1093 = vst [vmem:[#allocation2 + $0x1d8] sm:$0xf0] %v1014
      %1094 = vst [vmem:[#allocation2 + $0x1e0] sm:$0xf0] %v1015
      %1095 = vst [vmem:[#allocation2 + $0x1e8] sm:$0xf0] %v1016
      %1096 = vst [vmem:[#allocation2 + $0x1f0] sm:$0xf0] %v1017
      %1097 = vst [vmem:[#allocation2 + $0x1f8] sm:$0xf0] %v1018
      %1098 = vst [vmem:[#allocation2 + $0x200] sm:$0xf0] %v1019
      %1099 = vst [vmem:[#allocation2 + $0x208] sm:$0xf0] %v1020
      %1100 = vst [vmem:[#allocation2 + $0x210] sm:$0xf0] %v1021
      %1101 = vst [vmem:[#allocation2 + $0x218] sm:$0xf0] %v1022
      %1102 = vst [vmem:[#allocation2 + $0x220] sm:$0xf0] %v1023
      %1103 = vst [vmem:[#allocation2 + $0x228] sm:$0xf0] %v1024
      %1104 = vst [vmem:[#allocation2 + $0x230] sm:$0xf0] %v1025
      %1105 = vst [vmem:[#allocation2 + $0x238] sm:$0xf0] %v1026
      %1106 = vst [vmem:[#allocation2 + $0x240] sm:$0xf0] %v1027
      %1107 = vst [vmem:[#allocation2 + $0x248] sm:$0xf0] %v1028
      %1108 = vst [vmem:[#allocation2 + $0x250] sm:$0xf0] %v1029
      %1109 = vst [vmem:[#allocation2 + $0x258] sm:$0xf0] %v1030
      %1110 = vst [vmem:[#allocation2 + $0x260] sm:$0xf0] %v1031
      %1111 = vst [vmem:[#allocation2 + $0x268] sm:$0xf0] %v1032
      %1112 = vst [vmem:[#allocation2 + $0x270] sm:$0xf0] %v1033
      %1113 = vst.msk [vmem:[#allocation2 + $0x278] sm:$0xf0] %vm572, %v993
      %v1114 = vld [vmem:[%s165] sm:$0xff]
      %v1115 = vld [vmem:[%s165 + $0x8] sm:$0xff]
      %v1116 = vld [vmem:[%s165 + $0x10] sm:$0xff]
      %v1117 = vld [vmem:[%s165 + $0x18] sm:$0xff]
      %v1118 = vld [vmem:[%s165 + $0x20] sm:$0xff]
      %v1119 = vld [vmem:[%s165 + $0x28] sm:$0xff]
      %v1120 = vld [vmem:[%s165 + $0x30] sm:$0xff]
      %v1121 = vld [vmem:[%s165 + $0x38] sm:$0xff]
      %v1122 = vld [vmem:[%s165 + $0x40] sm:$0xff]
      %v1123 = vld [vmem:[%s165 + $0x48] sm:$0xff]
      %v1124 = vunpack.c.l.bf16 %v1114
      %v1125 = vunpack.c.h.bf16 %v1114
      %v1126 = vunpack.c.l.bf16 %v1115
      %v1127 = vunpack.c.h.bf16 %v1115
      %v1128 = vunpack.c.l.bf16 %v1116
      %v1129 = vunpack.c.h.bf16 %v1116
      %v1130 = vunpack.c.l.bf16 %v1117
      %v1131 = vunpack.c.h.bf16 %v1117
      %v1132 = vunpack.c.l.bf16 %v1118
      %v1133 = vunpack.c.h.bf16 %v1118
      %v1134 = vunpack.c.l.bf16 %v1119
      %v1135 = vunpack.c.h.bf16 %v1119
      %v1136 = vunpack.c.l.bf16 %v1120
      %v1137 = vunpack.c.h.bf16 %v1120
      %v1138 = vunpack.c.l.bf16 %v1121
      %v1139 = vunpack.c.h.bf16 %v1121
      %v1140 = vunpack.c.l.bf16 %v1122
      %v1141 = vunpack.c.h.bf16 %v1122
      %v1142 = vunpack.c.l.bf16 %v1123
      %v1143 = vunpack.c.h.bf16 %v1123
      %v1164 = vcombine.high %v1124, %v1124
      %v1165 = vcombine.high %v1125, %v1125
      %v1166 = vcombine.high %v1126, %v1126
      %v1167 = vcombine.high %v1127, %v1127
      %v1168 = vcombine.high %v1128, %v1128
      %v1169 = vcombine.high %v1129, %v1129
      %v1170 = vcombine.high %v1130, %v1130
      %v1171 = vcombine.high %v1131, %v1131
      %v1172 = vcombine.high %v1132, %v1132
      %v1173 = vcombine.high %v1133, %v1133
      %v1174 = vcombine.high %v1134, %v1134
      %v1175 = vcombine.high %v1135, %v1135
      %v1176 = vcombine.high %v1136, %v1136
      %v1177 = vcombine.high %v1137, %v1137
      %v1178 = vcombine.high %v1138, %v1138
      %v1179 = vcombine.high %v1139, %v1139
      %v1180 = vcombine.high %v1140, %v1140
      %v1181 = vcombine.high %v1141, %v1141
      %v1182 = vcombine.high %v1142, %v1142
      %v1183 = vcombine.high %v1143, %v1143
      %1184 = vrot.lane.b32.xlu0 %v1124, 93
      %v1185 = vpop.permute.xlu0 %1184
      %1186 = vrot.lane.b32.xlu0 %v1164, 93
      %v1187 = vpop.permute.xlu0 %1186
      %1188 = vrot.lane.b32.xlu0 %v1125, 93
      %v1189 = vpop.permute.xlu0 %1188
      %1190 = vrot.lane.b32.xlu0 %v1165, 93
      %v1191 = vpop.permute.xlu0 %1190
      %1192 = vrot.lane.b32.xlu0 %v1126, 93
      %v1193 = vpop.permute.xlu0 %1192
      %1194 = vrot.lane.b32.xlu0 %v1166, 93
      %v1195 = vpop.permute.xlu0 %1194
      %1196 = vrot.lane.b32.xlu0 %v1127, 93
      %v1197 = vpop.permute.xlu0 %1196
      %1198 = vrot.lane.b32.xlu0 %v1167, 93
      %v1199 = vpop.permute.xlu0 %1198
      %1200 = vrot.lane.b32.xlu0 %v1128, 93
      %v1201 = vpop.permute.xlu0 %1200
      %1202 = vrot.lane.b32.xlu0 %v1168, 93
      %v1203 = vpop.permute.xlu0 %1202
      %1204 = vrot.lane.b32.xlu0 %v1129, 93
      %v1205 = vpop.permute.xlu0 %1204
      %1206 = vrot.lane.b32.xlu0 %v1169, 93
      %v1207 = vpop.permute.xlu0 %1206
      %1208 = vrot.lane.b32.xlu0 %v1130, 93
      %v1209 = vpop.permute.xlu0 %1208
      %1210 = vrot.lane.b32.xlu0 %v1170, 93
      %v1211 = vpop.permute.xlu0 %1210
      %1212 = vrot.lane.b32.xlu0 %v1131, 93
      %v1213 = vpop.permute.xlu0 %1212
      %1214 = vrot.lane.b32.xlu0 %v1171, 93
      %v1215 = vpop.permute.xlu0 %1214
      %1216 = vrot.lane.b32.xlu0 %v1132, 93
      %v1217 = vpop.permute.xlu0 %1216
      %1218 = vrot.lane.b32.xlu0 %v1172, 93
      %v1219 = vpop.permute.xlu0 %1218
      %1220 = vrot.lane.b32.xlu0 %v1133, 93
      %v1221 = vpop.permute.xlu0 %1220
      %1222 = vrot.lane.b32.xlu0 %v1173, 93
      %v1223 = vpop.permute.xlu0 %1222
      %1224 = vrot.lane.b32.xlu0 %v1134, 93
      %v1225 = vpop.permute.xlu0 %1224
      %1226 = vrot.lane.b32.xlu0 %v1174, 93
      %v1227 = vpop.permute.xlu0 %1226
      %1228 = vrot.lane.b32.xlu0 %v1135, 93
      %v1229 = vpop.permute.xlu0 %1228
      %1230 = vrot.lane.b32.xlu0 %v1175, 93
      %v1231 = vpop.permute.xlu0 %1230
      %1232 = vrot.lane.b32.xlu0 %v1136, 93
      %v1233 = vpop.permute.xlu0 %1232
      %1234 = vrot.lane.b32.xlu0 %v1176, 93
      %v1235 = vpop.permute.xlu0 %1234
      %1236 = vrot.lane.b32.xlu0 %v1137, 93
      %v1237 = vpop.permute.xlu0 %1236
      %1238 = vrot.lane.b32.xlu0 %v1177, 93
      %v1239 = vpop.permute.xlu0 %1238
      %1240 = vrot.lane.b32.xlu0 %v1138, 93
      %v1241 = vpop.permute.xlu0 %1240
      %1242 = vrot.lane.b32.xlu0 %v1178, 93
      %v1243 = vpop.permute.xlu0 %1242
      %1244 = vrot.lane.b32.xlu0 %v1139, 93
      %v1245 = vpop.permute.xlu0 %1244
      %1246 = vrot.lane.b32.xlu0 %v1179, 93
      %v1247 = vpop.permute.xlu0 %1246
      %1248 = vrot.lane.b32.xlu0 %v1140, 93
      %v1249 = vpop.permute.xlu0 %1248
      %1250 = vrot.lane.b32.xlu0 %v1180, 93
      %v1251 = vpop.permute.xlu0 %1250
      %1252 = vrot.lane.b32.xlu0 %v1141, 93
      %v1253 = vpop.permute.xlu0 %1252
      %1254 = vrot.lane.b32.xlu0 %v1181, 93
      %v1255 = vpop.permute.xlu0 %1254
      %1256 = vrot.lane.b32.xlu0 %v1142, 93
      %v1257 = vpop.permute.xlu0 %1256
      %1258 = vrot.lane.b32.xlu0 %v1182, 93
      %v1259 = vpop.permute.xlu0 %1258
      %1260 = vrot.lane.b32.xlu0 %v1143, 93
      %v1261 = vpop.permute.xlu0 %1260
      %1262 = vrot.lane.b32.xlu0 %v1183, 93
      %v1263 = vpop.permute.xlu0 %1262
      %vm1264 = vcmask 760832
      %v1265 = vsel %vm1264, %v1185, %v1187
      %v1266 = vsel %vm1264, %v1187, %v1189
      %v1267 = vsel %vm1264, %v1189, %v1191
      %v1268 = vsel %vm1264, %v1191, %v1193
      %v1269 = vsel %vm1264, %v1193, %v1195
      %v1270 = vsel %vm1264, %v1195, %v1197
      %v1271 = vsel %vm1264, %v1197, %v1199
      %v1272 = vsel %vm1264, %v1199, %v1201
      %v1273 = vsel %vm1264, %v1201, %v1203
      %v1274 = vsel %vm1264, %v1203, %v1205
      %v1275 = vsel %vm1264, %v1205, %v1207
      %v1276 = vsel %vm1264, %v1207, %v1209
      %v1277 = vsel %vm1264, %v1209, %v1211
      %v1278 = vsel %vm1264, %v1211, %v1213
      %v1279 = vsel %vm1264, %v1213, %v1215
      %v1280 = vsel %vm1264, %v1215, %v1217
      %v1281 = vsel %vm1264, %v1217, %v1219
      %v1282 = vsel %vm1264, %v1219, %v1221
      %v1283 = vsel %vm1264, %v1221, %v1223
      %v1284 = vsel %vm1264, %v1223, %v1225
      %v1285 = vsel %vm1264, %v1225, %v1227
      %v1286 = vsel %vm1264, %v1227, %v1229
      %v1287 = vsel %vm1264, %v1229, %v1231
      %v1288 = vsel %vm1264, %v1231, %v1233
      %v1289 = vsel %vm1264, %v1233, %v1235
      %v1290 = vsel %vm1264, %v1235, %v1237
      %v1291 = vsel %vm1264, %v1237, %v1239
      %v1292 = vsel %vm1264, %v1239, %v1241
      %v1293 = vsel %vm1264, %v1241, %v1243
      %v1294 = vsel %vm1264, %v1243, %v1245
      %v1295 = vsel %vm1264, %v1245, %v1247
      %v1296 = vsel %vm1264, %v1247, %v1249
      %v1297 = vsel %vm1264, %v1249, %v1251
      %v1298 = vsel %vm1264, %v1251, %v1253
      %v1299 = vsel %vm1264, %v1253, %v1255
      %v1300 = vsel %vm1264, %v1255, %v1257
      %v1301 = vsel %vm1264, %v1257, %v1259
      %v1302 = vsel %vm1264, %v1259, %v1261
      %v1303 = vsel %vm1264, %v1261, %v1263
      %1344 = vst [vmem:[#allocation2 + $0x280] sm:$0xf] %v1265
      %1345 = vst [vmem:[#allocation2 + $0x288] sm:$0xf] %v1266
      %1346 = vst [vmem:[#allocation2 + $0x290] sm:$0xf] %v1267
      %1347 = vst [vmem:[#allocation2 + $0x298] sm:$0xf] %v1268
      %1348 = vst [vmem:[#allocation2 + $0x2a0] sm:$0xf] %v1269
      %1349 = vst [vmem:[#allocation2 + $0x2a8] sm:$0xf] %v1270
      %1350 = vst [vmem:[#allocation2 + $0x2b0] sm:$0xf] %v1271
      %1351 = vst [vmem:[#allocation2 + $0x2b8] sm:$0xf] %v1272
      %1352 = vst [vmem:[#allocation2 + $0x2c0] sm:$0xf] %v1273
      %1353 = vst [vmem:[#allocation2 + $0x2c8] sm:$0xf] %v1274
      %1354 = vst [vmem:[#allocation2 + $0x2d0] sm:$0xf] %v1275
      %1355 = vst [vmem:[#allocation2 + $0x2d8] sm:$0xf] %v1276
      %1356 = vst [vmem:[#allocation2 + $0x2e0] sm:$0xf] %v1277
      %1357 = vst [vmem:[#allocation2 + $0x2e8] sm:$0xf] %v1278
      %1358 = vst [vmem:[#allocation2 + $0x2f0] sm:$0xf] %v1279
      %1359 = vst [vmem:[#allocation2 + $0x2f8] sm:$0xf] %v1280
      %1360 = vst [vmem:[#allocation2 + $0x300] sm:$0xf] %v1281
      %1361 = vst [vmem:[#allocation2 + $0x308] sm:$0xf] %v1282
      %1362 = vst [vmem:[#allocation2 + $0x310] sm:$0xf] %v1283
      %1363 = vst [vmem:[#allocation2 + $0x318] sm:$0xf] %v1284
      %1364 = vst [vmem:[#allocation2 + $0x320] sm:$0xf] %v1285
      %1365 = vst [vmem:[#allocation2 + $0x328] sm:$0xf] %v1286
      %1366 = vst [vmem:[#allocation2 + $0x330] sm:$0xf] %v1287
      %1367 = vst [vmem:[#allocation2 + $0x338] sm:$0xf] %v1288
      %1368 = vst [vmem:[#allocation2 + $0x340] sm:$0xf] %v1289
      %1369 = vst [vmem:[#allocation2 + $0x348] sm:$0xf] %v1290
      %1370 = vst [vmem:[#allocation2 + $0x350] sm:$0xf] %v1291
      %1371 = vst [vmem:[#allocation2 + $0x358] sm:$0xf] %v1292
      %1372 = vst [vmem:[#allocation2 + $0x360] sm:$0xf] %v1293
      %1373 = vst [vmem:[#allocation2 + $0x368] sm:$0xf] %v1294
      %1374 = vst [vmem:[#allocation2 + $0x370] sm:$0xf] %v1295
      %1375 = vst [vmem:[#allocation2 + $0x378] sm:$0xf] %v1296
      %1376 = vst [vmem:[#allocation2 + $0x380] sm:$0xf] %v1297
      %1377 = vst [vmem:[#allocation2 + $0x388] sm:$0xf] %v1298
      %1378 = vst [vmem:[#allocation2 + $0x390] sm:$0xf] %v1299
      %1379 = vst [vmem:[#allocation2 + $0x398] sm:$0xf] %v1300
      %1380 = vst [vmem:[#allocation2 + $0x3a0] sm:$0xf] %v1301
      %1381 = vst [vmem:[#allocation2 + $0x3a8] sm:$0xf] %v1302
      %1382 = vst [vmem:[#allocation2 + $0x3b0] sm:$0xf] %v1303
      %1383 = vst.msk [vmem:[#allocation2 + $0x3b8] sm:$0xf] %vm301, %v1263
      %v1384 = vld [vmem:[%s165] sm:$0xff]
      %v1385 = vld [vmem:[%s165 + $0x8] sm:$0xff]
      %v1386 = vld [vmem:[%s165 + $0x10] sm:$0xff]
      %v1387 = vld [vmem:[%s165 + $0x18] sm:$0xff]
      %v1388 = vld [vmem:[%s165 + $0x20] sm:$0xff]
      %v1389 = vld [vmem:[%s165 + $0x28] sm:$0xff]
      %v1390 = vld [vmem:[%s165 + $0x30] sm:$0xff]
      %v1391 = vld [vmem:[%s165 + $0x38] sm:$0xff]
      %v1392 = vld [vmem:[%s165 + $0x40] sm:$0xff]
      %v1393 = vld [vmem:[%s165 + $0x48] sm:$0xff]
      %v1394 = vunpack.c.l.bf16 %v1384
      %v1395 = vunpack.c.h.bf16 %v1384
      %v1396 = vunpack.c.l.bf16 %v1385
      %v1397 = vunpack.c.h.bf16 %v1385
      %v1398 = vunpack.c.l.bf16 %v1386
      %v1399 = vunpack.c.h.bf16 %v1386
      %v1400 = vunpack.c.l.bf16 %v1387
      %v1401 = vunpack.c.h.bf16 %v1387
      %v1402 = vunpack.c.l.bf16 %v1388
      %v1403 = vunpack.c.h.bf16 %v1388
      %v1404 = vunpack.c.l.bf16 %v1389
      %v1405 = vunpack.c.h.bf16 %v1389
      %v1406 = vunpack.c.l.bf16 %v1390
      %v1407 = vunpack.c.h.bf16 %v1390
      %v1408 = vunpack.c.l.bf16 %v1391
      %v1409 = vunpack.c.h.bf16 %v1391
      %v1410 = vunpack.c.l.bf16 %v1392
      %v1411 = vunpack.c.h.bf16 %v1392
      %v1412 = vunpack.c.l.bf16 %v1393
      %v1413 = vunpack.c.h.bf16 %v1393
      %v1434 = vcombine.low %v1394, %v1394
      %v1435 = vcombine.low %v1395, %v1395
      %v1436 = vcombine.low %v1396, %v1396
      %v1437 = vcombine.low %v1397, %v1397
      %v1438 = vcombine.low %v1398, %v1398
      %v1439 = vcombine.low %v1399, %v1399
      %v1440 = vcombine.low %v1400, %v1400
      %v1441 = vcombine.low %v1401, %v1401
      %v1442 = vcombine.low %v1402, %v1402
      %v1443 = vcombine.low %v1403, %v1403
      %v1444 = vcombine.low %v1404, %v1404
      %v1445 = vcombine.low %v1405, %v1405
      %v1446 = vcombine.low %v1406, %v1406
      %v1447 = vcombine.low %v1407, %v1407
      %v1448 = vcombine.low %v1408, %v1408
      %v1449 = vcombine.low %v1409, %v1409
      %v1450 = vcombine.low %v1410, %v1410
      %v1451 = vcombine.low %v1411, %v1411
      %v1452 = vcombine.low %v1412, %v1412
      %v1453 = vcombine.low %v1413, %v1413
      %1454 = vrot.lane.b32.xlu0 %v1434, 92
      %v1455 = vpop.permute.xlu0 %1454
      %1456 = vrot.lane.b32.xlu0 %v1394, 92
      %v1457 = vpop.permute.xlu0 %1456
      %1458 = vrot.lane.b32.xlu0 %v1435, 92
      %v1459 = vpop.permute.xlu0 %1458
      %1460 = vrot.lane.b32.xlu0 %v1395, 92
      %v1461 = vpop.permute.xlu0 %1460
      %1462 = vrot.lane.b32.xlu0 %v1436, 92
      %v1463 = vpop.permute.xlu0 %1462
      %1464 = vrot.lane.b32.xlu0 %v1396, 92
      %v1465 = vpop.permute.xlu0 %1464
      %1466 = vrot.lane.b32.xlu0 %v1437, 92
      %v1467 = vpop.permute.xlu0 %1466
      %1468 = vrot.lane.b32.xlu0 %v1397, 92
      %v1469 = vpop.permute.xlu0 %1468
      %1470 = vrot.lane.b32.xlu0 %v1438, 92
      %v1471 = vpop.permute.xlu0 %1470
      %1472 = vrot.lane.b32.xlu0 %v1398, 92
      %v1473 = vpop.permute.xlu0 %1472
      %1474 = vrot.lane.b32.xlu0 %v1439, 92
      %v1475 = vpop.permute.xlu0 %1474
      %1476 = vrot.lane.b32.xlu0 %v1399, 92
      %v1477 = vpop.permute.xlu0 %1476
      %1478 = vrot.lane.b32.xlu0 %v1440, 92
      %v1479 = vpop.permute.xlu0 %1478
      %1480 = vrot.lane.b32.xlu0 %v1400, 92
      %v1481 = vpop.permute.xlu0 %1480
      %1482 = vrot.lane.b32.xlu0 %v1441, 92
      %v1483 = vpop.permute.xlu0 %1482
      %1484 = vrot.lane.b32.xlu0 %v1401, 92
      %v1485 = vpop.permute.xlu0 %1484
      %1486 = vrot.lane.b32.xlu0 %v1442, 92
      %v1487 = vpop.permute.xlu0 %1486
      %1488 = vrot.lane.b32.xlu0 %v1402, 92
      %v1489 = vpop.permute.xlu0 %1488
      %1490 = vrot.lane.b32.xlu0 %v1443, 92
      %v1491 = vpop.permute.xlu0 %1490
      %1492 = vrot.lane.b32.xlu0 %v1403, 92
      %v1493 = vpop.permute.xlu0 %1492
      %1494 = vrot.lane.b32.xlu0 %v1444, 92
      %v1495 = vpop.permute.xlu0 %1494
      %1496 = vrot.lane.b32.xlu0 %v1404, 92
      %v1497 = vpop.permute.xlu0 %1496
      %1498 = vrot.lane.b32.xlu0 %v1445, 92
      %v1499 = vpop.permute.xlu0 %1498
      %1500 = vrot.lane.b32.xlu0 %v1405, 92
      %v1501 = vpop.permute.xlu0 %1500
      %1502 = vrot.lane.b32.xlu0 %v1446, 92
      %v1503 = vpop.permute.xlu0 %1502
      %1504 = vrot.lane.b32.xlu0 %v1406, 92
      %v1505 = vpop.permute.xlu0 %1504
      %1506 = vrot.lane.b32.xlu0 %v1447, 92
      %v1507 = vpop.permute.xlu0 %1506
      %1508 = vrot.lane.b32.xlu0 %v1407, 92
      %v1509 = vpop.permute.xlu0 %1508
      %1510 = vrot.lane.b32.xlu0 %v1448, 92
      %v1511 = vpop.permute.xlu0 %1510
      %1512 = vrot.lane.b32.xlu0 %v1408, 92
      %v1513 = vpop.permute.xlu0 %1512
      %1514 = vrot.lane.b32.xlu0 %v1449, 92
      %v1515 = vpop.permute.xlu0 %1514
      %1516 = vrot.lane.b32.xlu0 %v1409, 92
      %v1517 = vpop.permute.xlu0 %1516
      %1518 = vrot.lane.b32.xlu0 %v1450, 92
      %v1519 = vpop.permute.xlu0 %1518
      %1520 = vrot.lane.b32.xlu0 %v1410, 92
      %v1521 = vpop.permute.xlu0 %1520
      %1522 = vrot.lane.b32.xlu0 %v1451, 92
      %v1523 = vpop.permute.xlu0 %1522
      %1524 = vrot.lane.b32.xlu0 %v1411, 92
      %v1525 = vpop.permute.xlu0 %1524
      %1526 = vrot.lane.b32.xlu0 %v1452, 92
      %v1527 = vpop.permute.xlu0 %1526
      %1528 = vrot.lane.b32.xlu0 %v1412, 92
      %v1529 = vpop.permute.xlu0 %1528
      %1530 = vrot.lane.b32.xlu0 %v1453, 92
      %v1531 = vpop.permute.xlu0 %1530
      %1532 = vrot.lane.b32.xlu0 %v1413, 92
      %v1533 = vpop.permute.xlu0 %1532
      %vm1534 = vcmask 752640
      %v1535 = vsel %vm1534, %v1455, %v1457
      %v1536 = vsel %vm1534, %v1457, %v1459
      %v1537 = vsel %vm1534, %v1459, %v1461
      %v1538 = vsel %vm1534, %v1461, %v1463
      %v1539 = vsel %vm1534, %v1463, %v1465
      %v1540 = vsel %vm1534, %v1465, %v1467
      %v1541 = vsel %vm1534, %v1467, %v1469
      %v1542 = vsel %vm1534, %v1469, %v1471
      %v1543 = vsel %vm1534, %v1471, %v1473
      %v1544 = vsel %vm1534, %v1473, %v1475
      %v1545 = vsel %vm1534, %v1475, %v1477
      %v1546 = vsel %vm1534, %v1477, %v1479
      %v1547 = vsel %vm1534, %v1479, %v1481
      %v1548 = vsel %vm1534, %v1481, %v1483
      %v1549 = vsel %vm1534, %v1483, %v1485
      %v1550 = vsel %vm1534, %v1485, %v1487
      %v1551 = vsel %vm1534, %v1487, %v1489
      %v1552 = vsel %vm1534, %v1489, %v1491
      %v1553 = vsel %vm1534, %v1491, %v1493
      %v1554 = vsel %vm1534, %v1493, %v1495
      %v1555 = vsel %vm1534, %v1495, %v1497
      %v1556 = vsel %vm1534, %v1497, %v1499
      %v1557 = vsel %vm1534, %v1499, %v1501
      %v1558 = vsel %vm1534, %v1501, %v1503
      %v1559 = vsel %vm1534, %v1503, %v1505
      %v1560 = vsel %vm1534, %v1505, %v1507
      %v1561 = vsel %vm1534, %v1507, %v1509
      %v1562 = vsel %vm1534, %v1509, %v1511
      %v1563 = vsel %vm1534, %v1511, %v1513
      %v1564 = vsel %vm1534, %v1513, %v1515
      %v1565 = vsel %vm1534, %v1515, %v1517
      %v1566 = vsel %vm1534, %v1517, %v1519
      %v1567 = vsel %vm1534, %v1519, %v1521
      %v1568 = vsel %vm1534, %v1521, %v1523
      %v1569 = vsel %vm1534, %v1523, %v1525
      %v1570 = vsel %vm1534, %v1525, %v1527
      %v1571 = vsel %vm1534, %v1527, %v1529
      %v1572 = vsel %vm1534, %v1529, %v1531
      %v1573 = vsel %vm1534, %v1531, %v1533
      %1614 = vst [vmem:[#allocation2 + $0x280] sm:$0xf0] %v1535
      %1615 = vst [vmem:[#allocation2 + $0x288] sm:$0xf0] %v1536
      %1616 = vst [vmem:[#allocation2 + $0x290] sm:$0xf0] %v1537
      %1617 = vst [vmem:[#allocation2 + $0x298] sm:$0xf0] %v1538
      %1618 = vst [vmem:[#allocation2 + $0x2a0] sm:$0xf0] %v1539
      %1619 = vst [vmem:[#allocation2 + $0x2a8] sm:$0xf0] %v1540
      %1620 = vst [vmem:[#allocation2 + $0x2b0] sm:$0xf0] %v1541
      %1621 = vst [vmem:[#allocation2 + $0x2b8] sm:$0xf0] %v1542
      %1622 = vst [vmem:[#allocation2 + $0x2c0] sm:$0xf0] %v1543
      %1623 = vst [vmem:[#allocation2 + $0x2c8] sm:$0xf0] %v1544
      %1624 = vst [vmem:[#allocation2 + $0x2d0] sm:$0xf0] %v1545
      %1625 = vst [vmem:[#allocation2 + $0x2d8] sm:$0xf0] %v1546
      %1626 = vst [vmem:[#allocation2 + $0x2e0] sm:$0xf0] %v1547
      %1627 = vst [vmem:[#allocation2 + $0x2e8] sm:$0xf0] %v1548
      %1628 = vst [vmem:[#allocation2 + $0x2f0] sm:$0xf0] %v1549
      %1629 = vst [vmem:[#allocation2 + $0x2f8] sm:$0xf0] %v1550
      %1630 = vst [vmem:[#allocation2 + $0x300] sm:$0xf0] %v1551
      %1631 = vst [vmem:[#allocation2 + $0x308] sm:$0xf0] %v1552
      %1632 = vst [vmem:[#allocation2 + $0x310] sm:$0xf0] %v1553
      %1633 = vst [vmem:[#allocation2 + $0x318] sm:$0xf0] %v1554
      %1634 = vst [vmem:[#allocation2 + $0x320] sm:$0xf0] %v1555
      %1635 = vst [vmem:[#allocation2 + $0x328] sm:$0xf0] %v1556
      %1636 = vst [vmem:[#allocation2 + $0x330] sm:$0xf0] %v1557
      %1637 = vst [vmem:[#allocation2 + $0x338] sm:$0xf0] %v1558
      %1638 = vst [vmem:[#allocation2 + $0x340] sm:$0xf0] %v1559
      %1639 = vst [vmem:[#allocation2 + $0x348] sm:$0xf0] %v1560
      %1640 = vst [vmem:[#allocation2 + $0x350] sm:$0xf0] %v1561
      %1641 = vst [vmem:[#allocation2 + $0x358] sm:$0xf0] %v1562
      %1642 = vst [vmem:[#allocation2 + $0x360] sm:$0xf0] %v1563
      %1643 = vst [vmem:[#allocation2 + $0x368] sm:$0xf0] %v1564
      %1644 = vst [vmem:[#allocation2 + $0x370] sm:$0xf0] %v1565
      %1645 = vst [vmem:[#allocation2 + $0x378] sm:$0xf0] %v1566
      %1646 = vst [vmem:[#allocation2 + $0x380] sm:$0xf0] %v1567
      %1647 = vst [vmem:[#allocation2 + $0x388] sm:$0xf0] %v1568
      %1648 = vst [vmem:[#allocation2 + $0x390] sm:$0xf0] %v1569
      %1649 = vst [vmem:[#allocation2 + $0x398] sm:$0xf0] %v1570
      %1650 = vst [vmem:[#allocation2 + $0x3a0] sm:$0xf0] %v1571
      %1651 = vst [vmem:[#allocation2 + $0x3a8] sm:$0xf0] %v1572
      %1652 = vst [vmem:[#allocation2 + $0x3b0] sm:$0xf0] %v1573
      %1653 = vst.msk [vmem:[#allocation2 + $0x3b8] sm:$0xf0] %vm572, %v1533
      %v1654 = vld [vmem:[%s165] sm:$0xff]
      %v1655 = vld [vmem:[%s165 + $0x8] sm:$0xff]
      %v1656 = vld [vmem:[%s165 + $0x10] sm:$0xff]
      %v1657 = vld [vmem:[%s165 + $0x18] sm:$0xff]
      %v1658 = vld [vmem:[%s165 + $0x20] sm:$0xff]
      %v1659 = vld [vmem:[%s165 + $0x28] sm:$0xff]
      %v1660 = vld [vmem:[%s165 + $0x30] sm:$0xff]
      %v1661 = vld [vmem:[%s165 + $0x38] sm:$0xff]
      %v1662 = vld [vmem:[%s165 + $0x40] sm:$0xff]
      %v1663 = vld [vmem:[%s165 + $0x48] sm:$0xff]
      %v1664 = vunpack.c.l.bf16 %v1654
      %v1665 = vunpack.c.h.bf16 %v1654
      %v1666 = vunpack.c.l.bf16 %v1655
      %v1667 = vunpack.c.h.bf16 %v1655
      %v1668 = vunpack.c.l.bf16 %v1656
      %v1669 = vunpack.c.h.bf16 %v1656
      %v1670 = vunpack.c.l.bf16 %v1657
      %v1671 = vunpack.c.h.bf16 %v1657
      %v1672 = vunpack.c.l.bf16 %v1658
      %v1673 = vunpack.c.h.bf16 %v1658
      %v1674 = vunpack.c.l.bf16 %v1659
      %v1675 = vunpack.c.h.bf16 %v1659
      %v1676 = vunpack.c.l.bf16 %v1660
      %v1677 = vunpack.c.h.bf16 %v1660
      %v1678 = vunpack.c.l.bf16 %v1661
      %v1679 = vunpack.c.h.bf16 %v1661
      %v1680 = vunpack.c.l.bf16 %v1662
      %v1681 = vunpack.c.h.bf16 %v1662
      %v1682 = vunpack.c.l.bf16 %v1663
      %v1683 = vunpack.c.h.bf16 %v1663
      %v1704 = vcombine.high %v1664, %v1664
      %v1705 = vcombine.high %v1665, %v1665
      %v1706 = vcombine.high %v1666, %v1666
      %v1707 = vcombine.high %v1667, %v1667
      %v1708 = vcombine.high %v1668, %v1668
      %v1709 = vcombine.high %v1669, %v1669
      %v1710 = vcombine.high %v1670, %v1670
      %v1711 = vcombine.high %v1671, %v1671
      %v1712 = vcombine.high %v1672, %v1672
      %v1713 = vcombine.high %v1673, %v1673
      %v1714 = vcombine.high %v1674, %v1674
      %v1715 = vcombine.high %v1675, %v1675
      %v1716 = vcombine.high %v1676, %v1676
      %v1717 = vcombine.high %v1677, %v1677
      %v1718 = vcombine.high %v1678, %v1678
      %v1719 = vcombine.high %v1679, %v1679
      %v1720 = vcombine.high %v1680, %v1680
      %v1721 = vcombine.high %v1681, %v1681
      %v1722 = vcombine.high %v1682, %v1682
      %v1723 = vcombine.high %v1683, %v1683
      %1724 = vrot.lane.b32.xlu0 %v1664, 60
      %v1725 = vpop.permute.xlu0 %1724
      %1726 = vrot.lane.b32.xlu0 %v1704, 60
      %v1727 = vpop.permute.xlu0 %1726
      %1728 = vrot.lane.b32.xlu0 %v1665, 60
      %v1729 = vpop.permute.xlu0 %1728
      %1730 = vrot.lane.b32.xlu0 %v1705, 60
      %v1731 = vpop.permute.xlu0 %1730
      %1732 = vrot.lane.b32.xlu0 %v1666, 60
      %v1733 = vpop.permute.xlu0 %1732
      %1734 = vrot.lane.b32.xlu0 %v1706, 60
      %v1735 = vpop.permute.xlu0 %1734
      %1736 = vrot.lane.b32.xlu0 %v1667, 60
      %v1737 = vpop.permute.xlu0 %1736
      %1738 = vrot.lane.b32.xlu0 %v1707, 60
      %v1739 = vpop.permute.xlu0 %1738
      %1740 = vrot.lane.b32.xlu0 %v1668, 60
      %v1741 = vpop.permute.xlu0 %1740
      %1742 = vrot.lane.b32.xlu0 %v1708, 60
      %v1743 = vpop.permute.xlu0 %1742
      %1744 = vrot.lane.b32.xlu0 %v1669, 60
      %v1745 = vpop.permute.xlu0 %1744
      %1746 = vrot.lane.b32.xlu0 %v1709, 60
      %v1747 = vpop.permute.xlu0 %1746
      %1748 = vrot.lane.b32.xlu0 %v1670, 60
      %v1749 = vpop.permute.xlu0 %1748
      %1750 = vrot.lane.b32.xlu0 %v1710, 60
      %v1751 = vpop.permute.xlu0 %1750
      %1752 = vrot.lane.b32.xlu0 %v1671, 60
      %v1753 = vpop.permute.xlu0 %1752
      %1754 = vrot.lane.b32.xlu0 %v1711, 60
      %v1755 = vpop.permute.xlu0 %1754
      %1756 = vrot.lane.b32.xlu0 %v1672, 60
      %v1757 = vpop.permute.xlu0 %1756
      %1758 = vrot.lane.b32.xlu0 %v1712, 60
      %v1759 = vpop.permute.xlu0 %1758
      %1760 = vrot.lane.b32.xlu0 %v1673, 60
      %v1761 = vpop.permute.xlu0 %1760
      %1762 = vrot.lane.b32.xlu0 %v1713, 60
      %v1763 = vpop.permute.xlu0 %1762
      %1764 = vrot.lane.b32.xlu0 %v1674, 60
      %v1765 = vpop.permute.xlu0 %1764
      %1766 = vrot.lane.b32.xlu0 %v1714, 60
      %v1767 = vpop.permute.xlu0 %1766
      %1768 = vrot.lane.b32.xlu0 %v1675, 60
      %v1769 = vpop.permute.xlu0 %1768
      %1770 = vrot.lane.b32.xlu0 %v1715, 60
      %v1771 = vpop.permute.xlu0 %1770
      %1772 = vrot.lane.b32.xlu0 %v1676, 60
      %v1773 = vpop.permute.xlu0 %1772
      %1774 = vrot.lane.b32.xlu0 %v1716, 60
      %v1775 = vpop.permute.xlu0 %1774
      %1776 = vrot.lane.b32.xlu0 %v1677, 60
      %v1777 = vpop.permute.xlu0 %1776
      %1778 = vrot.lane.b32.xlu0 %v1717, 60
      %v1779 = vpop.permute.xlu0 %1778
      %1780 = vrot.lane.b32.xlu0 %v1678, 60
      %v1781 = vpop.permute.xlu0 %1780
      %1782 = vrot.lane.b32.xlu0 %v1718, 60
      %v1783 = vpop.permute.xlu0 %1782
      %1784 = vrot.lane.b32.xlu0 %v1679, 60
      %v1785 = vpop.permute.xlu0 %1784
      %1786 = vrot.lane.b32.xlu0 %v1719, 60
      %v1787 = vpop.permute.xlu0 %1786
      %1788 = vrot.lane.b32.xlu0 %v1680, 60
      %v1789 = vpop.permute.xlu0 %1788
      %1790 = vrot.lane.b32.xlu0 %v1720, 60
      %v1791 = vpop.permute.xlu0 %1790
      %1792 = vrot.lane.b32.xlu0 %v1681, 60
      %v1793 = vpop.permute.xlu0 %1792
      %1794 = vrot.lane.b32.xlu0 %v1721, 60
      %v1795 = vpop.permute.xlu0 %1794
      %1796 = vrot.lane.b32.xlu0 %v1682, 60
      %v1797 = vpop.permute.xlu0 %1796
      %1798 = vrot.lane.b32.xlu0 %v1722, 60
      %v1799 = vpop.permute.xlu0 %1798
      %1800 = vrot.lane.b32.xlu0 %v1683, 60
      %v1801 = vpop.permute.xlu0 %1800
      %1802 = vrot.lane.b32.xlu0 %v1723, 60
      %v1803 = vpop.permute.xlu0 %1802
      %vm1804 = vcmask 490496
      %v1805 = vsel %vm1804, %v1725, %v1727
      %v1806 = vsel %vm1804, %v1727, %v1729
      %v1807 = vsel %vm1804, %v1729, %v1731
      %v1808 = vsel %vm1804, %v1731, %v1733
      %v1809 = vsel %vm1804, %v1733, %v1735
      %v1810 = vsel %vm1804, %v1735, %v1737
      %v1811 = vsel %vm1804, %v1737, %v1739
      %v1812 = vsel %vm1804, %v1739, %v1741
      %v1813 = vsel %vm1804, %v1741, %v1743
      %v1814 = vsel %vm1804, %v1743, %v1745
      %v1815 = vsel %vm1804, %v1745, %v1747
      %v1816 = vsel %vm1804, %v1747, %v1749
      %v1817 = vsel %vm1804, %v1749, %v1751
      %v1818 = vsel %vm1804, %v1751, %v1753
      %v1819 = vsel %vm1804, %v1753, %v1755
      %v1820 = vsel %vm1804, %v1755, %v1757
      %v1821 = vsel %vm1804, %v1757, %v1759
      %v1822 = vsel %vm1804, %v1759, %v1761
      %v1823 = vsel %vm1804, %v1761, %v1763
      %v1824 = vsel %vm1804, %v1763, %v1765
      %v1825 = vsel %vm1804, %v1765, %v1767
      %v1826 = vsel %vm1804, %v1767, %v1769
      %v1827 = vsel %vm1804, %v1769, %v1771
      %v1828 = vsel %vm1804, %v1771, %v1773
      %v1829 = vsel %vm1804, %v1773, %v1775
      %v1830 = vsel %vm1804, %v1775, %v1777
      %v1831 = vsel %vm1804, %v1777, %v1779
      %v1832 = vsel %vm1804, %v1779, %v1781
      %v1833 = vsel %vm1804, %v1781, %v1783
      %v1834 = vsel %vm1804, %v1783, %v1785
      %v1835 = vsel %vm1804, %v1785, %v1787
      %v1836 = vsel %vm1804, %v1787, %v1789
      %v1837 = vsel %vm1804, %v1789, %v1791
      %v1838 = vsel %vm1804, %v1791, %v1793
      %v1839 = vsel %vm1804, %v1793, %v1795
      %v1840 = vsel %vm1804, %v1795, %v1797
      %v1841 = vsel %vm1804, %v1797, %v1799
      %v1842 = vsel %vm1804, %v1799, %v1801
      %v1843 = vsel %vm1804, %v1801, %v1803
      %1884 = vst [vmem:[#allocation2 + $0x3c0] sm:$0xf] %v1805
      %1885 = vst [vmem:[#allocation2 + $0x3c8] sm:$0xf] %v1806
      %1886 = vst [vmem:[#allocation2 + $0x3d0] sm:$0xf] %v1807
      %1887 = vst [vmem:[#allocation2 + $0x3d8] sm:$0xf] %v1808
      %1888 = vst [vmem:[#allocation2 + $0x3e0] sm:$0xf] %v1809
      %1889 = vst [vmem:[#allocation2 + $0x3e8] sm:$0xf] %v1810
      %1890 = vst [vmem:[#allocation2 + $0x3f0] sm:$0xf] %v1811
      %1891 = vst [vmem:[#allocation2 + $0x3f8] sm:$0xf] %v1812
      %1892 = vst [vmem:[#allocation2 + $0x400] sm:$0xf] %v1813
      %1893 = vst [vmem:[#allocation2 + $0x408] sm:$0xf] %v1814
      %1894 = vst [vmem:[#allocation2 + $0x410] sm:$0xf] %v1815
      %1895 = vst [vmem:[#allocation2 + $0x418] sm:$0xf] %v1816
      %1896 = vst [vmem:[#allocation2 + $0x420] sm:$0xf] %v1817
      %1897 = vst [vmem:[#allocation2 + $0x428] sm:$0xf] %v1818
      %1898 = vst [vmem:[#allocation2 + $0x430] sm:$0xf] %v1819
      %1899 = vst [vmem:[#allocation2 + $0x438] sm:$0xf] %v1820
      %1900 = vst [vmem:[#allocation2 + $0x440] sm:$0xf] %v1821
      %1901 = vst [vmem:[#allocation2 + $0x448] sm:$0xf] %v1822
      %1902 = vst [vmem:[#allocation2 + $0x450] sm:$0xf] %v1823
      %1903 = vst [vmem:[#allocation2 + $0x458] sm:$0xf] %v1824
      %1904 = vst [vmem:[#allocation2 + $0x460] sm:$0xf] %v1825
      %1905 = vst [vmem:[#allocation2 + $0x468] sm:$0xf] %v1826
      %1906 = vst [vmem:[#allocation2 + $0x470] sm:$0xf] %v1827
      %1907 = vst [vmem:[#allocation2 + $0x478] sm:$0xf] %v1828
      %1908 = vst [vmem:[#allocation2 + $0x480] sm:$0xf] %v1829
      %1909 = vst [vmem:[#allocation2 + $0x488] sm:$0xf] %v1830
      %1910 = vst [vmem:[#allocation2 + $0x490] sm:$0xf] %v1831
      %1911 = vst [vmem:[#allocation2 + $0x498] sm:$0xf] %v1832
      %1912 = vst [vmem:[#allocation2 + $0x4a0] sm:$0xf] %v1833
      %1913 = vst [vmem:[#allocation2 + $0x4a8] sm:$0xf] %v1834
      %1914 = vst [vmem:[#allocation2 + $0x4b0] sm:$0xf] %v1835
      %1915 = vst [vmem:[#allocation2 + $0x4b8] sm:$0xf] %v1836
      %1916 = vst [vmem:[#allocation2 + $0x4c0] sm:$0xf] %v1837
      %1917 = vst [vmem:[#allocation2 + $0x4c8] sm:$0xf] %v1838
      %1918 = vst [vmem:[#allocation2 + $0x4d0] sm:$0xf] %v1839
      %1919 = vst [vmem:[#allocation2 + $0x4d8] sm:$0xf] %v1840
      %1920 = vst [vmem:[#allocation2 + $0x4e0] sm:$0xf] %v1841
      %1921 = vst [vmem:[#allocation2 + $0x4e8] sm:$0xf] %v1842
      %1922 = vst [vmem:[#allocation2 + $0x4f0] sm:$0xf] %v1843
      %1923 = vst.msk [vmem:[#allocation2 + $0x4f8] sm:$0xf] %vm301, %v1803
      %v1924 = vld [vmem:[%s165] sm:$0xff]
      %v1925 = vld [vmem:[%s165 + $0x8] sm:$0xff]
      %v1926 = vld [vmem:[%s165 + $0x10] sm:$0xff]
      %v1927 = vld [vmem:[%s165 + $0x18] sm:$0xff]
      %v1928 = vld [vmem:[%s165 + $0x20] sm:$0xff]
      %v1929 = vld [vmem:[%s165 + $0x28] sm:$0xff]
      %v1930 = vld [vmem:[%s165 + $0x30] sm:$0xff]
      %v1931 = vld [vmem:[%s165 + $0x38] sm:$0xff]
      %v1932 = vld [vmem:[%s165 + $0x40] sm:$0xff]
      %v1933 = vld [vmem:[%s165 + $0x48] sm:$0xff]
      %v1934 = vunpack.c.l.bf16 %v1924
      %v1935 = vunpack.c.h.bf16 %v1924
      %v1936 = vunpack.c.l.bf16 %v1925
      %v1937 = vunpack.c.h.bf16 %v1925
      %v1938 = vunpack.c.l.bf16 %v1926
      %v1939 = vunpack.c.h.bf16 %v1926
      %v1940 = vunpack.c.l.bf16 %v1927
      %v1941 = vunpack.c.h.bf16 %v1927
      %v1942 = vunpack.c.l.bf16 %v1928
      %v1943 = vunpack.c.h.bf16 %v1928
      %v1944 = vunpack.c.l.bf16 %v1929
      %v1945 = vunpack.c.h.bf16 %v1929
      %v1946 = vunpack.c.l.bf16 %v1930
      %v1947 = vunpack.c.h.bf16 %v1930
      %v1948 = vunpack.c.l.bf16 %v1931
      %v1949 = vunpack.c.h.bf16 %v1931
      %v1950 = vunpack.c.l.bf16 %v1932
      %v1951 = vunpack.c.h.bf16 %v1932
      %v1952 = vunpack.c.l.bf16 %v1933
      %v1953 = vunpack.c.h.bf16 %v1933
      %v1974 = vcombine.low %v1934, %v1934
      %v1975 = vcombine.low %v1935, %v1935
      %v1976 = vcombine.low %v1936, %v1936
      %v1977 = vcombine.low %v1937, %v1937
      %v1978 = vcombine.low %v1938, %v1938
      %v1979 = vcombine.low %v1939, %v1939
      %v1980 = vcombine.low %v1940, %v1940
      %v1981 = vcombine.low %v1941, %v1941
      %v1982 = vcombine.low %v1942, %v1942
      %v1983 = vcombine.low %v1943, %v1943
      %v1984 = vcombine.low %v1944, %v1944
      %v1985 = vcombine.low %v1945, %v1945
      %v1986 = vcombine.low %v1946, %v1946
      %v1987 = vcombine.low %v1947, %v1947
      %v1988 = vcombine.low %v1948, %v1948
      %v1989 = vcombine.low %v1949, %v1949
      %v1990 = vcombine.low %v1950, %v1950
      %v1991 = vcombine.low %v1951, %v1951
      %v1992 = vcombine.low %v1952, %v1952
      %v1993 = vcombine.low %v1953, %v1953
      %1994 = vrot.lane.b32.xlu0 %v1974, 59
      %v1995 = vpop.permute.xlu0 %1994
      %1996 = vrot.lane.b32.xlu0 %v1934, 59
      %v1997 = vpop.permute.xlu0 %1996
      %1998 = vrot.lane.b32.xlu0 %v1975, 59
      %v1999 = vpop.permute.xlu0 %1998
      %2000 = vrot.lane.b32.xlu0 %v1935, 59
      %v2001 = vpop.permute.xlu0 %2000
      %2002 = vrot.lane.b32.xlu0 %v1976, 59
      %v2003 = vpop.permute.xlu0 %2002
      %2004 = vrot.lane.b32.xlu0 %v1936, 59
      %v2005 = vpop.permute.xlu0 %2004
      %2006 = vrot.lane.b32.xlu0 %v1977, 59
      %v2007 = vpop.permute.xlu0 %2006
      %2008 = vrot.lane.b32.xlu0 %v1937, 59
      %v2009 = vpop.permute.xlu0 %2008
      %2010 = vrot.lane.b32.xlu0 %v1978, 59
      %v2011 = vpop.permute.xlu0 %2010
      %2012 = vrot.lane.b32.xlu0 %v1938, 59
      %v2013 = vpop.permute.xlu0 %2012
      %2014 = vrot.lane.b32.xlu0 %v1979, 59
      %v2015 = vpop.permute.xlu0 %2014
      %2016 = vrot.lane.b32.xlu0 %v1939, 59
      %v2017 = vpop.permute.xlu0 %2016
      %2018 = vrot.lane.b32.xlu0 %v1980, 59
      %v2019 = vpop.permute.xlu0 %2018
      %2020 = vrot.lane.b32.xlu0 %v1940, 59
      %v2021 = vpop.permute.xlu0 %2020
      %2022 = vrot.lane.b32.xlu0 %v1981, 59
      %v2023 = vpop.permute.xlu0 %2022
      %2024 = vrot.lane.b32.xlu0 %v1941, 59
      %v2025 = vpop.permute.xlu0 %2024
      %2026 = vrot.lane.b32.xlu0 %v1982, 59
      %v2027 = vpop.permute.xlu0 %2026
      %2028 = vrot.lane.b32.xlu0 %v1942, 59
      %v2029 = vpop.permute.xlu0 %2028
      %2030 = vrot.lane.b32.xlu0 %v1983, 59
      %v2031 = vpop.permute.xlu0 %2030
      %2032 = vrot.lane.b32.xlu0 %v1943, 59
      %v2033 = vpop.permute.xlu0 %2032
      %2034 = vrot.lane.b32.xlu0 %v1984, 59
      %v2035 = vpop.permute.xlu0 %2034
      %2036 = vrot.lane.b32.xlu0 %v1944, 59
      %v2037 = vpop.permute.xlu0 %2036
      %2038 = vrot.lane.b32.xlu0 %v1985, 59
      %v2039 = vpop.permute.xlu0 %2038
      %2040 = vrot.lane.b32.xlu0 %v1945, 59
      %v2041 = vpop.permute.xlu0 %2040
      %2042 = vrot.lane.b32.xlu0 %v1986, 59
      %v2043 = vpop.permute.xlu0 %2042
      %2044 = vrot.lane.b32.xlu0 %v1946, 59
      %v2045 = vpop.permute.xlu0 %2044
      %2046 = vrot.lane.b32.xlu0 %v1987, 59
      %v2047 = vpop.permute.xlu0 %2046
      %2048 = vrot.lane.b32.xlu0 %v1947, 59
      %v2049 = vpop.permute.xlu0 %2048
      %2050 = vrot.lane.b32.xlu0 %v1988, 59
      %v2051 = vpop.permute.xlu0 %2050
      %2052 = vrot.lane.b32.xlu0 %v1948, 59
      %v2053 = vpop.permute.xlu0 %2052
      %2054 = vrot.lane.b32.xlu0 %v1989, 59
      %v2055 = vpop.permute.xlu0 %2054
      %2056 = vrot.lane.b32.xlu0 %v1949, 59
      %v2057 = vpop.permute.xlu0 %2056
      %2058 = vrot.lane.b32.xlu0 %v1990, 59
      %v2059 = vpop.permute.xlu0 %2058
      %2060 = vrot.lane.b32.xlu0 %v1950, 59
      %v2061 = vpop.permute.xlu0 %2060
      %2062 = vrot.lane.b32.xlu0 %v1991, 59
      %v2063 = vpop.permute.xlu0 %2062
      %2064 = vrot.lane.b32.xlu0 %v1951, 59
      %v2065 = vpop.permute.xlu0 %2064
      %2066 = vrot.lane.b32.xlu0 %v1992, 59
      %v2067 = vpop.permute.xlu0 %2066
      %2068 = vrot.lane.b32.xlu0 %v1952, 59
      %v2069 = vpop.permute.xlu0 %2068
      %2070 = vrot.lane.b32.xlu0 %v1993, 59
      %v2071 = vpop.permute.xlu0 %2070
      %2072 = vrot.lane.b32.xlu0 %v1953, 59
      %v2073 = vpop.permute.xlu0 %2072
      %vm2074 = vcmask 482304
      %v2075 = vsel %vm2074, %v1995, %v1997
      %v2076 = vsel %vm2074, %v1997, %v1999
      %v2077 = vsel %vm2074, %v1999, %v2001
      %v2078 = vsel %vm2074, %v2001, %v2003
      %v2079 = vsel %vm2074, %v2003, %v2005
      %v2080 = vsel %vm2074, %v2005, %v2007
      %v2081 = vsel %vm2074, %v2007, %v2009
      %v2082 = vsel %vm2074, %v2009, %v2011
      %v2083 = vsel %vm2074, %v2011, %v2013
      %v2084 = vsel %vm2074, %v2013, %v2015
      %v2085 = vsel %vm2074, %v2015, %v2017
      %v2086 = vsel %vm2074, %v2017, %v2019
      %v2087 = vsel %vm2074, %v2019, %v2021
      %v2088 = vsel %vm2074, %v2021, %v2023
      %v2089 = vsel %vm2074, %v2023, %v2025
      %v2090 = vsel %vm2074, %v2025, %v2027
      %v2091 = vsel %vm2074, %v2027, %v2029
      %v2092 = vsel %vm2074, %v2029, %v2031
      %v2093 = vsel %vm2074, %v2031, %v2033
      %v2094 = vsel %vm2074, %v2033, %v2035
      %v2095 = vsel %vm2074, %v2035, %v2037
      %v2096 = vsel %vm2074, %v2037, %v2039
      %v2097 = vsel %vm2074, %v2039, %v2041
      %v2098 = vsel %vm2074, %v2041, %v2043
      %v2099 = vsel %vm2074, %v2043, %v2045
      %v2100 = vsel %vm2074, %v2045, %v2047
      %v2101 = vsel %vm2074, %v2047, %v2049
      %v2102 = vsel %vm2074, %v2049, %v2051
      %v2103 = vsel %vm2074, %v2051, %v2053
      %v2104 = vsel %vm2074, %v2053, %v2055
      %v2105 = vsel %vm2074, %v2055, %v2057
      %v2106 = vsel %vm2074, %v2057, %v2059
      %v2107 = vsel %vm2074, %v2059, %v2061
      %v2108 = vsel %vm2074, %v2061, %v2063
      %v2109 = vsel %vm2074, %v2063, %v2065
      %v2110 = vsel %vm2074, %v2065, %v2067
      %v2111 = vsel %vm2074, %v2067, %v2069
      %v2112 = vsel %vm2074, %v2069, %v2071
      %v2113 = vsel %vm2074, %v2071, %v2073
      %2154 = vst [vmem:[#allocation2 + $0x3c0] sm:$0xf0] %v2075
      %2155 = vst [vmem:[#allocation2 + $0x3c8] sm:$0xf0] %v2076
      %2156 = vst [vmem:[#allocation2 + $0x3d0] sm:$0xf0] %v2077
      %2157 = vst [vmem:[#allocation2 + $0x3d8] sm:$0xf0] %v2078
      %2158 = vst [vmem:[#allocation2 + $0x3e0] sm:$0xf0] %v2079
      %2159 = vst [vmem:[#allocation2 + $0x3e8] sm:$0xf0] %v2080
      %2160 = vst [vmem:[#allocation2 + $0x3f0] sm:$0xf0] %v2081
      %2161 = vst [vmem:[#allocation2 + $0x3f8] sm:$0xf0] %v2082
      %2162 = vst [vmem:[#allocation2 + $0x400] sm:$0xf0] %v2083
      %2163 = vst [vmem:[#allocation2 + $0x408] sm:$0xf0] %v2084
      %2164 = vst [vmem:[#allocation2 + $0x410] sm:$0xf0] %v2085
      %2165 = vst [vmem:[#allocation2 + $0x418] sm:$0xf0] %v2086
      %2166 = vst [vmem:[#allocation2 + $0x420] sm:$0xf0] %v2087
      %2167 = vst [vmem:[#allocation2 + $0x428] sm:$0xf0] %v2088
      %2168 = vst [vmem:[#allocation2 + $0x430] sm:$0xf0] %v2089
      %2169 = vst [vmem:[#allocation2 + $0x438] sm:$0xf0] %v2090
      %2170 = vst [vmem:[#allocation2 + $0x440] sm:$0xf0] %v2091
      %2171 = vst [vmem:[#allocation2 + $0x448] sm:$0xf0] %v2092
      %2172 = vst [vmem:[#allocation2 + $0x450] sm:$0xf0] %v2093
      %2173 = vst [vmem:[#allocation2 + $0x458] sm:$0xf0] %v2094
      %2174 = vst [vmem:[#allocation2 + $0x460] sm:$0xf0] %v2095
      %2175 = vst [vmem:[#allocation2 + $0x468] sm:$0xf0] %v2096
      %2176 = vst [vmem:[#allocation2 + $0x470] sm:$0xf0] %v2097
      %2177 = vst [vmem:[#allocation2 + $0x478] sm:$0xf0] %v2098
      %2178 = vst [vmem:[#allocation2 + $0x480] sm:$0xf0] %v2099
      %2179 = vst [vmem:[#allocation2 + $0x488] sm:$0xf0] %v2100
      %2180 = vst [vmem:[#allocation2 + $0x490] sm:$0xf0] %v2101
      %2181 = vst [vmem:[#allocation2 + $0x498] sm:$0xf0] %v2102
      %2182 = vst [vmem:[#allocation2 + $0x4a0] sm:$0xf0] %v2103
      %2183 = vst [vmem:[#allocation2 + $0x4a8] sm:$0xf0] %v2104
      %2184 = vst [vmem:[#allocation2 + $0x4b0] sm:$0xf0] %v2105
      %2185 = vst [vmem:[#allocation2 + $0x4b8] sm:$0xf0] %v2106
      %2186 = vst [vmem:[#allocation2 + $0x4c0] sm:$0xf0] %v2107
      %2187 = vst [vmem:[#allocation2 + $0x4c8] sm:$0xf0] %v2108
      %2188 = vst [vmem:[#allocation2 + $0x4d0] sm:$0xf0] %v2109
      %2189 = vst [vmem:[#allocation2 + $0x4d8] sm:$0xf0] %v2110
      %2190 = vst [vmem:[#allocation2 + $0x4e0] sm:$0xf0] %v2111
      %2191 = vst [vmem:[#allocation2 + $0x4e8] sm:$0xf0] %v2112
      %2192 = vst [vmem:[#allocation2 + $0x4f0] sm:$0xf0] %v2113
      %2193 = vst.msk [vmem:[#allocation2 + $0x4f8] sm:$0xf0] %vm572, %v2073
      %v2194 = vld [vmem:[%s165] sm:$0xff]
      %v2195 = vld [vmem:[%s165 + $0x8] sm:$0xff]
      %v2196 = vld [vmem:[%s165 + $0x10] sm:$0xff]
      %v2197 = vld [vmem:[%s165 + $0x18] sm:$0xff]
      %v2198 = vld [vmem:[%s165 + $0x20] sm:$0xff]
      %v2199 = vld [vmem:[%s165 + $0x28] sm:$0xff]
      %v2200 = vld [vmem:[%s165 + $0x30] sm:$0xff]
      %v2201 = vld [vmem:[%s165 + $0x38] sm:$0xff]
      %v2202 = vld [vmem:[%s165 + $0x40] sm:$0xff]
      %v2203 = vld [vmem:[%s165 + $0x48] sm:$0xff]
      %v2204 = vunpack.c.l.bf16 %v2194
      %v2205 = vunpack.c.h.bf16 %v2194
      %v2206 = vunpack.c.l.bf16 %v2195
      %v2207 = vunpack.c.h.bf16 %v2195
      %v2208 = vunpack.c.l.bf16 %v2196
      %v2209 = vunpack.c.h.bf16 %v2196
      %v2210 = vunpack.c.l.bf16 %v2197
      %v2211 = vunpack.c.h.bf16 %v2197
      %v2212 = vunpack.c.l.bf16 %v2198
      %v2213 = vunpack.c.h.bf16 %v2198
      %v2214 = vunpack.c.l.bf16 %v2199
      %v2215 = vunpack.c.h.bf16 %v2199
      %v2216 = vunpack.c.l.bf16 %v2200
      %v2217 = vunpack.c.h.bf16 %v2200
      %v2218 = vunpack.c.l.bf16 %v2201
      %v2219 = vunpack.c.h.bf16 %v2201
      %v2220 = vunpack.c.l.bf16 %v2202
      %v2221 = vunpack.c.h.bf16 %v2202
      %v2222 = vunpack.c.l.bf16 %v2203
      %v2223 = vunpack.c.h.bf16 %v2203
      %v2244 = vcombine.high %v2204, %v2204
      %v2245 = vcombine.high %v2205, %v2205
      %v2246 = vcombine.high %v2206, %v2206
      %v2247 = vcombine.high %v2207, %v2207
      %v2248 = vcombine.high %v2208, %v2208
      %v2249 = vcombine.high %v2209, %v2209
      %v2250 = vcombine.high %v2210, %v2210
      %v2251 = vcombine.high %v2211, %v2211
      %v2252 = vcombine.high %v2212, %v2212
      %v2253 = vcombine.high %v2213, %v2213
      %v2254 = vcombine.high %v2214, %v2214
      %v2255 = vcombine.high %v2215, %v2215
      %v2256 = vcombine.high %v2216, %v2216
      %v2257 = vcombine.high %v2217, %v2217
      %v2258 = vcombine.high %v2218, %v2218
      %v2259 = vcombine.high %v2219, %v2219
      %v2260 = vcombine.high %v2220, %v2220
      %v2261 = vcombine.high %v2221, %v2221
      %v2262 = vcombine.high %v2222, %v2222
      %v2263 = vcombine.high %v2223, %v2223
      %2264 = vrot.lane.b32.xlu0 %v2204, 58
      %v2265 = vpop.permute.xlu0 %2264
      %2266 = vrot.lane.b32.xlu0 %v2244, 58
      %v2267 = vpop.permute.xlu0 %2266
      %2268 = vrot.lane.b32.xlu0 %v2205, 58
      %v2269 = vpop.permute.xlu0 %2268
      %2270 = vrot.lane.b32.xlu0 %v2245, 58
      %v2271 = vpop.permute.xlu0 %2270
      %2272 = vrot.lane.b32.xlu0 %v2206, 58
      %v2273 = vpop.permute.xlu0 %2272
      %2274 = vrot.lane.b32.xlu0 %v2246, 58
      %v2275 = vpop.permute.xlu0 %2274
      %2276 = vrot.lane.b32.xlu0 %v2207, 58
      %v2277 = vpop.permute.xlu0 %2276
      %2278 = vrot.lane.b32.xlu0 %v2247, 58
      %v2279 = vpop.permute.xlu0 %2278
      %2280 = vrot.lane.b32.xlu0 %v2208, 58
      %v2281 = vpop.permute.xlu0 %2280
      %2282 = vrot.lane.b32.xlu0 %v2248, 58
      %v2283 = vpop.permute.xlu0 %2282
      %2284 = vrot.lane.b32.xlu0 %v2209, 58
      %v2285 = vpop.permute.xlu0 %2284
      %2286 = vrot.lane.b32.xlu0 %v2249, 58
      %v2287 = vpop.permute.xlu0 %2286
      %2288 = vrot.lane.b32.xlu0 %v2210, 58
      %v2289 = vpop.permute.xlu0 %2288
      %2290 = vrot.lane.b32.xlu0 %v2250, 58
      %v2291 = vpop.permute.xlu0 %2290
      %2292 = vrot.lane.b32.xlu0 %v2211, 58
      %v2293 = vpop.permute.xlu0 %2292
      %2294 = vrot.lane.b32.xlu0 %v2251, 58
      %v2295 = vpop.permute.xlu0 %2294
      %2296 = vrot.lane.b32.xlu0 %v2212, 58
      %v2297 = vpop.permute.xlu0 %2296
      %2298 = vrot.lane.b32.xlu0 %v2252, 58
      %v2299 = vpop.permute.xlu0 %2298
      %2300 = vrot.lane.b32.xlu0 %v2213, 58
      %v2301 = vpop.permute.xlu0 %2300
      %2302 = vrot.lane.b32.xlu0 %v2253, 58
      %v2303 = vpop.permute.xlu0 %2302
      %2304 = vrot.lane.b32.xlu0 %v2214, 58
      %v2305 = vpop.permute.xlu0 %2304
      %2306 = vrot.lane.b32.xlu0 %v2254, 58
      %v2307 = vpop.permute.xlu0 %2306
      %2308 = vrot.lane.b32.xlu0 %v2215, 58
      %v2309 = vpop.permute.xlu0 %2308
      %2310 = vrot.lane.b32.xlu0 %v2255, 58
      %v2311 = vpop.permute.xlu0 %2310
      %2312 = vrot.lane.b32.xlu0 %v2216, 58
      %v2313 = vpop.permute.xlu0 %2312
      %2314 = vrot.lane.b32.xlu0 %v2256, 58
      %v2315 = vpop.permute.xlu0 %2314
      %2316 = vrot.lane.b32.xlu0 %v2217, 58
      %v2317 = vpop.permute.xlu0 %2316
      %2318 = vrot.lane.b32.xlu0 %v2257, 58
      %v2319 = vpop.permute.xlu0 %2318
      %2320 = vrot.lane.b32.xlu0 %v2218, 58
      %v2321 = vpop.permute.xlu0 %2320
      %2322 = vrot.lane.b32.xlu0 %v2258, 58
      %v2323 = vpop.permute.xlu0 %2322
      %2324 = vrot.lane.b32.xlu0 %v2219, 58
      %v2325 = vpop.permute.xlu0 %2324
      %2326 = vrot.lane.b32.xlu0 %v2259, 58
      %v2327 = vpop.permute.xlu0 %2326
      %2328 = vrot.lane.b32.xlu0 %v2220, 58
      %v2329 = vpop.permute.xlu0 %2328
      %2330 = vrot.lane.b32.xlu0 %v2260, 58
      %v2331 = vpop.permute.xlu0 %2330
      %2332 = vrot.lane.b32.xlu0 %v2221, 58
      %v2333 = vpop.permute.xlu0 %2332
      %2334 = vrot.lane.b32.xlu0 %v2261, 58
      %v2335 = vpop.permute.xlu0 %2334
      %2336 = vrot.lane.b32.xlu0 %v2222, 58
      %v2337 = vpop.permute.xlu0 %2336
      %2338 = vrot.lane.b32.xlu0 %v2262, 58
      %v2339 = vpop.permute.xlu0 %2338
      %2340 = vrot.lane.b32.xlu0 %v2223, 58
      %v2341 = vpop.permute.xlu0 %2340
      %2342 = vrot.lane.b32.xlu0 %v2263, 58
      %v2343 = vpop.permute.xlu0 %2342
      %vm2344 = vcmask 474112
      %v2345 = vsel %vm2344, %v2265, %v2267
      %v2346 = vsel %vm2344, %v2267, %v2269
      %v2347 = vsel %vm2344, %v2269, %v2271
      %v2348 = vsel %vm2344, %v2271, %v2273
      %v2349 = vsel %vm2344, %v2273, %v2275
      %v2350 = vsel %vm2344, %v2275, %v2277
      %v2351 = vsel %vm2344, %v2277, %v2279
      %v2352 = vsel %vm2344, %v2279, %v2281
      %v2353 = vsel %vm2344, %v2281, %v2283
      %v2354 = vsel %vm2344, %v2283, %v2285
      %v2355 = vsel %vm2344, %v2285, %v2287
      %v2356 = vsel %vm2344, %v2287, %v2289
      %v2357 = vsel %vm2344, %v2289, %v2291
      %v2358 = vsel %vm2344, %v2291, %v2293
      %v2359 = vsel %vm2344, %v2293, %v2295
      %v2360 = vsel %vm2344, %v2295, %v2297
      %v2361 = vsel %vm2344, %v2297, %v2299
      %v2362 = vsel %vm2344, %v2299, %v2301
      %v2363 = vsel %vm2344, %v2301, %v2303
      %v2364 = vsel %vm2344, %v2303, %v2305
      %v2365 = vsel %vm2344, %v2305, %v2307
      %v2366 = vsel %vm2344, %v2307, %v2309
      %v2367 = vsel %vm2344, %v2309, %v2311
      %v2368 = vsel %vm2344, %v2311, %v2313
      %v2369 = vsel %vm2344, %v2313, %v2315
      %v2370 = vsel %vm2344, %v2315, %v2317
      %v2371 = vsel %vm2344, %v2317, %v2319
      %v2372 = vsel %vm2344, %v2319, %v2321
      %v2373 = vsel %vm2344, %v2321, %v2323
      %v2374 = vsel %vm2344, %v2323, %v2325
      %v2375 = vsel %vm2344, %v2325, %v2327
      %v2376 = vsel %vm2344, %v2327, %v2329
      %v2377 = vsel %vm2344, %v2329, %v2331
      %v2378 = vsel %vm2344, %v2331, %v2333
      %v2379 = vsel %vm2344, %v2333, %v2335
      %v2380 = vsel %vm2344, %v2335, %v2337
      %v2381 = vsel %vm2344, %v2337, %v2339
      %v2382 = vsel %vm2344, %v2339, %v2341
      %v2383 = vsel %vm2344, %v2341, %v2343
      %2424 = vst [vmem:[#allocation2 + $0x500] sm:$0xf] %v2345
      %2425 = vst [vmem:[#allocation2 + $0x508] sm:$0xf] %v2346
      %2426 = vst [vmem:[#allocation2 + $0x510] sm:$0xf] %v2347
      %2427 = vst [vmem:[#allocation2 + $0x518] sm:$0xf] %v2348
      %2428 = vst [vmem:[#allocation2 + $0x520] sm:$0xf] %v2349
      %2429 = vst [vmem:[#allocation2 + $0x528] sm:$0xf] %v2350
      %2430 = vst [vmem:[#allocation2 + $0x530] sm:$0xf] %v2351
      %2431 = vst [vmem:[#allocation2 + $0x538] sm:$0xf] %v2352
      %2432 = vst [vmem:[#allocation2 + $0x540] sm:$0xf] %v2353
      %2433 = vst [vmem:[#allocation2 + $0x548] sm:$0xf] %v2354
      %2434 = vst [vmem:[#allocation2 + $0x550] sm:$0xf] %v2355
      %2435 = vst [vmem:[#allocation2 + $0x558] sm:$0xf] %v2356
      %2436 = vst [vmem:[#allocation2 + $0x560] sm:$0xf] %v2357
      %2437 = vst [vmem:[#allocation2 + $0x568] sm:$0xf] %v2358
      %2438 = vst [vmem:[#allocation2 + $0x570] sm:$0xf] %v2359
      %2439 = vst [vmem:[#allocation2 + $0x578] sm:$0xf] %v2360
      %2440 = vst [vmem:[#allocation2 + $0x580] sm:$0xf] %v2361
      %2441 = vst [vmem:[#allocation2 + $0x588] sm:$0xf] %v2362
      %2442 = vst [vmem:[#allocation2 + $0x590] sm:$0xf] %v2363
      %2443 = vst [vmem:[#allocation2 + $0x598] sm:$0xf] %v2364
      %2444 = vst [vmem:[#allocation2 + $0x5a0] sm:$0xf] %v2365
      %2445 = vst [vmem:[#allocation2 + $0x5a8] sm:$0xf] %v2366
      %2446 = vst [vmem:[#allocation2 + $0x5b0] sm:$0xf] %v2367
      %2447 = vst [vmem:[#allocation2 + $0x5b8] sm:$0xf] %v2368
      %2448 = vst [vmem:[#allocation2 + $0x5c0] sm:$0xf] %v2369
      %2449 = vst [vmem:[#allocation2 + $0x5c8] sm:$0xf] %v2370
      %2450 = vst [vmem:[#allocation2 + $0x5d0] sm:$0xf] %v2371
      %2451 = vst [vmem:[#allocation2 + $0x5d8] sm:$0xf] %v2372
      %2452 = vst [vmem:[#allocation2 + $0x5e0] sm:$0xf] %v2373
      %2453 = vst [vmem:[#allocation2 + $0x5e8] sm:$0xf] %v2374
      %2454 = vst [vmem:[#allocation2 + $0x5f0] sm:$0xf] %v2375
      %2455 = vst [vmem:[#allocation2 + $0x5f8] sm:$0xf] %v2376
      %2456 = vst [vmem:[#allocation2 + $0x600] sm:$0xf] %v2377
      %2457 = vst [vmem:[#allocation2 + $0x608] sm:$0xf] %v2378
      %2458 = vst [vmem:[#allocation2 + $0x610] sm:$0xf] %v2379
      %2459 = vst [vmem:[#allocation2 + $0x618] sm:$0xf] %v2380
      %2460 = vst [vmem:[#allocation2 + $0x620] sm:$0xf] %v2381
      %2461 = vst [vmem:[#allocation2 + $0x628] sm:$0xf] %v2382
      %2462 = vst [vmem:[#allocation2 + $0x630] sm:$0xf] %v2383
      %2463 = vst.msk [vmem:[#allocation2 + $0x638] sm:$0xf] %vm301, %v2343
      %v2464 = vld [vmem:[%s0] sm:$0x3]
      %v2465 = vld [vmem:[#allocation2] sm:$0xff]
      %v2466 = vld [vmem:[#allocation2 + $0x8] sm:$0xff]
      %v2467 = vld [vmem:[#allocation2 + $0x10] sm:$0xff]
      %v2468 = vld [vmem:[#allocation2 + $0x18] sm:$0xff]
      %v2469 = vld [vmem:[#allocation2 + $0x20] sm:$0xff]
      %v2470 = vld [vmem:[#allocation2 + $0x28] sm:$0xff]
      %v2471 = vld [vmem:[#allocation2 + $0x30] sm:$0xff]
      %v2472 = vld [vmem:[#allocation2 + $0x38] sm:$0xff]
      %v2473 = vld [vmem:[#allocation2 + $0x40] sm:$0xff]
      %v2474 = vld [vmem:[#allocation2 + $0x48] sm:$0xff]
      %v2475 = vld [vmem:[#allocation2 + $0x50] sm:$0xff]
      %v2476 = vld [vmem:[#allocation2 + $0x58] sm:$0xff]
      %v2477 = vld [vmem:[#allocation2 + $0x60] sm:$0xff]
      %v2478 = vld [vmem:[#allocation2 + $0x68] sm:$0xff]
      %v2479 = vld [vmem:[#allocation2 + $0x70] sm:$0xff]
      %v2480 = vld [vmem:[#allocation2 + $0x78] sm:$0xff]
      %v2481 = vld [vmem:[#allocation2 + $0x80] sm:$0xff]
      %v2482 = vld [vmem:[#allocation2 + $0x88] sm:$0xff]
      %v2483 = vld [vmem:[#allocation2 + $0x90] sm:$0xff]
      %v2484 = vld [vmem:[#allocation2 + $0x98] sm:$0xff]
      %v2485 = vld [vmem:[#allocation2 + $0xa0] sm:$0xff]
      %v2486 = vld [vmem:[#allocation2 + $0xa8] sm:$0xff]
      %v2487 = vld [vmem:[#allocation2 + $0xb0] sm:$0xff]
      %v2488 = vld [vmem:[#allocation2 + $0xb8] sm:$0xff]
      %v2489 = vld [vmem:[#allocation2 + $0xc0] sm:$0xff]
      %v2490 = vld [vmem:[#allocation2 + $0xc8] sm:$0xff]
      %v2491 = vld [vmem:[#allocation2 + $0xd0] sm:$0xff]
      %v2492 = vld [vmem:[#allocation2 + $0xd8] sm:$0xff]
      %v2493 = vld [vmem:[#allocation2 + $0xe0] sm:$0xff]
      %v2494 = vld [vmem:[#allocation2 + $0xe8] sm:$0xff]
      %v2495 = vld [vmem:[#allocation2 + $0xf0] sm:$0xff]
      %v2496 = vld [vmem:[#allocation2 + $0xf8] sm:$0xff]
      %v2497 = vld [vmem:[#allocation2 + $0x100] sm:$0xff]
      %v2498 = vld [vmem:[#allocation2 + $0x108] sm:$0xff]
      %v2499 = vld [vmem:[#allocation2 + $0x110] sm:$0xff]
      %v2500 = vld [vmem:[#allocation2 + $0x118] sm:$0xff]
      %v2501 = vld [vmem:[#allocation2 + $0x120] sm:$0xff]
      %v2502 = vld [vmem:[#allocation2 + $0x128] sm:$0xff]
      %v2503 = vld [vmem:[#allocation2 + $0x130] sm:$0xff]
      %v2504 = vld [vmem:[#allocation2 + $0x138] sm:$0xff]
      %v2505 = vld [vmem:[#allocation2 + $0x140] sm:$0xff]
      %v2506 = vld [vmem:[#allocation2 + $0x148] sm:$0xff]
      %v2507 = vld [vmem:[#allocation2 + $0x150] sm:$0xff]
      %v2508 = vld [vmem:[#allocation2 + $0x158] sm:$0xff]
      %v2509 = vld [vmem:[#allocation2 + $0x160] sm:$0xff]
      %v2510 = vld [vmem:[#allocation2 + $0x168] sm:$0xff]
      %v2511 = vld [vmem:[#allocation2 + $0x170] sm:$0xff]
      %v2512 = vld [vmem:[#allocation2 + $0x178] sm:$0xff]
      %v2513 = vld [vmem:[#allocation2 + $0x180] sm:$0xff]
      %v2514 = vld [vmem:[#allocation2 + $0x188] sm:$0xff]
      %v2515 = vld [vmem:[#allocation2 + $0x190] sm:$0xff]
      %v2516 = vld [vmem:[#allocation2 + $0x198] sm:$0xff]
      %v2517 = vld [vmem:[#allocation2 + $0x1a0] sm:$0xff]
      %v2518 = vld [vmem:[#allocation2 + $0x1a8] sm:$0xff]
      %v2519 = vld [vmem:[#allocation2 + $0x1b0] sm:$0xff]
      %v2520 = vld [vmem:[#allocation2 + $0x1b8] sm:$0xff]
      %v2521 = vld [vmem:[#allocation2 + $0x1c0] sm:$0xff]
      %v2522 = vld [vmem:[#allocation2 + $0x1c8] sm:$0xff]
      %v2523 = vld [vmem:[#allocation2 + $0x1d0] sm:$0xff]
      %v2524 = vld [vmem:[#allocation2 + $0x1d8] sm:$0xff]
      %v2525 = vld [vmem:[#allocation2 + $0x1e0] sm:$0xff]
      %v2526 = vld [vmem:[#allocation2 + $0x1e8] sm:$0xff]
      %v2527 = vld [vmem:[#allocation2 + $0x1f0] sm:$0xff]
      %v2528 = vld [vmem:[#allocation2 + $0x1f8] sm:$0xff]
      %v2529 = vld [vmem:[#allocation2 + $0x200] sm:$0xff]
      %v2530 = vld [vmem:[#allocation2 + $0x208] sm:$0xff]
      %v2531 = vld [vmem:[#allocation2 + $0x210] sm:$0xff]
      %v2532 = vld [vmem:[#allocation2 + $0x218] sm:$0xff]
      %v2533 = vld [vmem:[#allocation2 + $0x220] sm:$0xff]
      %v2534 = vld [vmem:[#allocation2 + $0x228] sm:$0xff]
      %v2535 = vld [vmem:[#allocation2 + $0x230] sm:$0xff]
      %v2536 = vld [vmem:[#allocation2 + $0x238] sm:$0xff]
      %v2537 = vld [vmem:[#allocation2 + $0x240] sm:$0xff]
      %v2538 = vld [vmem:[#allocation2 + $0x248] sm:$0xff]
      %v2539 = vld [vmem:[#allocation2 + $0x250] sm:$0xff]
      %v2540 = vld [vmem:[#allocation2 + $0x258] sm:$0xff]
      %v2541 = vld [vmem:[#allocation2 + $0x260] sm:$0xff]
      %v2542 = vld [vmem:[#allocation2 + $0x268] sm:$0xff]
      %v2543 = vld [vmem:[#allocation2 + $0x270] sm:$0xff]
      %v2544 = vld [vmem:[#allocation2 + $0x278] sm:$0xff]
      %v2545 = vld [vmem:[#allocation2 + $0x280] sm:$0xff]
      %v2546 = vld [vmem:[#allocation2 + $0x288] sm:$0xff]
      %v2547 = vld [vmem:[#allocation2 + $0x290] sm:$0xff]
      %v2548 = vld [vmem:[#allocation2 + $0x298] sm:$0xff]
      %v2549 = vld [vmem:[#allocation2 + $0x2a0] sm:$0xff]
      %v2550 = vld [vmem:[#allocation2 + $0x2a8] sm:$0xff]
      %v2551 = vld [vmem:[#allocation2 + $0x2b0] sm:$0xff]
      %v2552 = vld [vmem:[#allocation2 + $0x2b8] sm:$0xff]
      %v2553 = vld [vmem:[#allocation2 + $0x2c0] sm:$0xff]
      %v2554 = vld [vmem:[#allocation2 + $0x2c8] sm:$0xff]
      %v2555 = vld [vmem:[#allocation2 + $0x2d0] sm:$0xff]
      %v2556 = vld [vmem:[#allocation2 + $0x2d8] sm:$0xff]
      %v2557 = vld [vmem:[#allocation2 + $0x2e0] sm:$0xff]
      %v2558 = vld [vmem:[#allocation2 + $0x2e8] sm:$0xff]
      %v2559 = vld [vmem:[#allocation2 + $0x2f0] sm:$0xff]
      %v2560 = vld [vmem:[#allocation2 + $0x2f8] sm:$0xff]
      %v2561 = vld [vmem:[#allocation2 + $0x300] sm:$0xff]
      %v2562 = vld [vmem:[#allocation2 + $0x308] sm:$0xff]
      %v2563 = vld [vmem:[#allocation2 + $0x310] sm:$0xff]
      %v2564 = vld [vmem:[#allocation2 + $0x318] sm:$0xff]
      %v2565 = vld [vmem:[#allocation2 + $0x320] sm:$0xff]
      %v2566 = vld [vmem:[#allocation2 + $0x328] sm:$0xff]
      %v2567 = vld [vmem:[#allocation2 + $0x330] sm:$0xff]
      %v2568 = vld [vmem:[#allocation2 + $0x338] sm:$0xff]
      %v2569 = vld [vmem:[#allocation2 + $0x340] sm:$0xff]
      %v2570 = vld [vmem:[#allocation2 + $0x348] sm:$0xff]
      %v2571 = vld [vmem:[#allocation2 + $0x350] sm:$0xff]
      %v2572 = vld [vmem:[#allocation2 + $0x358] sm:$0xff]
      %v2573 = vld [vmem:[#allocation2 + $0x360] sm:$0xff]
      %v2574 = vld [vmem:[#allocation2 + $0x368] sm:$0xff]
      %v2575 = vld [vmem:[#allocation2 + $0x370] sm:$0xff]
      %v2576 = vld [vmem:[#allocation2 + $0x378] sm:$0xff]
      %v2577 = vld [vmem:[#allocation2 + $0x380] sm:$0xff]
      %v2578 = vld [vmem:[#allocation2 + $0x388] sm:$0xff]
      %v2579 = vld [vmem:[#allocation2 + $0x390] sm:$0xff]
      %v2580 = vld [vmem:[#allocation2 + $0x398] sm:$0xff]
      %v2581 = vld [vmem:[#allocation2 + $0x3a0] sm:$0xff]
      %v2582 = vld [vmem:[#allocation2 + $0x3a8] sm:$0xff]
      %v2583 = vld [vmem:[#allocation2 + $0x3b0] sm:$0xff]
      %v2584 = vld [vmem:[#allocation2 + $0x3b8] sm:$0xff]
      %v2585 = vld [vmem:[#allocation2 + $0x3c0] sm:$0xff]
      %v2586 = vld [vmem:[#allocation2 + $0x3c8] sm:$0xff]
      %v2587 = vld [vmem:[#allocation2 + $0x3d0] sm:$0xff]
      %v2588 = vld [vmem:[#allocation2 + $0x3d8] sm:$0xff]
      %v2589 = vld [vmem:[#allocation2 + $0x3e0] sm:$0xff]
      %v2590 = vld [vmem:[#allocation2 + $0x3e8] sm:$0xff]
      %v2591 = vld [vmem:[#allocation2 + $0x3f0] sm:$0xff]
      %v2592 = vld [vmem:[#allocation2 + $0x3f8] sm:$0xff]
      %v2593 = vld [vmem:[#allocation2 + $0x400] sm:$0xff]
      %v2594 = vld [vmem:[#allocation2 + $0x408] sm:$0xff]
      %v2595 = vld [vmem:[#allocation2 + $0x410] sm:$0xff]
      %v2596 = vld [vmem:[#allocation2 + $0x418] sm:$0xff]
      %v2597 = vld [vmem:[#allocation2 + $0x420] sm:$0xff]
      %v2598 = vld [vmem:[#allocation2 + $0x428] sm:$0xff]
      %v2599 = vld [vmem:[#allocation2 + $0x430] sm:$0xff]
      %v2600 = vld [vmem:[#allocation2 + $0x438] sm:$0xff]
      %v2601 = vld [vmem:[#allocation2 + $0x440] sm:$0xff]
      %v2602 = vld [vmem:[#allocation2 + $0x448] sm:$0xff]
      %v2603 = vld [vmem:[#allocation2 + $0x450] sm:$0xff]
      %v2604 = vld [vmem:[#allocation2 + $0x458] sm:$0xff]
      %v2605 = vld [vmem:[#allocation2 + $0x460] sm:$0xff]
      %v2606 = vld [vmem:[#allocation2 + $0x468] sm:$0xff]
      %v2607 = vld [vmem:[#allocation2 + $0x470] sm:$0xff]
      %v2608 = vld [vmem:[#allocation2 + $0x478] sm:$0xff]
      %v2609 = vld [vmem:[#allocation2 + $0x480] sm:$0xff]
      %v2610 = vld [vmem:[#allocation2 + $0x488] sm:$0xff]
      %v2611 = vld [vmem:[#allocation2 + $0x490] sm:$0xff]
      %v2612 = vld [vmem:[#allocation2 + $0x498] sm:$0xff]
      %v2613 = vld [vmem:[#allocation2 + $0x4a0] sm:$0xff]
      %v2614 = vld [vmem:[#allocation2 + $0x4a8] sm:$0xff]
      %v2615 = vld [vmem:[#allocation2 + $0x4b0] sm:$0xff]
      %v2616 = vld [vmem:[#allocation2 + $0x4b8] sm:$0xff]
      %v2617 = vld [vmem:[#allocation2 + $0x4c0] sm:$0xff]
      %v2618 = vld [vmem:[#allocation2 + $0x4c8] sm:$0xff]
      %v2619 = vld [vmem:[#allocation2 + $0x4d0] sm:$0xff]
      %v2620 = vld [vmem:[#allocation2 + $0x4d8] sm:$0xff]
      %v2621 = vld [vmem:[#allocation2 + $0x4e0] sm:$0xff]
      %v2622 = vld [vmem:[#allocation2 + $0x4e8] sm:$0xff]
      %v2623 = vld [vmem:[#allocation2 + $0x4f0] sm:$0xff]
      %v2624 = vld [vmem:[#allocation2 + $0x4f8] sm:$0xff]
      %v2625 = vld [vmem:[#allocation2 + $0x500] sm:$0xf]
      %v2626 = vld [vmem:[#allocation2 + $0x508] sm:$0xf]
      %v2627 = vld [vmem:[#allocation2 + $0x510] sm:$0xf]
      %v2628 = vld [vmem:[#allocation2 + $0x518] sm:$0xf]
      %v2629 = vld [vmem:[#allocation2 + $0x520] sm:$0xf]
      %v2630 = vld [vmem:[#allocation2 + $0x528] sm:$0xf]
      %v2631 = vld [vmem:[#allocation2 + $0x530] sm:$0xf]
      %v2632 = vld [vmem:[#allocation2 + $0x538] sm:$0xf]
      %v2633 = vld [vmem:[#allocation2 + $0x540] sm:$0xf]
      %v2634 = vld [vmem:[#allocation2 + $0x548] sm:$0xf]
      %v2635 = vld [vmem:[#allocation2 + $0x550] sm:$0xf]
      %v2636 = vld [vmem:[#allocation2 + $0x558] sm:$0xf]
      %v2637 = vld [vmem:[#allocation2 + $0x560] sm:$0xf]
      %v2638 = vld [vmem:[#allocation2 + $0x568] sm:$0xf]
      %v2639 = vld [vmem:[#allocation2 + $0x570] sm:$0xf]
      %v2640 = vld [vmem:[#allocation2 + $0x578] sm:$0xf]
      %v2641 = vld [vmem:[#allocation2 + $0x580] sm:$0xf]
      %v2642 = vld [vmem:[#allocation2 + $0x588] sm:$0xf]
      %v2643 = vld [vmem:[#allocation2 + $0x590] sm:$0xf]
      %v2644 = vld [vmem:[#allocation2 + $0x598] sm:$0xf]
      %v2645 = vld [vmem:[#allocation2 + $0x5a0] sm:$0xf]
      %v2646 = vld [vmem:[#allocation2 + $0x5a8] sm:$0xf]
      %v2647 = vld [vmem:[#allocation2 + $0x5b0] sm:$0xf]
      %v2648 = vld [vmem:[#allocation2 + $0x5b8] sm:$0xf]
      %v2649 = vld [vmem:[#allocation2 + $0x5c0] sm:$0xf]
      %v2650 = vld [vmem:[#allocation2 + $0x5c8] sm:$0xf]
      %v2651 = vld [vmem:[#allocation2 + $0x5d0] sm:$0xf]
      %v2652 = vld [vmem:[#allocation2 + $0x5d8] sm:$0xf]
      %v2653 = vld [vmem:[#allocation2 + $0x5e0] sm:$0xf]
      %v2654 = vld [vmem:[#allocation2 + $0x5e8] sm:$0xf]
      %v2655 = vld [vmem:[#allocation2 + $0x5f0] sm:$0xf]
      %v2656 = vld [vmem:[#allocation2 + $0x5f8] sm:$0xf]
      %v2657 = vld [vmem:[#allocation2 + $0x600] sm:$0xf]
      %v2658 = vld [vmem:[#allocation2 + $0x608] sm:$0xf]
      %v2659 = vld [vmem:[#allocation2 + $0x610] sm:$0xf]
      %v2660 = vld [vmem:[#allocation2 + $0x618] sm:$0xf]
      %v2661 = vld [vmem:[#allocation2 + $0x620] sm:$0xf]
      %v2662 = vld [vmem:[#allocation2 + $0x628] sm:$0xf]
      %v2663 = vld [vmem:[#allocation2 + $0x630] sm:$0xf]
      %v2664 = vld [vmem:[#allocation2 + $0x638] sm:$0xf]
      %v2665 = vld [vmem:[%s1] sm:$0x3]
      %2667 = vset.pattern.permute.xlu0 0
      %2668 = vperm.xlu0 %2667, %v2665
      %v2669 = vpop.permute.xlu0 %2668
      %vm2671 = vcmask 293888
      %v2673 = vsel %vm2671, %v2464, 0
      %vm2675 = vcmask 1043456
      %v2677 = vsel %vm2675, %v2625, 0
      %v2680 = vsel %vm2675, %v2626, 0
      %v2683 = vsel %vm2675, %v2627, 0
      %v2686 = vsel %vm2675, %v2628, 0
      %v2689 = vsel %vm2675, %v2629, 0
      %v2692 = vsel %vm2675, %v2630, 0
      %v2695 = vsel %vm2675, %v2631, 0
      %v2698 = vsel %vm2675, %v2632, 0
      %v2701 = vsel %vm2675, %v2633, 0
      %v2704 = vsel %vm2675, %v2634, 0
      %v2707 = vsel %vm2675, %v2635, 0
      %v2710 = vsel %vm2675, %v2636, 0
      %v2713 = vsel %vm2675, %v2637, 0
      %v2716 = vsel %vm2675, %v2638, 0
      %v2719 = vsel %vm2675, %v2639, 0
      %v2722 = vsel %vm2675, %v2640, 0
      %v2725 = vsel %vm2675, %v2641, 0
      %v2728 = vsel %vm2675, %v2642, 0
      %v2731 = vsel %vm2675, %v2643, 0
      %v2734 = vsel %vm2675, %v2644, 0
      %v2737 = vsel %vm2675, %v2645, 0
      %v2740 = vsel %vm2675, %v2646, 0
      %v2743 = vsel %vm2675, %v2647, 0
      %v2746 = vsel %vm2675, %v2648, 0
      %v2749 = vsel %vm2675, %v2649, 0
      %v2752 = vsel %vm2675, %v2650, 0
      %v2755 = vsel %vm2675, %v2651, 0
      %v2758 = vsel %vm2675, %v2652, 0
      %v2761 = vsel %vm2675, %v2653, 0
      %v2764 = vsel %vm2675, %v2654, 0
      %v2767 = vsel %vm2675, %v2655, 0
      %v2770 = vsel %vm2675, %v2656, 0
      %v2773 = vsel %vm2675, %v2657, 0
      %v2776 = vsel %vm2675, %v2658, 0
      %v2779 = vsel %vm2675, %v2659, 0
      %v2782 = vsel %vm2675, %v2660, 0
      %v2785 = vsel %vm2675, %v2661, 0
      %v2788 = vsel %vm2675, %v2662, 0
      %v2791 = vsel %vm2675, %v2663, 0
      %v2794 = vsel %vm2675, %v2664, 0
      %2796 = vmatprep.subr.mxu0 %v2466
      %2797 = vmatpush1.msra.mxu0 %v2465
      %2798 = vmatprep.subr.mxu0 %v2506
      %2799 = vmatpush1.msra.mxu0 %v2505
      %2800 = vmatprep.subr.mxu0 %v2546
      %2801 = vmatpush1.msra.mxu0 %v2545
      %2802 = vmatprep.subr.mxu0 %v2586
      %2803 = vmatpush1.msra.mxu0 %v2585
      %2804 = vmatprep.subr.mxu0 %v2680
      %2805 = vmatpush1.msra.mxu0 %v2677
      %2806 = vmatprep.subr.mxu0 0.0
      %2807 = vmatpush1.msra.mxu0 0.0
      %2808 = vmatprep.subr.mxu0 0.0
      %2809 = vmatpush1.msra.mxu0 0.0
      %2810 = vmatprep.subr.mxu0 0.0
      %2811 = vmatpush1.msra.mxu0 0.0
      %2812 = vmatprep.subr.mxu0 0.0
      %2813 = vmatpush1.msra.mxu0 0.0
      %2814 = vmatprep.subr.mxu0 0.0
      %2815 = vmatpush1.msra.mxu0 0.0
      %2816 = vmatprep.subr.mxu0 0.0
      %2817 = vmatpush1.msra.mxu0 0.0
      %2818 = vmatprep.subr.mxu0 0.0
      %2819 = vmatpush1.msra.mxu0 0.0
      %2820 = vmatprep.subr.mxu0 0.0
      %2821 = vmatpush1.msra.mxu0 0.0
      %2822 = vmatprep.subr.mxu0 0.0
      %2823 = vmatpush1.msra.mxu0 0.0
      %2824 = vmatprep.subr.mxu0 0.0
      %2825 = vmatpush1.msra.mxu0 0.0
      %2826 = vmatprep.subr.mxu0 0.0
      %2827 = vmatpush1.msra.mxu0 0.0
      %2828 = vmatprep.subr.mxu0 0.0
      %2829 = vmatpush1.msra.mxu0 0.0
      %2830 = vmatprep.subr.mxu0 0.0
      %2831 = vmatpush1.msra.mxu0 0.0
      %2832 = vmatprep.subr.mxu0 0.0
      %2833 = vmatpush1.msra.mxu0 0.0
      %2834 = vmatprep.subr.mxu0 0.0
      %2835 = vmatpush1.msra.mxu0 0.0
      %2836 = vmatprep.subr.mxu0 0.0
      %2837 = vmatpush1.msra.mxu0 0.0
      %2838 = vmatprep.subr.mxu0 0.0
      %2839 = vmatpush1.msra.mxu0 0.0
      %2840 = vmatprep.subr.mxu0 0.0
      %2841 = vmatpush1.msra.mxu0 0.0
      %2842 = vmatprep.subr.mxu0 0.0
      %2843 = vmatpush1.msra.mxu0 0.0
      %2844 = vmatprep.subr.mxu0 0.0
      %2845 = vmatpush1.msra.mxu0 0.0
      %2846 = vmatprep.subr.mxu0 0.0
      %2847 = vmatpush1.msra.mxu0 0.0
      %2848 = vmatprep.subr.mxu0 0.0
      %2849 = vmatpush1.msra.mxu0 0.0
      %2850 = vmatprep.subr.mxu0 0.0
      %2851 = vmatpush1.msra.mxu0 0.0
      %2852 = vmatprep.subr.mxu0 0.0
      %2853 = vmatpush1.msra.mxu0 0.0
      %2854 = vmatprep.subr.mxu0 0.0
      %2855 = vmatpush1.msra.mxu0 0.0
      %2856 = vmatprep.subr.mxu0 0.0
      %2857 = vmatpush1.msra.mxu0 0.0
      %2858 = vmatprep.subr.mxu0 0.0
      %2859 = vmatpush1.msra.mxu0 0.0
      %2860 = vmatprep.mubr.f32.mxu0 0.0
      %2861 = vmatmul.mubr.f32.gmra.mrb[0].mxu0 %v2673
      %v2862 = vpop.f32.mrb[0].mxu0
      %v2863 = vadd.f32 %v2669, %v2862
      %v2864 = vpop.f32.mrb[0].mxu0
      %v2865 = vadd.f32 %v2669, %v2864
      %2866 = vdwg.mxu0
      %2867 = vmatprep.subr.mxu0 %v2468
      %2868 = vmatpush1.msra.mxu0 %v2467
      %2869 = vmatprep.subr.mxu0 %v2508
      %2870 = vmatpush1.msra.mxu0 %v2507
      %2871 = vmatprep.subr.mxu0 %v2548
      %2872 = vmatpush1.msra.mxu0 %v2547
      %2873 = vmatprep.subr.mxu0 %v2588
      %2874 = vmatpush1.msra.mxu0 %v2587
      %2875 = vmatprep.subr.mxu0 %v2686
      %2876 = vmatpush1.msra.mxu0 %v2683
      %2877 = vmatprep.subr.mxu0 0.0
      %2878 = vmatpush1.msra.mxu0 0.0
      %2879 = vmatprep.subr.mxu0 0.0
      %2880 = vmatpush1.msra.mxu0 0.0
      %2881 = vmatprep.subr.mxu0 0.0
      %2882 = vmatpush1.msra.mxu0 0.0
      %2883 = vmatprep.subr.mxu0 0.0
      %2884 = vmatpush1.msra.mxu0 0.0
      %2885 = vmatprep.subr.mxu0 0.0
      %2886 = vmatpush1.msra.mxu0 0.0
      %2887 = vmatprep.subr.mxu0 0.0
      %2888 = vmatpush1.msra.mxu0 0.0
      %2889 = vmatprep.subr.mxu0 0.0
      %2890 = vmatpush1.msra.mxu0 0.0
      %2891 = vmatprep.subr.mxu0 0.0
      %2892 = vmatpush1.msra.mxu0 0.0
      %2893 = vmatprep.subr.mxu0 0.0
      %2894 = vmatpush1.msra.mxu0 0.0
      %2895 = vmatprep.subr.mxu0 0.0
      %2896 = vmatpush1.msra.mxu0 0.0
      %2897 = vmatprep.subr.mxu0 0.0
      %2898 = vmatpush1.msra.mxu0 0.0
      %2899 = vmatprep.subr.mxu0 0.0
      %2900 = vmatpush1.msra.mxu0 0.0
      %2901 = vmatprep.subr.mxu0 0.0
      %2902 = vmatpush1.msra.mxu0 0.0
      %2903 = vmatprep.subr.mxu0 0.0
      %2904 = vmatpush1.msra.mxu0 0.0
      %2905 = vmatprep.subr.mxu0 0.0
      %2906 = vmatpush1.msra.mxu0 0.0
      %2907 = vmatprep.subr.mxu0 0.0
      %2908 = vmatpush1.msra.mxu0 0.0
      %2909 = vmatprep.subr.mxu0 0.0
      %2910 = vmatpush1.msra.mxu0 0.0
      %2911 = vmatprep.subr.mxu0 0.0
      %2912 = vmatpush1.msra.mxu0 0.0
      %2913 = vmatprep.subr.mxu0 0.0
      %2914 = vmatpush1.msra.mxu0 0.0
      %2915 = vmatprep.subr.mxu0 0.0
      %2916 = vmatpush1.msra.mxu0 0.0
      %2917 = vmatprep.subr.mxu0 0.0
      %2918 = vmatpush1.msra.mxu0 0.0
      %2919 = vmatprep.subr.mxu0 0.0
      %2920 = vmatpush1.msra.mxu0 0.0
      %2921 = vmatprep.subr.mxu0 0.0
      %2922 = vmatpush1.msra.mxu0 0.0
      %2923 = vmatprep.subr.mxu0 0.0
      %2924 = vmatpush1.msra.mxu0 0.0
      %2925 = vmatprep.subr.mxu0 0.0
      %2926 = vmatpush1.msra.mxu0 0.0
      %2927 = vmatprep.subr.mxu0 0.0
      %2928 = vmatpush1.msra.mxu0 0.0
      %2929 = vmatprep.subr.mxu0 0.0
      %2930 = vmatpush1.msra.mxu0 0.0
      %2931 = vmatprep.mubr.f32.mxu0 0.0
      %2932 = vmatmul.mubr.f32.gmra.mrb[0].mxu0 %v2673
      %v2933 = vpop.f32.mrb[0].mxu0
      %v2934 = vadd.f32 %v2669, %v2933
      %v2935 = vpop.f32.mrb[0].mxu0
      %v2936 = vadd.f32 %v2669, %v2935
      %2937 = vdwg.mxu0
      %2938 = vmatprep.subr.mxu0 %v2470
      %2939 = vmatpush1.msra.mxu0 %v2469
      %2940 = vmatprep.subr.mxu0 %v2510
      %2941 = vmatpush1.msra.mxu0 %v2509
      %2942 = vmatprep.subr.mxu0 %v2550
      %2943 = vmatpush1.msra.mxu0 %v2549
      %2944 = vmatprep.subr.mxu0 %v2590
      %2945 = vmatpush1.msra.mxu0 %v2589
      %2946 = vmatprep.subr.mxu0 %v2692
      %2947 = vmatpush1.msra.mxu0 %v2689
      %2948 = vmatprep.subr.mxu0 0.0
      %2949 = vmatpush1.msra.mxu0 0.0
      %2950 = vmatprep.subr.mxu0 0.0
      %2951 = vmatpush1.msra.mxu0 0.0
      %2952 = vmatprep.subr.mxu0 0.0
      %2953 = vmatpush1.msra.mxu0 0.0
      %2954 = vmatprep.subr.mxu0 0.0
      %2955 = vmatpush1.msra.mxu0 0.0
      %2956 = vmatprep.subr.mxu0 0.0
      %2957 = vmatpush1.msra.mxu0 0.0
      %2958 = vmatprep.subr.mxu0 0.0
      %2959 = vmatpush1.msra.mxu0 0.0
      %2960 = vmatprep.subr.mxu0 0.0
      %2961 = vmatpush1.msra.mxu0 0.0
      %2962 = vmatprep.subr.mxu0 0.0
      %2963 = vmatpush1.msra.mxu0 0.0
      %2964 = vmatprep.subr.mxu0 0.0
      %2965 = vmatpush1.msra.mxu0 0.0
      %2966 = vmatprep.subr.mxu0 0.0
      %2967 = vmatpush1.msra.mxu0 0.0
      %2968 = vmatprep.subr.mxu0 0.0
      %2969 = vmatpush1.msra.mxu0 0.0
      %2970 = vmatprep.subr.mxu0 0.0
      %2971 = vmatpush1.msra.mxu0 0.0
      %2972 = vmatprep.subr.mxu0 0.0
      %2973 = vmatpush1.msra.mxu0 0.0
      %2974 = vmatprep.subr.mxu0 0.0
      %2975 = vmatpush1.msra.mxu0 0.0
      %2976 = vmatprep.subr.mxu0 0.0
      %2977 = vmatpush1.msra.mxu0 0.0
      %2978 = vmatprep.subr.mxu0 0.0
      %2979 = vmatpush1.msra.mxu0 0.0
      %2980 = vmatprep.subr.mxu0 0.0
      %2981 = vmatpush1.msra.mxu0 0.0
      %2982 = vmatprep.subr.mxu0 0.0
      %2983 = vmatpush1.msra.mxu0 0.0
      %2984 = vmatprep.subr.mxu0 0.0
      %2985 = vmatpush1.msra.mxu0 0.0
      %2986 = vmatprep.subr.mxu0 0.0
      %2987 = vmatpush1.msra.mxu0 0.0
      %2988 = vmatprep.subr.mxu0 0.0
      %2989 = vmatpush1.msra.mxu0 0.0
      %2990 = vmatprep.subr.mxu0 0.0
      %2991 = vmatpush1.msra.mxu0 0.0
      %2992 = vmatprep.subr.mxu0 0.0
      %2993 = vmatpush1.msra.mxu0 0.0
      %2994 = vmatprep.subr.mxu0 0.0
      %2995 = vmatpush1.msra.mxu0 0.0
      %2996 = vmatprep.subr.mxu0 0.0
      %2997 = vmatpush1.msra.mxu0 0.0
      %2998 = vmatprep.subr.mxu0 0.0
      %2999 = vmatpush1.msra.mxu0 0.0
      %3000 = vmatprep.subr.mxu0 0.0
      %3001 = vmatpush1.msra.mxu0 0.0
      %3002 = vmatprep.mubr.f32.mxu0 0.0
      %3003 = vmatmul.mubr.f32.gmra.mrb[0].mxu0 %v2673
      %v3004 = vpop.f32.mrb[0].mxu0
      %v3005 = vadd.f32 %v2669, %v3004
      %v3006 = vpop.f32.mrb[0].mxu0
      %v3007 = vadd.f32 %v2669, %v3006
      %3008 = vdwg.mxu0
      %3009 = vmatprep.subr.mxu0 %v2472
      %3010 = vmatpush1.msra.mxu0 %v2471
      %3011 = vmatprep.subr.mxu0 %v2512
      %3012 = vmatpush1.msra.mxu0 %v2511
      %3013 = vmatprep.subr.mxu0 %v2552
      %3014 = vmatpush1.msra.mxu0 %v2551
      %3015 = vmatprep.subr.mxu0 %v2592
      %3016 = vmatpush1.msra.mxu0 %v2591
      %3017 = vmatprep.subr.mxu0 %v2698
      %3018 = vmatpush1.msra.mxu0 %v2695
      %3019 = vmatprep.subr.mxu0 0.0
      %3020 = vmatpush1.msra.mxu0 0.0
      %3021 = vmatprep.subr.mxu0 0.0
      %3022 = vmatpush1.msra.mxu0 0.0
      %3023 = vmatprep.subr.mxu0 0.0
      %3024 = vmatpush1.msra.mxu0 0.0
      %3025 = vmatprep.subr.mxu0 0.0
      %3026 = vmatpush1.msra.mxu0 0.0
      %3027 = vmatprep.subr.mxu0 0.0
      %3028 = vmatpush1.msra.mxu0 0.0
      %3029 = vmatprep.subr.mxu0 0.0
      %3030 = vmatpush1.msra.mxu0 0.0
      %3031 = vmatprep.subr.mxu0 0.0
      %3032 = vmatpush1.msra.mxu0 0.0
      %3033 = vmatprep.subr.mxu0 0.0
      %3034 = vmatpush1.msra.mxu0 0.0
      %3035 = vmatprep.subr.mxu0 0.0
      %3036 = vmatpush1.msra.mxu0 0.0
      %3037 = vmatprep.subr.mxu0 0.0
      %3038 = vmatpush1.msra.mxu0 0.0
      %3039 = vmatprep.subr.mxu0 0.0
      %3040 = vmatpush1.msra.mxu0 0.0
      %3041 = vmatprep.subr.mxu0 0.0
      %3042 = vmatpush1.msra.mxu0 0.0
      %3043 = vmatprep.subr.mxu0 0.0
      %3044 = vmatpush1.msra.mxu0 0.0
      %3045 = vmatprep.subr.mxu0 0.0
      %3046 = vmatpush1.msra.mxu0 0.0
      %3047 = vmatprep.subr.mxu0 0.0
      %3048 = vmatpush1.msra.mxu0 0.0
      %3049 = vmatprep.subr.mxu0 0.0
      %3050 = vmatpush1.msra.mxu0 0.0
      %3051 = vmatprep.subr.mxu0 0.0
      %3052 = vmatpush1.msra.mxu0 0.0
      %3053 = vmatprep.subr.mxu0 0.0
      %3054 = vmatpush1.msra.mxu0 0.0
      %3055 = vmatprep.subr.mxu0 0.0
      %3056 = vmatpush1.msra.mxu0 0.0
      %3057 = vmatprep.subr.mxu0 0.0
      %3058 = vmatpush1.msra.mxu0 0.0
      %3059 = vmatprep.subr.mxu0 0.0
      %3060 = vmatpush1.msra.mxu0 0.0
      %3061 = vmatprep.subr.mxu0 0.0
      %3062 = vmatpush1.msra.mxu0 0.0
      %3063 = vmatprep.subr.mxu0 0.0
      %3064 = vmatpush1.msra.mxu0 0.0
      %3065 = vmatprep.subr.mxu0 0.0
      %3066 = vmatpush1.msra.mxu0 0.0
      %3067 = vmatprep.subr.mxu0 0.0
      %3068 = vmatpush1.msra.mxu0 0.0
      %3069 = vmatprep.subr.mxu0 0.0
      %3070 = vmatpush1.msra.mxu0 0.0
      %3071 = vmatprep.subr.mxu0 0.0
      %3072 = vmatpush1.msra.mxu0 0.0
      %3073 = vmatprep.mubr.f32.mxu0 0.0
      %3074 = vmatmul.mubr.f32.gmra.mrb[0].mxu0 %v2673
      %v3075 = vpop.f32.mrb[0].mxu0
      %v3076 = vadd.f32 %v2669, %v3075
      %v3077 = vpop.f32.mrb[0].mxu0
      %v3078 = vadd.f32 %v2669, %v3077
      %3079 = vdwg.mxu0
      %3080 = vmatprep.subr.mxu0 %v2474
      %3081 = vmatpush1.msra.mxu0 %v2473
      %3082 = vmatprep.subr.mxu0 %v2514
      %3083 = vmatpush1.msra.mxu0 %v2513
      %3084 = vmatprep.subr.mxu0 %v2554
      %3085 = vmatpush1.msra.mxu0 %v2553
      %3086 = vmatprep.subr.mxu0 %v2594
      %3087 = vmatpush1.msra.mxu0 %v2593
      %3088 = vmatprep.subr.mxu0 %v2704
      %3089 = vmatpush1.msra.mxu0 %v2701
      %3090 = vmatprep.subr.mxu0 0.0
      %3091 = vmatpush1.msra.mxu0 0.0
      %3092 = vmatprep.subr.mxu0 0.0
      %3093 = vmatpush1.msra.mxu0 0.0
      %3094 = vmatprep.subr.mxu0 0.0
      %3095 = vmatpush1.msra.mxu0 0.0
      %3096 = vmatprep.subr.mxu0 0.0
      %3097 = vmatpush1.msra.mxu0 0.0
      %3098 = vmatprep.subr.mxu0 0.0
      %3099 = vmatpush1.msra.mxu0 0.0
      %3100 = vmatprep.subr.mxu0 0.0
      %3101 = vmatpush1.msra.mxu0 0.0
      %3102 = vmatprep.subr.mxu0 0.0
      %3103 = vmatpush1.msra.mxu0 0.0
      %3104 = vmatprep.subr.mxu0 0.0
      %3105 = vmatpush1.msra.mxu0 0.0
      %3106 = vmatprep.subr.mxu0 0.0
      %3107 = vmatpush1.msra.mxu0 0.0
      %3108 = vmatprep.subr.mxu0 0.0
      %3109 = vmatpush1.msra.mxu0 0.0
      %3110 = vmatprep.subr.mxu0 0.0
      %3111 = vmatpush1.msra.mxu0 0.0
      %3112 = vmatprep.subr.mxu0 0.0
      %3113 = vmatpush1.msra.mxu0 0.0
      %3114 = vmatprep.subr.mxu0 0.0
      %3115 = vmatpush1.msra.mxu0 0.0
      %3116 = vmatprep.subr.mxu0 0.0
      %3117 = vmatpush1.msra.mxu0 0.0
      %3118 = vmatprep.subr.mxu0 0.0
      %3119 = vmatpush1.msra.mxu0 0.0
      %3120 = vmatprep.subr.mxu0 0.0
      %3121 = vmatpush1.msra.mxu0 0.0
      %3122 = vmatprep.subr.mxu0 0.0
      %3123 = vmatpush1.msra.mxu0 0.0
      %3124 = vmatprep.subr.mxu0 0.0
      %3125 = vmatpush1.msra.mxu0 0.0
      %3126 = vmatprep.subr.mxu0 0.0
      %3127 = vmatpush1.msra.mxu0 0.0
      %3128 = vmatprep.subr.mxu0 0.0
      %3129 = vmatpush1.msra.mxu0 0.0
      %3130 = vmatprep.subr.mxu0 0.0
      %3131 = vmatpush1.msra.mxu0 0.0
      %3132 = vmatprep.subr.mxu0 0.0
      %3133 = vmatpush1.msra.mxu0 0.0
      %3134 = vmatprep.subr.mxu0 0.0
      %3135 = vmatpush1.msra.mxu0 0.0
      %3136 = vmatprep.subr.mxu0 0.0
      %3137 = vmatpush1.msra.mxu0 0.0
      %3138 = vmatprep.subr.mxu0 0.0
      %3139 = vmatpush1.msra.mxu0 0.0
      %3140 = vmatprep.subr.mxu0 0.0
      %3141 = vmatpush1.msra.mxu0 0.0
      %3142 = vmatprep.subr.mxu0 0.0
      %3143 = vmatpush1.msra.mxu0 0.0
      %3144 = vmatprep.mubr.f32.mxu0 0.0
      %3145 = vmatmul.mubr.f32.gmra.mrb[0].mxu0 %v2673
      %v3146 = vpop.f32.mrb[0].mxu0
      %v3147 = vadd.f32 %v2669, %v3146
      %v3148 = vpop.f32.mrb[0].mxu0
      %v3149 = vadd.f32 %v2669, %v3148
      %3150 = vdwg.mxu0
      %3151 = vmatprep.subr.mxu0 %v2476
      %3152 = vmatpush1.msra.mxu0 %v2475
      %3153 = vmatprep.subr.mxu0 %v2516
      %3154 = vmatpush1.msra.mxu0 %v2515
      %3155 = vmatprep.subr.mxu0 %v2556
      %3156 = vmatpush1.msra.mxu0 %v2555
      %3157 = vmatprep.subr.mxu0 %v2596
      %3158 = vmatpush1.msra.mxu0 %v2595
      %3159 = vmatprep.subr.mxu0 %v2710
      %3160 = vmatpush1.msra.mxu0 %v2707
      %3161 = vmatprep.subr.mxu0 0.0
      %3162 = vmatpush1.msra.mxu0 0.0
      %3163 = vmatprep.subr.mxu0 0.0
      %3164 = vmatpush1.msra.mxu0 0.0
      %3165 = vmatprep.subr.mxu0 0.0
      %3166 = vmatpush1.msra.mxu0 0.0
      %3167 = vmatprep.subr.mxu0 0.0
      %3168 = vmatpush1.msra.mxu0 0.0
      %3169 = vmatprep.subr.mxu0 0.0
      %3170 = vmatpush1.msra.mxu0 0.0
      %3171 = vmatprep.subr.mxu0 0.0
      %3172 = vmatpush1.msra.mxu0 0.0
      %3173 = vmatprep.subr.mxu0 0.0
      %3174 = vmatpush1.msra.mxu0 0.0
      %3175 = vmatprep.subr.mxu0 0.0
      %3176 = vmatpush1.msra.mxu0 0.0
      %3177 = vmatprep.subr.mxu0 0.0
      %3178 = vmatpush1.msra.mxu0 0.0
      %3179 = vmatprep.subr.mxu0 0.0
      %3180 = vmatpush1.msra.mxu0 0.0
      %3181 = vmatprep.subr.mxu0 0.0
      %3182 = vmatpush1.msra.mxu0 0.0
      %3183 = vmatprep.subr.mxu0 0.0
      %3184 = vmatpush1.msra.mxu0 0.0
      %3185 = vmatprep.subr.mxu0 0.0
      %3186 = vmatpush1.msra.mxu0 0.0
      %3187 = vmatprep.subr.mxu0 0.0
      %3188 = vmatpush1.msra.mxu0 0.0
      %3189 = vmatprep.subr.mxu0 0.0
      %3190 = vmatpush1.msra.mxu0 0.0
      %3191 = vmatprep.subr.mxu0 0.0
      %3192 = vmatpush1.msra.mxu0 0.0
      %3193 = vmatprep.subr.mxu0 0.0
      %3194 = vmatpush1.msra.mxu0 0.0
      %3195 = vmatprep.subr.mxu0 0.0
      %3196 = vmatpush1.msra.mxu0 0.0
      %3197 = vmatprep.subr.mxu0 0.0
      %3198 = vmatpush1.msra.mxu0 0.0
      %3199 = vmatprep.subr.mxu0 0.0
      %3200 = vmatpush1.msra.mxu0 0.0
      %3201 = vmatprep.subr.mxu0 0.0
      %3202 = vmatpush1.msra.mxu0 0.0
      %3203 = vmatprep.subr.mxu0 0.0
      %3204 = vmatpush1.msra.mxu0 0.0
      %3205 = vmatprep.subr.mxu0 0.0
      %3206 = vmatpush1.msra.mxu0 0.0
      %3207 = vmatprep.subr.mxu0 0.0
      %3208 = vmatpush1.msra.mxu0 0.0
      %3209 = vmatprep.subr.mxu0 0.0
      %3210 = vmatpush1.msra.mxu0 0.0
      %3211 = vmatprep.subr.mxu0 0.0
      %3212 = vmatpush1.msra.mxu0 0.0
      %3213 = vmatprep.subr.mxu0 0.0
      %3214 = vmatpush1.msra.mxu0 0.0
      %3215 = vmatprep.mubr.f32.mxu0 0.0
      %3216 = vmatmul.mubr.f32.gmra.mrb[0].mxu0 %v2673
      %v3217 = vpop.f32.mrb[0].mxu0
      %v3218 = vadd.f32 %v2669, %v3217
      %v3219 = vpop.f32.mrb[0].mxu0
      %v3220 = vadd.f32 %v2669, %v3219
      %3221 = vdwg.mxu0
      %3222 = vmatprep.subr.mxu0 %v2478
      %3223 = vmatpush1.msra.mxu0 %v2477
      %3224 = vmatprep.subr.mxu0 %v2518
      %3225 = vmatpush1.msra.mxu0 %v2517
      %3226 = vmatprep.subr.mxu0 %v2558
      %3227 = vmatpush1.msra.mxu0 %v2557
      %3228 = vmatprep.subr.mxu0 %v2598
      %3229 = vmatpush1.msra.mxu0 %v2597
      %3230 = vmatprep.subr.mxu0 %v2716
      %3231 = vmatpush1.msra.mxu0 %v2713
      %3232 = vmatprep.subr.mxu0 0.0
      %3233 = vmatpush1.msra.mxu0 0.0
      %3234 = vmatprep.subr.mxu0 0.0
      %3235 = vmatpush1.msra.mxu0 0.0
      %3236 = vmatprep.subr.mxu0 0.0
      %3237 = vmatpush1.msra.mxu0 0.0
      %3238 = vmatprep.subr.mxu0 0.0
      %3239 = vmatpush1.msra.mxu0 0.0
      %3240 = vmatprep.subr.mxu0 0.0
      %3241 = vmatpush1.msra.mxu0 0.0
      %3242 = vmatprep.subr.mxu0 0.0
      %3243 = vmatpush1.msra.mxu0 0.0
      %3244 = vmatprep.subr.mxu0 0.0
      %3245 = vmatpush1.msra.mxu0 0.0
      %3246 = vmatprep.subr.mxu0 0.0
      %3247 = vmatpush1.msra.mxu0 0.0
      %3248 = vmatprep.subr.mxu0 0.0
      %3249 = vmatpush1.msra.mxu0 0.0
      %3250 = vmatprep.subr.mxu0 0.0
      %3251 = vmatpush1.msra.mxu0 0.0
      %3252 = vmatprep.subr.mxu0 0.0
      %3253 = vmatpush1.msra.mxu0 0.0
      %3254 = vmatprep.subr.mxu0 0.0
      %3255 = vmatpush1.msra.mxu0 0.0
      %3256 = vmatprep.subr.mxu0 0.0
      %3257 = vmatpush1.msra.mxu0 0.0
      %3258 = vmatprep.subr.mxu0 0.0
      %3259 = vmatpush1.msra.mxu0 0.0
      %3260 = vmatprep.subr.mxu0 0.0
      %3261 = vmatpush1.msra.mxu0 0.0
      %3262 = vmatprep.subr.mxu0 0.0
      %3263 = vmatpush1.msra.mxu0 0.0
      %3264 = vmatprep.subr.mxu0 0.0
      %3265 = vmatpush1.msra.mxu0 0.0
      %3266 = vmatprep.subr.mxu0 0.0
      %3267 = vmatpush1.msra.mxu0 0.0
      %3268 = vmatprep.subr.mxu0 0.0
      %3269 = vmatpush1.msra.mxu0 0.0
      %3270 = vmatprep.subr.mxu0 0.0
      %3271 = vmatpush1.msra.mxu0 0.0
      %3272 = vmatprep.subr.mxu0 0.0
      %3273 = vmatpush1.msra.mxu0 0.0
      %3274 = vmatprep.subr.mxu0 0.0
      %3275 = vmatpush1.msra.mxu0 0.0
      %3276 = vmatprep.subr.mxu0 0.0
      %3277 = vmatpush1.msra.mxu0 0.0
      %3278 = vmatprep.subr.mxu0 0.0
      %3279 = vmatpush1.msra.mxu0 0.0
      %3280 = vmatprep.subr.mxu0 0.0
      %3281 = vmatpush1.msra.mxu0 0.0
      %3282 = vmatprep.subr.mxu0 0.0
      %3283 = vmatpush1.msra.mxu0 0.0
      %3284 = vmatprep.subr.mxu0 0.0
      %3285 = vmatpush1.msra.mxu0 0.0
      %3286 = vmatprep.mubr.f32.mxu0 0.0
      %3287 = vmatmul.mubr.f32.gmra.mrb[0].mxu0 %v2673
      %v3288 = vpop.f32.mrb[0].mxu0
      %v3289 = vadd.f32 %v2669, %v3288
      %v3290 = vpop.f32.mrb[0].mxu0
      %v3291 = vadd.f32 %v2669, %v3290
      %3292 = vdwg.mxu0
      %3293 = vmatprep.subr.mxu0 %v2480
      %3294 = vmatpush1.msra.mxu0 %v2479
      %3295 = vmatprep.subr.mxu0 %v2520
      %3296 = vmatpush1.msra.mxu0 %v2519
      %3297 = vmatprep.subr.mxu0 %v2560
      %3298 = vmatpush1.msra.mxu0 %v2559
      %3299 = vmatprep.subr.mxu0 %v2600
      %3300 = vmatpush1.msra.mxu0 %v2599
      %3301 = vmatprep.subr.mxu0 %v2722
      %3302 = vmatpush1.msra.mxu0 %v2719
      %3303 = vmatprep.subr.mxu0 0.0
      %3304 = vmatpush1.msra.mxu0 0.0
      %3305 = vmatprep.subr.mxu0 0.0
      %3306 = vmatpush1.msra.mxu0 0.0
      %3307 = vmatprep.subr.mxu0 0.0
      %3308 = vmatpush1.msra.mxu0 0.0
      %3309 = vmatprep.subr.mxu0 0.0
      %3310 = vmatpush1.msra.mxu0 0.0
      %3311 = vmatprep.subr.mxu0 0.0
      %3312 = vmatpush1.msra.mxu0 0.0
      %3313 = vmatprep.subr.mxu0 0.0
      %3314 = vmatpush1.msra.mxu0 0.0
      %3315 = vmatprep.subr.mxu0 0.0
      %3316 = vmatpush1.msra.mxu0 0.0
      %3317 = vmatprep.subr.mxu0 0.0
      %3318 = vmatpush1.msra.mxu0 0.0
      %3319 = vmatprep.subr.mxu0 0.0
      %3320 = vmatpush1.msra.mxu0 0.0
      %3321 = vmatprep.subr.mxu0 0.0
      %3322 = vmatpush1.msra.mxu0 0.0
      %3323 = vmatprep.subr.mxu0 0.0
      %3324 = vmatpush1.msra.mxu0 0.0
      %3325 = vmatprep.subr.mxu0 0.0
      %3326 = vmatpush1.msra.mxu0 0.0
      %3327 = vmatprep.subr.mxu0 0.0
      %3328 = vmatpush1.msra.mxu0 0.0
      %3329 = vmatprep.subr.mxu0 0.0
      %3330 = vmatpush1.msra.mxu0 0.0
      %3331 = vmatprep.subr.mxu0 0.0
      %3332 = vmatpush1.msra.mxu0 0.0
      %3333 = vmatprep.subr.mxu0 0.0
      %3334 = vmatpush1.msra.mxu0 0.0
      %3335 = vmatprep.subr.mxu0 0.0
      %3336 = vmatpush1.msra.mxu0 0.0
      %3337 = vmatprep.subr.mxu0 0.0
      %3338 = vmatpush1.msra.mxu0 0.0
      %3339 = vmatprep.subr.mxu0 0.0
      %3340 = vmatpush1.msra.mxu0 0.0
      %3341 = vmatprep.subr.mxu0 0.0
      %3342 = vmatpush1.msra.mxu0 0.0
      %3343 = vmatprep.subr.mxu0 0.0
      %3344 = vmatpush1.msra.mxu0 0.0
      %3345 = vmatprep.subr.mxu0 0.0
      %3346 = vmatpush1.msra.mxu0 0.0
      %3347 = vmatprep.subr.mxu0 0.0
      %3348 = vmatpush1.msra.mxu0 0.0
      %3349 = vmatprep.subr.mxu0 0.0
      %3350 = vmatpush1.msra.mxu0 0.0
      %3351 = vmatprep.subr.mxu0 0.0
      %3352 = vmatpush1.msra.mxu0 0.0
      %3353 = vmatprep.subr.mxu0 0.0
      %3354 = vmatpush1.msra.mxu0 0.0
      %3355 = vmatprep.subr.mxu0 0.0
      %3356 = vmatpush1.msra.mxu0 0.0
      %3357 = vmatprep.mubr.f32.mxu0 0.0
      %3358 = vmatmul.mubr.f32.gmra.mrb[0].mxu0 %v2673
      %v3359 = vpop.f32.mrb[0].mxu0
      %v3360 = vadd.f32 %v2669, %v3359
      %v3361 = vpop.f32.mrb[0].mxu0
      %v3362 = vadd.f32 %v2669, %v3361
      %3363 = vdwg.mxu0
      %3364 = vmatprep.subr.mxu0 %v2482
      %3365 = vmatpush1.msra.mxu0 %v2481
      %3366 = vmatprep.subr.mxu0 %v2522
      %3367 = vmatpush1.msra.mxu0 %v2521
      %3368 = vmatprep.subr.mxu0 %v2562
      %3369 = vmatpush1.msra.mxu0 %v2561
      %3370 = vmatprep.subr.mxu0 %v2602
      %3371 = vmatpush1.msra.mxu0 %v2601
      %3372 = vmatprep.subr.mxu0 %v2728
      %3373 = vmatpush1.msra.mxu0 %v2725
      %3374 = vmatprep.subr.mxu0 0.0
      %3375 = vmatpush1.msra.mxu0 0.0
      %3376 = vmatprep.subr.mxu0 0.0
      %3377 = vmatpush1.msra.mxu0 0.0
      %3378 = vmatprep.subr.mxu0 0.0
      %3379 = vmatpush1.msra.mxu0 0.0
      %3380 = vmatprep.subr.mxu0 0.0
      %3381 = vmatpush1.msra.mxu0 0.0
      %3382 = vmatprep.subr.mxu0 0.0
      %3383 = vmatpush1.msra.mxu0 0.0
      %3384 = vmatprep.subr.mxu0 0.0
      %3385 = vmatpush1.msra.mxu0 0.0
      %3386 = vmatprep.subr.mxu0 0.0
      %3387 = vmatpush1.msra.mxu0 0.0
      %3388 = vmatprep.subr.mxu0 0.0
      %3389 = vmatpush1.msra.mxu0 0.0
      %3390 = vmatprep.subr.mxu0 0.0
      %3391 = vmatpush1.msra.mxu0 0.0
      %3392 = vmatprep.subr.mxu0 0.0
      %3393 = vmatpush1.msra.mxu0 0.0
      %3394 = vmatprep.subr.mxu0 0.0
      %3395 = vmatpush1.msra.mxu0 0.0
      %3396 = vmatprep.subr.mxu0 0.0
      %3397 = vmatpush1.msra.mxu0 0.0
      %3398 = vmatprep.subr.mxu0 0.0
      %3399 = vmatpush1.msra.mxu0 0.0
      %3400 = vmatprep.subr.mxu0 0.0
      %3401 = vmatpush1.msra.mxu0 0.0
      %3402 = vmatprep.subr.mxu0 0.0
      %3403 = vmatpush1.msra.mxu0 0.0
      %3404 = vmatprep.subr.mxu0 0.0
      %3405 = vmatpush1.msra.mxu0 0.0
      %3406 = vmatprep.subr.mxu0 0.0
      %3407 = vmatpush1.msra.mxu0 0.0
      %3408 = vmatprep.subr.mxu0 0.0
      %3409 = vmatpush1.msra.mxu0 0.0
      %3410 = vmatprep.subr.mxu0 0.0
      %3411 = vmatpush1.msra.mxu0 0.0
      %3412 = vmatprep.subr.mxu0 0.0
      %3413 = vmatpush1.msra.mxu0 0.0
      %3414 = vmatprep.subr.mxu0 0.0
      %3415 = vmatpush1.msra.mxu0 0.0
      %3416 = vmatprep.subr.mxu0 0.0
      %3417 = vmatpush1.msra.mxu0 0.0
      %3418 = vmatprep.subr.mxu0 0.0
      %3419 = vmatpush1.msra.mxu0 0.0
      %3420 = vmatprep.subr.mxu0 0.0
      %3421 = vmatpush1.msra.mxu0 0.0
      %3422 = vmatprep.subr.mxu0 0.0
      %3423 = vmatpush1.msra.mxu0 0.0
      %3424 = vmatprep.subr.mxu0 0.0
      %3425 = vmatpush1.msra.mxu0 0.0
      %3426 = vmatprep.subr.mxu0 0.0
      %3427 = vmatpush1.msra.mxu0 0.0
      %3428 = vmatprep.mubr.f32.mxu0 0.0
      %3429 = vmatmul.mubr.f32.gmra.mrb[0].mxu0 %v2673
      %v3430 = vpop.f32.mrb[0].mxu0
      %v3431 = vadd.f32 %v2669, %v3430
      %v3432 = vpop.f32.mrb[0].mxu0
      %v3433 = vadd.f32 %v2669, %v3432
      %3434 = vdwg.mxu0
      %3435 = vmatprep.subr.mxu0 %v2484
      %3436 = vmatpush1.msra.mxu0 %v2483
      %3437 = vmatprep.subr.mxu0 %v2524
      %3438 = vmatpush1.msra.mxu0 %v2523
      %3439 = vmatprep.subr.mxu0 %v2564
      %3440 = vmatpush1.msra.mxu0 %v2563
      %3441 = vmatprep.subr.mxu0 %v2604
      %3442 = vmatpush1.msra.mxu0 %v2603
      %3443 = vmatprep.subr.mxu0 %v2734
      %3444 = vmatpush1.msra.mxu0 %v2731
      %3445 = vmatprep.subr.mxu0 0.0
      %3446 = vmatpush1.msra.mxu0 0.0
      %3447 = vmatprep.subr.mxu0 0.0
      %3448 = vmatpush1.msra.mxu0 0.0
      %3449 = vmatprep.subr.mxu0 0.0
      %3450 = vmatpush1.msra.mxu0 0.0
      %3451 = vmatprep.subr.mxu0 0.0
      %3452 = vmatpush1.msra.mxu0 0.0
      %3453 = vmatprep.subr.mxu0 0.0
      %3454 = vmatpush1.msra.mxu0 0.0
      %3455 = vmatprep.subr.mxu0 0.0
      %3456 = vmatpush1.msra.mxu0 0.0
      %3457 = vmatprep.subr.mxu0 0.0
      %3458 = vmatpush1.msra.mxu0 0.0
      %3459 = vmatprep.subr.mxu0 0.0
      %3460 = vmatpush1.msra.mxu0 0.0
      %3461 = vmatprep.subr.mxu0 0.0
      %3462 = vmatpush1.msra.mxu0 0.0
      %3463 = vmatprep.subr.mxu0 0.0
      %3464 = vmatpush1.msra.mxu0 0.0
      %3465 = vmatprep.subr.mxu0 0.0
      %3466 = vmatpush1.msra.mxu0 0.0
      %3467 = vmatprep.subr.mxu0 0.0
      %3468 = vmatpush1.msra.mxu0 0.0
      %3469 = vmatprep.subr.mxu0 0.0
      %3470 = vmatpush1.msra.mxu0 0.0
      %3471 = vmatprep.subr.mxu0 0.0
      %3472 = vmatpush1.msra.mxu0 0.0
      %3473 = vmatprep.subr.mxu0 0.0
      %3474 = vmatpush1.msra.mxu0 0.0
      %3475 = vmatprep.subr.mxu0 0.0
      %3476 = vmatpush1.msra.mxu0 0.0
      %3477 = vmatprep.subr.mxu0 0.0
      %3478 = vmatpush1.msra.mxu0 0.0
      %3479 = vmatprep.subr.mxu0 0.0
      %3480 = vmatpush1.msra.mxu0 0.0
      %3481 = vmatprep.subr.mxu0 0.0
      %3482 = vmatpush1.msra.mxu0 0.0
      %3483 = vmatprep.subr.mxu0 0.0
      %3484 = vmatpush1.msra.mxu0 0.0
      %3485 = vmatprep.subr.mxu0 0.0
      %3486 = vmatpush1.msra.mxu0 0.0
      %3487 = vmatprep.subr.mxu0 0.0
      %3488 = vmatpush1.msra.mxu0 0.0
      %3489 = vmatprep.subr.mxu0 0.0
      %3490 = vmatpush1.msra.mxu0 0.0
      %3491 = vmatprep.subr.mxu0 0.0
      %3492 = vmatpush1.msra.mxu0 0.0
      %3493 = vmatprep.subr.mxu0 0.0
      %3494 = vmatpush1.msra.mxu0 0.0
      %3495 = vmatprep.subr.mxu0 0.0
      %3496 = vmatpush1.msra.mxu0 0.0
      %3497 = vmatprep.subr.mxu0 0.0
      %3498 = vmatpush1.msra.mxu0 0.0
      %3499 = vmatprep.mubr.f32.mxu0 0.0
      %3500 = vmatmul.mubr.f32.gmra.mrb[0].mxu0 %v2673
      %v3501 = vpop.f32.mrb[0].mxu0
      %v3502 = vadd.f32 %v2669, %v3501
      %v3503 = vpop.f32.mrb[0].mxu0
      %v3504 = vadd.f32 %v2669, %v3503
      %3505 = vdwg.mxu0
      %3506 = vmatprep.subr.mxu0 %v2486
      %3507 = vmatpush1.msra.mxu0 %v2485
      %3508 = vmatprep.subr.mxu0 %v2526
      %3509 = vmatpush1.msra.mxu0 %v2525
      %3510 = vmatprep.subr.mxu0 %v2566
      %3511 = vmatpush1.msra.mxu0 %v2565
      %3512 = vmatprep.subr.mxu0 %v2606
      %3513 = vmatpush1.msra.mxu0 %v2605
      %3514 = vmatprep.subr.mxu0 %v2740
      %3515 = vmatpush1.msra.mxu0 %v2737
      %3516 = vmatprep.subr.mxu0 0.0
      %3517 = vmatpush1.msra.mxu0 0.0
      %3518 = vmatprep.subr.mxu0 0.0
      %3519 = vmatpush1.msra.mxu0 0.0
      %3520 = vmatprep.subr.mxu0 0.0
      %3521 = vmatpush1.msra.mxu0 0.0
      %3522 = vmatprep.subr.mxu0 0.0
      %3523 = vmatpush1.msra.mxu0 0.0
      %3524 = vmatprep.subr.mxu0 0.0
      %3525 = vmatpush1.msra.mxu0 0.0
      %3526 = vmatprep.subr.mxu0 0.0
      %3527 = vmatpush1.msra.mxu0 0.0
      %3528 = vmatprep.subr.mxu0 0.0
      %3529 = vmatpush1.msra.mxu0 0.0
      %3530 = vmatprep.subr.mxu0 0.0
      %3531 = vmatpush1.msra.mxu0 0.0
      %3532 = vmatprep.subr.mxu0 0.0
      %3533 = vmatpush1.msra.mxu0 0.0
      %3534 = vmatprep.subr.mxu0 0.0
      %3535 = vmatpush1.msra.mxu0 0.0
      %3536 = vmatprep.subr.mxu0 0.0
      %3537 = vmatpush1.msra.mxu0 0.0
      %3538 = vmatprep.subr.mxu0 0.0
      %3539 = vmatpush1.msra.mxu0 0.0
      %3540 = vmatprep.subr.mxu0 0.0
      %3541 = vmatpush1.msra.mxu0 0.0
      %3542 = vmatprep.subr.mxu0 0.0
      %3543 = vmatpush1.msra.mxu0 0.0
      %3544 = vmatprep.subr.mxu0 0.0
      %3545 = vmatpush1.msra.mxu0 0.0
      %3546 = vmatprep.subr.mxu0 0.0
      %3547 = vmatpush1.msra.mxu0 0.0
      %3548 = vmatprep.subr.mxu0 0.0
      %3549 = vmatpush1.msra.mxu0 0.0
      %3550 = vmatprep.subr.mxu0 0.0
      %3551 = vmatpush1.msra.mxu0 0.0
      %3552 = vmatprep.subr.mxu0 0.0
      %3553 = vmatpush1.msra.mxu0 0.0
      %3554 = vmatprep.subr.mxu0 0.0
      %3555 = vmatpush1.msra.mxu0 0.0
      %3556 = vmatprep.subr.mxu0 0.0
      %3557 = vmatpush1.msra.mxu0 0.0
      %3558 = vmatprep.subr.mxu0 0.0
      %3559 = vmatpush1.msra.mxu0 0.0
      %3560 = vmatprep.subr.mxu0 0.0
      %3561 = vmatpush1.msra.mxu0 0.0
      %3562 = vmatprep.subr.mxu0 0.0
      %3563 = vmatpush1.msra.mxu0 0.0
      %3564 = vmatprep.subr.mxu0 0.0
      %3565 = vmatpush1.msra.mxu0 0.0
      %3566 = vmatprep.subr.mxu0 0.0
      %3567 = vmatpush1.msra.mxu0 0.0
      %3568 = vmatprep.subr.mxu0 0.0
      %3569 = vmatpush1.msra.mxu0 0.0
      %3570 = vmatprep.mubr.f32.mxu0 0.0
      %3571 = vmatmul.mubr.f32.gmra.mrb[0].mxu0 %v2673
      %v3572 = vpop.f32.mrb[0].mxu0
      %v3573 = vadd.f32 %v2669, %v3572
      %v3574 = vpop.f32.mrb[0].mxu0
      %v3575 = vadd.f32 %v2669, %v3574
      %3576 = vdwg.mxu0
      %3577 = vmatprep.subr.mxu0 %v2488
      %3578 = vmatpush1.msra.mxu0 %v2487
      %3579 = vmatprep.subr.mxu0 %v2528
      %3580 = vmatpush1.msra.mxu0 %v2527
      %3581 = vmatprep.subr.mxu0 %v2568
      %3582 = vmatpush1.msra.mxu0 %v2567
      %3583 = vmatprep.subr.mxu0 %v2608
      %3584 = vmatpush1.msra.mxu0 %v2607
      %3585 = vmatprep.subr.mxu0 %v2746
      %3586 = vmatpush1.msra.mxu0 %v2743
      %3587 = vmatprep.subr.mxu0 0.0
      %3588 = vmatpush1.msra.mxu0 0.0
      %3589 = vmatprep.subr.mxu0 0.0
      %3590 = vmatpush1.msra.mxu0 0.0
      %3591 = vmatprep.subr.mxu0 0.0
      %3592 = vmatpush1.msra.mxu0 0.0
      %3593 = vmatprep.subr.mxu0 0.0
      %3594 = vmatpush1.msra.mxu0 0.0
      %3595 = vmatprep.subr.mxu0 0.0
      %3596 = vmatpush1.msra.mxu0 0.0
      %3597 = vmatprep.subr.mxu0 0.0
      %3598 = vmatpush1.msra.mxu0 0.0
      %3599 = vmatprep.subr.mxu0 0.0
      %3600 = vmatpush1.msra.mxu0 0.0
      %3601 = vmatprep.subr.mxu0 0.0
      %3602 = vmatpush1.msra.mxu0 0.0
      %3603 = vmatprep.subr.mxu0 0.0
      %3604 = vmatpush1.msra.mxu0 0.0
      %3605 = vmatprep.subr.mxu0 0.0
      %3606 = vmatpush1.msra.mxu0 0.0
      %3607 = vmatprep.subr.mxu0 0.0
      %3608 = vmatpush1.msra.mxu0 0.0
      %3609 = vmatprep.subr.mxu0 0.0
      %3610 = vmatpush1.msra.mxu0 0.0
      %3611 = vmatprep.subr.mxu0 0.0
      %3612 = vmatpush1.msra.mxu0 0.0
      %3613 = vmatprep.subr.mxu0 0.0
      %3614 = vmatpush1.msra.mxu0 0.0
      %3615 = vmatprep.subr.mxu0 0.0
      %3616 = vmatpush1.msra.mxu0 0.0
      %3617 = vmatprep.subr.mxu0 0.0
      %3618 = vmatpush1.msra.mxu0 0.0
      %3619 = vmatprep.subr.mxu0 0.0
      %3620 = vmatpush1.msra.mxu0 0.0
      %3621 = vmatprep.subr.mxu0 0.0
      %3622 = vmatpush1.msra.mxu0 0.0
      %3623 = vmatprep.subr.mxu0 0.0
      %3624 = vmatpush1.msra.mxu0 0.0
      %3625 = vmatprep.subr.mxu0 0.0
      %3626 = vmatpush1.msra.mxu0 0.0
      %3627 = vmatprep.subr.mxu0 0.0
      %3628 = vmatpush1.msra.mxu0 0.0
      %3629 = vmatprep.subr.mxu0 0.0
      %3630 = vmatpush1.msra.mxu0 0.0
      %3631 = vmatprep.subr.mxu0 0.0
      %3632 = vmatpush1.msra.mxu0 0.0
      %3633 = vmatprep.subr.mxu0 0.0
      %3634 = vmatpush1.msra.mxu0 0.0
      %3635 = vmatprep.subr.mxu0 0.0
      %3636 = vmatpush1.msra.mxu0 0.0
      %3637 = vmatprep.subr.mxu0 0.0
      %3638 = vmatpush1.msra.mxu0 0.0
      %3639 = vmatprep.subr.mxu0 0.0
      %3640 = vmatpush1.msra.mxu0 0.0
      %3641 = vmatprep.mubr.f32.mxu0 0.0
      %3642 = vmatmul.mubr.f32.gmra.mrb[0].mxu0 %v2673
      %v3643 = vpop.f32.mrb[0].mxu0
      %v3644 = vadd.f32 %v2669, %v3643
      %v3645 = vpop.f32.mrb[0].mxu0
      %v3646 = vadd.f32 %v2669, %v3645
      %3647 = vdwg.mxu0
      %3648 = vmatprep.subr.mxu0 %v2490
      %3649 = vmatpush1.msra.mxu0 %v2489
      %3650 = vmatprep.subr.mxu0 %v2530
      %3651 = vmatpush1.msra.mxu0 %v2529
      %3652 = vmatprep.subr.mxu0 %v2570
      %3653 = vmatpush1.msra.mxu0 %v2569
      %3654 = vmatprep.subr.mxu0 %v2610
      %3655 = vmatpush1.msra.mxu0 %v2609
      %3656 = vmatprep.subr.mxu0 %v2752
      %3657 = vmatpush1.msra.mxu0 %v2749
      %3658 = vmatprep.subr.mxu0 0.0
      %3659 = vmatpush1.msra.mxu0 0.0
      %3660 = vmatprep.subr.mxu0 0.0
      %3661 = vmatpush1.msra.mxu0 0.0
      %3662 = vmatprep.subr.mxu0 0.0
      %3663 = vmatpush1.msra.mxu0 0.0
      %3664 = vmatprep.subr.mxu0 0.0
      %3665 = vmatpush1.msra.mxu0 0.0
      %3666 = vmatprep.subr.mxu0 0.0
      %3667 = vmatpush1.msra.mxu0 0.0
      %3668 = vmatprep.subr.mxu0 0.0
      %3669 = vmatpush1.msra.mxu0 0.0
      %3670 = vmatprep.subr.mxu0 0.0
      %3671 = vmatpush1.msra.mxu0 0.0
      %3672 = vmatprep.subr.mxu0 0.0
      %3673 = vmatpush1.msra.mxu0 0.0
      %3674 = vmatprep.subr.mxu0 0.0
      %3675 = vmatpush1.msra.mxu0 0.0
      %3676 = vmatprep.subr.mxu0 0.0
      %3677 = vmatpush1.msra.mxu0 0.0
      %3678 = vmatprep.subr.mxu0 0.0
      %3679 = vmatpush1.msra.mxu0 0.0
      %3680 = vmatprep.subr.mxu0 0.0
      %3681 = vmatpush1.msra.mxu0 0.0
      %3682 = vmatprep.subr.mxu0 0.0
      %3683 = vmatpush1.msra.mxu0 0.0
      %3684 = vmatprep.subr.mxu0 0.0
      %3685 = vmatpush1.msra.mxu0 0.0
      %3686 = vmatprep.subr.mxu0 0.0
      %3687 = vmatpush1.msra.mxu0 0.0
      %3688 = vmatprep.subr.mxu0 0.0
      %3689 = vmatpush1.msra.mxu0 0.0
      %3690 = vmatprep.subr.mxu0 0.0
      %3691 = vmatpush1.msra.mxu0 0.0
      %3692 = vmatprep.subr.mxu0 0.0
      %3693 = vmatpush1.msra.mxu0 0.0
      %3694 = vmatprep.subr.mxu0 0.0
      %3695 = vmatpush1.msra.mxu0 0.0
      %3696 = vmatprep.subr.mxu0 0.0
      %3697 = vmatpush1.msra.mxu0 0.0
      %3698 = vmatprep.subr.mxu0 0.0
      %3699 = vmatpush1.msra.mxu0 0.0
      %3700 = vmatprep.subr.mxu0 0.0
      %3701 = vmatpush1.msra.mxu0 0.0
      %3702 = vmatprep.subr.mxu0 0.0
      %3703 = vmatpush1.msra.mxu0 0.0
      %3704 = vmatprep.subr.mxu0 0.0
      %3705 = vmatpush1.msra.mxu0 0.0
      %3706 = vmatprep.subr.mxu0 0.0
      %3707 = vmatpush1.msra.mxu0 0.0
      %3708 = vmatprep.subr.mxu0 0.0
      %3709 = vmatpush1.msra.mxu0 0.0
      %3710 = vmatprep.subr.mxu0 0.0
      %3711 = vmatpush1.msra.mxu0 0.0
      %3712 = vmatprep.mubr.f32.mxu0 0.0
      %3713 = vmatmul.mubr.f32.gmra.mrb[0].mxu0 %v2673
      %v3714 = vpop.f32.mrb[0].mxu0
      %v3715 = vadd.f32 %v2669, %v3714
      %v3716 = vpop.f32.mrb[0].mxu0
      %v3717 = vadd.f32 %v2669, %v3716
      %3718 = vdwg.mxu0
      %3719 = vmatprep.subr.mxu0 %v2492
      %3720 = vmatpush1.msra.mxu0 %v2491
      %3721 = vmatprep.subr.mxu0 %v2532
      %3722 = vmatpush1.msra.mxu0 %v2531
      %3723 = vmatprep.subr.mxu0 %v2572
      %3724 = vmatpush1.msra.mxu0 %v2571
      %3725 = vmatprep.subr.mxu0 %v2612
      %3726 = vmatpush1.msra.mxu0 %v2611
      %3727 = vmatprep.subr.mxu0 %v2758
      %3728 = vmatpush1.msra.mxu0 %v2755
      %3729 = vmatprep.subr.mxu0 0.0
      %3730 = vmatpush1.msra.mxu0 0.0
      %3731 = vmatprep.subr.mxu0 0.0
      %3732 = vmatpush1.msra.mxu0 0.0
      %3733 = vmatprep.subr.mxu0 0.0
      %3734 = vmatpush1.msra.mxu0 0.0
      %3735 = vmatprep.subr.mxu0 0.0
      %3736 = vmatpush1.msra.mxu0 0.0
      %3737 = vmatprep.subr.mxu0 0.0
      %3738 = vmatpush1.msra.mxu0 0.0
      %3739 = vmatprep.subr.mxu0 0.0
      %3740 = vmatpush1.msra.mxu0 0.0
      %3741 = vmatprep.subr.mxu0 0.0
      %3742 = vmatpush1.msra.mxu0 0.0
      %3743 = vmatprep.subr.mxu0 0.0
      %3744 = vmatpush1.msra.mxu0 0.0
      %3745 = vmatprep.subr.mxu0 0.0
      %3746 = vmatpush1.msra.mxu0 0.0
      %3747 = vmatprep.subr.mxu0 0.0
      %3748 = vmatpush1.msra.mxu0 0.0
      %3749 = vmatprep.subr.mxu0 0.0
      %3750 = vmatpush1.msra.mxu0 0.0
      %3751 = vmatprep.subr.mxu0 0.0
      %3752 = vmatpush1.msra.mxu0 0.0
      %3753 = vmatprep.subr.mxu0 0.0
      %3754 = vmatpush1.msra.mxu0 0.0
      %3755 = vmatprep.subr.mxu0 0.0
      %3756 = vmatpush1.msra.mxu0 0.0
      %3757 = vmatprep.subr.mxu0 0.0
      %3758 = vmatpush1.msra.mxu0 0.0
      %3759 = vmatprep.subr.mxu0 0.0
      %3760 = vmatpush1.msra.mxu0 0.0
      %3761 = vmatprep.subr.mxu0 0.0
      %3762 = vmatpush1.msra.mxu0 0.0
      %3763 = vmatprep.subr.mxu0 0.0
      %3764 = vmatpush1.msra.mxu0 0.0
      %3765 = vmatprep.subr.mxu0 0.0
      %3766 = vmatpush1.msra.mxu0 0.0
      %3767 = vmatprep.subr.mxu0 0.0
      %3768 = vmatpush1.msra.mxu0 0.0
      %3769 = vmatprep.subr.mxu0 0.0
      %3770 = vmatpush1.msra.mxu0 0.0
      %3771 = vmatprep.subr.mxu0 0.0
      %3772 = vmatpush1.msra.mxu0 0.0
      %3773 = vmatprep.subr.mxu0 0.0
      %3774 = vmatpush1.msra.mxu0 0.0
      %3775 = vmatprep.subr.mxu0 0.0
      %3776 = vmatpush1.msra.mxu0 0.0
      %3777 = vmatprep.subr.mxu0 0.0
      %3778 = vmatpush1.msra.mxu0 0.0
      %3779 = vmatprep.subr.mxu0 0.0
      %3780 = vmatpush1.msra.mxu0 0.0
      %3781 = vmatprep.subr.mxu0 0.0
      %3782 = vmatpush1.msra.mxu0 0.0
      %3783 = vmatprep.mubr.f32.mxu0 0.0
      %3784 = vmatmul.mubr.f32.gmra.mrb[0].mxu0 %v2673
      %v3785 = vpop.f32.mrb[0].mxu0
      %v3786 = vadd.f32 %v2669, %v3785
      %v3787 = vpop.f32.mrb[0].mxu0
      %v3788 = vadd.f32 %v2669, %v3787
      %3789 = vdwg.mxu0
      %3790 = vmatprep.subr.mxu0 %v2494
      %3791 = vmatpush1.msra.mxu0 %v2493
      %3792 = vmatprep.subr.mxu0 %v2534
      %3793 = vmatpush1.msra.mxu0 %v2533
      %3794 = vmatprep.subr.mxu0 %v2574
      %3795 = vmatpush1.msra.mxu0 %v2573
      %3796 = vmatprep.subr.mxu0 %v2614
      %3797 = vmatpush1.msra.mxu0 %v2613
      %3798 = vmatprep.subr.mxu0 %v2764
      %3799 = vmatpush1.msra.mxu0 %v2761
      %3800 = vmatprep.subr.mxu0 0.0
      %3801 = vmatpush1.msra.mxu0 0.0
      %3802 = vmatprep.subr.mxu0 0.0
      %3803 = vmatpush1.msra.mxu0 0.0
      %3804 = vmatprep.subr.mxu0 0.0
      %3805 = vmatpush1.msra.mxu0 0.0
      %3806 = vmatprep.subr.mxu0 0.0
      %3807 = vmatpush1.msra.mxu0 0.0
      %3808 = vmatprep.subr.mxu0 0.0
      %3809 = vmatpush1.msra.mxu0 0.0
      %3810 = vmatprep.subr.mxu0 0.0
      %3811 = vmatpush1.msra.mxu0 0.0
      %3812 = vmatprep.subr.mxu0 0.0
      %3813 = vmatpush1.msra.mxu0 0.0
      %3814 = vmatprep.subr.mxu0 0.0
      %3815 = vmatpush1.msra.mxu0 0.0
      %3816 = vmatprep.subr.mxu0 0.0
      %3817 = vmatpush1.msra.mxu0 0.0
      %3818 = vmatprep.subr.mxu0 0.0
      %3819 = vmatpush1.msra.mxu0 0.0
      %3820 = vmatprep.subr.mxu0 0.0
      %3821 = vmatpush1.msra.mxu0 0.0
      %3822 = vmatprep.subr.mxu0 0.0
      %3823 = vmatpush1.msra.mxu0 0.0
      %3824 = vmatprep.subr.mxu0 0.0
      %3825 = vmatpush1.msra.mxu0 0.0
      %3826 = vmatprep.subr.mxu0 0.0
      %3827 = vmatpush1.msra.mxu0 0.0
      %3828 = vmatprep.subr.mxu0 0.0
      %3829 = vmatpush1.msra.mxu0 0.0
      %3830 = vmatprep.subr.mxu0 0.0
      %3831 = vmatpush1.msra.mxu0 0.0
      %3832 = vmatprep.subr.mxu0 0.0
      %3833 = vmatpush1.msra.mxu0 0.0
      %3834 = vmatprep.subr.mxu0 0.0
      %3835 = vmatpush1.msra.mxu0 0.0
      %3836 = vmatprep.subr.mxu0 0.0
      %3837 = vmatpush1.msra.mxu0 0.0
      %3838 = vmatprep.subr.mxu0 0.0
      %3839 = vmatpush1.msra.mxu0 0.0
      %3840 = vmatprep.subr.mxu0 0.0
      %3841 = vmatpush1.msra.mxu0 0.0
      %3842 = vmatprep.subr.mxu0 0.0
      %3843 = vmatpush1.msra.mxu0 0.0
      %3844 = vmatprep.subr.mxu0 0.0
      %3845 = vmatpush1.msra.mxu0 0.0
      %3846 = vmatprep.subr.mxu0 0.0
      %3847 = vmatpush1.msra.mxu0 0.0
      %3848 = vmatprep.subr.mxu0 0.0
      %3849 = vmatpush1.msra.mxu0 0.0
      %3850 = vmatprep.subr.mxu0 0.0
      %3851 = vmatpush1.msra.mxu0 0.0
      %3852 = vmatprep.subr.mxu0 0.0
      %3853 = vmatpush1.msra.mxu0 0.0
      %3854 = vmatprep.mubr.f32.mxu0 0.0
      %3855 = vmatmul.mubr.f32.gmra.mrb[0].mxu0 %v2673
      %v3856 = vpop.f32.mrb[0].mxu0
      %v3857 = vadd.f32 %v2669, %v3856
      %v3858 = vpop.f32.mrb[0].mxu0
      %v3859 = vadd.f32 %v2669, %v3858
      %3860 = vdwg.mxu0
      %3861 = vmatprep.subr.mxu0 %v2496
      %3862 = vmatpush1.msra.mxu0 %v2495
      %3863 = vmatprep.subr.mxu0 %v2536
      %3864 = vmatpush1.msra.mxu0 %v2535
      %3865 = vmatprep.subr.mxu0 %v2576
      %3866 = vmatpush1.msra.mxu0 %v2575
      %3867 = vmatprep.subr.mxu0 %v2616
      %3868 = vmatpush1.msra.mxu0 %v2615
      %3869 = vmatprep.subr.mxu0 %v2770
      %3870 = vmatpush1.msra.mxu0 %v2767
      %3871 = vmatprep.subr.mxu0 0.0
      %3872 = vmatpush1.msra.mxu0 0.0
      %3873 = vmatprep.subr.mxu0 0.0
      %3874 = vmatpush1.msra.mxu0 0.0
      %3875 = vmatprep.subr.mxu0 0.0
      %3876 = vmatpush1.msra.mxu0 0.0
      %3877 = vmatprep.subr.mxu0 0.0
      %3878 = vmatpush1.msra.mxu0 0.0
      %3879 = vmatprep.subr.mxu0 0.0
      %3880 = vmatpush1.msra.mxu0 0.0
      %3881 = vmatprep.subr.mxu0 0.0
      %3882 = vmatpush1.msra.mxu0 0.0
      %3883 = vmatprep.subr.mxu0 0.0
      %3884 = vmatpush1.msra.mxu0 0.0
      %3885 = vmatprep.subr.mxu0 0.0
      %3886 = vmatpush1.msra.mxu0 0.0
      %3887 = vmatprep.subr.mxu0 0.0
      %3888 = vmatpush1.msra.mxu0 0.0
      %3889 = vmatprep.subr.mxu0 0.0
      %3890 = vmatpush1.msra.mxu0 0.0
      %3891 = vmatprep.subr.mxu0 0.0
      %3892 = vmatpush1.msra.mxu0 0.0
      %3893 = vmatprep.subr.mxu0 0.0
      %3894 = vmatpush1.msra.mxu0 0.0
      %3895 = vmatprep.subr.mxu0 0.0
      %3896 = vmatpush1.msra.mxu0 0.0
      %3897 = vmatprep.subr.mxu0 0.0
      %3898 = vmatpush1.msra.mxu0 0.0
      %3899 = vmatprep.subr.mxu0 0.0
      %3900 = vmatpush1.msra.mxu0 0.0
      %3901 = vmatprep.subr.mxu0 0.0
      %3902 = vmatpush1.msra.mxu0 0.0
      %3903 = vmatprep.subr.mxu0 0.0
      %3904 = vmatpush1.msra.mxu0 0.0
      %3905 = vmatprep.subr.mxu0 0.0
      %3906 = vmatpush1.msra.mxu0 0.0
      %3907 = vmatprep.subr.mxu0 0.0
      %3908 = vmatpush1.msra.mxu0 0.0
      %3909 = vmatprep.subr.mxu0 0.0
      %3910 = vmatpush1.msra.mxu0 0.0
      %3911 = vmatprep.subr.mxu0 0.0
      %3912 = vmatpush1.msra.mxu0 0.0
      %3913 = vmatprep.subr.mxu0 0.0
      %3914 = vmatpush1.msra.mxu0 0.0
      %3915 = vmatprep.subr.mxu0 0.0
      %3916 = vmatpush1.msra.mxu0 0.0
      %3917 = vmatprep.subr.mxu0 0.0
      %3918 = vmatpush1.msra.mxu0 0.0
      %3919 = vmatprep.subr.mxu0 0.0
      %3920 = vmatpush1.msra.mxu0 0.0
      %3921 = vmatprep.subr.mxu0 0.0
      %3922 = vmatpush1.msra.mxu0 0.0
      %3923 = vmatprep.subr.mxu0 0.0
      %3924 = vmatpush1.msra.mxu0 0.0
      %3925 = vmatprep.mubr.f32.mxu0 0.0
      %3926 = vmatmul.mubr.f32.gmra.mrb[0].mxu0 %v2673
      %v3927 = vpop.f32.mrb[0].mxu0
      %v3928 = vadd.f32 %v2669, %v3927
      %v3929 = vpop.f32.mrb[0].mxu0
      %v3930 = vadd.f32 %v2669, %v3929
      %3931 = vdwg.mxu0
      %3932 = vmatprep.subr.mxu0 %v2498
      %3933 = vmatpush1.msra.mxu0 %v2497
      %3934 = vmatprep.subr.mxu0 %v2538
      %3935 = vmatpush1.msra.mxu0 %v2537
      %3936 = vmatprep.subr.mxu0 %v2578
      %3937 = vmatpush1.msra.mxu0 %v2577
      %3938 = vmatprep.subr.mxu0 %v2618
      %3939 = vmatpush1.msra.mxu0 %v2617
      %3940 = vmatprep.subr.mxu0 %v2776
      %3941 = vmatpush1.msra.mxu0 %v2773
      %3942 = vmatprep.subr.mxu0 0.0
      %3943 = vmatpush1.msra.mxu0 0.0
      %3944 = vmatprep.subr.mxu0 0.0
      %3945 = vmatpush1.msra.mxu0 0.0
      %3946 = vmatprep.subr.mxu0 0.0
      %3947 = vmatpush1.msra.mxu0 0.0
      %3948 = vmatprep.subr.mxu0 0.0
      %3949 = vmatpush1.msra.mxu0 0.0
      %3950 = vmatprep.subr.mxu0 0.0
      %3951 = vmatpush1.msra.mxu0 0.0
      %3952 = vmatprep.subr.mxu0 0.0
      %3953 = vmatpush1.msra.mxu0 0.0
      %3954 = vmatprep.subr.mxu0 0.0
      %3955 = vmatpush1.msra.mxu0 0.0
      %3956 = vmatprep.subr.mxu0 0.0
      %3957 = vmatpush1.msra.mxu0 0.0
      %3958 = vmatprep.subr.mxu0 0.0
      %3959 = vmatpush1.msra.mxu0 0.0
      %3960 = vmatprep.subr.mxu0 0.0
      %3961 = vmatpush1.msra.mxu0 0.0
      %3962 = vmatprep.subr.mxu0 0.0
      %3963 = vmatpush1.msra.mxu0 0.0
      %3964 = vmatprep.subr.mxu0 0.0
      %3965 = vmatpush1.msra.mxu0 0.0
      %3966 = vmatprep.subr.mxu0 0.0
      %3967 = vmatpush1.msra.mxu0 0.0
      %3968 = vmatprep.subr.mxu0 0.0
      %3969 = vmatpush1.msra.mxu0 0.0
      %3970 = vmatprep.subr.mxu0 0.0
      %3971 = vmatpush1.msra.mxu0 0.0
      %3972 = vmatprep.subr.mxu0 0.0
      %3973 = vmatpush1.msra.mxu0 0.0
      %3974 = vmatprep.subr.mxu0 0.0
      %3975 = vmatpush1.msra.mxu0 0.0
      %3976 = vmatprep.subr.mxu0 0.0
      %3977 = vmatpush1.msra.mxu0 0.0
      %3978 = vmatprep.subr.mxu0 0.0
      %3979 = vmatpush1.msra.mxu0 0.0
      %3980 = vmatprep.subr.mxu0 0.0
      %3981 = vmatpush1.msra.mxu0 0.0
      %3982 = vmatprep.subr.mxu0 0.0
      %3983 = vmatpush1.msra.mxu0 0.0
      %3984 = vmatprep.subr.mxu0 0.0
      %3985 = vmatpush1.msra.mxu0 0.0
      %3986 = vmatprep.subr.mxu0 0.0
      %3987 = vmatpush1.msra.mxu0 0.0
      %3988 = vmatprep.subr.mxu0 0.0
      %3989 = vmatpush1.msra.mxu0 0.0
      %3990 = vmatprep.subr.mxu0 0.0
      %3991 = vmatpush1.msra.mxu0 0.0
      %3992 = vmatprep.subr.mxu0 0.0
      %3993 = vmatpush1.msra.mxu0 0.0
      %3994 = vmatprep.subr.mxu0 0.0
      %3995 = vmatpush1.msra.mxu0 0.0
      %3996 = vmatprep.mubr.f32.mxu0 0.0
      %3997 = vmatmul.mubr.f32.gmra.mrb[0].mxu0 %v2673
      %v3998 = vpop.f32.mrb[0].mxu0
      %v3999 = vadd.f32 %v2669, %v3998
      %v4000 = vpop.f32.mrb[0].mxu0
      %v4001 = vadd.f32 %v2669, %v4000
      %4002 = vdwg.mxu0
      %4003 = vmatprep.subr.mxu0 %v2500
      %4004 = vmatpush1.msra.mxu0 %v2499
      %4005 = vmatprep.subr.mxu0 %v2540
      %4006 = vmatpush1.msra.mxu0 %v2539
      %4007 = vmatprep.subr.mxu0 %v2580
      %4008 = vmatpush1.msra.mxu0 %v2579
      %4009 = vmatprep.subr.mxu0 %v2620
      %4010 = vmatpush1.msra.mxu0 %v2619
      %4011 = vmatprep.subr.mxu0 %v2782
      %4012 = vmatpush1.msra.mxu0 %v2779
      %4013 = vmatprep.subr.mxu0 0.0
      %4014 = vmatpush1.msra.mxu0 0.0
      %4015 = vmatprep.subr.mxu0 0.0
      %4016 = vmatpush1.msra.mxu0 0.0
      %4017 = vmatprep.subr.mxu0 0.0
      %4018 = vmatpush1.msra.mxu0 0.0
      %4019 = vmatprep.subr.mxu0 0.0
      %4020 = vmatpush1.msra.mxu0 0.0
      %4021 = vmatprep.subr.mxu0 0.0
      %4022 = vmatpush1.msra.mxu0 0.0
      %4023 = vmatprep.subr.mxu0 0.0
      %4024 = vmatpush1.msra.mxu0 0.0
      %4025 = vmatprep.subr.mxu0 0.0
      %4026 = vmatpush1.msra.mxu0 0.0
      %4027 = vmatprep.subr.mxu0 0.0
      %4028 = vmatpush1.msra.mxu0 0.0
      %4029 = vmatprep.subr.mxu0 0.0
      %4030 = vmatpush1.msra.mxu0 0.0
      %4031 = vmatprep.subr.mxu0 0.0
      %4032 = vmatpush1.msra.mxu0 0.0
      %4033 = vmatprep.subr.mxu0 0.0
      %4034 = vmatpush1.msra.mxu0 0.0
      %4035 = vmatprep.subr.mxu0 0.0
      %4036 = vmatpush1.msra.mxu0 0.0
      %4037 = vmatprep.subr.mxu0 0.0
      %4038 = vmatpush1.msra.mxu0 0.0
      %4039 = vmatprep.subr.mxu0 0.0
      %4040 = vmatpush1.msra.mxu0 0.0
      %4041 = vmatprep.subr.mxu0 0.0
      %4042 = vmatpush1.msra.mxu0 0.0
      %4043 = vmatprep.subr.mxu0 0.0
      %4044 = vmatpush1.msra.mxu0 0.0
      %4045 = vmatprep.subr.mxu0 0.0
      %4046 = vmatpush1.msra.mxu0 0.0
      %4047 = vmatprep.subr.mxu0 0.0
      %4048 = vmatpush1.msra.mxu0 0.0
      %4049 = vmatprep.subr.mxu0 0.0
      %4050 = vmatpush1.msra.mxu0 0.0
      %4051 = vmatprep.subr.mxu0 0.0
      %4052 = vmatpush1.msra.mxu0 0.0
      %4053 = vmatprep.subr.mxu0 0.0
      %4054 = vmatpush1.msra.mxu0 0.0
      %4055 = vmatprep.subr.mxu0 0.0
      %4056 = vmatpush1.msra.mxu0 0.0
      %4057 = vmatprep.subr.mxu0 0.0
      %4058 = vmatpush1.msra.mxu0 0.0
      %4059 = vmatprep.subr.mxu0 0.0
      %4060 = vmatpush1.msra.mxu0 0.0
      %4061 = vmatprep.subr.mxu0 0.0
      %4062 = vmatpush1.msra.mxu0 0.0
      %4063 = vmatprep.subr.mxu0 0.0
      %4064 = vmatpush1.msra.mxu0 0.0
      %4065 = vmatprep.subr.mxu0 0.0
      %4066 = vmatpush1.msra.mxu0 0.0
      %4067 = vmatprep.mubr.f32.mxu0 0.0
      %4068 = vmatmul.mubr.f32.gmra.mrb[0].mxu0 %v2673
      %v4069 = vpop.f32.mrb[0].mxu0
      %v4070 = vadd.f32 %v2669, %v4069
      %v4071 = vpop.f32.mrb[0].mxu0
      %v4072 = vadd.f32 %v2669, %v4071
      %4073 = vdwg.mxu0
      %4074 = vmatprep.subr.mxu0 %v2502
      %4075 = vmatpush1.msra.mxu0 %v2501
      %4076 = vmatprep.subr.mxu0 %v2542
      %4077 = vmatpush1.msra.mxu0 %v2541
      %4078 = vmatprep.subr.mxu0 %v2582
      %4079 = vmatpush1.msra.mxu0 %v2581
      %4080 = vmatprep.subr.mxu0 %v2622
      %4081 = vmatpush1.msra.mxu0 %v2621
      %4082 = vmatprep.subr.mxu0 %v2788
      %4083 = vmatpush1.msra.mxu0 %v2785
      %4084 = vmatprep.subr.mxu0 0.0
      %4085 = vmatpush1.msra.mxu0 0.0
      %4086 = vmatprep.subr.mxu0 0.0
      %4087 = vmatpush1.msra.mxu0 0.0
      %4088 = vmatprep.subr.mxu0 0.0
      %4089 = vmatpush1.msra.mxu0 0.0
      %4090 = vmatprep.subr.mxu0 0.0
      %4091 = vmatpush1.msra.mxu0 0.0
      %4092 = vmatprep.subr.mxu0 0.0
      %4093 = vmatpush1.msra.mxu0 0.0
      %4094 = vmatprep.subr.mxu0 0.0
      %4095 = vmatpush1.msra.mxu0 0.0
      %4096 = vmatprep.subr.mxu0 0.0
      %4097 = vmatpush1.msra.mxu0 0.0
      %4098 = vmatprep.subr.mxu0 0.0
      %4099 = vmatpush1.msra.mxu0 0.0
      %4100 = vmatprep.subr.mxu0 0.0
      %4101 = vmatpush1.msra.mxu0 0.0
      %4102 = vmatprep.subr.mxu0 0.0
      %4103 = vmatpush1.msra.mxu0 0.0
      %4104 = vmatprep.subr.mxu0 0.0
      %4105 = vmatpush1.msra.mxu0 0.0
      %4106 = vmatprep.subr.mxu0 0.0
      %4107 = vmatpush1.msra.mxu0 0.0
      %4108 = vmatprep.subr.mxu0 0.0
      %4109 = vmatpush1.msra.mxu0 0.0
      %4110 = vmatprep.subr.mxu0 0.0
      %4111 = vmatpush1.msra.mxu0 0.0
      %4112 = vmatprep.subr.mxu0 0.0
      %4113 = vmatpush1.msra.mxu0 0.0
      %4114 = vmatprep.subr.mxu0 0.0
      %4115 = vmatpush1.msra.mxu0 0.0
      %4116 = vmatprep.subr.mxu0 0.0
      %4117 = vmatpush1.msra.mxu0 0.0
      %4118 = vmatprep.subr.mxu0 0.0
      %4119 = vmatpush1.msra.mxu0 0.0
      %4120 = vmatprep.subr.mxu0 0.0
      %4121 = vmatpush1.msra.mxu0 0.0
      %4122 = vmatprep.subr.mxu0 0.0
      %4123 = vmatpush1.msra.mxu0 0.0
      %4124 = vmatprep.subr.mxu0 0.0
      %4125 = vmatpush1.msra.mxu0 0.0
      %4126 = vmatprep.subr.mxu0 0.0
      %4127 = vmatpush1.msra.mxu0 0.0
      %4128 = vmatprep.subr.mxu0 0.0
      %4129 = vmatpush1.msra.mxu0 0.0
      %4130 = vmatprep.subr.mxu0 0.0
      %4131 = vmatpush1.msra.mxu0 0.0
      %4132 = vmatprep.subr.mxu0 0.0
      %4133 = vmatpush1.msra.mxu0 0.0
      %4134 = vmatprep.subr.mxu0 0.0
      %4135 = vmatpush1.msra.mxu0 0.0
      %4136 = vmatprep.subr.mxu0 0.0
      %4137 = vmatpush1.msra.mxu0 0.0
      %4138 = vmatprep.mubr.f32.mxu0 0.0
      %4139 = vmatmul.mubr.f32.gmra.mrb[0].mxu0 %v2673
      %v4140 = vpop.f32.mrb[0].mxu0
      %v4141 = vadd.f32 %v2669, %v4140
      %v4142 = vpop.f32.mrb[0].mxu0
      %v4143 = vadd.f32 %v2669, %v4142
      %4144 = vdwg.mxu0
      %4145 = vmatprep.subr.mxu0 %v2504
      %4146 = vmatpush1.msra.mxu0 %v2503
      %4147 = vmatprep.subr.mxu0 %v2544
      %4148 = vmatpush1.msra.mxu0 %v2543
      %4149 = vmatprep.subr.mxu0 %v2584
      %4150 = vmatpush1.msra.mxu0 %v2583
      %4151 = vmatprep.subr.mxu0 %v2624
      %4152 = vmatpush1.msra.mxu0 %v2623
      %4153 = vmatprep.subr.mxu0 %v2794
      %4154 = vmatpush1.msra.mxu0 %v2791
      %4155 = vmatprep.subr.mxu0 0.0
      %4156 = vmatpush1.msra.mxu0 0.0
      %4157 = vmatprep.subr.mxu0 0.0
      %4158 = vmatpush1.msra.mxu0 0.0
      %4159 = vmatprep.subr.mxu0 0.0
      %4160 = vmatpush1.msra.mxu0 0.0
      %4161 = vmatprep.subr.mxu0 0.0
      %4162 = vmatpush1.msra.mxu0 0.0
      %4163 = vmatprep.subr.mxu0 0.0
      %4164 = vmatpush1.msra.mxu0 0.0
      %4165 = vmatprep.subr.mxu0 0.0
      %4166 = vmatpush1.msra.mxu0 0.0
      %4167 = vmatprep.subr.mxu0 0.0
      %4168 = vmatpush1.msra.mxu0 0.0
      %4169 = vmatprep.subr.mxu0 0.0
      %4170 = vmatpush1.msra.mxu0 0.0
      %4171 = vmatprep.subr.mxu0 0.0
      %4172 = vmatpush1.msra.mxu0 0.0
      %4173 = vmatprep.subr.mxu0 0.0
      %4174 = vmatpush1.msra.mxu0 0.0
      %4175 = vmatprep.subr.mxu0 0.0
      %4176 = vmatpush1.msra.mxu0 0.0
      %4177 = vmatprep.subr.mxu0 0.0
      %4178 = vmatpush1.msra.mxu0 0.0
      %4179 = vmatprep.subr.mxu0 0.0
      %4180 = vmatpush1.msra.mxu0 0.0
      %4181 = vmatprep.subr.mxu0 0.0
      %4182 = vmatpush1.msra.mxu0 0.0
      %4183 = vmatprep.subr.mxu0 0.0
      %4184 = vmatpush1.msra.mxu0 0.0
      %4185 = vmatprep.subr.mxu0 0.0
      %4186 = vmatpush1.msra.mxu0 0.0
      %4187 = vmatprep.subr.mxu0 0.0
      %4188 = vmatpush1.msra.mxu0 0.0
      %4189 = vmatprep.subr.mxu0 0.0
      %4190 = vmatpush1.msra.mxu0 0.0
      %4191 = vmatprep.subr.mxu0 0.0
      %4192 = vmatpush1.msra.mxu0 0.0
      %4193 = vmatprep.subr.mxu0 0.0
      %4194 = vmatpush1.msra.mxu0 0.0
      %4195 = vmatprep.subr.mxu0 0.0
      %4196 = vmatpush1.msra.mxu0 0.0
      %4197 = vmatprep.subr.mxu0 0.0
      %4198 = vmatpush1.msra.mxu0 0.0
      %4199 = vmatprep.subr.mxu0 0.0
      %4200 = vmatpush1.msra.mxu0 0.0
      %4201 = vmatprep.subr.mxu0 0.0
      %4202 = vmatpush1.msra.mxu0 0.0
      %4203 = vmatprep.subr.mxu0 0.0
      %4204 = vmatpush1.msra.mxu0 0.0
      %4205 = vmatprep.subr.mxu0 0.0
      %4206 = vmatpush1.msra.mxu0 0.0
      %4207 = vmatprep.subr.mxu0 0.0
      %4208 = vmatpush1.msra.mxu0 0.0
      %4209 = vmatprep.mubr.f32.mxu0 0.0
      %4210 = vmatmul.mubr.f32.gmra.mrb[0].mxu0 %v2673
      %v4211 = vpop.f32.mrb[0].mxu0
      %v4212 = vadd.f32 %v2669, %v4211
      %v4213 = vpop.f32.mrb[0].mxu0
      %v4214 = vadd.f32 %v2669, %v4213
      %4215 = vdwg.mxu0
      %v4216 = vmax.f32 %v2863, 0.0
      %v4217 = vmax.f32 %v2865, 0.0
      %v4218 = vmax.f32 %v2934, 0.0
      %v4219 = vmax.f32 %v2936, 0.0
      %v4220 = vmax.f32 %v3005, 0.0
      %v4221 = vmax.f32 %v3007, 0.0
      %v4222 = vmax.f32 %v3076, 0.0
      %v4223 = vmax.f32 %v3078, 0.0
      %v4224 = vmax.f32 %v3147, 0.0
      %v4225 = vmax.f32 %v3149, 0.0
      %v4226 = vmax.f32 %v3218, 0.0
      %v4227 = vmax.f32 %v3220, 0.0
      %v4228 = vmax.f32 %v3289, 0.0
      %v4229 = vmax.f32 %v3291, 0.0
      %v4230 = vmax.f32 %v3360, 0.0
      %v4231 = vmax.f32 %v3362, 0.0
      %v4232 = vmax.f32 %v3431, 0.0
      %v4233 = vmax.f32 %v3433, 0.0
      %v4234 = vmax.f32 %v3502, 0.0
      %v4235 = vmax.f32 %v3504, 0.0
      %v4236 = vmax.f32 %v3573, 0.0
      %v4237 = vmax.f32 %v3575, 0.0
      %v4238 = vmax.f32 %v3644, 0.0
      %v4239 = vmax.f32 %v3646, 0.0
      %v4240 = vmax.f32 %v3715, 0.0
      %v4241 = vmax.f32 %v3717, 0.0
      %v4242 = vmax.f32 %v3786, 0.0
      %v4243 = vmax.f32 %v3788, 0.0
      %v4244 = vmax.f32 %v3857, 0.0
      %v4245 = vmax.f32 %v3859, 0.0
      %v4246 = vmax.f32 %v3928, 0.0
      %v4247 = vmax.f32 %v3930, 0.0
      %v4248 = vmax.f32 %v3999, 0.0
      %v4249 = vmax.f32 %v4001, 0.0
      %v4250 = vmax.f32 %v4070, 0.0
      %v4251 = vmax.f32 %v4072, 0.0
      %v4252 = vmax.f32 %v4141, 0.0
      %v4253 = vmax.f32 %v4143, 0.0
      %v4254 = vmax.f32 %v4212, 0.0
      %v4255 = vmax.f32 %v4214, 0.0
      %v4256 = vpack.c.bf16 %v4216, %v4216
      %v4257 = vpack.c.bf16 %v4217, %v4217
      %v4258 = vpack.c.bf16 %v4218, %v4218
      %v4259 = vpack.c.bf16 %v4219, %v4219
      %v4260 = vpack.c.bf16 %v4220, %v4220
      %v4261 = vpack.c.bf16 %v4221, %v4221
      %v4262 = vpack.c.bf16 %v4222, %v4222
      %v4263 = vpack.c.bf16 %v4223, %v4223
      %v4264 = vpack.c.bf16 %v4224, %v4224
      %v4265 = vpack.c.bf16 %v4225, %v4225
      %v4266 = vpack.c.bf16 %v4226, %v4226
      %v4267 = vpack.c.bf16 %v4227, %v4227
      %v4268 = vpack.c.bf16 %v4228, %v4228
      %v4269 = vpack.c.bf16 %v4229, %v4229
      %v4270 = vpack.c.bf16 %v4230, %v4230
      %v4271 = vpack.c.bf16 %v4231, %v4231
      %v4272 = vpack.c.bf16 %v4232, %v4232
      %v4273 = vpack.c.bf16 %v4233, %v4233
      %v4274 = vpack.c.bf16 %v4234, %v4234
      %v4275 = vpack.c.bf16 %v4235, %v4235
      %v4276 = vpack.c.bf16 %v4236, %v4236
      %v4277 = vpack.c.bf16 %v4237, %v4237
      %v4278 = vpack.c.bf16 %v4238, %v4238
      %v4279 = vpack.c.bf16 %v4239, %v4239
      %v4280 = vpack.c.bf16 %v4240, %v4240
      %v4281 = vpack.c.bf16 %v4241, %v4241
      %v4282 = vpack.c.bf16 %v4242, %v4242
      %v4283 = vpack.c.bf16 %v4243, %v4243
      %v4284 = vpack.c.bf16 %v4244, %v4244
      %v4285 = vpack.c.bf16 %v4245, %v4245
      %v4286 = vpack.c.bf16 %v4246, %v4246
      %v4287 = vpack.c.bf16 %v4247, %v4247
      %v4288 = vpack.c.bf16 %v4248, %v4248
      %v4289 = vpack.c.bf16 %v4249, %v4249
      %v4290 = vpack.c.bf16 %v4250, %v4250
      %v4291 = vpack.c.bf16 %v4251, %v4251
      %v4292 = vpack.c.bf16 %v4252, %v4252
      %v4293 = vpack.c.bf16 %v4253, %v4253
      %v4294 = vpack.c.bf16 %v4254, %v4254
      %v4295 = vpack.c.bf16 %v4255, %v4255
      %v4336 = vcombine.low %v4256, %v4257
      %v4337 = vcombine.low %v4258, %v4259
      %v4338 = vcombine.low %v4260, %v4261
      %v4339 = vcombine.low %v4262, %v4263
      %v4341 = vunpack.c.l.s4 1966171168
      %v4342 = vunpack.c.0.s8 %v4341
      %v4343 = vlaneseq
      %v4344 = vshrl.u32 %v4343, 7
      %v4345 = vsub.s32 %v4342, %v4344
      %v4346 = vrot.slane %v4336, %v4345
      %v4348 = vunpack.c.l.s4 1966171168
      %v4349 = vunpack.c.0.s8 %v4348
      %v4350 = vlaneseq
      %v4351 = vshrl.u32 %v4350, 7
      %v4352 = vsub.s32 %v4349, %v4351
      %v4353 = vrot.slane %v4337, %v4352
      %v4355 = vunpack.c.l.s4 1966171168
      %v4356 = vunpack.c.0.s8 %v4355
      %v4357 = vlaneseq
      %v4358 = vshrl.u32 %v4357, 7
      %v4359 = vsub.s32 %v4356, %v4358
      %v4360 = vrot.slane %v4338, %v4359
      %v4362 = vunpack.c.l.s4 1966171168
      %v4363 = vunpack.c.0.s8 %v4362
      %v4364 = vlaneseq
      %v4365 = vshrl.u32 %v4364, 7
      %v4366 = vsub.s32 %v4363, %v4365
      %v4367 = vrot.slane %v4339, %v4366
      %v4368 = vcombine.low %v4346, %v4353
      %v4369 = vcombine.low %v4360, %v4367
      %v4371 = vunpack.c.l.s4 1966171168
      %v4372 = vunpack.c.0.s8 %v4371
      %v4373 = vlaneseq
      %v4374 = vshrl.u32 %v4373, 7
      %v4375 = vsub.s32 %v4372, %v4374
      %v4376 = vrot.slane %v4368, %v4375
      %v4378 = vunpack.c.l.s4 1966171168
      %v4379 = vunpack.c.0.s8 %v4378
      %v4380 = vlaneseq
      %v4381 = vshrl.u32 %v4380, 7
      %v4382 = vsub.s32 %v4379, %v4381
      %v4383 = vrot.slane %v4369, %v4382
      %v4384 = vcombine.low %v4376, %v4383
      %v4385 = vcombine.low %v4264, %v4265
      %v4386 = vcombine.low %v4266, %v4267
      %v4387 = vcombine.low %v4268, %v4269
      %v4388 = vcombine.low %v4270, %v4271
      %v4390 = vunpack.c.l.s4 1966171168
      %v4391 = vunpack.c.0.s8 %v4390
      %v4392 = vlaneseq
      %v4393 = vshrl.u32 %v4392, 7
      %v4394 = vsub.s32 %v4391, %v4393
      %v4395 = vrot.slane %v4385, %v4394
      %v4397 = vunpack.c.l.s4 1966171168
      %v4398 = vunpack.c.0.s8 %v4397
      %v4399 = vlaneseq
      %v4400 = vshrl.u32 %v4399, 7
      %v4401 = vsub.s32 %v4398, %v4400
      %v4402 = vrot.slane %v4386, %v4401
      %v4404 = vunpack.c.l.s4 1966171168
      %v4405 = vunpack.c.0.s8 %v4404
      %v4406 = vlaneseq
      %v4407 = vshrl.u32 %v4406, 7
      %v4408 = vsub.s32 %v4405, %v4407
      %v4409 = vrot.slane %v4387, %v4408
      %v4411 = vunpack.c.l.s4 1966171168
      %v4412 = vunpack.c.0.s8 %v4411
      %v4413 = vlaneseq
      %v4414 = vshrl.u32 %v4413, 7
      %v4415 = vsub.s32 %v4412, %v4414
      %v4416 = vrot.slane %v4388, %v4415
      %v4417 = vcombine.low %v4395, %v4402
      %v4418 = vcombine.low %v4409, %v4416
      %v4420 = vunpack.c.l.s4 1966171168
      %v4421 = vunpack.c.0.s8 %v4420
      %v4422 = vlaneseq
      %v4423 = vshrl.u32 %v4422, 7
      %v4424 = vsub.s32 %v4421, %v4423
      %v4425 = vrot.slane %v4417, %v4424
      %v4427 = vunpack.c.l.s4 1966171168
      %v4428 = vunpack.c.0.s8 %v4427
      %v4429 = vlaneseq
      %v4430 = vshrl.u32 %v4429, 7
      %v4431 = vsub.s32 %v4428, %v4430
      %v4432 = vrot.slane %v4418, %v4431
      %v4433 = vcombine.low %v4425, %v4432
      %v4434 = vcombine.low %v4272, %v4273
      %v4435 = vcombine.low %v4274, %v4275
      %v4436 = vcombine.low %v4276, %v4277
      %v4437 = vcombine.low %v4278, %v4279
      %v4439 = vunpack.c.l.s4 1966171168
      %v4440 = vunpack.c.0.s8 %v4439
      %v4441 = vlaneseq
      %v4442 = vshrl.u32 %v4441, 7
      %v4443 = vsub.s32 %v4440, %v4442
      %v4444 = vrot.slane %v4434, %v4443
      %v4446 = vunpack.c.l.s4 1966171168
      %v4447 = vunpack.c.0.s8 %v4446
      %v4448 = vlaneseq
      %v4449 = vshrl.u32 %v4448, 7
      %v4450 = vsub.s32 %v4447, %v4449
      %v4451 = vrot.slane %v4435, %v4450
      %v4453 = vunpack.c.l.s4 1966171168
      %v4454 = vunpack.c.0.s8 %v4453
      %v4455 = vlaneseq
      %v4456 = vshrl.u32 %v4455, 7
      %v4457 = vsub.s32 %v4454, %v4456
      %v4458 = vrot.slane %v4436, %v4457
      %v4460 = vunpack.c.l.s4 1966171168
      %v4461 = vunpack.c.0.s8 %v4460
      %v4462 = vlaneseq
      %v4463 = vshrl.u32 %v4462, 7
      %v4464 = vsub.s32 %v4461, %v4463
      %v4465 = vrot.slane %v4437, %v4464
      %v4466 = vcombine.low %v4444, %v4451
      %v4467 = vcombine.low %v4458, %v4465
      %v4469 = vunpack.c.l.s4 1966171168
      %v4470 = vunpack.c.0.s8 %v4469
      %v4471 = vlaneseq
      %v4472 = vshrl.u32 %v4471, 7
      %v4473 = vsub.s32 %v4470, %v4472
      %v4474 = vrot.slane %v4466, %v4473
      %v4476 = vunpack.c.l.s4 1966171168
      %v4477 = vunpack.c.0.s8 %v4476
      %v4478 = vlaneseq
      %v4479 = vshrl.u32 %v4478, 7
      %v4480 = vsub.s32 %v4477, %v4479
      %v4481 = vrot.slane %v4467, %v4480
      %v4482 = vcombine.low %v4474, %v4481
      %v4483 = vcombine.low %v4280, %v4281
      %v4484 = vcombine.low %v4282, %v4283
      %v4485 = vcombine.low %v4284, %v4285
      %v4486 = vcombine.low %v4286, %v4287
      %v4488 = vunpack.c.l.s4 1966171168
      %v4489 = vunpack.c.0.s8 %v4488
      %v4490 = vlaneseq
      %v4491 = vshrl.u32 %v4490, 7
      %v4492 = vsub.s32 %v4489, %v4491
      %v4493 = vrot.slane %v4483, %v4492
      %v4495 = vunpack.c.l.s4 1966171168
      %v4496 = vunpack.c.0.s8 %v4495
      %v4497 = vlaneseq
      %v4498 = vshrl.u32 %v4497, 7
      %v4499 = vsub.s32 %v4496, %v4498
      %v4500 = vrot.slane %v4484, %v4499
      %v4502 = vunpack.c.l.s4 1966171168
      %v4503 = vunpack.c.0.s8 %v4502
      %v4504 = vlaneseq
      %v4505 = vshrl.u32 %v4504, 7
      %v4506 = vsub.s32 %v4503, %v4505
      %v4507 = vrot.slane %v4485, %v4506
      %v4509 = vunpack.c.l.s4 1966171168
      %v4510 = vunpack.c.0.s8 %v4509
      %v4511 = vlaneseq
      %v4512 = vshrl.u32 %v4511, 7
      %v4513 = vsub.s32 %v4510, %v4512
      %v4514 = vrot.slane %v4486, %v4513
      %v4515 = vcombine.low %v4493, %v4500
      %v4516 = vcombine.low %v4507, %v4514
      %v4518 = vunpack.c.l.s4 1966171168
      %v4519 = vunpack.c.0.s8 %v4518
      %v4520 = vlaneseq
      %v4521 = vshrl.u32 %v4520, 7
      %v4522 = vsub.s32 %v4519, %v4521
      %v4523 = vrot.slane %v4515, %v4522
      %v4525 = vunpack.c.l.s4 1966171168
      %v4526 = vunpack.c.0.s8 %v4525
      %v4527 = vlaneseq
      %v4528 = vshrl.u32 %v4527, 7
      %v4529 = vsub.s32 %v4526, %v4528
      %v4530 = vrot.slane %v4516, %v4529
      %v4531 = vcombine.low %v4523, %v4530
      %v4532 = vcombine.low %v4288, %v4289
      %v4533 = vcombine.low %v4290, %v4291
      %v4534 = vcombine.low %v4292, %v4293
      %v4535 = vcombine.low %v4294, %v4295
      %v4537 = vunpack.c.l.s4 1966171168
      %v4538 = vunpack.c.0.s8 %v4537
      %v4539 = vlaneseq
      %v4540 = vshrl.u32 %v4539, 7
      %v4541 = vsub.s32 %v4538, %v4540
      %v4542 = vrot.slane %v4532, %v4541
      %v4544 = vunpack.c.l.s4 1966171168
      %v4545 = vunpack.c.0.s8 %v4544
      %v4546 = vlaneseq
      %v4547 = vshrl.u32 %v4546, 7
      %v4548 = vsub.s32 %v4545, %v4547
      %v4549 = vrot.slane %v4533, %v4548
      %v4551 = vunpack.c.l.s4 1966171168
      %v4552 = vunpack.c.0.s8 %v4551
      %v4553 = vlaneseq
      %v4554 = vshrl.u32 %v4553, 7
      %v4555 = vsub.s32 %v4552, %v4554
      %v4556 = vrot.slane %v4534, %v4555
      %v4558 = vunpack.c.l.s4 1966171168
      %v4559 = vunpack.c.0.s8 %v4558
      %v4560 = vlaneseq
      %v4561 = vshrl.u32 %v4560, 7
      %v4562 = vsub.s32 %v4559, %v4561
      %v4563 = vrot.slane %v4535, %v4562
      %v4564 = vcombine.low %v4542, %v4549
      %v4565 = vcombine.low %v4556, %v4563
      %v4567 = vunpack.c.l.s4 1966171168
      %v4568 = vunpack.c.0.s8 %v4567
      %v4569 = vlaneseq
      %v4570 = vshrl.u32 %v4569, 7
      %v4571 = vsub.s32 %v4568, %v4570
      %v4572 = vrot.slane %v4564, %v4571
      %v4574 = vunpack.c.l.s4 1966171168
      %v4575 = vunpack.c.0.s8 %v4574
      %v4576 = vlaneseq
      %v4577 = vshrl.u32 %v4576, 7
      %v4578 = vsub.s32 %v4575, %v4577
      %v4579 = vrot.slane %v4565, %v4578
      %v4580 = vcombine.low %v4572, %v4579
      %4586 = vst [vmem:[%s170] sm:$0xff] %v4384
      %4587 = vst [vmem:[%s170 + $0x8] sm:$0xff] %v4433
      %4588 = vst [vmem:[%s170 + $0x10] sm:$0xff] %v4482
      %4589 = vst [vmem:[%s170 + $0x18] sm:$0xff] %v4531
      %4590 = vst [vmem:[%s170 + $0x20] sm:$0xff] %v4580
      %s4591 = smul.u32 40, %s14
      %p4592 = scmp.lt.s32.totalorder %s4591, 159
      %s4593 = scalar_select %p4592, %s4591, 159
      %s4594 = scalar_lea.vmem %s3, %s4593
      // Predicated region
      $region33: #{segmentation_encoder.4} parent=31 // pred_check
        %p4595 = pneg %p100
      $region34: #{segmentation_encoder.4} parent=31 // pred_check_branch
        %4597 = sbr.rel (%p4595) target = $region36
      $region35: #{segmentation_encoder.4} parent=31 // pred_region
        %s4598 = smul.u32 40, %s14
      $region36: #{segmentation_encoder.4} parent=31 // pred_fallthru
        _
    $region32: #{segmentation_encoder.4} parent=5 // pred_fallthru
      _
    %p4599 = scmp.le.s32.totalorder 2, %s9
    // Predicated region
    $region37: #{segmentation_encoder.4} parent=5 // pred_check
      %p4600 = pneg %p4599
    $region38: #{segmentation_encoder.4} parent=5 // pred_check_branch
      %4602 = sbr.rel (%p4600) target = $region40
    $region39: #{segmentation_encoder.4} parent=5 // pred_region
      %s4603 = ssub.s32 %s9, 2
      // Predicated region
      $region41: #{segmentation_encoder.4} parent=39 // pred_check
        %p4604 = pneg %p106
      $region42: #{segmentation_encoder.4} parent=39 // pred_check_branch
        %4606 = sbr.rel (%p4604) target = $region44
      $region43: #{segmentation_encoder.4} parent=39 // pred_region
        %s4607 = smul.u32 40, %s15
        %p4608 = scmp.lt.s32.totalorder %s4607, 159
        %s4609 = scalar_select %p4608, %s4607, 159
        %s4610 = scalar_lea.vmem %s3, %s4609
      $region44: #{segmentation_encoder.4} parent=39 // pred_fallthru
        _
    $region40: #{segmentation_encoder.4} parent=5 // pred_fallthru
      _
  $region6: #{segmentation_encoder.4} parent=0 // loop_footer
    %s13 = sadd.s32 1, %s9
  $region7: #{segmentation_encoder.4} parent=0 // loop_footer_branch
    %8 = sbr.rel target = $region3
  $region8: #{segmentation_encoder.4} parent=0 // loop_exit
    _

// kernel: segmentation_encoder.5
$region0: #{segmentation_encoder.5}
  #allocation0 [shape = 'u32[]', space=smem, size = 0x4, offset = 0x4, fixed_abs, tag = 'smem constant byte address 0x4 - core index']
  #allocation1 [shape = 'u32[144,128]{1,0:T(1,128)}', space=vmem, size = 0x12000, scoped, tag = 'internal scratch']
  #allocation2 [shape = 'f32[72,3328]{1,0:T(8,128)}', space=vmem, size = 0xea000, scoped, tag = 'scratch operand']
  %s0 = inlined_call_operand.vmem [shape: f32[6,72], index: 0, kind: input, shape index: {}]
  %s1 = inlined_call_operand.vmem [shape: f32[6,1], index: 1, kind: input, shape index: {}]
  %s2 = inlined_call_operand.vmem [shape: bf16[6,6656], index: 2, kind: input, shape index: {}]
  %s3 = inlined_call_operand.vmem [shape: bf16[6,6656], index: 3, kind: output, shape index: {}]
  %s4 = sld [smem:[#allocation0]]
  $region45: #{segmentation_encoder.5} parent=0
    _
  %s6 = ssub.s32 1, %s4
  %s7 = scalar_select 0, %s6, %s4
  loop: start=0, step=1, limit=4
  $region2: #{segmentation_encoder.5} parent=0 // loop_pre_header
    _
  $region3: #{segmentation_encoder.5} parent=0 // loop_header
    %s9 = sphi 0, %s13
    %p10 = scmp.ge.s32.totalorder %s9, 4
    %s17 = sphi 0, %s17
    %s19 = sphi 0, %s17
    %s20 = sphi 0, %s19
    %s34 = sphi 0, %s20
    %s38 = sphi 0, %s38
    %s40 = sphi 0, %s38
    %s41 = sphi 0, %s40
    %s55 = sphi 0, %s41
    %s61 = sphi 0, %s63
    %s64 = sphi 0, %s61
    %s65 = sphi 0, %s64
    %s81 = sphi 0, %s65
    %s87 = sphi 0, %s89
    %s90 = sphi 0, %s87
    %s91 = sphi 0, %s90
    %s107 = sphi 0, %s91
  $region4: #{segmentation_encoder.5} parent=0 // loop_header_branch
    %12 = sbr.rel (%p10) target = $region8
  $region5: #{segmentation_encoder.5} parent=0 // loop_body
    %s14 = ssub.s32 %s9, 1
    %s15 = ssub.s32 %s9, 2
    %s16 = sadd.s32 %s9, 1
    %s18 = sadd.s32 %s17, 1
    %p21 = scmp.eq.s32.totalorder %s9, 1
    %p22 = scmp.ne.s32.totalorder %s17, %s19
    %p23 = scmp.eq.s32.totalorder %s9, 0
    %p24 = por %p22, %p23
    %p25 = scmp.ne.s32.totalorder %s17, %s19
    %p26 = scmp.eq.s32.totalorder %s14, 1
    %p27 = por %p25, %p26
    %p28 = scmp.ne.s32.totalorder %s19, %s20
    %p29 = scmp.eq.s32.totalorder %s14, 0
    %p30 = por %p28, %p29
    %p31 = scmp.ne.s32.totalorder %s19, %s20
    %p32 = scmp.eq.s32.totalorder %s15, 1
    %p33 = por %p31, %p32
    %p35 = scmp.ne.s32.totalorder %s20, %s34
    %p36 = scmp.eq.s32.totalorder %s15, 0
    %p37 = por %p35, %p36
    %s39 = sadd.s32 %s38, 1
    %p42 = scmp.eq.s32.totalorder %s9, 1
    %p43 = scmp.ne.s32.totalorder %s38, %s40
    %p44 = scmp.eq.s32.totalorder %s9, 0
    %p45 = por %p43, %p44
    %p46 = scmp.ne.s32.totalorder %s38, %s40
    %p47 = scmp.eq.s32.totalorder %s14, 1
    %p48 = por %p46, %p47
    %p49 = scmp.ne.s32.totalorder %s40, %s41
    %p50 = scmp.eq.s32.totalorder %s14, 0
    %p51 = por %p49, %p50
    %p52 = scmp.ne.s32.totalorder %s40, %s41
    %p53 = scmp.eq.s32.totalorder %s15, 1
    %p54 = por %p52, %p53
    %p56 = scmp.ne.s32.totalorder %s41, %s55
    %p57 = scmp.eq.s32.totalorder %s15, 0
    %p58 = por %p56, %p57
    %s59 = ssub.s32 %s9, %s16
    %p60 = scmp.eq.s32.totalorder %s59, 0
    %s62 = sadd.s32 %s61, 1
    %s63 = scalar_select %p60, %s61, %s62
    %p66 = pneg %p60
    %p67 = scmp.eq.s32.totalorder %s9, 1
    %p68 = por %p66, %p67
    %p69 = scmp.ne.s32.totalorder %s61, %s64
    %p70 = scmp.eq.s32.totalorder %s9, 0
    %p71 = por %p69, %p70
    %p72 = scmp.ne.s32.totalorder %s61, %s64
    %p73 = scmp.eq.s32.totalorder %s14, 1
    %p74 = por %p72, %p73
    %p75 = scmp.ne.s32.totalorder %s64, %s65
    %p76 = scmp.eq.s32.totalorder %s14, 0
    %p77 = por %p75, %p76
    %p78 = scmp.ne.s32.totalorder %s64, %s65
    %p79 = scmp.eq.s32.totalorder %s15, 1
    %p80 = por %p78, %p79
    %p82 = scmp.ne.s32.totalorder %s65, %s81
    %p83 = scmp.eq.s32.totalorder %s15, 0
    %p84 = por %p82, %p83
    %s85 = ssub.s32 %s9, %s16
    %p86 = scmp.eq.s32.totalorder %s85, 0
    %s88 = sadd.s32 %s87, 1
    %s89 = scalar_select %p86, %s87, %s88
    %p92 = pneg %p86
    %p93 = scmp.eq.s32.totalorder %s9, 1
    %p94 = por %p92, %p93
    %p95 = scmp.ne.s32.totalorder %s87, %s90
    %p96 = scmp.eq.s32.totalorder %s9, 0
    %p97 = por %p95, %p96
    %p98 = scmp.ne.s32.totalorder %s87, %s90
    %p99 = scmp.eq.s32.totalorder %s14, 1
    %p100 = por %p98, %p99
    %p101 = scmp.ne.s32.totalorder %s90, %s91
    %p102 = scmp.eq.s32.totalorder %s14, 0
    %p103 = por %p101, %p102
    %p104 = scmp.ne.s32.totalorder %s90, %s91
    %p105 = scmp.eq.s32.totalorder %s15, 1
    %p106 = por %p104, %p105
    %p108 = scmp.ne.s32.totalorder %s91, %s107
    %p109 = scmp.eq.s32.totalorder %s15, 0
    %p110 = por %p108, %p109
    %p111 = scmp.le.s32.totalorder 1, %s9
    %p112 = scmp.lt.s32.totalorder %s9, 3
    %p113 = pnand %p111, %p112
    %p114 = pneg %p113
    // Predicated region
    $region9: #{segmentation_encoder.5} parent=5 // pred_check
      _
    $region10: #{segmentation_encoder.5} parent=5 // pred_check_branch
      %116 = sbr.rel (%p113) target = $region12
    $region11: #{segmentation_encoder.5} parent=5 // pred_region
      %s117 = ssub.s32 %s9, 1
      // Predicated region
      $region13: #{segmentation_encoder.5} parent=11 // pred_check
        %p118 = pneg %p30
      $region14: #{segmentation_encoder.5} parent=11 // pred_check_branch
        %120 = sbr.rel (%p118) target = $region16
      $region15: #{segmentation_encoder.5} parent=11 // pred_region
        _
      $region16: #{segmentation_encoder.5} parent=11 // pred_fallthru
        _
      // Predicated region
      $region17: #{segmentation_encoder.5} parent=11 // pred_check
        %p121 = pneg %p51
      $region18: #{segmentation_encoder.5} parent=11 // pred_check_branch
        %123 = sbr.rel (%p121) target = $region20
      $region19: #{segmentation_encoder.5} parent=11 // pred_region
        _
      $region20: #{segmentation_encoder.5} parent=11 // pred_fallthru
        _
    $region12: #{segmentation_encoder.5} parent=5 // pred_fallthru
      _
    %p124 = scmp.lt.s32.totalorder %s9, 2
    // Predicated region
    $region21: #{segmentation_encoder.5} parent=5 // pred_check
      %p125 = pneg %p124
    $region22: #{segmentation_encoder.5} parent=5 // pred_check_branch
      %127 = sbr.rel (%p125) target = $region24
    $region23: #{segmentation_encoder.5} parent=5 // pred_region
      // Predicated region
      $region25: #{segmentation_encoder.5} parent=23 // pred_check
        %p128 = pneg %p71
      $region26: #{segmentation_encoder.5} parent=23 // pred_check_branch
        %130 = sbr.rel (%p128) target = $region28
      $region27: #{segmentation_encoder.5} parent=23 // pred_region
        %s131 = smul.u32 26, %s9
        %p132 = scmp.lt.s32.totalorder %s131, 51
        %s133 = scalar_select %p132, %s131, 51
        %s134 = smul.addr %s133, 4
        %s135 = scalar_lea.vmem %s2, %s134
        %s136 = smul.u32 26, %s9
      $region28: #{segmentation_encoder.5} parent=23 // pred_fallthru
        _
    $region24: #{segmentation_encoder.5} parent=5 // pred_fallthru
      _
    %p137 = scmp.le.s32.totalorder 1, %s9
    %p138 = scmp.lt.s32.totalorder %s9, 3
    %p139 = pnand %p137, %p138
    %p140 = pneg %p139
    // Predicated region
    $region29: #{segmentation_encoder.5} parent=5 // pred_check
      _
    $region30: #{segmentation_encoder.5} parent=5 // pred_check_branch
      %142 = sbr.rel (%p139) target = $region32
    $region31: #{segmentation_encoder.5} parent=5 // pred_region
      %s143 = ssub.s32 %s9, 1
      %p144 = pneg %p30
      %p145 = pneg %p27
      %p146 = pneg %p51
      %p147 = pneg %p48
      %s148 = smul.u32 26, %s14
      %p149 = scmp.lt.s32.totalorder %s148, 51
      %s150 = scalar_select %p149, %s148, 51
      %s151 = smul.addr %s150, 4
      %s152 = scalar_lea.vmem %s2, %s151
      %p153 = pneg %p77
      %p154 = pneg %p74
      %p155 = pneg %p103
      %p156 = pneg %p100
      %s157 = smul.u32 26, %s14
      %p158 = scmp.lt.s32.totalorder %s157, 51
      %s159 = scalar_select %p158, %s157, 51
      %s160 = smul.addr %s159, 4
      %s161 = scalar_lea.vmem %s3, %s160
      %s162 = smul.u32 26, %s14
      %p163 = scmp.lt.s32.totalorder %s162, 51
      %s164 = scalar_select %p163, %s162, 51
      %s165 = smul.addr %s164, 4
      %s166 = scalar_lea.vmem %s2, %s165
      %s167 = smul.u32 26, %s14
      %s168 = smul.u32 26, %s14
      %p169 = scmp.lt.s32.totalorder %s168, 51
      %s170 = scalar_select %p169, %s168, 51
      %s171 = smul.addr %s170, 4
      %s172 = scalar_lea.vmem %s3, %s171
      %s173 = smul.u32 26, %s14
      %v174 = vld [vmem:[%s166 + $0x8] sm:$0x77]
      %v175 = vld [vmem:[%s166 + $0x10] sm:$0x77]
      %v176 = vld [vmem:[%s166 + $0x18] sm:$0x77]
      %v177 = vld [vmem:[%s166 + $0x20] sm:$0x77]
      %v178 = vld [vmem:[%s166 + $0x28] sm:$0x77]
      %v179 = vld [vmem:[%s166 + $0x30] sm:$0x77]
      %v180 = vld [vmem:[%s166 + $0x38] sm:$0x77]
      %v181 = vld [vmem:[%s166 + $0x40] sm:$0x77]
      %v182 = vld [vmem:[%s166 + $0x48] sm:$0x77]
      %v183 = vld [vmem:[%s166 + $0x50] sm:$0x77]
      %v184 = vld [vmem:[%s166 + $0x58] sm:$0x77]
      %v185 = vunpack.c.l.bf16 %v174
      %v186 = vunpack.c.h.bf16 %v174
      %v187 = vunpack.c.l.bf16 %v175
      %v188 = vunpack.c.h.bf16 %v175
      %v189 = vunpack.c.l.bf16 %v176
      %v190 = vunpack.c.h.bf16 %v176
      %v191 = vunpack.c.l.bf16 %v177
      %v192 = vunpack.c.h.bf16 %v177
      %v193 = vunpack.c.l.bf16 %v178
      %v194 = vunpack.c.h.bf16 %v178
      %v195 = vunpack.c.l.bf16 %v179
      %v196 = vunpack.c.h.bf16 %v179
      %v197 = vunpack.c.l.bf16 %v180
      %v198 = vunpack.c.h.bf16 %v180
      %v199 = vunpack.c.l.bf16 %v181
      %v200 = vunpack.c.h.bf16 %v181
      %v201 = vunpack.c.l.bf16 %v182
      %v202 = vunpack.c.h.bf16 %v182
      %v203 = vunpack.c.l.bf16 %v183
      %v204 = vunpack.c.h.bf16 %v183
      %v205 = vunpack.c.l.bf16 %v184
      %v206 = vunpack.c.h.bf16 %v184
      %229 = vrot.lane.b32.xlu0 %v185, 60
      %v230 = vpop.permute.xlu0 %229
      %231 = vrot.lane.b32.xlu0 %v186, 60
      %v232 = vpop.permute.xlu0 %231
      %233 = vrot.lane.b32.xlu0 %v187, 60
      %v234 = vpop.permute.xlu0 %233
      %235 = vrot.lane.b32.xlu0 %v188, 60
      %v236 = vpop.permute.xlu0 %235
      %237 = vrot.lane.b32.xlu0 %v189, 60
      %v238 = vpop.permute.xlu0 %237
      %239 = vrot.lane.b32.xlu0 %v190, 60
      %v240 = vpop.permute.xlu0 %239
      %241 = vrot.lane.b32.xlu0 %v191, 60
      %v242 = vpop.permute.xlu0 %241
      %243 = vrot.lane.b32.xlu0 %v192, 60
      %v244 = vpop.permute.xlu0 %243
      %245 = vrot.lane.b32.xlu0 %v193, 60
      %v246 = vpop.permute.xlu0 %245
      %247 = vrot.lane.b32.xlu0 %v194, 60
      %v248 = vpop.permute.xlu0 %247
      %249 = vrot.lane.b32.xlu0 %v195, 60
      %v250 = vpop.permute.xlu0 %249
      %251 = vrot.lane.b32.xlu0 %v196, 60
      %v252 = vpop.permute.xlu0 %251
      %253 = vrot.lane.b32.xlu0 %v197, 60
      %v254 = vpop.permute.xlu0 %253
      %255 = vrot.lane.b32.xlu0 %v198, 60
      %v256 = vpop.permute.xlu0 %255
      %257 = vrot.lane.b32.xlu0 %v199, 60
      %v258 = vpop.permute.xlu0 %257
      %259 = vrot.lane.b32.xlu0 %v200, 60
      %v260 = vpop.permute.xlu0 %259
      %261 = vrot.lane.b32.xlu0 %v201, 60
      %v262 = vpop.permute.xlu0 %261
      %263 = vrot.lane.b32.xlu0 %v202, 60
      %v264 = vpop.permute.xlu0 %263
      %265 = vrot.lane.b32.xlu0 %v203, 60
      %v266 = vpop.permute.xlu0 %265
      %267 = vrot.lane.b32.xlu0 %v204, 60
      %v268 = vpop.permute.xlu0 %267
      %269 = vrot.lane.b32.xlu0 %v205, 60
      %v270 = vpop.permute.xlu0 %269
      %271 = vrot.lane.b32.xlu0 %v206, 60
      %v272 = vpop.permute.xlu0 %271
      %vm273 = vcmask 490496
      %v274 = vsel %vm273, %v230, %v232
      %v275 = vsel %vm273, %v232, %v234
      %v276 = vsel %vm273, %v234, %v236
      %v277 = vsel %vm273, %v236, %v238
      %v278 = vsel %vm273, %v238, %v240
      %v279 = vsel %vm273, %v240, %v242
      %v280 = vsel %vm273, %v242, %v244
      %v281 = vsel %vm273, %v244, %v246
      %v282 = vsel %vm273, %v246, %v248
      %v283 = vsel %vm273, %v248, %v250
      %v284 = vsel %vm273, %v250, %v252
      %v285 = vsel %vm273, %v252, %v254
      %v286 = vsel %vm273, %v254, %v256
      %v287 = vsel %vm273, %v256, %v258
      %v288 = vsel %vm273, %v258, %v260
      %v289 = vsel %vm273, %v260, %v262
      %v290 = vsel %vm273, %v262, %v264
      %v291 = vsel %vm273, %v264, %v266
      %v292 = vsel %vm273, %v266, %v268
      %v293 = vsel %vm273, %v268, %v270
      %v294 = vsel %vm273, %v270, %v272
      %316 = vst [vmem:[#allocation2] sm:$0x3f] %v274
      %317 = vst [vmem:[#allocation2 + $0x8] sm:$0x3f] %v275
      %318 = vst [vmem:[#allocation2 + $0x10] sm:$0x3f] %v276
      %319 = vst [vmem:[#allocation2 + $0x18] sm:$0x3f] %v277
      %320 = vst [vmem:[#allocation2 + $0x20] sm:$0x3f] %v278
      %321 = vst [vmem:[#allocation2 + $0x28] sm:$0x3f] %v279
      %322 = vst [vmem:[#allocation2 + $0x30] sm:$0x3f] %v280
      %323 = vst [vmem:[#allocation2 + $0x38] sm:$0x3f] %v281
      %324 = vst [vmem:[#allocation2 + $0x40] sm:$0x3f] %v282
      %325 = vst [vmem:[#allocation2 + $0x48] sm:$0x3f] %v283
      %326 = vst [vmem:[#allocation2 + $0x50] sm:$0x3f] %v284
      %327 = vst [vmem:[#allocation2 + $0x58] sm:$0x3f] %v285
      %328 = vst [vmem:[#allocation2 + $0x60] sm:$0x3f] %v286
      %329 = vst [vmem:[#allocation2 + $0x68] sm:$0x3f] %v287
      %330 = vst [vmem:[#allocation2 + $0x70] sm:$0x3f] %v288
      %331 = vst [vmem:[#allocation2 + $0x78] sm:$0x3f] %v289
      %332 = vst [vmem:[#allocation2 + $0x80] sm:$0x3f] %v290
      %333 = vst [vmem:[#allocation2 + $0x88] sm:$0x3f] %v291
      %334 = vst [vmem:[#allocation2 + $0x90] sm:$0x3f] %v292
      %335 = vst [vmem:[#allocation2 + $0x98] sm:$0x3f] %v293
      %vm336 = vcmask 824320
      %337 = vst.msk [vmem:[#allocation2 + $0xa0] sm:$0x3f] %vm336, %v294
      %v338 = vld [vmem:[%s166 + $0x8] sm:$0x77]
      %v339 = vld [vmem:[%s166 + $0x10] sm:$0x77]
      %v340 = vld [vmem:[%s166 + $0x18] sm:$0x77]
      %v341 = vld [vmem:[%s166 + $0x20] sm:$0x77]
      %v342 = vld [vmem:[%s166 + $0x28] sm:$0x77]
      %v343 = vld [vmem:[%s166 + $0x30] sm:$0x77]
      %v344 = vld [vmem:[%s166 + $0x38] sm:$0x77]
      %v345 = vld [vmem:[%s166 + $0x40] sm:$0x77]
      %v346 = vld [vmem:[%s166 + $0x48] sm:$0x77]
      %v347 = vld [vmem:[%s166 + $0x50] sm:$0x77]
      %v348 = vld [vmem:[%s166 + $0x58] sm:$0x77]
      %v349 = vunpack.c.l.bf16 %v338
      %v350 = vunpack.c.h.bf16 %v338
      %v351 = vunpack.c.l.bf16 %v339
      %v352 = vunpack.c.h.bf16 %v339
      %v353 = vunpack.c.l.bf16 %v340
      %v354 = vunpack.c.h.bf16 %v340
      %v355 = vunpack.c.l.bf16 %v341
      %v356 = vunpack.c.h.bf16 %v341
      %v357 = vunpack.c.l.bf16 %v342
      %v358 = vunpack.c.h.bf16 %v342
      %v359 = vunpack.c.l.bf16 %v343
      %v360 = vunpack.c.h.bf16 %v343
      %v361 = vunpack.c.l.bf16 %v344
      %v362 = vunpack.c.h.bf16 %v344
      %v363 = vunpack.c.l.bf16 %v345
      %v364 = vunpack.c.h.bf16 %v345
      %v365 = vunpack.c.l.bf16 %v346
      %v366 = vunpack.c.h.bf16 %v346
      %v367 = vunpack.c.l.bf16 %v347
      %v368 = vunpack.c.h.bf16 %v347
      %v369 = vunpack.c.l.bf16 %v348
      %v370 = vunpack.c.h.bf16 %v348
      %v393 = vrot.slane %v349, 2
      %v394 = vrot.slane %v350, 2
      %v395 = vrot.slane %v351, 2
      %v396 = vrot.slane %v352, 2
      %v397 = vrot.slane %v353, 2
      %v398 = vrot.slane %v354, 2
      %v399 = vrot.slane %v355, 2
      %v400 = vrot.slane %v356, 2
      %v401 = vrot.slane %v357, 2
      %v402 = vrot.slane %v358, 2
      %v403 = vrot.slane %v359, 2
      %v404 = vrot.slane %v360, 2
      %v405 = vrot.slane %v361, 2
      %v406 = vrot.slane %v362, 2
      %v407 = vrot.slane %v363, 2
      %v408 = vrot.slane %v364, 2
      %v409 = vrot.slane %v365, 2
      %v410 = vrot.slane %v366, 2
      %v411 = vrot.slane %v367, 2
      %v412 = vrot.slane %v368, 2
      %v413 = vrot.slane %v369, 2
      %v414 = vrot.slane %v370, 2
      %415 = vrot.lane.b32.xlu0 %v393, 59
      %v416 = vpop.permute.xlu0 %415
      %417 = vrot.lane.b32.xlu0 %v394, 59
      %v418 = vpop.permute.xlu0 %417
      %419 = vrot.lane.b32.xlu0 %v395, 59
      %v420 = vpop.permute.xlu0 %419
      %421 = vrot.lane.b32.xlu0 %v396, 59
      %v422 = vpop.permute.xlu0 %421
      %423 = vrot.lane.b32.xlu0 %v397, 59
      %v424 = vpop.permute.xlu0 %423
      %425 = vrot.lane.b32.xlu0 %v398, 59
      %v426 = vpop.permute.xlu0 %425
      %427 = vrot.lane.b32.xlu0 %v399, 59
      %v428 = vpop.permute.xlu0 %427
      %429 = vrot.lane.b32.xlu0 %v400, 59
      %v430 = vpop.permute.xlu0 %429
      %431 = vrot.lane.b32.xlu0 %v401, 59
      %v432 = vpop.permute.xlu0 %431
      %433 = vrot.lane.b32.xlu0 %v402, 59
      %v434 = vpop.permute.xlu0 %433
      %435 = vrot.lane.b32.xlu0 %v403, 59
      %v436 = vpop.permute.xlu0 %435
      %437 = vrot.lane.b32.xlu0 %v404, 59
      %v438 = vpop.permute.xlu0 %437
      %439 = vrot.lane.b32.xlu0 %v405, 59
      %v440 = vpop.permute.xlu0 %439
      %441 = vrot.lane.b32.xlu0 %v406, 59
      %v442 = vpop.permute.xlu0 %441
      %443 = vrot.lane.b32.xlu0 %v407, 59
      %v444 = vpop.permute.xlu0 %443
      %445 = vrot.lane.b32.xlu0 %v408, 59
      %v446 = vpop.permute.xlu0 %445
      %447 = vrot.lane.b32.xlu0 %v409, 59
      %v448 = vpop.permute.xlu0 %447
      %449 = vrot.lane.b32.xlu0 %v410, 59
      %v450 = vpop.permute.xlu0 %449
      %451 = vrot.lane.b32.xlu0 %v411, 59
      %v452 = vpop.permute.xlu0 %451
      %453 = vrot.lane.b32.xlu0 %v412, 59
      %v454 = vpop.permute.xlu0 %453
      %455 = vrot.lane.b32.xlu0 %v413, 59
      %v456 = vpop.permute.xlu0 %455
      %457 = vrot.lane.b32.xlu0 %v414, 59
      %v458 = vpop.permute.xlu0 %457
      %vm459 = vcmask 482304
      %v460 = vsel %vm459, %v416, %v418
      %v461 = vsel %vm459, %v418, %v420
      %v462 = vsel %vm459, %v420, %v422
      %v463 = vsel %vm459, %v422, %v424
      %v464 = vsel %vm459, %v424, %v426
      %v465 = vsel %vm459, %v426, %v428
      %v466 = vsel %vm459, %v428, %v430
      %v467 = vsel %vm459, %v430, %v432
      %v468 = vsel %vm459, %v432, %v434
      %v469 = vsel %vm459, %v434, %v436
      %v470 = vsel %vm459, %v436, %v438
      %v471 = vsel %vm459, %v438, %v440
      %v472 = vsel %vm459, %v440, %v442
      %v473 = vsel %vm459, %v442, %v444
      %v474 = vsel %vm459, %v444, %v446
      %v475 = vsel %vm459, %v446, %v448
      %v476 = vsel %vm459, %v448, %v450
      %v477 = vsel %vm459, %v450, %v452
      %v478 = vsel %vm459, %v452, %v454
      %v479 = vsel %vm459, %v454, %v456
      %v480 = vsel %vm459, %v456, %v458
      %502 = vst [vmem:[#allocation2] sm:$0xc0] %v460
      %503 = vst [vmem:[#allocation2 + $0x8] sm:$0xc0] %v461
      %504 = vst [vmem:[#allocation2 + $0x10] sm:$0xc0] %v462
      %505 = vst [vmem:[#allocation2 + $0x18] sm:$0xc0] %v463
      %506 = vst [vmem:[#allocation2 + $0x20] sm:$0xc0] %v464
      %507 = vst [vmem:[#allocation2 + $0x28] sm:$0xc0] %v465
      %508 = vst [vmem:[#allocation2 + $0x30] sm:$0xc0] %v466
      %509 = vst [vmem:[#allocation2 + $0x38] sm:$0xc0] %v467
      %510 = vst [vmem:[#allocation2 + $0x40] sm:$0xc0] %v468
      %511 = vst [vmem:[#allocation2 + $0x48] sm:$0xc0] %v469
      %512 = vst [vmem:[#allocation2 + $0x50] sm:$0xc0] %v470
      %513 = vst [vmem:[#allocation2 + $0x58] sm:$0xc0] %v471
      %514 = vst [vmem:[#allocation2 + $0x60] sm:$0xc0] %v472
      %515 = vst [vmem:[#allocation2 + $0x68] sm:$0xc0] %v473
      %516 = vst [vmem:[#allocation2 + $0x70] sm:$0xc0] %v474
      %517 = vst [vmem:[#allocation2 + $0x78] sm:$0xc0] %v475
      %518 = vst [vmem:[#allocation2 + $0x80] sm:$0xc0] %v476
      %519 = vst [vmem:[#allocation2 + $0x88] sm:$0xc0] %v477
      %520 = vst [vmem:[#allocation2 + $0x90] sm:$0xc0] %v478
      %521 = vst [vmem:[#allocation2 + $0x98] sm:$0xc0] %v479
      %vm522 = vcmask 826374
      %523 = vst.msk [vmem:[#allocation2 + $0xa0] sm:$0xc0] %vm522, %v480
      %524 = vst [vmem:[#allocation2 + $0xd0] sm:$0xf] %v460
      %525 = vst [vmem:[#allocation2 + $0xd8] sm:$0xf] %v461
      %526 = vst [vmem:[#allocation2 + $0xe0] sm:$0xf] %v462
      %527 = vst [vmem:[#allocation2 + $0xe8] sm:$0xf] %v463
      %528 = vst [vmem:[#allocation2 + $0xf0] sm:$0xf] %v464
      %529 = vst [vmem:[#allocation2 + $0xf8] sm:$0xf] %v465
      %530 = vst [vmem:[#allocation2 + $0x100] sm:$0xf] %v466
      %531 = vst [vmem:[#allocation2 + $0x108] sm:$0xf] %v467
      %532 = vst [vmem:[#allocation2 + $0x110] sm:$0xf] %v468
      %533 = vst [vmem:[#allocation2 + $0x118] sm:$0xf] %v469
      %534 = vst [vmem:[#allocation2 + $0x120] sm:$0xf] %v470
      %535 = vst [vmem:[#allocation2 + $0x128] sm:$0xf] %v471
      %536 = vst [vmem:[#allocation2 + $0x130] sm:$0xf] %v472
      %537 = vst [vmem:[#allocation2 + $0x138] sm:$0xf] %v473
      %538 = vst [vmem:[#allocation2 + $0x140] sm:$0xf] %v474
      %539 = vst [vmem:[#allocation2 + $0x148] sm:$0xf] %v475
      %540 = vst [vmem:[#allocation2 + $0x150] sm:$0xf] %v476
      %541 = vst [vmem:[#allocation2 + $0x158] sm:$0xf] %v477
      %542 = vst [vmem:[#allocation2 + $0x160] sm:$0xf] %v478
      %543 = vst [vmem:[#allocation2 + $0x168] sm:$0xf] %v479
      %vm544 = vcmask 822272
      %545 = vst.msk [vmem:[#allocation2 + $0x170] sm:$0xf] %vm544, %v480
      %v546 = vld [vmem:[%s166 + $0x8] sm:$0x77]
      %v547 = vld [vmem:[%s166 + $0x10] sm:$0x77]
      %v548 = vld [vmem:[%s166 + $0x18] sm:$0x77]
      %v549 = vld [vmem:[%s166 + $0x20] sm:$0x77]
      %v550 = vld [vmem:[%s166 + $0x28] sm:$0x77]
      %v551 = vld [vmem:[%s166 + $0x30] sm:$0x77]
      %v552 = vld [vmem:[%s166 + $0x38] sm:$0x77]
      %v553 = vld [vmem:[%s166 + $0x40] sm:$0x77]
      %v554 = vld [vmem:[%s166 + $0x48] sm:$0x77]
      %v555 = vld [vmem:[%s166 + $0x50] sm:$0x77]
      %v556 = vld [vmem:[%s166 + $0x58] sm:$0x77]
      %v557 = vunpack.c.l.bf16 %v546
      %v558 = vunpack.c.h.bf16 %v546
      %v559 = vunpack.c.l.bf16 %v547
      %v560 = vunpack.c.h.bf16 %v547
      %v561 = vunpack.c.l.bf16 %v548
      %v562 = vunpack.c.h.bf16 %v548
      %v563 = vunpack.c.l.bf16 %v549
      %v564 = vunpack.c.h.bf16 %v549
      %v565 = vunpack.c.l.bf16 %v550
      %v566 = vunpack.c.h.bf16 %v550
      %v567 = vunpack.c.l.bf16 %v551
      %v568 = vunpack.c.h.bf16 %v551
      %v569 = vunpack.c.l.bf16 %v552
      %v570 = vunpack.c.h.bf16 %v552
      %v571 = vunpack.c.l.bf16 %v553
      %v572 = vunpack.c.h.bf16 %v553
      %v573 = vunpack.c.l.bf16 %v554
      %v574 = vunpack.c.h.bf16 %v554
      %v575 = vunpack.c.l.bf16 %v555
      %v576 = vunpack.c.h.bf16 %v555
      %v577 = vunpack.c.l.bf16 %v556
      %v578 = vunpack.c.h.bf16 %v556
      %v601 = vrot.slane %v557, 4
      %v602 = vrot.slane %v558, 4
      %v603 = vrot.slane %v559, 4
      %v604 = vrot.slane %v560, 4
      %v605 = vrot.slane %v561, 4
      %v606 = vrot.slane %v562, 4
      %v607 = vrot.slane %v563, 4
      %v608 = vrot.slane %v564, 4
      %v609 = vrot.slane %v565, 4
      %v610 = vrot.slane %v566, 4
      %v611 = vrot.slane %v567, 4
      %v612 = vrot.slane %v568, 4
      %v613 = vrot.slane %v569, 4
      %v614 = vrot.slane %v570, 4
      %v615 = vrot.slane %v571, 4
      %v616 = vrot.slane %v572, 4
      %v617 = vrot.slane %v573, 4
      %v618 = vrot.slane %v574, 4
      %v619 = vrot.slane %v575, 4
      %v620 = vrot.slane %v576, 4
      %v621 = vrot.slane %v577, 4
      %v622 = vrot.slane %v578, 4
      %623 = vrot.lane.b32.xlu0 %v601, 58
      %v624 = vpop.permute.xlu0 %623
      %625 = vrot.lane.b32.xlu0 %v602, 58
      %v626 = vpop.permute.xlu0 %625
      %627 = vrot.lane.b32.xlu0 %v603, 58
      %v628 = vpop.permute.xlu0 %627
      %629 = vrot.lane.b32.xlu0 %v604, 58
      %v630 = vpop.permute.xlu0 %629
      %631 = vrot.lane.b32.xlu0 %v605, 58
      %v632 = vpop.permute.xlu0 %631
      %633 = vrot.lane.b32.xlu0 %v606, 58
      %v634 = vpop.permute.xlu0 %633
      %635 = vrot.lane.b32.xlu0 %v607, 58
      %v636 = vpop.permute.xlu0 %635
      %637 = vrot.lane.b32.xlu0 %v608, 58
      %v638 = vpop.permute.xlu0 %637
      %639 = vrot.lane.b32.xlu0 %v609, 58
      %v640 = vpop.permute.xlu0 %639
      %641 = vrot.lane.b32.xlu0 %v610, 58
      %v642 = vpop.permute.xlu0 %641
      %643 = vrot.lane.b32.xlu0 %v611, 58
      %v644 = vpop.permute.xlu0 %643
      %645 = vrot.lane.b32.xlu0 %v612, 58
      %v646 = vpop.permute.xlu0 %645
      %647 = vrot.lane.b32.xlu0 %v613, 58
      %v648 = vpop.permute.xlu0 %647
      %649 = vrot.lane.b32.xlu0 %v614, 58
      %v650 = vpop.permute.xlu0 %649
      %651 = vrot.lane.b32.xlu0 %v615, 58
      %v652 = vpop.permute.xlu0 %651
      %653 = vrot.lane.b32.xlu0 %v616, 58
      %v654 = vpop.permute.xlu0 %653
      %655 = vrot.lane.b32.xlu0 %v617, 58
      %v656 = vpop.permute.xlu0 %655
      %657 = vrot.lane.b32.xlu0 %v618, 58
      %v658 = vpop.permute.xlu0 %657
      %659 = vrot.lane.b32.xlu0 %v619, 58
      %v660 = vpop.permute.xlu0 %659
      %661 = vrot.lane.b32.xlu0 %v620, 58
      %v662 = vpop.permute.xlu0 %661
      %663 = vrot.lane.b32.xlu0 %v621, 58
      %v664 = vpop.permute.xlu0 %663
      %665 = vrot.lane.b32.xlu0 %v622, 58
      %v666 = vpop.permute.xlu0 %665
      %vm667 = vcmask 474112
      %v668 = vsel %vm667, %v624, %v626
      %v669 = vsel %vm667, %v626, %v628
      %v670 = vsel %vm667, %v628, %v630
      %v671 = vsel %vm667, %v630, %v632
      %v672 = vsel %vm667, %v632, %v634
      %v673 = vsel %vm667, %v634, %v636
      %v674 = vsel %vm667, %v636, %v638
      %v675 = vsel %vm667, %v638, %v640
      %v676 = vsel %vm667, %v640, %v642
      %v677 = vsel %vm667, %v642, %v644
      %v678 = vsel %vm667, %v644, %v646
      %v679 = vsel %vm667, %v646, %v648
      %v680 = vsel %vm667, %v648, %v650
      %v681 = vsel %vm667, %v650, %v652
      %v682 = vsel %vm667, %v652, %v654
      %v683 = vsel %vm667, %v654, %v656
      %v684 = vsel %vm667, %v656, %v658
      %v685 = vsel %vm667, %v658, %v660
      %v686 = vsel %vm667, %v660, %v662
      %v687 = vsel %vm667, %v662, %v664
      %v688 = vsel %vm667, %v664, %v666
      %710 = vst [vmem:[#allocation2 + $0xd0] sm:$0xf0] %v668
      %711 = vst [vmem:[#allocation2 + $0xd8] sm:$0xf0] %v669
      %712 = vst [vmem:[#allocation2 + $0xe0] sm:$0xf0] %v670
      %713 = vst [vmem:[#allocation2 + $0xe8] sm:$0xf0] %v671
      %714 = vst [vmem:[#allocation2 + $0xf0] sm:$0xf0] %v672
      %715 = vst [vmem:[#allocation2 + $0xf8] sm:$0xf0] %v673
      %716 = vst [vmem:[#allocation2 + $0x100] sm:$0xf0] %v674
      %717 = vst [vmem:[#allocation2 + $0x108] sm:$0xf0] %v675
      %718 = vst [vmem:[#allocation2 + $0x110] sm:$0xf0] %v676
      %719 = vst [vmem:[#allocation2 + $0x118] sm:$0xf0] %v677
      %720 = vst [vmem:[#allocation2 + $0x120] sm:$0xf0] %v678
      %721 = vst [vmem:[#allocation2 + $0x128] sm:$0xf0] %v679
      %722 = vst [vmem:[#allocation2 + $0x130] sm:$0xf0] %v680
      %723 = vst [vmem:[#allocation2 + $0x138] sm:$0xf0] %v681
      %724 = vst [vmem:[#allocation2 + $0x140] sm:$0xf0] %v682
      %725 = vst [vmem:[#allocation2 + $0x148] sm:$0xf0] %v683
      %726 = vst [vmem:[#allocation2 + $0x150] sm:$0xf0] %v684
      %727 = vst [vmem:[#allocation2 + $0x158] sm:$0xf0] %v685
      %728 = vst [vmem:[#allocation2 + $0x160] sm:$0xf0] %v686
      %729 = vst [vmem:[#allocation2 + $0x168] sm:$0xf0] %v687
      %vm730 = vcmask 826372
      %731 = vst.msk [vmem:[#allocation2 + $0x170] sm:$0xf0] %vm730, %v688
      %732 = vst [vmem:[#allocation2 + $0x1a0] sm:$0x3] %v668
      %733 = vst [vmem:[#allocation2 + $0x1a8] sm:$0x3] %v669
      %734 = vst [vmem:[#allocation2 + $0x1b0] sm:$0x3] %v670
      %735 = vst [vmem:[#allocation2 + $0x1b8] sm:$0x3] %v671
      %736 = vst [vmem:[#allocation2 + $0x1c0] sm:$0x3] %v672
      %737 = vst [vmem:[#allocation2 + $0x1c8] sm:$0x3] %v673
      %738 = vst [vmem:[#allocation2 + $0x1d0] sm:$0x3] %v674
      %739 = vst [vmem:[#allocation2 + $0x1d8] sm:$0x3] %v675
      %740 = vst [vmem:[#allocation2 + $0x1e0] sm:$0x3] %v676
      %741 = vst [vmem:[#allocation2 + $0x1e8] sm:$0x3] %v677
      %742 = vst [vmem:[#allocation2 + $0x1f0] sm:$0x3] %v678
      %743 = vst [vmem:[#allocation2 + $0x1f8] sm:$0x3] %v679
      %744 = vst [vmem:[#allocation2 + $0x200] sm:$0x3] %v680
      %745 = vst [vmem:[#allocation2 + $0x208] sm:$0x3] %v681
      %746 = vst [vmem:[#allocation2 + $0x210] sm:$0x3] %v682
      %747 = vst [vmem:[#allocation2 + $0x218] sm:$0x3] %v683
      %748 = vst [vmem:[#allocation2 + $0x220] sm:$0x3] %v684
      %749 = vst [vmem:[#allocation2 + $0x228] sm:$0x3] %v685
      %750 = vst [vmem:[#allocation2 + $0x230] sm:$0x3] %v686
      %751 = vst [vmem:[#allocation2 + $0x238] sm:$0x3] %v687
      %vm752 = vcmask 820224
      %753 = vst.msk [vmem:[#allocation2 + $0x240] sm:$0x3] %vm752, %v688
      %v754 = vld [vmem:[%s166 + $0x8] sm:$0x77]
      %v755 = vld [vmem:[%s166 + $0x10] sm:$0x77]
      %v756 = vld [vmem:[%s166 + $0x18] sm:$0x77]
      %v757 = vld [vmem:[%s166 + $0x20] sm:$0x77]
      %v758 = vld [vmem:[%s166 + $0x28] sm:$0x77]
      %v759 = vld [vmem:[%s166 + $0x30] sm:$0x77]
      %v760 = vld [vmem:[%s166 + $0x38] sm:$0x77]
      %v761 = vld [vmem:[%s166 + $0x40] sm:$0x77]
      %v762 = vld [vmem:[%s166 + $0x48] sm:$0x77]
      %v763 = vld [vmem:[%s166 + $0x50] sm:$0x77]
      %v764 = vld [vmem:[%s166 + $0x58] sm:$0x77]
      %v765 = vunpack.c.l.bf16 %v754
      %v766 = vunpack.c.h.bf16 %v754
      %v767 = vunpack.c.l.bf16 %v755
      %v768 = vunpack.c.h.bf16 %v755
      %v769 = vunpack.c.l.bf16 %v756
      %v770 = vunpack.c.h.bf16 %v756
      %v771 = vunpack.c.l.bf16 %v757
      %v772 = vunpack.c.h.bf16 %v757
      %v773 = vunpack.c.l.bf16 %v758
      %v774 = vunpack.c.h.bf16 %v758
      %v775 = vunpack.c.l.bf16 %v759
      %v776 = vunpack.c.h.bf16 %v759
      %v777 = vunpack.c.l.bf16 %v760
      %v778 = vunpack.c.h.bf16 %v760
      %v779 = vunpack.c.l.bf16 %v761
      %v780 = vunpack.c.h.bf16 %v761
      %v781 = vunpack.c.l.bf16 %v762
      %v782 = vunpack.c.h.bf16 %v762
      %v783 = vunpack.c.l.bf16 %v763
      %v784 = vunpack.c.h.bf16 %v763
      %v785 = vunpack.c.l.bf16 %v764
      %v786 = vunpack.c.h.bf16 %v764
      %v809 = vrot.slane %v765, 6
      %v810 = vrot.slane %v766, 6
      %v811 = vrot.slane %v767, 6
      %v812 = vrot.slane %v768, 6
      %v813 = vrot.slane %v769, 6
      %v814 = vrot.slane %v770, 6
      %v815 = vrot.slane %v771, 6
      %v816 = vrot.slane %v772, 6
      %v817 = vrot.slane %v773, 6
      %v818 = vrot.slane %v774, 6
      %v819 = vrot.slane %v775, 6
      %v820 = vrot.slane %v776, 6
      %v821 = vrot.slane %v777, 6
      %v822 = vrot.slane %v778, 6
      %v823 = vrot.slane %v779, 6
      %v824 = vrot.slane %v780, 6
      %v825 = vrot.slane %v781, 6
      %v826 = vrot.slane %v782, 6
      %v827 = vrot.slane %v783, 6
      %v828 = vrot.slane %v784, 6
      %v829 = vrot.slane %v785, 6
      %v830 = vrot.slane %v786, 6
      %831 = vrot.lane.b32.xlu0 %v809, 42
      %v832 = vpop.permute.xlu0 %831
      %833 = vrot.lane.b32.xlu0 %v810, 42
      %v834 = vpop.permute.xlu0 %833
      %835 = vrot.lane.b32.xlu0 %v811, 42
      %v836 = vpop.permute.xlu0 %835
      %837 = vrot.lane.b32.xlu0 %v812, 42
      %v838 = vpop.permute.xlu0 %837
      %839 = vrot.lane.b32.xlu0 %v813, 42
      %v840 = vpop.permute.xlu0 %839
      %841 = vrot.lane.b32.xlu0 %v814, 42
      %v842 = vpop.permute.xlu0 %841
      %843 = vrot.lane.b32.xlu0 %v815, 42
      %v844 = vpop.permute.xlu0 %843
      %845 = vrot.lane.b32.xlu0 %v816, 42
      %v846 = vpop.permute.xlu0 %845
      %847 = vrot.lane.b32.xlu0 %v817, 42
      %v848 = vpop.permute.xlu0 %847
      %849 = vrot.lane.b32.xlu0 %v818, 42
      %v850 = vpop.permute.xlu0 %849
      %851 = vrot.lane.b32.xlu0 %v819, 42
      %v852 = vpop.permute.xlu0 %851
      %853 = vrot.lane.b32.xlu0 %v820, 42
      %v854 = vpop.permute.xlu0 %853
      %855 = vrot.lane.b32.xlu0 %v821, 42
      %v856 = vpop.permute.xlu0 %855
      %857 = vrot.lane.b32.xlu0 %v822, 42
      %v858 = vpop.permute.xlu0 %857
      %859 = vrot.lane.b32.xlu0 %v823, 42
      %v860 = vpop.permute.xlu0 %859
      %861 = vrot.lane.b32.xlu0 %v824, 42
      %v862 = vpop.permute.xlu0 %861
      %863 = vrot.lane.b32.xlu0 %v825, 42
      %v864 = vpop.permute.xlu0 %863
      %865 = vrot.lane.b32.xlu0 %v826, 42
      %v866 = vpop.permute.xlu0 %865
      %867 = vrot.lane.b32.xlu0 %v827, 42
      %v868 = vpop.permute.xlu0 %867
      %869 = vrot.lane.b32.xlu0 %v828, 42
      %v870 = vpop.permute.xlu0 %869
      %871 = vrot.lane.b32.xlu0 %v829, 42
      %v872 = vpop.permute.xlu0 %871
      %873 = vrot.lane.b32.xlu0 %v830, 42
      %v874 = vpop.permute.xlu0 %873
      %vm875 = vcmask 343040
      %v876 = vsel %vm875, %v832, %v834
      %v877 = vsel %vm875, %v834, %v836
      %v878 = vsel %vm875, %v836, %v838
      %v879 = vsel %vm875, %v838, %v840
      %v880 = vsel %vm875, %v840, %v842
      %v881 = vsel %vm875, %v842, %v844
      %v882 = vsel %vm875, %v844, %v846
      %v883 = vsel %vm875, %v846, %v848
      %v884 = vsel %vm875, %v848, %v850
      %v885 = vsel %vm875, %v850, %v852
      %v886 = vsel %vm875, %v852, %v854
      %v887 = vsel %vm875, %v854, %v856
      %v888 = vsel %vm875, %v856, %v858
      %v889 = vsel %vm875, %v858, %v860
      %v890 = vsel %vm875, %v860, %v862
      %v891 = vsel %vm875, %v862, %v864
      %v892 = vsel %vm875, %v864, %v866
      %v893 = vsel %vm875, %v866, %v868
      %v894 = vsel %vm875, %v868, %v870
      %v895 = vsel %vm875, %v870, %v872
      %v896 = vsel %vm875, %v872, %v874
      %918 = vst [vmem:[#allocation2 + $0x1a0] sm:$0xfc] %v876
      %919 = vst [vmem:[#allocation2 + $0x1a8] sm:$0xfc] %v877
      %920 = vst [vmem:[#allocation2 + $0x1b0] sm:$0xfc] %v878
      %921 = vst [vmem:[#allocation2 + $0x1b8] sm:$0xfc] %v879
      %922 = vst [vmem:[#allocation2 + $0x1c0] sm:$0xfc] %v880
      %923 = vst [vmem:[#allocation2 + $0x1c8] sm:$0xfc] %v881
      %924 = vst [vmem:[#allocation2 + $0x1d0] sm:$0xfc] %v882
      %925 = vst [vmem:[#allocation2 + $0x1d8] sm:$0xfc] %v883
      %926 = vst [vmem:[#allocation2 + $0x1e0] sm:$0xfc] %v884
      %927 = vst [vmem:[#allocation2 + $0x1e8] sm:$0xfc] %v885
      %928 = vst [vmem:[#allocation2 + $0x1f0] sm:$0xfc] %v886
      %929 = vst [vmem:[#allocation2 + $0x1f8] sm:$0xfc] %v887
      %930 = vst [vmem:[#allocation2 + $0x200] sm:$0xfc] %v888
      %931 = vst [vmem:[#allocation2 + $0x208] sm:$0xfc] %v889
      %932 = vst [vmem:[#allocation2 + $0x210] sm:$0xfc] %v890
      %933 = vst [vmem:[#allocation2 + $0x218] sm:$0xfc] %v891
      %934 = vst [vmem:[#allocation2 + $0x220] sm:$0xfc] %v892
      %935 = vst [vmem:[#allocation2 + $0x228] sm:$0xfc] %v893
      %936 = vst [vmem:[#allocation2 + $0x230] sm:$0xfc] %v894
      %937 = vst [vmem:[#allocation2 + $0x238] sm:$0xfc] %v895
      %vm938 = vcmask 826370
      %939 = vst.msk [vmem:[#allocation2 + $0x240] sm:$0xfc] %vm938, %v896
      %v940 = vld [vmem:[%s166 + $0x8] sm:$0x77]
      %v941 = vld [vmem:[%s166 + $0x10] sm:$0x77]
      %v942 = vld [vmem:[%s166 + $0x18] sm:$0x77]
      %v943 = vld [vmem:[%s166 + $0x20] sm:$0x77]
      %v944 = vld [vmem:[%s166 + $0x28] sm:$0x77]
      %v945 = vld [vmem:[%s166 + $0x30] sm:$0x77]
      %v946 = vld [vmem:[%s166 + $0x38] sm:$0x77]
      %v947 = vld [vmem:[%s166 + $0x40] sm:$0x77]
      %v948 = vld [vmem:[%s166 + $0x48] sm:$0x77]
      %v949 = vld [vmem:[%s166 + $0x50] sm:$0x77]
      %v950 = vld [vmem:[%s166 + $0x58] sm:$0x77]
      %v951 = vunpack.c.l.bf16 %v940
      %v952 = vunpack.c.h.bf16 %v940
      %v953 = vunpack.c.l.bf16 %v941
      %v954 = vunpack.c.h.bf16 %v941
      %v955 = vunpack.c.l.bf16 %v942
      %v956 = vunpack.c.h.bf16 %v942
      %v957 = vunpack.c.l.bf16 %v943
      %v958 = vunpack.c.h.bf16 %v943
      %v959 = vunpack.c.l.bf16 %v944
      %v960 = vunpack.c.h.bf16 %v944
      %v961 = vunpack.c.l.bf16 %v945
      %v962 = vunpack.c.h.bf16 %v945
      %v963 = vunpack.c.l.bf16 %v946
      %v964 = vunpack.c.h.bf16 %v946
      %v965 = vunpack.c.l.bf16 %v947
      %v966 = vunpack.c.h.bf16 %v947
      %v967 = vunpack.c.l.bf16 %v948
      %v968 = vunpack.c.h.bf16 %v948
      %v969 = vunpack.c.l.bf16 %v949
      %v970 = vunpack.c.h.bf16 %v949
      %v971 = vunpack.c.l.bf16 %v950
      %v972 = vunpack.c.h.bf16 %v950
      %995 = vrot.lane.b32.xlu0 %v951, 41
      %v996 = vpop.permute.xlu0 %995
      %997 = vrot.lane.b32.xlu0 %v952, 41
      %v998 = vpop.permute.xlu0 %997
      %999 = vrot.lane.b32.xlu0 %v953, 41
      %v1000 = vpop.permute.xlu0 %999
      %1001 = vrot.lane.b32.xlu0 %v954, 41
      %v1002 = vpop.permute.xlu0 %1001
      %1003 = vrot.lane.b32.xlu0 %v955, 41
      %v1004 = vpop.permute.xlu0 %1003
      %1005 = vrot.lane.b32.xlu0 %v956, 41
      %v1006 = vpop.permute.xlu0 %1005
      %1007 = vrot.lane.b32.xlu0 %v957, 41
      %v1008 = vpop.permute.xlu0 %1007
      %1009 = vrot.lane.b32.xlu0 %v958, 41
      %v1010 = vpop.permute.xlu0 %1009
      %1011 = vrot.lane.b32.xlu0 %v959, 41
      %v1012 = vpop.permute.xlu0 %1011
      %1013 = vrot.lane.b32.xlu0 %v960, 41
      %v1014 = vpop.permute.xlu0 %1013
      %1015 = vrot.lane.b32.xlu0 %v961, 41
      %v1016 = vpop.permute.xlu0 %1015
      %1017 = vrot.lane.b32.xlu0 %v962, 41
      %v1018 = vpop.permute.xlu0 %1017
      %1019 = vrot.lane.b32.xlu0 %v963, 41
      %v1020 = vpop.permute.xlu0 %1019
      %1021 = vrot.lane.b32.xlu0 %v964, 41
      %v1022 = vpop.permute.xlu0 %1021
      %1023 = vrot.lane.b32.xlu0 %v965, 41
      %v1024 = vpop.permute.xlu0 %1023
      %1025 = vrot.lane.b32.xlu0 %v966, 41
      %v1026 = vpop.permute.xlu0 %1025
      %1027 = vrot.lane.b32.xlu0 %v967, 41
      %v1028 = vpop.permute.xlu0 %1027
      %1029 = vrot.lane.b32.xlu0 %v968, 41
      %v1030 = vpop.permute.xlu0 %1029
      %1031 = vrot.lane.b32.xlu0 %v969, 41
      %v1032 = vpop.permute.xlu0 %1031
      %1033 = vrot.lane.b32.xlu0 %v970, 41
      %v1034 = vpop.permute.xlu0 %1033
      %1035 = vrot.lane.b32.xlu0 %v971, 41
      %v1036 = vpop.permute.xlu0 %1035
      %1037 = vrot.lane.b32.xlu0 %v972, 41
      %v1038 = vpop.permute.xlu0 %1037
      %vm1039 = vcmask 334848
      %v1040 = vsel %vm1039, %v996, %v998
      %v1041 = vsel %vm1039, %v998, %v1000
      %v1042 = vsel %vm1039, %v1000, %v1002
      %v1043 = vsel %vm1039, %v1002, %v1004
      %v1044 = vsel %vm1039, %v1004, %v1006
      %v1045 = vsel %vm1039, %v1006, %v1008
      %v1046 = vsel %vm1039, %v1008, %v1010
      %v1047 = vsel %vm1039, %v1010, %v1012
      %v1048 = vsel %vm1039, %v1012, %v1014
      %v1049 = vsel %vm1039, %v1014, %v1016
      %v1050 = vsel %vm1039, %v1016, %v1018
      %v1051 = vsel %vm1039, %v1018, %v1020
      %v1052 = vsel %vm1039, %v1020, %v1022
      %v1053 = vsel %vm1039, %v1022, %v1024
      %v1054 = vsel %vm1039, %v1024, %v1026
      %v1055 = vsel %vm1039, %v1026, %v1028
      %v1056 = vsel %vm1039, %v1028, %v1030
      %v1057 = vsel %vm1039, %v1030, %v1032
      %v1058 = vsel %vm1039, %v1032, %v1034
      %v1059 = vsel %vm1039, %v1034, %v1036
      %v1060 = vsel %vm1039, %v1036, %v1038
      %1082 = vst [vmem:[#allocation2 + $0x270] sm:$0x3f] %v1040
      %1083 = vst [vmem:[#allocation2 + $0x278] sm:$0x3f] %v1041
      %1084 = vst [vmem:[#allocation2 + $0x280] sm:$0x3f] %v1042
      %1085 = vst [vmem:[#allocation2 + $0x288] sm:$0x3f] %v1043
      %1086 = vst [vmem:[#allocation2 + $0x290] sm:$0x3f] %v1044
      %1087 = vst [vmem:[#allocation2 + $0x298] sm:$0x3f] %v1045
      %1088 = vst [vmem:[#allocation2 + $0x2a0] sm:$0x3f] %v1046
      %1089 = vst [vmem:[#allocation2 + $0x2a8] sm:$0x3f] %v1047
      %1090 = vst [vmem:[#allocation2 + $0x2b0] sm:$0x3f] %v1048
      %1091 = vst [vmem:[#allocation2 + $0x2b8] sm:$0x3f] %v1049
      %1092 = vst [vmem:[#allocation2 + $0x2c0] sm:$0x3f] %v1050
      %1093 = vst [vmem:[#allocation2 + $0x2c8] sm:$0x3f] %v1051
      %1094 = vst [vmem:[#allocation2 + $0x2d0] sm:$0x3f] %v1052
      %1095 = vst [vmem:[#allocation2 + $0x2d8] sm:$0x3f] %v1053
      %1096 = vst [vmem:[#allocation2 + $0x2e0] sm:$0x3f] %v1054
      %1097 = vst [vmem:[#allocation2 + $0x2e8] sm:$0x3f] %v1055
      %1098 = vst [vmem:[#allocation2 + $0x2f0] sm:$0x3f] %v1056
      %1099 = vst [vmem:[#allocation2 + $0x2f8] sm:$0x3f] %v1057
      %1100 = vst [vmem:[#allocation2 + $0x300] sm:$0x3f] %v1058
      %1101 = vst [vmem:[#allocation2 + $0x308] sm:$0x3f] %v1059
      %1102 = vst.msk [vmem:[#allocation2 + $0x310] sm:$0x3f] %vm336, %v1060
      %v1103 = vld [vmem:[%s166 + $0x8] sm:$0x77]
      %v1104 = vld [vmem:[%s166 + $0x10] sm:$0x77]
      %v1105 = vld [vmem:[%s166 + $0x18] sm:$0x77]
      %v1106 = vld [vmem:[%s166 + $0x20] sm:$0x77]
      %v1107 = vld [vmem:[%s166 + $0x28] sm:$0x77]
      %v1108 = vld [vmem:[%s166 + $0x30] sm:$0x77]
      %v1109 = vld [vmem:[%s166 + $0x38] sm:$0x77]
      %v1110 = vld [vmem:[%s166 + $0x40] sm:$0x77]
      %v1111 = vld [vmem:[%s166 + $0x48] sm:$0x77]
      %v1112 = vld [vmem:[%s166 + $0x50] sm:$0x77]
      %v1113 = vld [vmem:[%s166 + $0x58] sm:$0x77]
      %v1114 = vunpack.c.l.bf16 %v1103
      %v1115 = vunpack.c.h.bf16 %v1103
      %v1116 = vunpack.c.l.bf16 %v1104
      %v1117 = vunpack.c.h.bf16 %v1104
      %v1118 = vunpack.c.l.bf16 %v1105
      %v1119 = vunpack.c.h.bf16 %v1105
      %v1120 = vunpack.c.l.bf16 %v1106
      %v1121 = vunpack.c.h.bf16 %v1106
      %v1122 = vunpack.c.l.bf16 %v1107
      %v1123 = vunpack.c.h.bf16 %v1107
      %v1124 = vunpack.c.l.bf16 %v1108
      %v1125 = vunpack.c.h.bf16 %v1108
      %v1126 = vunpack.c.l.bf16 %v1109
      %v1127 = vunpack.c.h.bf16 %v1109
      %v1128 = vunpack.c.l.bf16 %v1110
      %v1129 = vunpack.c.h.bf16 %v1110
      %v1130 = vunpack.c.l.bf16 %v1111
      %v1131 = vunpack.c.h.bf16 %v1111
      %v1132 = vunpack.c.l.bf16 %v1112
      %v1133 = vunpack.c.h.bf16 %v1112
      %v1134 = vunpack.c.l.bf16 %v1113
      %v1135 = vunpack.c.h.bf16 %v1113
      %v1158 = vrot.slane %v1114, 2
      %v1159 = vrot.slane %v1115, 2
      %v1160 = vrot.slane %v1116, 2
      %v1161 = vrot.slane %v1117, 2
      %v1162 = vrot.slane %v1118, 2
      %v1163 = vrot.slane %v1119, 2
      %v1164 = vrot.slane %v1120, 2
      %v1165 = vrot.slane %v1121, 2
      %v1166 = vrot.slane %v1122, 2
      %v1167 = vrot.slane %v1123, 2
      %v1168 = vrot.slane %v1124, 2
      %v1169 = vrot.slane %v1125, 2
      %v1170 = vrot.slane %v1126, 2
      %v1171 = vrot.slane %v1127, 2
      %v1172 = vrot.slane %v1128, 2
      %v1173 = vrot.slane %v1129, 2
      %v1174 = vrot.slane %v1130, 2
      %v1175 = vrot.slane %v1131, 2
      %v1176 = vrot.slane %v1132, 2
      %v1177 = vrot.slane %v1133, 2
      %v1178 = vrot.slane %v1134, 2
      %v1179 = vrot.slane %v1135, 2
      %1180 = vrot.lane.b32.xlu0 %v1158, 40
      %v1181 = vpop.permute.xlu0 %1180
      %1182 = vrot.lane.b32.xlu0 %v1159, 40
      %v1183 = vpop.permute.xlu0 %1182
      %1184 = vrot.lane.b32.xlu0 %v1160, 40
      %v1185 = vpop.permute.xlu0 %1184
      %1186 = vrot.lane.b32.xlu0 %v1161, 40
      %v1187 = vpop.permute.xlu0 %1186
      %1188 = vrot.lane.b32.xlu0 %v1162, 40
      %v1189 = vpop.permute.xlu0 %1188
      %1190 = vrot.lane.b32.xlu0 %v1163, 40
      %v1191 = vpop.permute.xlu0 %1190
      %1192 = vrot.lane.b32.xlu0 %v1164, 40
      %v1193 = vpop.permute.xlu0 %1192
      %1194 = vrot.lane.b32.xlu0 %v1165, 40
      %v1195 = vpop.permute.xlu0 %1194
      %1196 = vrot.lane.b32.xlu0 %v1166, 40
      %v1197 = vpop.permute.xlu0 %1196
      %1198 = vrot.lane.b32.xlu0 %v1167, 40
      %v1199 = vpop.permute.xlu0 %1198
      %1200 = vrot.lane.b32.xlu0 %v1168, 40
      %v1201 = vpop.permute.xlu0 %1200
      %1202 = vrot.lane.b32.xlu0 %v1169, 40
      %v1203 = vpop.permute.xlu0 %1202
      %1204 = vrot.lane.b32.xlu0 %v1170, 40
      %v1205 = vpop.permute.xlu0 %1204
      %1206 = vrot.lane.b32.xlu0 %v1171, 40
      %v1207 = vpop.permute.xlu0 %1206
      %1208 = vrot.lane.b32.xlu0 %v1172, 40
      %v1209 = vpop.permute.xlu0 %1208
      %1210 = vrot.lane.b32.xlu0 %v1173, 40
      %v1211 = vpop.permute.xlu0 %1210
      %1212 = vrot.lane.b32.xlu0 %v1174, 40
      %v1213 = vpop.permute.xlu0 %1212
      %1214 = vrot.lane.b32.xlu0 %v1175, 40
      %v1215 = vpop.permute.xlu0 %1214
      %1216 = vrot.lane.b32.xlu0 %v1176, 40
      %v1217 = vpop.permute.xlu0 %1216
      %1218 = vrot.lane.b32.xlu0 %v1177, 40
      %v1219 = vpop.permute.xlu0 %1218
      %1220 = vrot.lane.b32.xlu0 %v1178, 40
      %v1221 = vpop.permute.xlu0 %1220
      %1222 = vrot.lane.b32.xlu0 %v1179, 40
      %v1223 = vpop.permute.xlu0 %1222
      %vm1224 = vcmask 326656
      %v1225 = vsel %vm1224, %v1181, %v1183
      %v1226 = vsel %vm1224, %v1183, %v1185
      %v1227 = vsel %vm1224, %v1185, %v1187
      %v1228 = vsel %vm1224, %v1187, %v1189
      %v1229 = vsel %vm1224, %v1189, %v1191
      %v1230 = vsel %vm1224, %v1191, %v1193
      %v1231 = vsel %vm1224, %v1193, %v1195
      %v1232 = vsel %vm1224, %v1195, %v1197
      %v1233 = vsel %vm1224, %v1197, %v1199
      %v1234 = vsel %vm1224, %v1199, %v1201
      %v1235 = vsel %vm1224, %v1201, %v1203
      %v1236 = vsel %vm1224, %v1203, %v1205
      %v1237 = vsel %vm1224, %v1205, %v1207
      %v1238 = vsel %vm1224, %v1207, %v1209
      %v1239 = vsel %vm1224, %v1209, %v1211
      %v1240 = vsel %vm1224, %v1211, %v1213
      %v1241 = vsel %vm1224, %v1213, %v1215
      %v1242 = vsel %vm1224, %v1215, %v1217
      %v1243 = vsel %vm1224, %v1217, %v1219
      %v1244 = vsel %vm1224, %v1219, %v1221
      %v1245 = vsel %vm1224, %v1221, %v1223
      %1267 = vst [vmem:[#allocation2 + $0x270] sm:$0xc0] %v1225
      %1268 = vst [vmem:[#allocation2 + $0x278] sm:$0xc0] %v1226
      %1269 = vst [vmem:[#allocation2 + $0x280] sm:$0xc0] %v1227
      %1270 = vst [vmem:[#allocation2 + $0x288] sm:$0xc0] %v1228
      %1271 = vst [vmem:[#allocation2 + $0x290] sm:$0xc0] %v1229
      %1272 = vst [vmem:[#allocation2 + $0x298] sm:$0xc0] %v1230
      %1273 = vst [vmem:[#allocation2 + $0x2a0] sm:$0xc0] %v1231
      %1274 = vst [vmem:[#allocation2 + $0x2a8] sm:$0xc0] %v1232
      %1275 = vst [vmem:[#allocation2 + $0x2b0] sm:$0xc0] %v1233
      %1276 = vst [vmem:[#allocation2 + $0x2b8] sm:$0xc0] %v1234
      %1277 = vst [vmem:[#allocation2 + $0x2c0] sm:$0xc0] %v1235
      %1278 = vst [vmem:[#allocation2 + $0x2c8] sm:$0xc0] %v1236
      %1279 = vst [vmem:[#allocation2 + $0x2d0] sm:$0xc0] %v1237
      %1280 = vst [vmem:[#allocation2 + $0x2d8] sm:$0xc0] %v1238
      %1281 = vst [vmem:[#allocation2 + $0x2e0] sm:$0xc0] %v1239
      %1282 = vst [vmem:[#allocation2 + $0x2e8] sm:$0xc0] %v1240
      %1283 = vst [vmem:[#allocation2 + $0x2f0] sm:$0xc0] %v1241
      %1284 = vst [vmem:[#allocation2 + $0x2f8] sm:$0xc0] %v1242
      %1285 = vst [vmem:[#allocation2 + $0x300] sm:$0xc0] %v1243
      %1286 = vst [vmem:[#allocation2 + $0x308] sm:$0xc0] %v1244
      %1287 = vst.msk [vmem:[#allocation2 + $0x310] sm:$0xc0] %vm522, %v1245
      %1288 = vst [vmem:[#allocation2 + $0x340] sm:$0xf] %v1225
      %1289 = vst [vmem:[#allocation2 + $0x348] sm:$0xf] %v1226
      %1290 = vst [vmem:[#allocation2 + $0x350] sm:$0xf] %v1227
      %1291 = vst [vmem:[#allocation2 + $0x358] sm:$0xf] %v1228
      %1292 = vst [vmem:[#allocation2 + $0x360] sm:$0xf] %v1229
      %1293 = vst [vmem:[#allocation2 + $0x368] sm:$0xf] %v1230
      %1294 = vst [vmem:[#allocation2 + $0x370] sm:$0xf] %v1231
      %1295 = vst [vmem:[#allocation2 + $0x378] sm:$0xf] %v1232
      %1296 = vst [vmem:[#allocation2 + $0x380] sm:$0xf] %v1233
      %1297 = vst [vmem:[#allocation2 + $0x388] sm:$0xf] %v1234
      %1298 = vst [vmem:[#allocation2 + $0x390] sm:$0xf] %v1235
      %1299 = vst [vmem:[#allocation2 + $0x398] sm:$0xf] %v1236
      %1300 = vst [vmem:[#allocation2 + $0x3a0] sm:$0xf] %v1237
      %1301 = vst [vmem:[#allocation2 + $0x3a8] sm:$0xf] %v1238
      %1302 = vst [vmem:[#allocation2 + $0x3b0] sm:$0xf] %v1239
      %1303 = vst [vmem:[#allocation2 + $0x3b8] sm:$0xf] %v1240
      %1304 = vst [vmem:[#allocation2 + $0x3c0] sm:$0xf] %v1241
      %1305 = vst [vmem:[#allocation2 + $0x3c8] sm:$0xf] %v1242
      %1306 = vst [vmem:[#allocation2 + $0x3d0] sm:$0xf] %v1243
      %1307 = vst [vmem:[#allocation2 + $0x3d8] sm:$0xf] %v1244
      %1308 = vst.msk [vmem:[#allocation2 + $0x3e0] sm:$0xf] %vm544, %v1245
      %v1309 = vld [vmem:[%s166 + $0x8] sm:$0x77]
      %v1310 = vld [vmem:[%s166 + $0x10] sm:$0x77]
      %v1311 = vld [vmem:[%s166 + $0x18] sm:$0x77]
      %v1312 = vld [vmem:[%s166 + $0x20] sm:$0x77]
      %v1313 = vld [vmem:[%s166 + $0x28] sm:$0x77]
      %v1314 = vld [vmem:[%s166 + $0x30] sm:$0x77]
      %v1315 = vld [vmem:[%s166 + $0x38] sm:$0x77]
      %v1316 = vld [vmem:[%s166 + $0x40] sm:$0x77]
      %v1317 = vld [vmem:[%s166 + $0x48] sm:$0x77]
      %v1318 = vld [vmem:[%s166 + $0x50] sm:$0x77]
      %v1319 = vld [vmem:[%s166 + $0x58] sm:$0x77]
      %v1320 = vunpack.c.l.bf16 %v1309
      %v1321 = vunpack.c.h.bf16 %v1309
      %v1322 = vunpack.c.l.bf16 %v1310
      %v1323 = vunpack.c.h.bf16 %v1310
      %v1324 = vunpack.c.l.bf16 %v1311
      %v1325 = vunpack.c.h.bf16 %v1311
      %v1326 = vunpack.c.l.bf16 %v1312
      %v1327 = vunpack.c.h.bf16 %v1312
      %v1328 = vunpack.c.l.bf16 %v1313
      %v1329 = vunpack.c.h.bf16 %v1313
      %v1330 = vunpack.c.l.bf16 %v1314
      %v1331 = vunpack.c.h.bf16 %v1314
      %v1332 = vunpack.c.l.bf16 %v1315
      %v1333 = vunpack.c.h.bf16 %v1315
      %v1334 = vunpack.c.l.bf16 %v1316
      %v1335 = vunpack.c.h.bf16 %v1316
      %v1336 = vunpack.c.l.bf16 %v1317
      %v1337 = vunpack.c.h.bf16 %v1317
      %v1338 = vunpack.c.l.bf16 %v1318
      %v1339 = vunpack.c.h.bf16 %v1318
      %v1340 = vunpack.c.l.bf16 %v1319
      %v1341 = vunpack.c.h.bf16 %v1319
      %v1364 = vrot.slane %v1320, 4
      %v1365 = vrot.slane %v1321, 4
      %v1366 = vrot.slane %v1322, 4
      %v1367 = vrot.slane %v1323, 4
      %v1368 = vrot.slane %v1324, 4
      %v1369 = vrot.slane %v1325, 4
      %v1370 = vrot.slane %v1326, 4
      %v1371 = vrot.slane %v1327, 4
      %v1372 = vrot.slane %v1328, 4
      %v1373 = vrot.slane %v1329, 4
      %v1374 = vrot.slane %v1330, 4
      %v1375 = vrot.slane %v1331, 4
      %v1376 = vrot.slane %v1332, 4
      %v1377 = vrot.slane %v1333, 4
      %v1378 = vrot.slane %v1334, 4
      %v1379 = vrot.slane %v1335, 4
      %v1380 = vrot.slane %v1336, 4
      %v1381 = vrot.slane %v1337, 4
      %v1382 = vrot.slane %v1338, 4
      %v1383 = vrot.slane %v1339, 4
      %v1384 = vrot.slane %v1340, 4
      %v1385 = vrot.slane %v1341, 4
      %1386 = vrot.lane.b32.xlu0 %v1364, 24
      %v1387 = vpop.permute.xlu0 %1386
      %1388 = vrot.lane.b32.xlu0 %v1365, 24
      %v1389 = vpop.permute.xlu0 %1388
      %1390 = vrot.lane.b32.xlu0 %v1366, 24
      %v1391 = vpop.permute.xlu0 %1390
      %1392 = vrot.lane.b32.xlu0 %v1367, 24
      %v1393 = vpop.permute.xlu0 %1392
      %1394 = vrot.lane.b32.xlu0 %v1368, 24
      %v1395 = vpop.permute.xlu0 %1394
      %1396 = vrot.lane.b32.xlu0 %v1369, 24
      %v1397 = vpop.permute.xlu0 %1396
      %1398 = vrot.lane.b32.xlu0 %v1370, 24
      %v1399 = vpop.permute.xlu0 %1398
      %1400 = vrot.lane.b32.xlu0 %v1371, 24
      %v1401 = vpop.permute.xlu0 %1400
      %1402 = vrot.lane.b32.xlu0 %v1372, 24
      %v1403 = vpop.permute.xlu0 %1402
      %1404 = vrot.lane.b32.xlu0 %v1373, 24
      %v1405 = vpop.permute.xlu0 %1404
      %1406 = vrot.lane.b32.xlu0 %v1374, 24
      %v1407 = vpop.permute.xlu0 %1406
      %1408 = vrot.lane.b32.xlu0 %v1375, 24
      %v1409 = vpop.permute.xlu0 %1408
      %1410 = vrot.lane.b32.xlu0 %v1376, 24
      %v1411 = vpop.permute.xlu0 %1410
      %1412 = vrot.lane.b32.xlu0 %v1377, 24
      %v1413 = vpop.permute.xlu0 %1412
      %1414 = vrot.lane.b32.xlu0 %v1378, 24
      %v1415 = vpop.permute.xlu0 %1414
      %1416 = vrot.lane.b32.xlu0 %v1379, 24
      %v1417 = vpop.permute.xlu0 %1416
      %1418 = vrot.lane.b32.xlu0 %v1380, 24
      %v1419 = vpop.permute.xlu0 %1418
      %1420 = vrot.lane.b32.xlu0 %v1381, 24
      %v1421 = vpop.permute.xlu0 %1420
      %1422 = vrot.lane.b32.xlu0 %v1382, 24
      %v1423 = vpop.permute.xlu0 %1422
      %1424 = vrot.lane.b32.xlu0 %v1383, 24
      %v1425 = vpop.permute.xlu0 %1424
      %1426 = vrot.lane.b32.xlu0 %v1384, 24
      %v1427 = vpop.permute.xlu0 %1426
      %1428 = vrot.lane.b32.xlu0 %v1385, 24
      %v1429 = vpop.permute.xlu0 %1428
      %vm1430 = vcmask 195584
      %v1431 = vsel %vm1430, %v1387, %v1389
      %v1432 = vsel %vm1430, %v1389, %v1391
      %v1433 = vsel %vm1430, %v1391, %v1393
      %v1434 = vsel %vm1430, %v1393, %v1395
      %v1435 = vsel %vm1430, %v1395, %v1397
      %v1436 = vsel %vm1430, %v1397, %v1399
      %v1437 = vsel %vm1430, %v1399, %v1401
      %v1438 = vsel %vm1430, %v1401, %v1403
      %v1439 = vsel %vm1430, %v1403, %v1405
      %v1440 = vsel %vm1430, %v1405, %v1407
      %v1441 = vsel %vm1430, %v1407, %v1409
      %v1442 = vsel %vm1430, %v1409, %v1411
      %v1443 = vsel %vm1430, %v1411, %v1413
      %v1444 = vsel %vm1430, %v1413, %v1415
      %v1445 = vsel %vm1430, %v1415, %v1417
      %v1446 = vsel %vm1430, %v1417, %v1419
      %v1447 = vsel %vm1430, %v1419, %v1421
      %v1448 = vsel %vm1430, %v1421, %v1423
      %v1449 = vsel %vm1430, %v1423, %v1425
      %v1450 = vsel %vm1430, %v1425, %v1427
      %v1451 = vsel %vm1430, %v1427, %v1429
      %1473 = vst [vmem:[#allocation2 + $0x340] sm:$0xf0] %v1431
      %1474 = vst [vmem:[#allocation2 + $0x348] sm:$0xf0] %v1432
      %1475 = vst [vmem:[#allocation2 + $0x350] sm:$0xf0] %v1433
      %1476 = vst [vmem:[#allocation2 + $0x358] sm:$0xf0] %v1434
      %1477 = vst [vmem:[#allocation2 + $0x360] sm:$0xf0] %v1435
      %1478 = vst [vmem:[#allocation2 + $0x368] sm:$0xf0] %v1436
      %1479 = vst [vmem:[#allocation2 + $0x370] sm:$0xf0] %v1437
      %1480 = vst [vmem:[#allocation2 + $0x378] sm:$0xf0] %v1438
      %1481 = vst [vmem:[#allocation2 + $0x380] sm:$0xf0] %v1439
      %1482 = vst [vmem:[#allocation2 + $0x388] sm:$0xf0] %v1440
      %1483 = vst [vmem:[#allocation2 + $0x390] sm:$0xf0] %v1441
      %1484 = vst [vmem:[#allocation2 + $0x398] sm:$0xf0] %v1442
      %1485 = vst [vmem:[#allocation2 + $0x3a0] sm:$0xf0] %v1443
      %1486 = vst [vmem:[#allocation2 + $0x3a8] sm:$0xf0] %v1444
      %1487 = vst [vmem:[#allocation2 + $0x3b0] sm:$0xf0] %v1445
      %1488 = vst [vmem:[#allocation2 + $0x3b8] sm:$0xf0] %v1446
      %1489 = vst [vmem:[#allocation2 + $0x3c0] sm:$0xf0] %v1447
      %1490 = vst [vmem:[#allocation2 + $0x3c8] sm:$0xf0] %v1448
      %1491 = vst [vmem:[#allocation2 + $0x3d0] sm:$0xf0] %v1449
      %1492 = vst [vmem:[#allocation2 + $0x3d8] sm:$0xf0] %v1450
      %1493 = vst.msk [vmem:[#allocation2 + $0x3e0] sm:$0xf0] %vm730, %v1451
      %1494 = vst [vmem:[#allocation2 + $0x410] sm:$0x3] %v1431
      %1495 = vst [vmem:[#allocation2 + $0x418] sm:$0x3] %v1432
      %1496 = vst [vmem:[#allocation2 + $0x420] sm:$0x3] %v1433
      %1497 = vst [vmem:[#allocation2 + $0x428] sm:$0x3] %v1434
      %1498 = vst [vmem:[#allocation2 + $0x430] sm:$0x3] %v1435
      %1499 = vst [vmem:[#allocation2 + $0x438] sm:$0x3] %v1436
      %1500 = vst [vmem:[#allocation2 + $0x440] sm:$0x3] %v1437
      %1501 = vst [vmem:[#allocation2 + $0x448] sm:$0x3] %v1438
      %1502 = vst [vmem:[#allocation2 + $0x450] sm:$0x3] %v1439
      %1503 = vst [vmem:[#allocation2 + $0x458] sm:$0x3] %v1440
      %1504 = vst [vmem:[#allocation2 + $0x460] sm:$0x3] %v1441
      %1505 = vst [vmem:[#allocation2 + $0x468] sm:$0x3] %v1442
      %1506 = vst [vmem:[#allocation2 + $0x470] sm:$0x3] %v1443
      %1507 = vst [vmem:[#allocation2 + $0x478] sm:$0x3] %v1444
      %1508 = vst [vmem:[#allocation2 + $0x480] sm:$0x3] %v1445
      %1509 = vst [vmem:[#allocation2 + $0x488] sm:$0x3] %v1446
      %1510 = vst [vmem:[#allocation2 + $0x490] sm:$0x3] %v1447
      %1511 = vst [vmem:[#allocation2 + $0x498] sm:$0x3] %v1448
      %1512 = vst [vmem:[#allocation2 + $0x4a0] sm:$0x3] %v1449
      %1513 = vst [vmem:[#allocation2 + $0x4a8] sm:$0x3] %v1450
      %1514 = vst.msk [vmem:[#allocation2 + $0x4b0] sm:$0x3] %vm752, %v1451
      %v1515 = vld [vmem:[%s166 + $0x8] sm:$0x77]
      %v1516 = vld [vmem:[%s166 + $0x10] sm:$0x77]
      %v1517 = vld [vmem:[%s166 + $0x18] sm:$0x77]
      %v1518 = vld [vmem:[%s166 + $0x20] sm:$0x77]
      %v1519 = vld [vmem:[%s166 + $0x28] sm:$0x77]
      %v1520 = vld [vmem:[%s166 + $0x30] sm:$0x77]
      %v1521 = vld [vmem:[%s166 + $0x38] sm:$0x77]
      %v1522 = vld [vmem:[%s166 + $0x40] sm:$0x77]
      %v1523 = vld [vmem:[%s166 + $0x48] sm:$0x77]
      %v1524 = vld [vmem:[%s166 + $0x50] sm:$0x77]
      %v1525 = vld [vmem:[%s166 + $0x58] sm:$0x77]
      %v1526 = vunpack.c.l.bf16 %v1515
      %v1527 = vunpack.c.h.bf16 %v1515
      %v1528 = vunpack.c.l.bf16 %v1516
      %v1529 = vunpack.c.h.bf16 %v1516
      %v1530 = vunpack.c.l.bf16 %v1517
      %v1531 = vunpack.c.h.bf16 %v1517
      %v1532 = vunpack.c.l.bf16 %v1518
      %v1533 = vunpack.c.h.bf16 %v1518
      %v1534 = vunpack.c.l.bf16 %v1519
      %v1535 = vunpack.c.h.bf16 %v1519
      %v1536 = vunpack.c.l.bf16 %v1520
      %v1537 = vunpack.c.h.bf16 %v1520
      %v1538 = vunpack.c.l.bf16 %v1521
      %v1539 = vunpack.c.h.bf16 %v1521
      %v1540 = vunpack.c.l.bf16 %v1522
      %v1541 = vunpack.c.h.bf16 %v1522
      %v1542 = vunpack.c.l.bf16 %v1523
      %v1543 = vunpack.c.h.bf16 %v1523
      %v1544 = vunpack.c.l.bf16 %v1524
      %v1545 = vunpack.c.h.bf16 %v1524
      %v1546 = vunpack.c.l.bf16 %v1525
      %v1547 = vunpack.c.h.bf16 %v1525
      %v1570 = vrot.slane %v1526, 6
      %v1571 = vrot.slane %v1527, 6
      %v1572 = vrot.slane %v1528, 6
      %v1573 = vrot.slane %v1529, 6
      %v1574 = vrot.slane %v1530, 6
      %v1575 = vrot.slane %v1531, 6
      %v1576 = vrot.slane %v1532, 6
      %v1577 = vrot.slane %v1533, 6
      %v1578 = vrot.slane %v1534, 6
      %v1579 = vrot.slane %v1535, 6
      %v1580 = vrot.slane %v1536, 6
      %v1581 = vrot.slane %v1537, 6
      %v1582 = vrot.slane %v1538, 6
      %v1583 = vrot.slane %v1539, 6
      %v1584 = vrot.slane %v1540, 6
      %v1585 = vrot.slane %v1541, 6
      %v1586 = vrot.slane %v1542, 6
      %v1587 = vrot.slane %v1543, 6
      %v1588 = vrot.slane %v1544, 6
      %v1589 = vrot.slane %v1545, 6
      %v1590 = vrot.slane %v1546, 6
      %v1591 = vrot.slane %v1547, 6
      %1592 = vrot.lane.b32.xlu0 %v1570, 23
      %v1593 = vpop.permute.xlu0 %1592
      %1594 = vrot.lane.b32.xlu0 %v1571, 23
      %v1595 = vpop.permute.xlu0 %1594
      %1596 = vrot.lane.b32.xlu0 %v1572, 23
      %v1597 = vpop.permute.xlu0 %1596
      %1598 = vrot.lane.b32.xlu0 %v1573, 23
      %v1599 = vpop.permute.xlu0 %1598
      %1600 = vrot.lane.b32.xlu0 %v1574, 23
      %v1601 = vpop.permute.xlu0 %1600
      %1602 = vrot.lane.b32.xlu0 %v1575, 23
      %v1603 = vpop.permute.xlu0 %1602
      %1604 = vrot.lane.b32.xlu0 %v1576, 23
      %v1605 = vpop.permute.xlu0 %1604
      %1606 = vrot.lane.b32.xlu0 %v1577, 23
      %v1607 = vpop.permute.xlu0 %1606
      %1608 = vrot.lane.b32.xlu0 %v1578, 23
      %v1609 = vpop.permute.xlu0 %1608
      %1610 = vrot.lane.b32.xlu0 %v1579, 23
      %v1611 = vpop.permute.xlu0 %1610
      %1612 = vrot.lane.b32.xlu0 %v1580, 23
      %v1613 = vpop.permute.xlu0 %1612
      %1614 = vrot.lane.b32.xlu0 %v1581, 23
      %v1615 = vpop.permute.xlu0 %1614
      %1616 = vrot.lane.b32.xlu0 %v1582, 23
      %v1617 = vpop.permute.xlu0 %1616
      %1618 = vrot.lane.b32.xlu0 %v1583, 23
      %v1619 = vpop.permute.xlu0 %1618
      %1620 = vrot.lane.b32.xlu0 %v1584, 23
      %v1621 = vpop.permute.xlu0 %1620
      %1622 = vrot.lane.b32.xlu0 %v1585, 23
      %v1623 = vpop.permute.xlu0 %1622
      %1624 = vrot.lane.b32.xlu0 %v1586, 23
      %v1625 = vpop.permute.xlu0 %1624
      %1626 = vrot.lane.b32.xlu0 %v1587, 23
      %v1627 = vpop.permute.xlu0 %1626
      %1628 = vrot.lane.b32.xlu0 %v1588, 23
      %v1629 = vpop.permute.xlu0 %1628
      %1630 = vrot.lane.b32.xlu0 %v1589, 23
      %v1631 = vpop.permute.xlu0 %1630
      %1632 = vrot.lane.b32.xlu0 %v1590, 23
      %v1633 = vpop.permute.xlu0 %1632
      %1634 = vrot.lane.b32.xlu0 %v1591, 23
      %v1635 = vpop.permute.xlu0 %1634
      %vm1636 = vcmask 187392
      %v1637 = vsel %vm1636, %v1593, %v1595
      %v1638 = vsel %vm1636, %v1595, %v1597
      %v1639 = vsel %vm1636, %v1597, %v1599
      %v1640 = vsel %vm1636, %v1599, %v1601
      %v1641 = vsel %vm1636, %v1601, %v1603
      %v1642 = vsel %vm1636, %v1603, %v1605
      %v1643 = vsel %vm1636, %v1605, %v1607
      %v1644 = vsel %vm1636, %v1607, %v1609
      %v1645 = vsel %vm1636, %v1609, %v1611
      %v1646 = vsel %vm1636, %v1611, %v1613
      %v1647 = vsel %vm1636, %v1613, %v1615
      %v1648 = vsel %vm1636, %v1615, %v1617
      %v1649 = vsel %vm1636, %v1617, %v1619
      %v1650 = vsel %vm1636, %v1619, %v1621
      %v1651 = vsel %vm1636, %v1621, %v1623
      %v1652 = vsel %vm1636, %v1623, %v1625
      %v1653 = vsel %vm1636, %v1625, %v1627
      %v1654 = vsel %vm1636, %v1627, %v1629
      %v1655 = vsel %vm1636, %v1629, %v1631
      %v1656 = vsel %vm1636, %v1631, %v1633
      %v1657 = vsel %vm1636, %v1633, %v1635
      %1679 = vst [vmem:[#allocation2 + $0x410] sm:$0xfc] %v1637
      %1680 = vst [vmem:[#allocation2 + $0x418] sm:$0xfc] %v1638
      %1681 = vst [vmem:[#allocation2 + $0x420] sm:$0xfc] %v1639
      %1682 = vst [vmem:[#allocation2 + $0x428] sm:$0xfc] %v1640
      %1683 = vst [vmem:[#allocation2 + $0x430] sm:$0xfc] %v1641
      %1684 = vst [vmem:[#allocation2 + $0x438] sm:$0xfc] %v1642
      %1685 = vst [vmem:[#allocation2 + $0x440] sm:$0xfc] %v1643
      %1686 = vst [vmem:[#allocation2 + $0x448] sm:$0xfc] %v1644
      %1687 = vst [vmem:[#allocation2 + $0x450] sm:$0xfc] %v1645
      %1688 = vst [vmem:[#allocation2 + $0x458] sm:$0xfc] %v1646
      %1689 = vst [vmem:[#allocation2 + $0x460] sm:$0xfc] %v1647
      %1690 = vst [vmem:[#allocation2 + $0x468] sm:$0xfc] %v1648
      %1691 = vst [vmem:[#allocation2 + $0x470] sm:$0xfc] %v1649
      %1692 = vst [vmem:[#allocation2 + $0x478] sm:$0xfc] %v1650
      %1693 = vst [vmem:[#allocation2 + $0x480] sm:$0xfc] %v1651
      %1694 = vst [vmem:[#allocation2 + $0x488] sm:$0xfc] %v1652
      %1695 = vst [vmem:[#allocation2 + $0x490] sm:$0xfc] %v1653
      %1696 = vst [vmem:[#allocation2 + $0x498] sm:$0xfc] %v1654
      %1697 = vst [vmem:[#allocation2 + $0x4a0] sm:$0xfc] %v1655
      %1698 = vst [vmem:[#allocation2 + $0x4a8] sm:$0xfc] %v1656
      %1699 = vst.msk [vmem:[#allocation2 + $0x4b0] sm:$0xfc] %vm938, %v1657
      %v1700 = vld [vmem:[%s166 + $0x8] sm:$0x77]
      %v1701 = vld [vmem:[%s166 + $0x10] sm:$0x77]
      %v1702 = vld [vmem:[%s166 + $0x18] sm:$0x77]
      %v1703 = vld [vmem:[%s166 + $0x20] sm:$0x77]
      %v1704 = vld [vmem:[%s166 + $0x28] sm:$0x77]
      %v1705 = vld [vmem:[%s166 + $0x30] sm:$0x77]
      %v1706 = vld [vmem:[%s166 + $0x38] sm:$0x77]
      %v1707 = vld [vmem:[%s166 + $0x40] sm:$0x77]
      %v1708 = vld [vmem:[%s166 + $0x48] sm:$0x77]
      %v1709 = vld [vmem:[%s166 + $0x50] sm:$0x77]
      %v1710 = vld [vmem:[%s166 + $0x58] sm:$0x77]
      %v1711 = vunpack.c.l.bf16 %v1700
      %v1712 = vunpack.c.h.bf16 %v1700
      %v1713 = vunpack.c.l.bf16 %v1701
      %v1714 = vunpack.c.h.bf16 %v1701
      %v1715 = vunpack.c.l.bf16 %v1702
      %v1716 = vunpack.c.h.bf16 %v1702
      %v1717 = vunpack.c.l.bf16 %v1703
      %v1718 = vunpack.c.h.bf16 %v1703
      %v1719 = vunpack.c.l.bf16 %v1704
      %v1720 = vunpack.c.h.bf16 %v1704
      %v1721 = vunpack.c.l.bf16 %v1705
      %v1722 = vunpack.c.h.bf16 %v1705
      %v1723 = vunpack.c.l.bf16 %v1706
      %v1724 = vunpack.c.h.bf16 %v1706
      %v1725 = vunpack.c.l.bf16 %v1707
      %v1726 = vunpack.c.h.bf16 %v1707
      %v1727 = vunpack.c.l.bf16 %v1708
      %v1728 = vunpack.c.h.bf16 %v1708
      %v1729 = vunpack.c.l.bf16 %v1709
      %v1730 = vunpack.c.h.bf16 %v1709
      %v1731 = vunpack.c.l.bf16 %v1710
      %v1732 = vunpack.c.h.bf16 %v1710
      %1755 = vrot.lane.b32.xlu0 %v1711, 22
      %v1756 = vpop.permute.xlu0 %1755
      %1757 = vrot.lane.b32.xlu0 %v1712, 22
      %v1758 = vpop.permute.xlu0 %1757
      %1759 = vrot.lane.b32.xlu0 %v1713, 22
      %v1760 = vpop.permute.xlu0 %1759
      %1761 = vrot.lane.b32.xlu0 %v1714, 22
      %v1762 = vpop.permute.xlu0 %1761
      %1763 = vrot.lane.b32.xlu0 %v1715, 22
      %v1764 = vpop.permute.xlu0 %1763
      %1765 = vrot.lane.b32.xlu0 %v1716, 22
      %v1766 = vpop.permute.xlu0 %1765
      %1767 = vrot.lane.b32.xlu0 %v1717, 22
      %v1768 = vpop.permute.xlu0 %1767
      %1769 = vrot.lane.b32.xlu0 %v1718, 22
      %v1770 = vpop.permute.xlu0 %1769
      %1771 = vrot.lane.b32.xlu0 %v1719, 22
      %v1772 = vpop.permute.xlu0 %1771
      %1773 = vrot.lane.b32.xlu0 %v1720, 22
      %v1774 = vpop.permute.xlu0 %1773
      %1775 = vrot.lane.b32.xlu0 %v1721, 22
      %v1776 = vpop.permute.xlu0 %1775
      %1777 = vrot.lane.b32.xlu0 %v1722, 22
      %v1778 = vpop.permute.xlu0 %1777
      %1779 = vrot.lane.b32.xlu0 %v1723, 22
      %v1780 = vpop.permute.xlu0 %1779
      %1781 = vrot.lane.b32.xlu0 %v1724, 22
      %v1782 = vpop.permute.xlu0 %1781
      %1783 = vrot.lane.b32.xlu0 %v1725, 22
      %v1784 = vpop.permute.xlu0 %1783
      %1785 = vrot.lane.b32.xlu0 %v1726, 22
      %v1786 = vpop.permute.xlu0 %1785
      %1787 = vrot.lane.b32.xlu0 %v1727, 22
      %v1788 = vpop.permute.xlu0 %1787
      %1789 = vrot.lane.b32.xlu0 %v1728, 22
      %v1790 = vpop.permute.xlu0 %1789
      %1791 = vrot.lane.b32.xlu0 %v1729, 22
      %v1792 = vpop.permute.xlu0 %1791
      %1793 = vrot.lane.b32.xlu0 %v1730, 22
      %v1794 = vpop.permute.xlu0 %1793
      %1795 = vrot.lane.b32.xlu0 %v1731, 22
      %v1796 = vpop.permute.xlu0 %1795
      %1797 = vrot.lane.b32.xlu0 %v1732, 22
      %v1798 = vpop.permute.xlu0 %1797
      %vm1799 = vcmask 179200
      %v1800 = vsel %vm1799, %v1756, %v1758
      %v1801 = vsel %vm1799, %v1758, %v1760
      %v1802 = vsel %vm1799, %v1760, %v1762
      %v1803 = vsel %vm1799, %v1762, %v1764
      %v1804 = vsel %vm1799, %v1764, %v1766
      %v1805 = vsel %vm1799, %v1766, %v1768
      %v1806 = vsel %vm1799, %v1768, %v1770
      %v1807 = vsel %vm1799, %v1770, %v1772
      %v1808 = vsel %vm1799, %v1772, %v1774
      %v1809 = vsel %vm1799, %v1774, %v1776
      %v1810 = vsel %vm1799, %v1776, %v1778
      %v1811 = vsel %vm1799, %v1778, %v1780
      %v1812 = vsel %vm1799, %v1780, %v1782
      %v1813 = vsel %vm1799, %v1782, %v1784
      %v1814 = vsel %vm1799, %v1784, %v1786
      %v1815 = vsel %vm1799, %v1786, %v1788
      %v1816 = vsel %vm1799, %v1788, %v1790
      %v1817 = vsel %vm1799, %v1790, %v1792
      %v1818 = vsel %vm1799, %v1792, %v1794
      %v1819 = vsel %vm1799, %v1794, %v1796
      %v1820 = vsel %vm1799, %v1796, %v1798
      %1842 = vst [vmem:[#allocation2 + $0x4e0] sm:$0x3f] %v1800
      %1843 = vst [vmem:[#allocation2 + $0x4e8] sm:$0x3f] %v1801
      %1844 = vst [vmem:[#allocation2 + $0x4f0] sm:$0x3f] %v1802
      %1845 = vst [vmem:[#allocation2 + $0x4f8] sm:$0x3f] %v1803
      %1846 = vst [vmem:[#allocation2 + $0x500] sm:$0x3f] %v1804
      %1847 = vst [vmem:[#allocation2 + $0x508] sm:$0x3f] %v1805
      %1848 = vst [vmem:[#allocation2 + $0x510] sm:$0x3f] %v1806
      %1849 = vst [vmem:[#allocation2 + $0x518] sm:$0x3f] %v1807
      %1850 = vst [vmem:[#allocation2 + $0x520] sm:$0x3f] %v1808
      %1851 = vst [vmem:[#allocation2 + $0x528] sm:$0x3f] %v1809
      %1852 = vst [vmem:[#allocation2 + $0x530] sm:$0x3f] %v1810
      %1853 = vst [vmem:[#allocation2 + $0x538] sm:$0x3f] %v1811
      %1854 = vst [vmem:[#allocation2 + $0x540] sm:$0x3f] %v1812
      %1855 = vst [vmem:[#allocation2 + $0x548] sm:$0x3f] %v1813
      %1856 = vst [vmem:[#allocation2 + $0x550] sm:$0x3f] %v1814
      %1857 = vst [vmem:[#allocation2 + $0x558] sm:$0x3f] %v1815
      %1858 = vst [vmem:[#allocation2 + $0x560] sm:$0x3f] %v1816
      %1859 = vst [vmem:[#allocation2 + $0x568] sm:$0x3f] %v1817
      %1860 = vst [vmem:[#allocation2 + $0x570] sm:$0x3f] %v1818
      %1861 = vst [vmem:[#allocation2 + $0x578] sm:$0x3f] %v1819
      %1862 = vst.msk [vmem:[#allocation2 + $0x580] sm:$0x3f] %vm336, %v1820
      %v1863 = vld [vmem:[%s166] sm:$0x77]
      %v1864 = vld [vmem:[%s166 + $0x8] sm:$0x77]
      %v1865 = vld [vmem:[%s166 + $0x10] sm:$0x77]
      %v1866 = vld [vmem:[%s166 + $0x18] sm:$0x77]
      %v1867 = vld [vmem:[%s166 + $0x20] sm:$0x77]
      %v1868 = vld [vmem:[%s166 + $0x28] sm:$0x77]
      %v1869 = vld [vmem:[%s166 + $0x30] sm:$0x77]
      %v1870 = vld [vmem:[%s166 + $0x38] sm:$0x77]
      %v1871 = vld [vmem:[%s166 + $0x40] sm:$0x77]
      %v1872 = vld [vmem:[%s166 + $0x48] sm:$0x77]
      %v1873 = vld [vmem:[%s166 + $0x50] sm:$0x7]
      %v1874 = vunpack.c.l.bf16 %v1863
      %v1875 = vunpack.c.h.bf16 %v1863
      %v1876 = vunpack.c.l.bf16 %v1864
      %v1877 = vunpack.c.h.bf16 %v1864
      %v1878 = vunpack.c.l.bf16 %v1865
      %v1879 = vunpack.c.h.bf16 %v1865
      %v1880 = vunpack.c.l.bf16 %v1866
      %v1881 = vunpack.c.h.bf16 %v1866
      %v1882 = vunpack.c.l.bf16 %v1867
      %v1883 = vunpack.c.h.bf16 %v1867
      %v1884 = vunpack.c.l.bf16 %v1868
      %v1885 = vunpack.c.h.bf16 %v1868
      %v1886 = vunpack.c.l.bf16 %v1869
      %v1887 = vunpack.c.h.bf16 %v1869
      %v1888 = vunpack.c.l.bf16 %v1870
      %v1889 = vunpack.c.h.bf16 %v1870
      %v1890 = vunpack.c.l.bf16 %v1871
      %v1891 = vunpack.c.h.bf16 %v1871
      %v1892 = vunpack.c.l.bf16 %v1872
      %v1893 = vunpack.c.h.bf16 %v1872
      %v1894 = vunpack.c.l.bf16 %v1873
      %v1916 = vrot.slane %v1874, 2
      %v1917 = vrot.slane %v1875, 2
      %v1918 = vrot.slane %v1876, 2
      %v1919 = vrot.slane %v1877, 2
      %v1920 = vrot.slane %v1878, 2
      %v1921 = vrot.slane %v1879, 2
      %v1922 = vrot.slane %v1880, 2
      %v1923 = vrot.slane %v1881, 2
      %v1924 = vrot.slane %v1882, 2
      %v1925 = vrot.slane %v1883, 2
      %v1926 = vrot.slane %v1884, 2
      %v1927 = vrot.slane %v1885, 2
      %v1928 = vrot.slane %v1886, 2
      %v1929 = vrot.slane %v1887, 2
      %v1930 = vrot.slane %v1888, 2
      %v1931 = vrot.slane %v1889, 2
      %v1932 = vrot.slane %v1890, 2
      %v1933 = vrot.slane %v1891, 2
      %v1934 = vrot.slane %v1892, 2
      %v1935 = vrot.slane %v1893, 2
      %v1936 = vrot.slane %v1894, 2
      %1937 = vrot.lane.b32.xlu0 %v1916, 109
      %v1938 = vpop.permute.xlu0 %1937
      %1939 = vrot.lane.b32.xlu0 %v1917, 109
      %v1940 = vpop.permute.xlu0 %1939
      %1941 = vrot.lane.b32.xlu0 %v1918, 109
      %v1942 = vpop.permute.xlu0 %1941
      %1943 = vrot.lane.b32.xlu0 %v1919, 109
      %v1944 = vpop.permute.xlu0 %1943
      %1945 = vrot.lane.b32.xlu0 %v1920, 109
      %v1946 = vpop.permute.xlu0 %1945
      %1947 = vrot.lane.b32.xlu0 %v1921, 109
      %v1948 = vpop.permute.xlu0 %1947
      %1949 = vrot.lane.b32.xlu0 %v1922, 109
      %v1950 = vpop.permute.xlu0 %1949
      %1951 = vrot.lane.b32.xlu0 %v1923, 109
      %v1952 = vpop.permute.xlu0 %1951
      %1953 = vrot.lane.b32.xlu0 %v1924, 109
      %v1954 = vpop.permute.xlu0 %1953
      %1955 = vrot.lane.b32.xlu0 %v1925, 109
      %v1956 = vpop.permute.xlu0 %1955
      %1957 = vrot.lane.b32.xlu0 %v1926, 109
      %v1958 = vpop.permute.xlu0 %1957
      %1959 = vrot.lane.b32.xlu0 %v1927, 109
      %v1960 = vpop.permute.xlu0 %1959
      %1961 = vrot.lane.b32.xlu0 %v1928, 109
      %v1962 = vpop.permute.xlu0 %1961
      %1963 = vrot.lane.b32.xlu0 %v1929, 109
      %v1964 = vpop.permute.xlu0 %1963
      %1965 = vrot.lane.b32.xlu0 %v1930, 109
      %v1966 = vpop.permute.xlu0 %1965
      %1967 = vrot.lane.b32.xlu0 %v1931, 109
      %v1968 = vpop.permute.xlu0 %1967
      %1969 = vrot.lane.b32.xlu0 %v1932, 109
      %v1970 = vpop.permute.xlu0 %1969
      %1971 = vrot.lane.b32.xlu0 %v1933, 109
      %v1972 = vpop.permute.xlu0 %1971
      %1973 = vrot.lane.b32.xlu0 %v1934, 109
      %v1974 = vpop.permute.xlu0 %1973
      %1975 = vrot.lane.b32.xlu0 %v1935, 109
      %v1976 = vpop.permute.xlu0 %1975
      %1977 = vrot.lane.b32.xlu0 %v1936, 109
      %v1978 = vpop.permute.xlu0 %1977
      %vm1979 = vcmask 891904
      %v1980 = vsel %vm1979, %v1938, %v1940
      %v1981 = vsel %vm1979, %v1940, %v1942
      %v1982 = vsel %vm1979, %v1942, %v1944
      %v1983 = vsel %vm1979, %v1944, %v1946
      %v1984 = vsel %vm1979, %v1946, %v1948
      %v1985 = vsel %vm1979, %v1948, %v1950
      %v1986 = vsel %vm1979, %v1950, %v1952
      %v1987 = vsel %vm1979, %v1952, %v1954
      %v1988 = vsel %vm1979, %v1954, %v1956
      %v1989 = vsel %vm1979, %v1956, %v1958
      %v1990 = vsel %vm1979, %v1958, %v1960
      %v1991 = vsel %vm1979, %v1960, %v1962
      %v1992 = vsel %vm1979, %v1962, %v1964
      %v1993 = vsel %vm1979, %v1964, %v1966
      %v1994 = vsel %vm1979, %v1966, %v1968
      %v1995 = vsel %vm1979, %v1968, %v1970
      %v1996 = vsel %vm1979, %v1970, %v1972
      %v1997 = vsel %vm1979, %v1972, %v1974
      %v1998 = vsel %vm1979, %v1974, %v1976
      %v1999 = vsel %vm1979, %v1976, %v1978
      %2021 = vst [vmem:[#allocation2 + $0x4e0] sm:$0xc0] %v1980
      %2022 = vst [vmem:[#allocation2 + $0x4e8] sm:$0xc0] %v1981
      %2023 = vst [vmem:[#allocation2 + $0x4f0] sm:$0xc0] %v1982
      %2024 = vst [vmem:[#allocation2 + $0x4f8] sm:$0xc0] %v1983
      %2025 = vst [vmem:[#allocation2 + $0x500] sm:$0xc0] %v1984
      %2026 = vst [vmem:[#allocation2 + $0x508] sm:$0xc0] %v1985
      %2027 = vst [vmem:[#allocation2 + $0x510] sm:$0xc0] %v1986
      %2028 = vst [vmem:[#allocation2 + $0x518] sm:$0xc0] %v1987
      %2029 = vst [vmem:[#allocation2 + $0x520] sm:$0xc0] %v1988
      %2030 = vst [vmem:[#allocation2 + $0x528] sm:$0xc0] %v1989
      %2031 = vst [vmem:[#allocation2 + $0x530] sm:$0xc0] %v1990
      %2032 = vst [vmem:[#allocation2 + $0x538] sm:$0xc0] %v1991
      %2033 = vst [vmem:[#allocation2 + $0x540] sm:$0xc0] %v1992
      %2034 = vst [vmem:[#allocation2 + $0x548] sm:$0xc0] %v1993
      %2035 = vst [vmem:[#allocation2 + $0x550] sm:$0xc0] %v1994
      %2036 = vst [vmem:[#allocation2 + $0x558] sm:$0xc0] %v1995
      %2037 = vst [vmem:[#allocation2 + $0x560] sm:$0xc0] %v1996
      %2038 = vst [vmem:[#allocation2 + $0x568] sm:$0xc0] %v1997
      %2039 = vst [vmem:[#allocation2 + $0x570] sm:$0xc0] %v1998
      %2040 = vst [vmem:[#allocation2 + $0x578] sm:$0xc0] %v1999
      %2041 = vst.msk [vmem:[#allocation2 + $0x580] sm:$0xc0] %vm522, %v1978
      %2042 = vst [vmem:[#allocation2 + $0x5b0] sm:$0xf] %v1980
      %2043 = vst [vmem:[#allocation2 + $0x5b8] sm:$0xf] %v1981
      %2044 = vst [vmem:[#allocation2 + $0x5c0] sm:$0xf] %v1982
      %2045 = vst [vmem:[#allocation2 + $0x5c8] sm:$0xf] %v1983
      %2046 = vst [vmem:[#allocation2 + $0x5d0] sm:$0xf] %v1984
      %2047 = vst [vmem:[#allocation2 + $0x5d8] sm:$0xf] %v1985
      %2048 = vst [vmem:[#allocation2 + $0x5e0] sm:$0xf] %v1986
      %2049 = vst [vmem:[#allocation2 + $0x5e8] sm:$0xf] %v1987
      %2050 = vst [vmem:[#allocation2 + $0x5f0] sm:$0xf] %v1988
      %2051 = vst [vmem:[#allocation2 + $0x5f8] sm:$0xf] %v1989
      %2052 = vst [vmem:[#allocation2 + $0x600] sm:$0xf] %v1990
      %2053 = vst [vmem:[#allocation2 + $0x608] sm:$0xf] %v1991
      %2054 = vst [vmem:[#allocation2 + $0x610] sm:$0xf] %v1992
      %2055 = vst [vmem:[#allocation2 + $0x618] sm:$0xf] %v1993
      %2056 = vst [vmem:[#allocation2 + $0x620] sm:$0xf] %v1994
      %2057 = vst [vmem:[#allocation2 + $0x628] sm:$0xf] %v1995
      %2058 = vst [vmem:[#allocation2 + $0x630] sm:$0xf] %v1996
      %2059 = vst [vmem:[#allocation2 + $0x638] sm:$0xf] %v1997
      %2060 = vst [vmem:[#allocation2 + $0x640] sm:$0xf] %v1998
      %2061 = vst [vmem:[#allocation2 + $0x648] sm:$0xf] %v1999
      %2062 = vst.msk [vmem:[#allocation2 + $0x650] sm:$0xf] %vm544, %v1978
      %v2063 = vld [vmem:[%s166 + $0x8] sm:$0x77]
      %v2064 = vld [vmem:[%s166 + $0x10] sm:$0x77]
      %v2065 = vld [vmem:[%s166 + $0x18] sm:$0x77]
      %v2066 = vld [vmem:[%s166 + $0x20] sm:$0x77]
      %v2067 = vld [vmem:[%s166 + $0x28] sm:$0x77]
      %v2068 = vld [vmem:[%s166 + $0x30] sm:$0x77]
      %v2069 = vld [vmem:[%s166 + $0x38] sm:$0x77]
      %v2070 = vld [vmem:[%s166 + $0x40] sm:$0x77]
      %v2071 = vld [vmem:[%s166 + $0x48] sm:$0x77]
      %v2072 = vld [vmem:[%s166 + $0x50] sm:$0x77]
      %v2073 = vld [vmem:[%s166 + $0x58] sm:$0x77]
      %v2074 = vunpack.c.l.bf16 %v2063
      %v2075 = vunpack.c.h.bf16 %v2063
      %v2076 = vunpack.c.l.bf16 %v2064
      %v2077 = vunpack.c.h.bf16 %v2064
      %v2078 = vunpack.c.l.bf16 %v2065
      %v2079 = vunpack.c.h.bf16 %v2065
      %v2080 = vunpack.c.l.bf16 %v2066
      %v2081 = vunpack.c.h.bf16 %v2066
      %v2082 = vunpack.c.l.bf16 %v2067
      %v2083 = vunpack.c.h.bf16 %v2067
      %v2084 = vunpack.c.l.bf16 %v2068
      %v2085 = vunpack.c.h.bf16 %v2068
      %v2086 = vunpack.c.l.bf16 %v2069
      %v2087 = vunpack.c.h.bf16 %v2069
      %v2088 = vunpack.c.l.bf16 %v2070
      %v2089 = vunpack.c.h.bf16 %v2070
      %v2090 = vunpack.c.l.bf16 %v2071
      %v2091 = vunpack.c.h.bf16 %v2071
      %v2092 = vunpack.c.l.bf16 %v2072
      %v2093 = vunpack.c.h.bf16 %v2072
      %v2094 = vunpack.c.l.bf16 %v2073
      %v2095 = vunpack.c.h.bf16 %v2073
      %v2118 = vrot.slane %v2074, 4
      %v2119 = vrot.slane %v2075, 4
      %v2120 = vrot.slane %v2076, 4
      %v2121 = vrot.slane %v2077, 4
      %v2122 = vrot.slane %v2078, 4
      %v2123 = vrot.slane %v2079, 4
      %v2124 = vrot.slane %v2080, 4
      %v2125 = vrot.slane %v2081, 4
      %v2126 = vrot.slane %v2082, 4
      %v2127 = vrot.slane %v2083, 4
      %v2128 = vrot.slane %v2084, 4
      %v2129 = vrot.slane %v2085, 4
      %v2130 = vrot.slane %v2086, 4
      %v2131 = vrot.slane %v2087, 4
      %v2132 = vrot.slane %v2088, 4
      %v2133 = vrot.slane %v2089, 4
      %v2134 = vrot.slane %v2090, 4
      %v2135 = vrot.slane %v2091, 4
      %v2136 = vrot.slane %v2092, 4
      %v2137 = vrot.slane %v2093, 4
      %v2138 = vrot.slane %v2094, 4
      %v2139 = vrot.slane %v2095, 4
      %2140 = vrot.lane.b32.xlu0 %v2118, 41
      %v2141 = vpop.permute.xlu0 %2140
      %2142 = vrot.lane.b32.xlu0 %v2119, 41
      %v2143 = vpop.permute.xlu0 %2142
      %2144 = vrot.lane.b32.xlu0 %v2120, 41
      %v2145 = vpop.permute.xlu0 %2144
      %2146 = vrot.lane.b32.xlu0 %v2121, 41
      %v2147 = vpop.permute.xlu0 %2146
      %2148 = vrot.lane.b32.xlu0 %v2122, 41
      %v2149 = vpop.permute.xlu0 %2148
      %2150 = vrot.lane.b32.xlu0 %v2123, 41
      %v2151 = vpop.permute.xlu0 %2150
      %2152 = vrot.lane.b32.xlu0 %v2124, 41
      %v2153 = vpop.permute.xlu0 %2152
      %2154 = vrot.lane.b32.xlu0 %v2125, 41
      %v2155 = vpop.permute.xlu0 %2154
      %2156 = vrot.lane.b32.xlu0 %v2126, 41
      %v2157 = vpop.permute.xlu0 %2156
      %2158 = vrot.lane.b32.xlu0 %v2127, 41
      %v2159 = vpop.permute.xlu0 %2158
      %2160 = vrot.lane.b32.xlu0 %v2128, 41
      %v2161 = vpop.permute.xlu0 %2160
      %2162 = vrot.lane.b32.xlu0 %v2129, 41
      %v2163 = vpop.permute.xlu0 %2162
      %2164 = vrot.lane.b32.xlu0 %v2130, 41
      %v2165 = vpop.permute.xlu0 %2164
      %2166 = vrot.lane.b32.xlu0 %v2131, 41
      %v2167 = vpop.permute.xlu0 %2166
      %2168 = vrot.lane.b32.xlu0 %v2132, 41
      %v2169 = vpop.permute.xlu0 %2168
      %2170 = vrot.lane.b32.xlu0 %v2133, 41
      %v2171 = vpop.permute.xlu0 %2170
      %2172 = vrot.lane.b32.xlu0 %v2134, 41
      %v2173 = vpop.permute.xlu0 %2172
      %2174 = vrot.lane.b32.xlu0 %v2135, 41
      %v2175 = vpop.permute.xlu0 %2174
      %2176 = vrot.lane.b32.xlu0 %v2136, 41
      %v2177 = vpop.permute.xlu0 %2176
      %2178 = vrot.lane.b32.xlu0 %v2137, 41
      %v2179 = vpop.permute.xlu0 %2178
      %2180 = vrot.lane.b32.xlu0 %v2138, 41
      %v2181 = vpop.permute.xlu0 %2180
      %2182 = vrot.lane.b32.xlu0 %v2139, 41
      %v2183 = vpop.permute.xlu0 %2182
      %v2184 = vsel %vm1039, %v2141, %v2143
      %v2185 = vsel %vm1039, %v2143, %v2145
      %v2186 = vsel %vm1039, %v2145, %v2147
      %v2187 = vsel %vm1039, %v2147, %v2149
      %v2188 = vsel %vm1039, %v2149, %v2151
      %v2189 = vsel %vm1039, %v2151, %v2153
      %v2190 = vsel %vm1039, %v2153, %v2155
      %v2191 = vsel %vm1039, %v2155, %v2157
      %v2192 = vsel %vm1039, %v2157, %v2159
      %v2193 = vsel %vm1039, %v2159, %v2161
      %v2194 = vsel %vm1039, %v2161, %v2163
      %v2195 = vsel %vm1039, %v2163, %v2165
      %v2196 = vsel %vm1039, %v2165, %v2167
      %v2197 = vsel %vm1039, %v2167, %v2169
      %v2198 = vsel %vm1039, %v2169, %v2171
      %v2199 = vsel %vm1039, %v2171, %v2173
      %v2200 = vsel %vm1039, %v2173, %v2175
      %v2201 = vsel %vm1039, %v2175, %v2177
      %v2202 = vsel %vm1039, %v2177, %v2179
      %v2203 = vsel %vm1039, %v2179, %v2181
      %v2204 = vsel %vm1039, %v2181, %v2183
      %2226 = vst [vmem:[#allocation2 + $0x5b0] sm:$0xf0] %v2184
      %2227 = vst [vmem:[#allocation2 + $0x5b8] sm:$0xf0] %v2185
      %2228 = vst [vmem:[#allocation2 + $0x5c0] sm:$0xf0] %v2186
      %2229 = vst [vmem:[#allocation2 + $0x5c8] sm:$0xf0] %v2187
      %2230 = vst [vmem:[#allocation2 + $0x5d0] sm:$0xf0] %v2188
      %2231 = vst [vmem:[#allocation2 + $0x5d8] sm:$0xf0] %v2189
      %2232 = vst [vmem:[#allocation2 + $0x5e0] sm:$0xf0] %v2190
      %2233 = vst [vmem:[#allocation2 + $0x5e8] sm:$0xf0] %v2191
      %2234 = vst [vmem:[#allocation2 + $0x5f0] sm:$0xf0] %v2192
      %2235 = vst [vmem:[#allocation2 + $0x5f8] sm:$0xf0] %v2193
      %2236 = vst [vmem:[#allocation2 + $0x600] sm:$0xf0] %v2194
      %2237 = vst [vmem:[#allocation2 + $0x608] sm:$0xf0] %v2195
      %2238 = vst [vmem:[#allocation2 + $0x610] sm:$0xf0] %v2196
      %2239 = vst [vmem:[#allocation2 + $0x618] sm:$0xf0] %v2197
      %2240 = vst [vmem:[#allocation2 + $0x620] sm:$0xf0] %v2198
      %2241 = vst [vmem:[#allocation2 + $0x628] sm:$0xf0] %v2199
      %2242 = vst [vmem:[#allocation2 + $0x630] sm:$0xf0] %v2200
      %2243 = vst [vmem:[#allocation2 + $0x638] sm:$0xf0] %v2201
      %2244 = vst [vmem:[#allocation2 + $0x640] sm:$0xf0] %v2202
      %2245 = vst [vmem:[#allocation2 + $0x648] sm:$0xf0] %v2203
      %2246 = vst.msk [vmem:[#allocation2 + $0x650] sm:$0xf0] %vm730, %v2204
      %2247 = vst [vmem:[#allocation2 + $0x680] sm:$0x3] %v2184
      %2248 = vst [vmem:[#allocation2 + $0x688] sm:$0x3] %v2185
      %2249 = vst [vmem:[#allocation2 + $0x690] sm:$0x3] %v2186
      %2250 = vst [vmem:[#allocation2 + $0x698] sm:$0x3] %v2187
      %2251 = vst [vmem:[#allocation2 + $0x6a0] sm:$0x3] %v2188
      %2252 = vst [vmem:[#allocation2 + $0x6a8] sm:$0x3] %v2189
      %2253 = vst [vmem:[#allocation2 + $0x6b0] sm:$0x3] %v2190
      %2254 = vst [vmem:[#allocation2 + $0x6b8] sm:$0x3] %v2191
      %2255 = vst [vmem:[#allocation2 + $0x6c0] sm:$0x3] %v2192
      %2256 = vst [vmem:[#allocation2 + $0x6c8] sm:$0x3] %v2193
      %2257 = vst [vmem:[#allocation2 + $0x6d0] sm:$0x3] %v2194
      %2258 = vst [vmem:[#allocation2 + $0x6d8] sm:$0x3] %v2195
      %2259 = vst [vmem:[#allocation2 + $0x6e0] sm:$0x3] %v2196
      %2260 = vst [vmem:[#allocation2 + $0x6e8] sm:$0x3] %v2197
      %2261 = vst [vmem:[#allocation2 + $0x6f0] sm:$0x3] %v2198
      %2262 = vst [vmem:[#allocation2 + $0x6f8] sm:$0x3] %v2199
      %2263 = vst [vmem:[#allocation2 + $0x700] sm:$0x3] %v2200
      %2264 = vst [vmem:[#allocation2 + $0x708] sm:$0x3] %v2201
      %2265 = vst [vmem:[#allocation2 + $0x710] sm:$0x3] %v2202
      %2266 = vst [vmem:[#allocation2 + $0x718] sm:$0x3] %v2203
      %2267 = vst.msk [vmem:[#allocation2 + $0x720] sm:$0x3] %vm752, %v2204
      %v2268 = vld [vmem:[%s166 + $0x14] sm:$0x77]
      %v2269 = vld [vmem:[%s166 + $0x1c] sm:$0x77]
      %v2270 = vld [vmem:[%s166 + $0x24] sm:$0x77]
      %v2271 = vld [vmem:[%s166 + $0x2c] sm:$0x77]
      %v2272 = vld [vmem:[%s166 + $0x34] sm:$0x77]
      %v2273 = vld [vmem:[%s166 + $0x3c] sm:$0x77]
      %v2274 = vld [vmem:[%s166 + $0x44] sm:$0x77]
      %v2275 = vld [vmem:[%s166 + $0x4c] sm:$0x77]
      %v2276 = vld [vmem:[%s166 + $0x54] sm:$0x77]
      %v2277 = vld [vmem:[%s166 + $0x5c] sm:$0x77]
      %v2278 = vld [vmem:[%s166 + $0x64] sm:$0x7]
      %v2279 = vunpack.c.l.bf16 %v2268
      %v2280 = vunpack.c.h.bf16 %v2268
      %v2281 = vunpack.c.l.bf16 %v2269
      %v2282 = vunpack.c.h.bf16 %v2269
      %v2283 = vunpack.c.l.bf16 %v2270
      %v2284 = vunpack.c.h.bf16 %v2270
      %v2285 = vunpack.c.l.bf16 %v2271
      %v2286 = vunpack.c.h.bf16 %v2271
      %v2287 = vunpack.c.l.bf16 %v2272
      %v2288 = vunpack.c.h.bf16 %v2272
      %v2289 = vunpack.c.l.bf16 %v2273
      %v2290 = vunpack.c.h.bf16 %v2273
      %v2291 = vunpack.c.l.bf16 %v2274
      %v2292 = vunpack.c.h.bf16 %v2274
      %v2293 = vunpack.c.l.bf16 %v2275
      %v2294 = vunpack.c.h.bf16 %v2275
      %v2295 = vunpack.c.l.bf16 %v2276
      %v2296 = vunpack.c.h.bf16 %v2276
      %v2297 = vunpack.c.l.bf16 %v2277
      %v2298 = vunpack.c.h.bf16 %v2277
      %v2299 = vunpack.c.l.bf16 %v2278
      %v2321 = vrot.slane %v2279, 6
      %v2322 = vrot.slane %v2280, 6
      %v2323 = vrot.slane %v2281, 6
      %v2324 = vrot.slane %v2282, 6
      %v2325 = vrot.slane %v2283, 6
      %v2326 = vrot.slane %v2284, 6
      %v2327 = vrot.slane %v2285, 6
      %v2328 = vrot.slane %v2286, 6
      %v2329 = vrot.slane %v2287, 6
      %v2330 = vrot.slane %v2288, 6
      %v2331 = vrot.slane %v2289, 6
      %v2332 = vrot.slane %v2290, 6
      %v2333 = vrot.slane %v2291, 6
      %v2334 = vrot.slane %v2292, 6
      %v2335 = vrot.slane %v2293, 6
      %v2336 = vrot.slane %v2294, 6
      %v2337 = vrot.slane %v2295, 6
      %v2338 = vrot.slane %v2296, 6
      %v2339 = vrot.slane %v2297, 6
      %v2340 = vrot.slane %v2298, 6
      %v2341 = vrot.slane %v2299, 6
      %2342 = vrot.lane.b32.xlu0 %v2321, 101
      %v2343 = vpop.permute.xlu0 %2342
      %2344 = vrot.lane.b32.xlu0 %v2322, 101
      %v2345 = vpop.permute.xlu0 %2344
      %2346 = vrot.lane.b32.xlu0 %v2323, 101
      %v2347 = vpop.permute.xlu0 %2346
      %2348 = vrot.lane.b32.xlu0 %v2324, 101
      %v2349 = vpop.permute.xlu0 %2348
      %2350 = vrot.lane.b32.xlu0 %v2325, 101
      %v2351 = vpop.permute.xlu0 %2350
      %2352 = vrot.lane.b32.xlu0 %v2326, 101
      %v2353 = vpop.permute.xlu0 %2352
      %2354 = vrot.lane.b32.xlu0 %v2327, 101
      %v2355 = vpop.permute.xlu0 %2354
      %2356 = vrot.lane.b32.xlu0 %v2328, 101
      %v2357 = vpop.permute.xlu0 %2356
      %2358 = vrot.lane.b32.xlu0 %v2329, 101
      %v2359 = vpop.permute.xlu0 %2358
      %2360 = vrot.lane.b32.xlu0 %v2330, 101
      %v2361 = vpop.permute.xlu0 %2360
      %2362 = vrot.lane.b32.xlu0 %v2331, 101
      %v2363 = vpop.permute.xlu0 %2362
      %2364 = vrot.lane.b32.xlu0 %v2332, 101
      %v2365 = vpop.permute.xlu0 %2364
      %2366 = vrot.lane.b32.xlu0 %v2333, 101
      %v2367 = vpop.permute.xlu0 %2366
      %2368 = vrot.lane.b32.xlu0 %v2334, 101
      %v2369 = vpop.permute.xlu0 %2368
      %2370 = vrot.lane.b32.xlu0 %v2335, 101
      %v2371 = vpop.permute.xlu0 %2370
      %2372 = vrot.lane.b32.xlu0 %v2336, 101
      %v2373 = vpop.permute.xlu0 %2372
      %2374 = vrot.lane.b32.xlu0 %v2337, 101
      %v2375 = vpop.permute.xlu0 %2374
      %2376 = vrot.lane.b32.xlu0 %v2338, 101
      %v2377 = vpop.permute.xlu0 %2376
      %2378 = vrot.lane.b32.xlu0 %v2339, 101
      %v2379 = vpop.permute.xlu0 %2378
      %2380 = vrot.lane.b32.xlu0 %v2340, 101
      %v2381 = vpop.permute.xlu0 %2380
      %2382 = vrot.lane.b32.xlu0 %v2341, 101
      %v2383 = vpop.permute.xlu0 %2382
      %vm2384 = vcmask 826368
      %v2385 = vsel %vm2384, %v2343, %v2345
      %v2386 = vsel %vm2384, %v2345, %v2347
      %v2387 = vsel %vm2384, %v2347, %v2349
      %v2388 = vsel %vm2384, %v2349, %v2351
      %v2389 = vsel %vm2384, %v2351, %v2353
      %v2390 = vsel %vm2384, %v2353, %v2355
      %v2391 = vsel %vm2384, %v2355, %v2357
      %v2392 = vsel %vm2384, %v2357, %v2359
      %v2393 = vsel %vm2384, %v2359, %v2361
      %v2394 = vsel %vm2384, %v2361, %v2363
      %v2395 = vsel %vm2384, %v2363, %v2365
      %v2396 = vsel %vm2384, %v2365, %v2367
      %v2397 = vsel %vm2384, %v2367, %v2369
      %v2398 = vsel %vm2384, %v2369, %v2371
      %v2399 = vsel %vm2384, %v2371, %v2373
      %v2400 = vsel %vm2384, %v2373, %v2375
      %v2401 = vsel %vm2384, %v2375, %v2377
      %v2402 = vsel %vm2384, %v2377, %v2379
      %v2403 = vsel %vm2384, %v2379, %v2381
      %v2404 = vsel %vm2384, %v2381, %v2383
      %2426 = vst [vmem:[#allocation2 + $0x680] sm:$0xfc] %v2385
      %2427 = vst [vmem:[#allocation2 + $0x688] sm:$0xfc] %v2386
      %2428 = vst [vmem:[#allocation2 + $0x690] sm:$0xfc] %v2387
      %2429 = vst [vmem:[#allocation2 + $0x698] sm:$0xfc] %v2388
      %2430 = vst [vmem:[#allocation2 + $0x6a0] sm:$0xfc] %v2389
      %2431 = vst [vmem:[#allocation2 + $0x6a8] sm:$0xfc] %v2390
      %2432 = vst [vmem:[#allocation2 + $0x6b0] sm:$0xfc] %v2391
      %2433 = vst [vmem:[#allocation2 + $0x6b8] sm:$0xfc] %v2392
      %2434 = vst [vmem:[#allocation2 + $0x6c0] sm:$0xfc] %v2393
      %2435 = vst [vmem:[#allocation2 + $0x6c8] sm:$0xfc] %v2394
      %2436 = vst [vmem:[#allocation2 + $0x6d0] sm:$0xfc] %v2395
      %2437 = vst [vmem:[#allocation2 + $0x6d8] sm:$0xfc] %v2396
      %2438 = vst [vmem:[#allocation2 + $0x6e0] sm:$0xfc] %v2397
      %2439 = vst [vmem:[#allocation2 + $0x6e8] sm:$0xfc] %v2398
      %2440 = vst [vmem:[#allocation2 + $0x6f0] sm:$0xfc] %v2399
      %2441 = vst [vmem:[#allocation2 + $0x6f8] sm:$0xfc] %v2400
      %2442 = vst [vmem:[#allocation2 + $0x700] sm:$0xfc] %v2401
      %2443 = vst [vmem:[#allocation2 + $0x708] sm:$0xfc] %v2402
      %2444 = vst [vmem:[#allocation2 + $0x710] sm:$0xfc] %v2403
      %2445 = vst [vmem:[#allocation2 + $0x718] sm:$0xfc] %v2404
      %2446 = vst.msk [vmem:[#allocation2 + $0x720] sm:$0xfc] %vm938, %v2383
      %v2447 = vld [vmem:[%s0] sm:$0x3f]
      %v2448 = vld [vmem:[#allocation2] sm:$0xff]
      %v2449 = vld [vmem:[#allocation2 + $0x8] sm:$0xff]
      %v2450 = vld [vmem:[#allocation2 + $0x10] sm:$0xff]
      %v2451 = vld [vmem:[#allocation2 + $0x18] sm:$0xff]
      %v2452 = vld [vmem:[#allocation2 + $0x20] sm:$0xff]
      %v2453 = vld [vmem:[#allocation2 + $0x28] sm:$0xff]
      %v2454 = vld [vmem:[#allocation2 + $0x30] sm:$0xff]
      %v2455 = vld [vmem:[#allocation2 + $0x38] sm:$0xff]
      %v2456 = vld [vmem:[#allocation2 + $0x40] sm:$0xff]
      %v2457 = vld [vmem:[#allocation2 + $0x48] sm:$0xff]
      %v2458 = vld [vmem:[#allocation2 + $0x50] sm:$0xff]
      %v2459 = vld [vmem:[#allocation2 + $0x58] sm:$0xff]
      %v2460 = vld [vmem:[#allocation2 + $0x60] sm:$0xff]
      %v2461 = vld [vmem:[#allocation2 + $0x68] sm:$0xff]
      %v2462 = vld [vmem:[#allocation2 + $0x70] sm:$0xff]
      %v2463 = vld [vmem:[#allocation2 + $0x78] sm:$0xff]
      %v2464 = vld [vmem:[#allocation2 + $0x80] sm:$0xff]
      %v2465 = vld [vmem:[#allocation2 + $0x88] sm:$0xff]
      %v2466 = vld [vmem:[#allocation2 + $0x90] sm:$0xff]
      %v2467 = vld [vmem:[#allocation2 + $0x98] sm:$0xff]
      %v2468 = vld [vmem:[#allocation2 + $0xa0] sm:$0xff]
      %v2469 = vld [vmem:[#allocation2 + $0xa8] sm:$0xff]
      %v2470 = vld [vmem:[#allocation2 + $0xb0] sm:$0xff]
      %v2471 = vld [vmem:[#allocation2 + $0xb8] sm:$0xff]
      %v2472 = vld [vmem:[#allocation2 + $0xc0] sm:$0xff]
      %v2473 = vld [vmem:[#allocation2 + $0xc8] sm:$0xff]
      %v2474 = vld [vmem:[#allocation2 + $0xd0] sm:$0xff]
      %v2475 = vld [vmem:[#allocation2 + $0xd8] sm:$0xff]
      %v2476 = vld [vmem:[#allocation2 + $0xe0] sm:$0xff]
      %v2477 = vld [vmem:[#allocation2 + $0xe8] sm:$0xff]
      %v2478 = vld [vmem:[#allocation2 + $0xf0] sm:$0xff]
      %v2479 = vld [vmem:[#allocation2 + $0xf8] sm:$0xff]
      %v2480 = vld [vmem:[#allocation2 + $0x100] sm:$0xff]
      %v2481 = vld [vmem:[#allocation2 + $0x108] sm:$0xff]
      %v2482 = vld [vmem:[#allocation2 + $0x110] sm:$0xff]
      %v2483 = vld [vmem:[#allocation2 + $0x118] sm:$0xff]
      %v2484 = vld [vmem:[#allocation2 + $0x120] sm:$0xff]
      %v2485 = vld [vmem:[#allocation2 + $0x128] sm:$0xff]
      %v2486 = vld [vmem:[#allocation2 + $0x130] sm:$0xff]
      %v2487 = vld [vmem:[#allocation2 + $0x138] sm:$0xff]
      %v2488 = vld [vmem:[#allocation2 + $0x140] sm:$0xff]
      %v2489 = vld [vmem:[#allocation2 + $0x148] sm:$0xff]
      %v2490 = vld [vmem:[#allocation2 + $0x150] sm:$0xff]
      %v2491 = vld [vmem:[#allocation2 + $0x158] sm:$0xff]
      %v2492 = vld [vmem:[#allocation2 + $0x160] sm:$0xff]
      %v2493 = vld [vmem:[#allocation2 + $0x168] sm:$0xff]
      %v2494 = vld [vmem:[#allocation2 + $0x170] sm:$0xff]
      %v2495 = vld [vmem:[#allocation2 + $0x178] sm:$0xff]
      %v2496 = vld [vmem:[#allocation2 + $0x180] sm:$0xff]
      %v2497 = vld [vmem:[#allocation2 + $0x188] sm:$0xff]
      %v2498 = vld [vmem:[#allocation2 + $0x190] sm:$0xff]
      %v2499 = vld [vmem:[#allocation2 + $0x198] sm:$0xff]
      %v2500 = vld [vmem:[#allocation2 + $0x1a0] sm:$0xff]
      %v2501 = vld [vmem:[#allocation2 + $0x1a8] sm:$0xff]
      %v2502 = vld [vmem:[#allocation2 + $0x1b0] sm:$0xff]
      %v2503 = vld [vmem:[#allocation2 + $0x1b8] sm:$0xff]
      %v2504 = vld [vmem:[#allocation2 + $0x1c0] sm:$0xff]
      %v2505 = vld [vmem:[#allocation2 + $0x1c8] sm:$0xff]
      %v2506 = vld [vmem:[#allocation2 + $0x1d0] sm:$0xff]
      %v2507 = vld [vmem:[#allocation2 + $0x1d8] sm:$0xff]
      %v2508 = vld [vmem:[#allocation2 + $0x1e0] sm:$0xff]
      %v2509 = vld [vmem:[#allocation2 + $0x1e8] sm:$0xff]
      %v2510 = vld [vmem:[#allocation2 + $0x1f0] sm:$0xff]
      %v2511 = vld [vmem:[#allocation2 + $0x1f8] sm:$0xff]
      %v2512 = vld [vmem:[#allocation2 + $0x200] sm:$0xff]
      %v2513 = vld [vmem:[#allocation2 + $0x208] sm:$0xff]
      %v2514 = vld [vmem:[#allocation2 + $0x210] sm:$0xff]
      %v2515 = vld [vmem:[#allocation2 + $0x218] sm:$0xff]
      %v2516 = vld [vmem:[#allocation2 + $0x220] sm:$0xff]
      %v2517 = vld [vmem:[#allocation2 + $0x228] sm:$0xff]
      %v2518 = vld [vmem:[#allocation2 + $0x230] sm:$0xff]
      %v2519 = vld [vmem:[#allocation2 + $0x238] sm:$0xff]
      %v2520 = vld [vmem:[#allocation2 + $0x240] sm:$0xff]
      %v2521 = vld [vmem:[#allocation2 + $0x248] sm:$0xff]
      %v2522 = vld [vmem:[#allocation2 + $0x250] sm:$0xff]
      %v2523 = vld [vmem:[#allocation2 + $0x258] sm:$0xff]
      %v2524 = vld [vmem:[#allocation2 + $0x260] sm:$0xff]
      %v2525 = vld [vmem:[#allocation2 + $0x268] sm:$0xff]
      %v2526 = vld [vmem:[#allocation2 + $0x270] sm:$0xff]
      %v2527 = vld [vmem:[#allocation2 + $0x278] sm:$0xff]
      %v2528 = vld [vmem:[#allocation2 + $0x280] sm:$0xff]
      %v2529 = vld [vmem:[#allocation2 + $0x288] sm:$0xff]
      %v2530 = vld [vmem:[#allocation2 + $0x290] sm:$0xff]
      %v2531 = vld [vmem:[#allocation2 + $0x298] sm:$0xff]
      %v2532 = vld [vmem:[#allocation2 + $0x2a0] sm:$0xff]
      %v2533 = vld [vmem:[#allocation2 + $0x2a8] sm:$0xff]
      %v2534 = vld [vmem:[#allocation2 + $0x2b0] sm:$0xff]
      %v2535 = vld [vmem:[#allocation2 + $0x2b8] sm:$0xff]
      %v2536 = vld [vmem:[#allocation2 + $0x2c0] sm:$0xff]
      %v2537 = vld [vmem:[#allocation2 + $0x2c8] sm:$0xff]
      %v2538 = vld [vmem:[#allocation2 + $0x2d0] sm:$0xff]
      %v2539 = vld [vmem:[#allocation2 + $0x2d8] sm:$0xff]
      %v2540 = vld [vmem:[#allocation2 + $0x2e0] sm:$0xff]
      %v2541 = vld [vmem:[#allocation2 + $0x2e8] sm:$0xff]
      %v2542 = vld [vmem:[#allocation2 + $0x2f0] sm:$0xff]
      %v2543 = vld [vmem:[#allocation2 + $0x2f8] sm:$0xff]
      %v2544 = vld [vmem:[#allocation2 + $0x300] sm:$0xff]
      %v2545 = vld [vmem:[#allocation2 + $0x308] sm:$0xff]
      %v2546 = vld [vmem:[#allocation2 + $0x310] sm:$0xff]
      %v2547 = vld [vmem:[#allocation2 + $0x318] sm:$0xff]
      %v2548 = vld [vmem:[#allocation2 + $0x320] sm:$0xff]
      %v2549 = vld [vmem:[#allocation2 + $0x328] sm:$0xff]
      %v2550 = vld [vmem:[#allocation2 + $0x330] sm:$0xff]
      %v2551 = vld [vmem:[#allocation2 + $0x338] sm:$0xff]
      %v2552 = vld [vmem:[#allocation2 + $0x340] sm:$0xff]
      %v2553 = vld [vmem:[#allocation2 + $0x348] sm:$0xff]
      %v2554 = vld [vmem:[#allocation2 + $0x350] sm:$0xff]
      %v2555 = vld [vmem:[#allocation2 + $0x358] sm:$0xff]
      %v2556 = vld [vmem:[#allocation2 + $0x360] sm:$0xff]
      %v2557 = vld [vmem:[#allocation2 + $0x368] sm:$0xff]
      %v2558 = vld [vmem:[#allocation2 + $0x370] sm:$0xff]
      %v2559 = vld [vmem:[#allocation2 + $0x378] sm:$0xff]
      %v2560 = vld [vmem:[#allocation2 + $0x380] sm:$0xff]
      %v2561 = vld [vmem:[#allocation2 + $0x388] sm:$0xff]
      %v2562 = vld [vmem:[#allocation2 + $0x390] sm:$0xff]
      %v2563 = vld [vmem:[#allocation2 + $0x398] sm:$0xff]
      %v2564 = vld [vmem:[#allocation2 + $0x3a0] sm:$0xff]
      %v2565 = vld [vmem:[#allocation2 + $0x3a8] sm:$0xff]
      %v2566 = vld [vmem:[#allocation2 + $0x3b0] sm:$0xff]
      %v2567 = vld [vmem:[#allocation2 + $0x3b8] sm:$0xff]
      %v2568 = vld [vmem:[#allocation2 + $0x3c0] sm:$0xff]
      %v2569 = vld [vmem:[#allocation2 + $0x3c8] sm:$0xff]
      %v2570 = vld [vmem:[#allocation2 + $0x3d0] sm:$0xff]
      %v2571 = vld [vmem:[#allocation2 + $0x3d8] sm:$0xff]
      %v2572 = vld [vmem:[#allocation2 + $0x3e0] sm:$0xff]
      %v2573 = vld [vmem:[#allocation2 + $0x3e8] sm:$0xff]
      %v2574 = vld [vmem:[#allocation2 + $0x3f0] sm:$0xff]
      %v2575 = vld [vmem:[#allocation2 + $0x3f8] sm:$0xff]
      %v2576 = vld [vmem:[#allocation2 + $0x400] sm:$0xff]
      %v2577 = vld [vmem:[#allocation2 + $0x408] sm:$0xff]
      %v2578 = vld [vmem:[#allocation2 + $0x410] sm:$0xff]
      %v2579 = vld [vmem:[#allocation2 + $0x418] sm:$0xff]
      %v2580 = vld [vmem:[#allocation2 + $0x420] sm:$0xff]
      %v2581 = vld [vmem:[#allocation2 + $0x428] sm:$0xff]
      %v2582 = vld [vmem:[#allocation2 + $0x430] sm:$0xff]
      %v2583 = vld [vmem:[#allocation2 + $0x438] sm:$0xff]
      %v2584 = vld [vmem:[#allocation2 + $0x440] sm:$0xff]
      %v2585 = vld [vmem:[#allocation2 + $0x448] sm:$0xff]
      %v2586 = vld [vmem:[#allocation2 + $0x450] sm:$0xff]
      %v2587 = vld [vmem:[#allocation2 + $0x458] sm:$0xff]
      %v2588 = vld [vmem:[#allocation2 + $0x460] sm:$0xff]
      %v2589 = vld [vmem:[#allocation2 + $0x468] sm:$0xff]
      %v2590 = vld [vmem:[#allocation2 + $0x470] sm:$0xff]
      %v2591 = vld [vmem:[#allocation2 + $0x478] sm:$0xff]
      %v2592 = vld [vmem:[#allocation2 + $0x480] sm:$0xff]
      %v2593 = vld [vmem:[#allocation2 + $0x488] sm:$0xff]
      %v2594 = vld [vmem:[#allocation2 + $0x490] sm:$0xff]
      %v2595 = vld [vmem:[#allocation2 + $0x498] sm:$0xff]
      %v2596 = vld [vmem:[#allocation2 + $0x4a0] sm:$0xff]
      %v2597 = vld [vmem:[#allocation2 + $0x4a8] sm:$0xff]
      %v2598 = vld [vmem:[#allocation2 + $0x4b0] sm:$0xff]
      %v2599 = vld [vmem:[#allocation2 + $0x4b8] sm:$0xff]
      %v2600 = vld [vmem:[#allocation2 + $0x4c0] sm:$0xff]
      %v2601 = vld [vmem:[#allocation2 + $0x4c8] sm:$0xff]
      %v2602 = vld [vmem:[#allocation2 + $0x4d0] sm:$0xff]
      %v2603 = vld [vmem:[#allocation2 + $0x4d8] sm:$0xff]
      %v2604 = vld [vmem:[#allocation2 + $0x4e0] sm:$0xff]
      %v2605 = vld [vmem:[#allocation2 + $0x4e8] sm:$0xff]
      %v2606 = vld [vmem:[#allocation2 + $0x4f0] sm:$0xff]
      %v2607 = vld [vmem:[#allocation2 + $0x4f8] sm:$0xff]
      %v2608 = vld [vmem:[#allocation2 + $0x500] sm:$0xff]
      %v2609 = vld [vmem:[#allocation2 + $0x508] sm:$0xff]
      %v2610 = vld [vmem:[#allocation2 + $0x510] sm:$0xff]
      %v2611 = vld [vmem:[#allocation2 + $0x518] sm:$0xff]
      %v2612 = vld [vmem:[#allocation2 + $0x520] sm:$0xff]
      %v2613 = vld [vmem:[#allocation2 + $0x528] sm:$0xff]
      %v2614 = vld [vmem:[#allocation2 + $0x530] sm:$0xff]
      %v2615 = vld [vmem:[#allocation2 + $0x538] sm:$0xff]
      %v2616 = vld [vmem:[#allocation2 + $0x540] sm:$0xff]
      %v2617 = vld [vmem:[#allocation2 + $0x548] sm:$0xff]
      %v2618 = vld [vmem:[#allocation2 + $0x550] sm:$0xff]
      %v2619 = vld [vmem:[#allocation2 + $0x558] sm:$0xff]
      %v2620 = vld [vmem:[#allocation2 + $0x560] sm:$0xff]
      %v2621 = vld [vmem:[#allocation2 + $0x568] sm:$0xff]
      %v2622 = vld [vmem:[#allocation2 + $0x570] sm:$0xff]
      %v2623 = vld [vmem:[#allocation2 + $0x578] sm:$0xff]
      %v2624 = vld [vmem:[#allocation2 + $0x580] sm:$0xff]
      %v2625 = vld [vmem:[#allocation2 + $0x588] sm:$0xff]
      %v2626 = vld [vmem:[#allocation2 + $0x590] sm:$0xff]
      %v2627 = vld [vmem:[#allocation2 + $0x598] sm:$0xff]
      %v2628 = vld [vmem:[#allocation2 + $0x5a0] sm:$0xff]
      %v2629 = vld [vmem:[#allocation2 + $0x5a8] sm:$0xff]
      %v2630 = vld [vmem:[#allocation2 + $0x5b0] sm:$0xff]
      %v2631 = vld [vmem:[#allocation2 + $0x5b8] sm:$0xff]
      %v2632 = vld [vmem:[#allocation2 + $0x5c0] sm:$0xff]
      %v2633 = vld [vmem:[#allocation2 + $0x5c8] sm:$0xff]
      %v2634 = vld [vmem:[#allocation2 + $0x5d0] sm:$0xff]
      %v2635 = vld [vmem:[#allocation2 + $0x5d8] sm:$0xff]
      %v2636 = vld [vmem:[#allocation2 + $0x5e0] sm:$0xff]
      %v2637 = vld [vmem:[#allocation2 + $0x5e8] sm:$0xff]
      %v2638 = vld [vmem:[#allocation2 + $0x5f0] sm:$0xff]
      %v2639 = vld [vmem:[#allocation2 + $0x5f8] sm:$0xff]
      %v2640 = vld [vmem:[#allocation2 + $0x600] sm:$0xff]
      %v2641 = vld [vmem:[#allocation2 + $0x608] sm:$0xff]
      %v2642 = vld [vmem:[#allocation2 + $0x610] sm:$0xff]
      %v2643 = vld [vmem:[#allocation2 + $0x618] sm:$0xff]
      %v2644 = vld [vmem:[#allocation2 + $0x620] sm:$0xff]
      %v2645 = vld [vmem:[#allocation2 + $0x628] sm:$0xff]
      %v2646 = vld [vmem:[#allocation2 + $0x630] sm:$0xff]
      %v2647 = vld [vmem:[#allocation2 + $0x638] sm:$0xff]
      %v2648 = vld [vmem:[#allocation2 + $0x640] sm:$0xff]
      %v2649 = vld [vmem:[#allocation2 + $0x648] sm:$0xff]
      %v2650 = vld [vmem:[#allocation2 + $0x650] sm:$0xff]
      %v2651 = vld [vmem:[#allocation2 + $0x658] sm:$0xff]
      %v2652 = vld [vmem:[#allocation2 + $0x660] sm:$0xff]
      %v2653 = vld [vmem:[#allocation2 + $0x668] sm:$0xff]
      %v2654 = vld [vmem:[#allocation2 + $0x670] sm:$0xff]
      %v2655 = vld [vmem:[#allocation2 + $0x678] sm:$0xff]
      %v2656 = vld [vmem:[#allocation2 + $0x680] sm:$0xff]
      %v2657 = vld [vmem:[#allocation2 + $0x688] sm:$0xff]
      %v2658 = vld [vmem:[#allocation2 + $0x690] sm:$0xff]
      %v2659 = vld [vmem:[#allocation2 + $0x698] sm:$0xff]
      %v2660 = vld [vmem:[#allocation2 + $0x6a0] sm:$0xff]
      %v2661 = vld [vmem:[#allocation2 + $0x6a8] sm:$0xff]
      %v2662 = vld [vmem:[#allocation2 + $0x6b0] sm:$0xff]
      %v2663 = vld [vmem:[#allocation2 + $0x6b8] sm:$0xff]
      %v2664 = vld [vmem:[#allocation2 + $0x6c0] sm:$0xff]
      %v2665 = vld [vmem:[#allocation2 + $0x6c8] sm:$0xff]
      %v2666 = vld [vmem:[#allocation2 + $0x6d0] sm:$0xff]
      %v2667 = vld [vmem:[#allocation2 + $0x6d8] sm:$0xff]
      %v2668 = vld [vmem:[#allocation2 + $0x6e0] sm:$0xff]
      %v2669 = vld [vmem:[#allocation2 + $0x6e8] sm:$0xff]
      %v2670 = vld [vmem:[#allocation2 + $0x6f0] sm:$0xff]
      %v2671 = vld [vmem:[#allocation2 + $0x6f8] sm:$0xff]
      %v2672 = vld [vmem:[#allocation2 + $0x700] sm:$0xff]
      %v2673 = vld [vmem:[#allocation2 + $0x708] sm:$0xff]
      %v2674 = vld [vmem:[#allocation2 + $0x710] sm:$0xff]
      %v2675 = vld [vmem:[#allocation2 + $0x718] sm:$0xff]
      %v2676 = vld [vmem:[#allocation2 + $0x720] sm:$0xff]
      %v2677 = vld [vmem:[#allocation2 + $0x728] sm:$0xff]
      %v2678 = vld [vmem:[#allocation2 + $0x730] sm:$0xff]
      %v2679 = vld [vmem:[#allocation2 + $0x738] sm:$0xff]
      %v2680 = vld [vmem:[#allocation2 + $0x740] sm:$0xff]
      %v2681 = vld [vmem:[#allocation2 + $0x748] sm:$0xff]
      %v2682 = vld [vmem:[%s1] sm:$0x3f]
      %2684 = vset.pattern.permute.xlu0 0
      %2685 = vperm.xlu0 %2684, %v2682
      %v2686 = vpop.permute.xlu0 %2685
      %vm2688 = vcmask 588800
      %v2690 = vsel %vm2688, %v2447, 0
      %2692 = vmatprep.subr.mxu0 %v2449
      %2693 = vmatpush1.msra.mxu0 %v2448
      %2694 = vmatprep.subr.mxu0 %v2475
      %2695 = vmatpush1.msra.mxu0 %v2474
      %2696 = vmatprep.subr.mxu0 %v2501
      %2697 = vmatpush1.msra.mxu0 %v2500
      %2698 = vmatprep.subr.mxu0 %v2527
      %2699 = vmatpush1.msra.mxu0 %v2526
      %2700 = vmatprep.subr.mxu0 %v2553
      %2701 = vmatpush1.msra.mxu0 %v2552
      %2702 = vmatprep.subr.mxu0 %v2579
      %2703 = vmatpush1.msra.mxu0 %v2578
      %2704 = vmatprep.subr.mxu0 %v2605
      %2705 = vmatpush1.msra.mxu0 %v2604
      %2706 = vmatprep.subr.mxu0 %v2631
      %2707 = vmatpush1.msra.mxu0 %v2630
      %2708 = vmatprep.subr.mxu0 %v2657
      %2709 = vmatpush1.msra.mxu0 %v2656
      %2710 = vmatprep.subr.mxu0 0.0
      %2711 = vmatpush1.msra.mxu0 0.0
      %2712 = vmatprep.subr.mxu0 0.0
      %2713 = vmatpush1.msra.mxu0 0.0
      %2714 = vmatprep.subr.mxu0 0.0
      %2715 = vmatpush1.msra.mxu0 0.0
      %2716 = vmatprep.subr.mxu0 0.0
      %2717 = vmatpush1.msra.mxu0 0.0
      %2718 = vmatprep.subr.mxu0 0.0
      %2719 = vmatpush1.msra.mxu0 0.0
      %2720 = vmatprep.subr.mxu0 0.0
      %2721 = vmatpush1.msra.mxu0 0.0
      %2722 = vmatprep.subr.mxu0 0.0
      %2723 = vmatpush1.msra.mxu0 0.0
      %2724 = vmatprep.subr.mxu0 0.0
      %2725 = vmatpush1.msra.mxu0 0.0
      %2726 = vmatprep.subr.mxu0 0.0
      %2727 = vmatpush1.msra.mxu0 0.0
      %2728 = vmatprep.subr.mxu0 0.0
      %2729 = vmatpush1.msra.mxu0 0.0
      %2730 = vmatprep.subr.mxu0 0.0
      %2731 = vmatpush1.msra.mxu0 0.0
      %2732 = vmatprep.subr.mxu0 0.0
      %2733 = vmatpush1.msra.mxu0 0.0
      %2734 = vmatprep.subr.mxu0 0.0
      %2735 = vmatpush1.msra.mxu0 0.0
      %2736 = vmatprep.subr.mxu0 0.0
      %2737 = vmatpush1.msra.mxu0 0.0
      %2738 = vmatprep.subr.mxu0 0.0
      %2739 = vmatpush1.msra.mxu0 0.0
      %2740 = vmatprep.subr.mxu0 0.0
      %2741 = vmatpush1.msra.mxu0 0.0
      %2742 = vmatprep.subr.mxu0 0.0
      %2743 = vmatpush1.msra.mxu0 0.0
      %2744 = vmatprep.subr.mxu0 0.0
      %2745 = vmatpush1.msra.mxu0 0.0
      %2746 = vmatprep.subr.mxu0 0.0
      %2747 = vmatpush1.msra.mxu0 0.0
      %2748 = vmatprep.subr.mxu0 0.0
      %2749 = vmatpush1.msra.mxu0 0.0
      %2750 = vmatprep.subr.mxu0 0.0
      %2751 = vmatpush1.msra.mxu0 0.0
      %2752 = vmatprep.subr.mxu0 0.0
      %2753 = vmatpush1.msra.mxu0 0.0
      %2754 = vmatprep.subr.mxu0 0.0
      %2755 = vmatpush1.msra.mxu0 0.0
      %2756 = vmatprep.mubr.f32.mxu0 0.0
      %2757 = vmatmul.mubr.f32.gmra.mrb[0].mxu0 %v2690
      %v2758 = vpop.f32.mrb[0].mxu0
      %v2759 = vadd.f32 %v2686, %v2758
      %v2760 = vpop.f32.mrb[0].mxu0
      %v2761 = vadd.f32 %v2686, %v2760
      %2762 = vdwg.mxu0
      %2763 = vmatprep.subr.mxu0 %v2451
      %2764 = vmatpush1.msra.mxu0 %v2450
      %2765 = vmatprep.subr.mxu0 %v2477
      %2766 = vmatpush1.msra.mxu0 %v2476
      %2767 = vmatprep.subr.mxu0 %v2503
      %2768 = vmatpush1.msra.mxu0 %v2502
      %2769 = vmatprep.subr.mxu0 %v2529
      %2770 = vmatpush1.msra.mxu0 %v2528
      %2771 = vmatprep.subr.mxu0 %v2555
      %2772 = vmatpush1.msra.mxu0 %v2554
      %2773 = vmatprep.subr.mxu0 %v2581
      %2774 = vmatpush1.msra.mxu0 %v2580
      %2775 = vmatprep.subr.mxu0 %v2607
      %2776 = vmatpush1.msra.mxu0 %v2606
      %2777 = vmatprep.subr.mxu0 %v2633
      %2778 = vmatpush1.msra.mxu0 %v2632
      %2779 = vmatprep.subr.mxu0 %v2659
      %2780 = vmatpush1.msra.mxu0 %v2658
      %2781 = vmatprep.subr.mxu0 0.0
      %2782 = vmatpush1.msra.mxu0 0.0
      %2783 = vmatprep.subr.mxu0 0.0
      %2784 = vmatpush1.msra.mxu0 0.0
      %2785 = vmatprep.subr.mxu0 0.0
      %2786 = vmatpush1.msra.mxu0 0.0
      %2787 = vmatprep.subr.mxu0 0.0
      %2788 = vmatpush1.msra.mxu0 0.0
      %2789 = vmatprep.subr.mxu0 0.0
      %2790 = vmatpush1.msra.mxu0 0.0
      %2791 = vmatprep.subr.mxu0 0.0
      %2792 = vmatpush1.msra.mxu0 0.0
      %2793 = vmatprep.subr.mxu0 0.0
      %2794 = vmatpush1.msra.mxu0 0.0
      %2795 = vmatprep.subr.mxu0 0.0
      %2796 = vmatpush1.msra.mxu0 0.0
      %2797 = vmatprep.subr.mxu0 0.0
      %2798 = vmatpush1.msra.mxu0 0.0
      %2799 = vmatprep.subr.mxu0 0.0
      %2800 = vmatpush1.msra.mxu0 0.0
      %2801 = vmatprep.subr.mxu0 0.0
      %2802 = vmatpush1.msra.mxu0 0.0
      %2803 = vmatprep.subr.mxu0 0.0
      %2804 = vmatpush1.msra.mxu0 0.0
      %2805 = vmatprep.subr.mxu0 0.0
      %2806 = vmatpush1.msra.mxu0 0.0
      %2807 = vmatprep.subr.mxu0 0.0
      %2808 = vmatpush1.msra.mxu0 0.0
      %2809 = vmatprep.subr.mxu0 0.0
      %2810 = vmatpush1.msra.mxu0 0.0
      %2811 = vmatprep.subr.mxu0 0.0
      %2812 = vmatpush1.msra.mxu0 0.0
      %2813 = vmatprep.subr.mxu0 0.0
      %2814 = vmatpush1.msra.mxu0 0.0
      %2815 = vmatprep.subr.mxu0 0.0
      %2816 = vmatpush1.msra.mxu0 0.0
      %2817 = vmatprep.subr.mxu0 0.0
      %2818 = vmatpush1.msra.mxu0 0.0
      %2819 = vmatprep.subr.mxu0 0.0
      %2820 = vmatpush1.msra.mxu0 0.0
      %2821 = vmatprep.subr.mxu0 0.0
      %2822 = vmatpush1.msra.mxu0 0.0
      %2823 = vmatprep.subr.mxu0 0.0
      %2824 = vmatpush1.msra.mxu0 0.0
      %2825 = vmatprep.subr.mxu0 0.0
      %2826 = vmatpush1.msra.mxu0 0.0
      %2827 = vmatprep.mubr.f32.mxu0 0.0
      %2828 = vmatmul.mubr.f32.gmra.mrb[0].mxu0 %v2690
      %v2829 = vpop.f32.mrb[0].mxu0
      %v2830 = vadd.f32 %v2686, %v2829
      %v2831 = vpop.f32.mrb[0].mxu0
      %v2832 = vadd.f32 %v2686, %v2831
      %2833 = vdwg.mxu0
      %2834 = vmatprep.subr.mxu0 %v2453
      %2835 = vmatpush1.msra.mxu0 %v2452
      %2836 = vmatprep.subr.mxu0 %v2479
      %2837 = vmatpush1.msra.mxu0 %v2478
      %2838 = vmatprep.subr.mxu0 %v2505
      %2839 = vmatpush1.msra.mxu0 %v2504
      %2840 = vmatprep.subr.mxu0 %v2531
      %2841 = vmatpush1.msra.mxu0 %v2530
      %2842 = vmatprep.subr.mxu0 %v2557
      %2843 = vmatpush1.msra.mxu0 %v2556
      %2844 = vmatprep.subr.mxu0 %v2583
      %2845 = vmatpush1.msra.mxu0 %v2582
      %2846 = vmatprep.subr.mxu0 %v2609
      %2847 = vmatpush1.msra.mxu0 %v2608
      %2848 = vmatprep.subr.mxu0 %v2635
      %2849 = vmatpush1.msra.mxu0 %v2634
      %2850 = vmatprep.subr.mxu0 %v2661
      %2851 = vmatpush1.msra.mxu0 %v2660
      %2852 = vmatprep.subr.mxu0 0.0
      %2853 = vmatpush1.msra.mxu0 0.0
      %2854 = vmatprep.subr.mxu0 0.0
      %2855 = vmatpush1.msra.mxu0 0.0
      %2856 = vmatprep.subr.mxu0 0.0
      %2857 = vmatpush1.msra.mxu0 0.0
      %2858 = vmatprep.subr.mxu0 0.0
      %2859 = vmatpush1.msra.mxu0 0.0
      %2860 = vmatprep.subr.mxu0 0.0
      %2861 = vmatpush1.msra.mxu0 0.0
      %2862 = vmatprep.subr.mxu0 0.0
      %2863 = vmatpush1.msra.mxu0 0.0
      %2864 = vmatprep.subr.mxu0 0.0
      %2865 = vmatpush1.msra.mxu0 0.0
      %2866 = vmatprep.subr.mxu0 0.0
      %2867 = vmatpush1.msra.mxu0 0.0
      %2868 = vmatprep.subr.mxu0 0.0
      %2869 = vmatpush1.msra.mxu0 0.0
      %2870 = vmatprep.subr.mxu0 0.0
      %2871 = vmatpush1.msra.mxu0 0.0
      %2872 = vmatprep.subr.mxu0 0.0
      %2873 = vmatpush1.msra.mxu0 0.0
      %2874 = vmatprep.subr.mxu0 0.0
      %2875 = vmatpush1.msra.mxu0 0.0
      %2876 = vmatprep.subr.mxu0 0.0
      %2877 = vmatpush1.msra.mxu0 0.0
      %2878 = vmatprep.subr.mxu0 0.0
      %2879 = vmatpush1.msra.mxu0 0.0
      %2880 = vmatprep.subr.mxu0 0.0
      %2881 = vmatpush1.msra.mxu0 0.0
      %2882 = vmatprep.subr.mxu0 0.0
      %2883 = vmatpush1.msra.mxu0 0.0
      %2884 = vmatprep.subr.mxu0 0.0
      %2885 = vmatpush1.msra.mxu0 0.0
      %2886 = vmatprep.subr.mxu0 0.0
      %2887 = vmatpush1.msra.mxu0 0.0
      %2888 = vmatprep.subr.mxu0 0.0
      %2889 = vmatpush1.msra.mxu0 0.0
      %2890 = vmatprep.subr.mxu0 0.0
      %2891 = vmatpush1.msra.mxu0 0.0
      %2892 = vmatprep.subr.mxu0 0.0
      %2893 = vmatpush1.msra.mxu0 0.0
      %2894 = vmatprep.subr.mxu0 0.0
      %2895 = vmatpush1.msra.mxu0 0.0
      %2896 = vmatprep.subr.mxu0 0.0
      %2897 = vmatpush1.msra.mxu0 0.0
      %2898 = vmatprep.mubr.f32.mxu0 0.0
      %2899 = vmatmul.mubr.f32.gmra.mrb[0].mxu0 %v2690
      %v2900 = vpop.f32.mrb[0].mxu0
      %v2901 = vadd.f32 %v2686, %v2900
      %v2902 = vpop.f32.mrb[0].mxu0
      %v2903 = vadd.f32 %v2686, %v2902
      %2904 = vdwg.mxu0
      %2905 = vmatprep.subr.mxu0 %v2455
      %2906 = vmatpush1.msra.mxu0 %v2454
      %2907 = vmatprep.subr.mxu0 %v2481
      %2908 = vmatpush1.msra.mxu0 %v2480
      %2909 = vmatprep.subr.mxu0 %v2507
      %2910 = vmatpush1.msra.mxu0 %v2506
      %2911 = vmatprep.subr.mxu0 %v2533
      %2912 = vmatpush1.msra.mxu0 %v2532
      %2913 = vmatprep.subr.mxu0 %v2559
      %2914 = vmatpush1.msra.mxu0 %v2558
      %2915 = vmatprep.subr.mxu0 %v2585
      %2916 = vmatpush1.msra.mxu0 %v2584
      %2917 = vmatprep.subr.mxu0 %v2611
      %2918 = vmatpush1.msra.mxu0 %v2610
      %2919 = vmatprep.subr.mxu0 %v2637
      %2920 = vmatpush1.msra.mxu0 %v2636
      %2921 = vmatprep.subr.mxu0 %v2663
      %2922 = vmatpush1.msra.mxu0 %v2662
      %2923 = vmatprep.subr.mxu0 0.0
      %2924 = vmatpush1.msra.mxu0 0.0
      %2925 = vmatprep.subr.mxu0 0.0
      %2926 = vmatpush1.msra.mxu0 0.0
      %2927 = vmatprep.subr.mxu0 0.0
      %2928 = vmatpush1.msra.mxu0 0.0
      %2929 = vmatprep.subr.mxu0 0.0
      %2930 = vmatpush1.msra.mxu0 0.0
      %2931 = vmatprep.subr.mxu0 0.0
      %2932 = vmatpush1.msra.mxu0 0.0
      %2933 = vmatprep.subr.mxu0 0.0
      %2934 = vmatpush1.msra.mxu0 0.0
      %2935 = vmatprep.subr.mxu0 0.0
      %2936 = vmatpush1.msra.mxu0 0.0
      %2937 = vmatprep.subr.mxu0 0.0
      %2938 = vmatpush1.msra.mxu0 0.0
      %2939 = vmatprep.subr.mxu0 0.0
      %2940 = vmatpush1.msra.mxu0 0.0
      %2941 = vmatprep.subr.mxu0 0.0
      %2942 = vmatpush1.msra.mxu0 0.0
      %2943 = vmatprep.subr.mxu0 0.0
      %2944 = vmatpush1.msra.mxu0 0.0
      %2945 = vmatprep.subr.mxu0 0.0
      %2946 = vmatpush1.msra.mxu0 0.0
      %2947 = vmatprep.subr.mxu0 0.0
      %2948 = vmatpush1.msra.mxu0 0.0
      %2949 = vmatprep.subr.mxu0 0.0
      %2950 = vmatpush1.msra.mxu0 0.0
      %2951 = vmatprep.subr.mxu0 0.0
      %2952 = vmatpush1.msra.mxu0 0.0
      %2953 = vmatprep.subr.mxu0 0.0
      %2954 = vmatpush1.msra.mxu0 0.0
      %2955 = vmatprep.subr.mxu0 0.0
      %2956 = vmatpush1.msra.mxu0 0.0
      %2957 = vmatprep.subr.mxu0 0.0
      %2958 = vmatpush1.msra.mxu0 0.0
      %2959 = vmatprep.subr.mxu0 0.0
      %2960 = vmatpush1.msra.mxu0 0.0
      %2961 = vmatprep.subr.mxu0 0.0
      %2962 = vmatpush1.msra.mxu0 0.0
      %2963 = vmatprep.subr.mxu0 0.0
      %2964 = vmatpush1.msra.mxu0 0.0
      %2965 = vmatprep.subr.mxu0 0.0
      %2966 = vmatpush1.msra.mxu0 0.0
      %2967 = vmatprep.subr.mxu0 0.0
      %2968 = vmatpush1.msra.mxu0 0.0
      %2969 = vmatprep.mubr.f32.mxu0 0.0
      %2970 = vmatmul.mubr.f32.gmra.mrb[0].mxu0 %v2690
      %v2971 = vpop.f32.mrb[0].mxu0
      %v2972 = vadd.f32 %v2686, %v2971
      %v2973 = vpop.f32.mrb[0].mxu0
      %v2974 = vadd.f32 %v2686, %v2973
      %2975 = vdwg.mxu0
      %2976 = vmatprep.subr.mxu0 %v2457
      %2977 = vmatpush1.msra.mxu0 %v2456
      %2978 = vmatprep.subr.mxu0 %v2483
      %2979 = vmatpush1.msra.mxu0 %v2482
      %2980 = vmatprep.subr.mxu0 %v2509
      %2981 = vmatpush1.msra.mxu0 %v2508
      %2982 = vmatprep.subr.mxu0 %v2535
      %2983 = vmatpush1.msra.mxu0 %v2534
      %2984 = vmatprep.subr.mxu0 %v2561
      %2985 = vmatpush1.msra.mxu0 %v2560
      %2986 = vmatprep.subr.mxu0 %v2587
      %2987 = vmatpush1.msra.mxu0 %v2586
      %2988 = vmatprep.subr.mxu0 %v2613
      %2989 = vmatpush1.msra.mxu0 %v2612
      %2990 = vmatprep.subr.mxu0 %v2639
      %2991 = vmatpush1.msra.mxu0 %v2638
      %2992 = vmatprep.subr.mxu0 %v2665
      %2993 = vmatpush1.msra.mxu0 %v2664
      %2994 = vmatprep.subr.mxu0 0.0
      %2995 = vmatpush1.msra.mxu0 0.0
      %2996 = vmatprep.subr.mxu0 0.0
      %2997 = vmatpush1.msra.mxu0 0.0
      %2998 = vmatprep.subr.mxu0 0.0
      %2999 = vmatpush1.msra.mxu0 0.0
      %3000 = vmatprep.subr.mxu0 0.0
      %3001 = vmatpush1.msra.mxu0 0.0
      %3002 = vmatprep.subr.mxu0 0.0
      %3003 = vmatpush1.msra.mxu0 0.0
      %3004 = vmatprep.subr.mxu0 0.0
      %3005 = vmatpush1.msra.mxu0 0.0
      %3006 = vmatprep.subr.mxu0 0.0
      %3007 = vmatpush1.msra.mxu0 0.0
      %3008 = vmatprep.subr.mxu0 0.0
      %3009 = vmatpush1.msra.mxu0 0.0
      %3010 = vmatprep.subr.mxu0 0.0
      %3011 = vmatpush1.msra.mxu0 0.0
      %3012 = vmatprep.subr.mxu0 0.0
      %3013 = vmatpush1.msra.mxu0 0.0
      %3014 = vmatprep.subr.mxu0 0.0
      %3015 = vmatpush1.msra.mxu0 0.0
      %3016 = vmatprep.subr.mxu0 0.0
      %3017 = vmatpush1.msra.mxu0 0.0
      %3018 = vmatprep.subr.mxu0 0.0
      %3019 = vmatpush1.msra.mxu0 0.0
      %3020 = vmatprep.subr.mxu0 0.0
      %3021 = vmatpush1.msra.mxu0 0.0
      %3022 = vmatprep.subr.mxu0 0.0
      %3023 = vmatpush1.msra.mxu0 0.0
      %3024 = vmatprep.subr.mxu0 0.0
      %3025 = vmatpush1.msra.mxu0 0.0
      %3026 = vmatprep.subr.mxu0 0.0
      %3027 = vmatpush1.msra.mxu0 0.0
      %3028 = vmatprep.subr.mxu0 0.0
      %3029 = vmatpush1.msra.mxu0 0.0
      %3030 = vmatprep.subr.mxu0 0.0
      %3031 = vmatpush1.msra.mxu0 0.0
      %3032 = vmatprep.subr.mxu0 0.0
      %3033 = vmatpush1.msra.mxu0 0.0
      %3034 = vmatprep.subr.mxu0 0.0
      %3035 = vmatpush1.msra.mxu0 0.0
      %3036 = vmatprep.subr.mxu0 0.0
      %3037 = vmatpush1.msra.mxu0 0.0
      %3038 = vmatprep.subr.mxu0 0.0
      %3039 = vmatpush1.msra.mxu0 0.0
      %3040 = vmatprep.mubr.f32.mxu0 0.0
      %3041 = vmatmul.mubr.f32.gmra.mrb[0].mxu0 %v2690
      %v3042 = vpop.f32.mrb[0].mxu0
      %v3043 = vadd.f32 %v2686, %v3042
      %v3044 = vpop.f32.mrb[0].mxu0
      %v3045 = vadd.f32 %v2686, %v3044
      %3046 = vdwg.mxu0
      %3047 = vmatprep.subr.mxu0 %v2459
      %3048 = vmatpush1.msra.mxu0 %v2458
      %3049 = vmatprep.subr.mxu0 %v2485
      %3050 = vmatpush1.msra.mxu0 %v2484
      %3051 = vmatprep.subr.mxu0 %v2511
      %3052 = vmatpush1.msra.mxu0 %v2510
      %3053 = vmatprep.subr.mxu0 %v2537
      %3054 = vmatpush1.msra.mxu0 %v2536
      %3055 = vmatprep.subr.mxu0 %v2563
      %3056 = vmatpush1.msra.mxu0 %v2562
      %3057 = vmatprep.subr.mxu0 %v2589
      %3058 = vmatpush1.msra.mxu0 %v2588
      %3059 = vmatprep.subr.mxu0 %v2615
      %3060 = vmatpush1.msra.mxu0 %v2614
      %3061 = vmatprep.subr.mxu0 %v2641
      %3062 = vmatpush1.msra.mxu0 %v2640
      %3063 = vmatprep.subr.mxu0 %v2667
      %3064 = vmatpush1.msra.mxu0 %v2666
      %3065 = vmatprep.subr.mxu0 0.0
      %3066 = vmatpush1.msra.mxu0 0.0
      %3067 = vmatprep.subr.mxu0 0.0
      %3068 = vmatpush1.msra.mxu0 0.0
      %3069 = vmatprep.subr.mxu0 0.0
      %3070 = vmatpush1.msra.mxu0 0.0
      %3071 = vmatprep.subr.mxu0 0.0
      %3072 = vmatpush1.msra.mxu0 0.0
      %3073 = vmatprep.subr.mxu0 0.0
      %3074 = vmatpush1.msra.mxu0 0.0
      %3075 = vmatprep.subr.mxu0 0.0
      %3076 = vmatpush1.msra.mxu0 0.0
      %3077 = vmatprep.subr.mxu0 0.0
      %3078 = vmatpush1.msra.mxu0 0.0
      %3079 = vmatprep.subr.mxu0 0.0
      %3080 = vmatpush1.msra.mxu0 0.0
      %3081 = vmatprep.subr.mxu0 0.0
      %3082 = vmatpush1.msra.mxu0 0.0
      %3083 = vmatprep.subr.mxu0 0.0
      %3084 = vmatpush1.msra.mxu0 0.0
      %3085 = vmatprep.subr.mxu0 0.0
      %3086 = vmatpush1.msra.mxu0 0.0
      %3087 = vmatprep.subr.mxu0 0.0
      %3088 = vmatpush1.msra.mxu0 0.0
      %3089 = vmatprep.subr.mxu0 0.0
      %3090 = vmatpush1.msra.mxu0 0.0
      %3091 = vmatprep.subr.mxu0 0.0
      %3092 = vmatpush1.msra.mxu0 0.0
      %3093 = vmatprep.subr.mxu0 0.0
      %3094 = vmatpush1.msra.mxu0 0.0
      %3095 = vmatprep.subr.mxu0 0.0
      %3096 = vmatpush1.msra.mxu0 0.0
      %3097 = vmatprep.subr.mxu0 0.0
      %3098 = vmatpush1.msra.mxu0 0.0
      %3099 = vmatprep.subr.mxu0 0.0
      %3100 = vmatpush1.msra.mxu0 0.0
      %3101 = vmatprep.subr.mxu0 0.0
      %3102 = vmatpush1.msra.mxu0 0.0
      %3103 = vmatprep.subr.mxu0 0.0
      %3104 = vmatpush1.msra.mxu0 0.0
      %3105 = vmatprep.subr.mxu0 0.0
      %3106 = vmatpush1.msra.mxu0 0.0
      %3107 = vmatprep.subr.mxu0 0.0
      %3108 = vmatpush1.msra.mxu0 0.0
      %3109 = vmatprep.subr.mxu0 0.0
      %3110 = vmatpush1.msra.mxu0 0.0
      %3111 = vmatprep.mubr.f32.mxu0 0.0
      %3112 = vmatmul.mubr.f32.gmra.mrb[0].mxu0 %v2690
      %v3113 = vpop.f32.mrb[0].mxu0
      %v3114 = vadd.f32 %v2686, %v3113
      %v3115 = vpop.f32.mrb[0].mxu0
      %v3116 = vadd.f32 %v2686, %v3115
      %3117 = vdwg.mxu0
      %3118 = vmatprep.subr.mxu0 %v2461
      %3119 = vmatpush1.msra.mxu0 %v2460
      %3120 = vmatprep.subr.mxu0 %v2487
      %3121 = vmatpush1.msra.mxu0 %v2486
      %3122 = vmatprep.subr.mxu0 %v2513
      %3123 = vmatpush1.msra.mxu0 %v2512
      %3124 = vmatprep.subr.mxu0 %v2539
      %3125 = vmatpush1.msra.mxu0 %v2538
      %3126 = vmatprep.subr.mxu0 %v2565
      %3127 = vmatpush1.msra.mxu0 %v2564
      %3128 = vmatprep.subr.mxu0 %v2591
      %3129 = vmatpush1.msra.mxu0 %v2590
      %3130 = vmatprep.subr.mxu0 %v2617
      %3131 = vmatpush1.msra.mxu0 %v2616
      %3132 = vmatprep.subr.mxu0 %v2643
      %3133 = vmatpush1.msra.mxu0 %v2642
      %3134 = vmatprep.subr.mxu0 %v2669
      %3135 = vmatpush1.msra.mxu0 %v2668
      %3136 = vmatprep.subr.mxu0 0.0
      %3137 = vmatpush1.msra.mxu0 0.0
      %3138 = vmatprep.subr.mxu0 0.0
      %3139 = vmatpush1.msra.mxu0 0.0
      %3140 = vmatprep.subr.mxu0 0.0
      %3141 = vmatpush1.msra.mxu0 0.0
      %3142 = vmatprep.subr.mxu0 0.0
      %3143 = vmatpush1.msra.mxu0 0.0
      %3144 = vmatprep.subr.mxu0 0.0
      %3145 = vmatpush1.msra.mxu0 0.0
      %3146 = vmatprep.subr.mxu0 0.0
      %3147 = vmatpush1.msra.mxu0 0.0
      %3148 = vmatprep.subr.mxu0 0.0
      %3149 = vmatpush1.msra.mxu0 0.0
      %3150 = vmatprep.subr.mxu0 0.0
      %3151 = vmatpush1.msra.mxu0 0.0
      %3152 = vmatprep.subr.mxu0 0.0
      %3153 = vmatpush1.msra.mxu0 0.0
      %3154 = vmatprep.subr.mxu0 0.0
      %3155 = vmatpush1.msra.mxu0 0.0
      %3156 = vmatprep.subr.mxu0 0.0
      %3157 = vmatpush1.msra.mxu0 0.0
      %3158 = vmatprep.subr.mxu0 0.0
      %3159 = vmatpush1.msra.mxu0 0.0
      %3160 = vmatprep.subr.mxu0 0.0
      %3161 = vmatpush1.msra.mxu0 0.0
      %3162 = vmatprep.subr.mxu0 0.0
      %3163 = vmatpush1.msra.mxu0 0.0
      %3164 = vmatprep.subr.mxu0 0.0
      %3165 = vmatpush1.msra.mxu0 0.0
      %3166 = vmatprep.subr.mxu0 0.0
      %3167 = vmatpush1.msra.mxu0 0.0
      %3168 = vmatprep.subr.mxu0 0.0
      %3169 = vmatpush1.msra.mxu0 0.0
      %3170 = vmatprep.subr.mxu0 0.0
      %3171 = vmatpush1.msra.mxu0 0.0
      %3172 = vmatprep.subr.mxu0 0.0
      %3173 = vmatpush1.msra.mxu0 0.0
      %3174 = vmatprep.subr.mxu0 0.0
      %3175 = vmatpush1.msra.mxu0 0.0
      %3176 = vmatprep.subr.mxu0 0.0
      %3177 = vmatpush1.msra.mxu0 0.0
      %3178 = vmatprep.subr.mxu0 0.0
      %3179 = vmatpush1.msra.mxu0 0.0
      %3180 = vmatprep.subr.mxu0 0.0
      %3181 = vmatpush1.msra.mxu0 0.0
      %3182 = vmatprep.mubr.f32.mxu0 0.0
      %3183 = vmatmul.mubr.f32.gmra.mrb[0].mxu0 %v2690
      %v3184 = vpop.f32.mrb[0].mxu0
      %v3185 = vadd.f32 %v2686, %v3184
      %v3186 = vpop.f32.mrb[0].mxu0
      %v3187 = vadd.f32 %v2686, %v3186
      %3188 = vdwg.mxu0
      %3189 = vmatprep.subr.mxu0 %v2463
      %3190 = vmatpush1.msra.mxu0 %v2462
      %3191 = vmatprep.subr.mxu0 %v2489
      %3192 = vmatpush1.msra.mxu0 %v2488
      %3193 = vmatprep.subr.mxu0 %v2515
      %3194 = vmatpush1.msra.mxu0 %v2514
      %3195 = vmatprep.subr.mxu0 %v2541
      %3196 = vmatpush1.msra.mxu0 %v2540
      %3197 = vmatprep.subr.mxu0 %v2567
      %3198 = vmatpush1.msra.mxu0 %v2566
      %3199 = vmatprep.subr.mxu0 %v2593
      %3200 = vmatpush1.msra.mxu0 %v2592
      %3201 = vmatprep.subr.mxu0 %v2619
      %3202 = vmatpush1.msra.mxu0 %v2618
      %3203 = vmatprep.subr.mxu0 %v2645
      %3204 = vmatpush1.msra.mxu0 %v2644
      %3205 = vmatprep.subr.mxu0 %v2671
      %3206 = vmatpush1.msra.mxu0 %v2670
      %3207 = vmatprep.subr.mxu0 0.0
      %3208 = vmatpush1.msra.mxu0 0.0
      %3209 = vmatprep.subr.mxu0 0.0
      %3210 = vmatpush1.msra.mxu0 0.0
      %3211 = vmatprep.subr.mxu0 0.0
      %3212 = vmatpush1.msra.mxu0 0.0
      %3213 = vmatprep.subr.mxu0 0.0
      %3214 = vmatpush1.msra.mxu0 0.0
      %3215 = vmatprep.subr.mxu0 0.0
      %3216 = vmatpush1.msra.mxu0 0.0
      %3217 = vmatprep.subr.mxu0 0.0
      %3218 = vmatpush1.msra.mxu0 0.0
      %3219 = vmatprep.subr.mxu0 0.0
      %3220 = vmatpush1.msra.mxu0 0.0
      %3221 = vmatprep.subr.mxu0 0.0
      %3222 = vmatpush1.msra.mxu0 0.0
      %3223 = vmatprep.subr.mxu0 0.0
      %3224 = vmatpush1.msra.mxu0 0.0
      %3225 = vmatprep.subr.mxu0 0.0
      %3226 = vmatpush1.msra.mxu0 0.0
      %3227 = vmatprep.subr.mxu0 0.0
      %3228 = vmatpush1.msra.mxu0 0.0
      %3229 = vmatprep.subr.mxu0 0.0
      %3230 = vmatpush1.msra.mxu0 0.0
      %3231 = vmatprep.subr.mxu0 0.0
      %3232 = vmatpush1.msra.mxu0 0.0
      %3233 = vmatprep.subr.mxu0 0.0
      %3234 = vmatpush1.msra.mxu0 0.0
      %3235 = vmatprep.subr.mxu0 0.0
      %3236 = vmatpush1.msra.mxu0 0.0
      %3237 = vmatprep.subr.mxu0 0.0
      %3238 = vmatpush1.msra.mxu0 0.0
      %3239 = vmatprep.subr.mxu0 0.0
      %3240 = vmatpush1.msra.mxu0 0.0
      %3241 = vmatprep.subr.mxu0 0.0
      %3242 = vmatpush1.msra.mxu0 0.0
      %3243 = vmatprep.subr.mxu0 0.0
      %3244 = vmatpush1.msra.mxu0 0.0
      %3245 = vmatprep.subr.mxu0 0.0
      %3246 = vmatpush1.msra.mxu0 0.0
      %3247 = vmatprep.subr.mxu0 0.0
      %3248 = vmatpush1.msra.mxu0 0.0
      %3249 = vmatprep.subr.mxu0 0.0
      %3250 = vmatpush1.msra.mxu0 0.0
      %3251 = vmatprep.subr.mxu0 0.0
      %3252 = vmatpush1.msra.mxu0 0.0
      %3253 = vmatprep.mubr.f32.mxu0 0.0
      %3254 = vmatmul.mubr.f32.gmra.mrb[0].mxu0 %v2690
      %v3255 = vpop.f32.mrb[0].mxu0
      %v3256 = vadd.f32 %v2686, %v3255
      %v3257 = vpop.f32.mrb[0].mxu0
      %v3258 = vadd.f32 %v2686, %v3257
      %3259 = vdwg.mxu0
      %3260 = vmatprep.subr.mxu0 %v2465
      %3261 = vmatpush1.msra.mxu0 %v2464
      %3262 = vmatprep.subr.mxu0 %v2491
      %3263 = vmatpush1.msra.mxu0 %v2490
      %3264 = vmatprep.subr.mxu0 %v2517
      %3265 = vmatpush1.msra.mxu0 %v2516
      %3266 = vmatprep.subr.mxu0 %v2543
      %3267 = vmatpush1.msra.mxu0 %v2542
      %3268 = vmatprep.subr.mxu0 %v2569
      %3269 = vmatpush1.msra.mxu0 %v2568
      %3270 = vmatprep.subr.mxu0 %v2595
      %3271 = vmatpush1.msra.mxu0 %v2594
      %3272 = vmatprep.subr.mxu0 %v2621
      %3273 = vmatpush1.msra.mxu0 %v2620
      %3274 = vmatprep.subr.mxu0 %v2647
      %3275 = vmatpush1.msra.mxu0 %v2646
      %3276 = vmatprep.subr.mxu0 %v2673
      %3277 = vmatpush1.msra.mxu0 %v2672
      %3278 = vmatprep.subr.mxu0 0.0
      %3279 = vmatpush1.msra.mxu0 0.0
      %3280 = vmatprep.subr.mxu0 0.0
      %3281 = vmatpush1.msra.mxu0 0.0
      %3282 = vmatprep.subr.mxu0 0.0
      %3283 = vmatpush1.msra.mxu0 0.0
      %3284 = vmatprep.subr.mxu0 0.0
      %3285 = vmatpush1.msra.mxu0 0.0
      %3286 = vmatprep.subr.mxu0 0.0
      %3287 = vmatpush1.msra.mxu0 0.0
      %3288 = vmatprep.subr.mxu0 0.0
      %3289 = vmatpush1.msra.mxu0 0.0
      %3290 = vmatprep.subr.mxu0 0.0
      %3291 = vmatpush1.msra.mxu0 0.0
      %3292 = vmatprep.subr.mxu0 0.0
      %3293 = vmatpush1.msra.mxu0 0.0
      %3294 = vmatprep.subr.mxu0 0.0
      %3295 = vmatpush1.msra.mxu0 0.0
      %3296 = vmatprep.subr.mxu0 0.0
      %3297 = vmatpush1.msra.mxu0 0.0
      %3298 = vmatprep.subr.mxu0 0.0
      %3299 = vmatpush1.msra.mxu0 0.0
      %3300 = vmatprep.subr.mxu0 0.0
      %3301 = vmatpush1.msra.mxu0 0.0
      %3302 = vmatprep.subr.mxu0 0.0
      %3303 = vmatpush1.msra.mxu0 0.0
      %3304 = vmatprep.subr.mxu0 0.0
      %3305 = vmatpush1.msra.mxu0 0.0
      %3306 = vmatprep.subr.mxu0 0.0
      %3307 = vmatpush1.msra.mxu0 0.0
      %3308 = vmatprep.subr.mxu0 0.0
      %3309 = vmatpush1.msra.mxu0 0.0
      %3310 = vmatprep.subr.mxu0 0.0
      %3311 = vmatpush1.msra.mxu0 0.0
      %3312 = vmatprep.subr.mxu0 0.0
      %3313 = vmatpush1.msra.mxu0 0.0
      %3314 = vmatprep.subr.mxu0 0.0
      %3315 = vmatpush1.msra.mxu0 0.0
      %3316 = vmatprep.subr.mxu0 0.0
      %3317 = vmatpush1.msra.mxu0 0.0
      %3318 = vmatprep.subr.mxu0 0.0
      %3319 = vmatpush1.msra.mxu0 0.0
      %3320 = vmatprep.subr.mxu0 0.0
      %3321 = vmatpush1.msra.mxu0 0.0
      %3322 = vmatprep.subr.mxu0 0.0
      %3323 = vmatpush1.msra.mxu0 0.0
      %3324 = vmatprep.mubr.f32.mxu0 0.0
      %3325 = vmatmul.mubr.f32.gmra.mrb[0].mxu0 %v2690
      %v3326 = vpop.f32.mrb[0].mxu0
      %v3327 = vadd.f32 %v2686, %v3326
      %v3328 = vpop.f32.mrb[0].mxu0
      %v3329 = vadd.f32 %v2686, %v3328
      %3330 = vdwg.mxu0
      %3331 = vmatprep.subr.mxu0 %v2467
      %3332 = vmatpush1.msra.mxu0 %v2466
      %3333 = vmatprep.subr.mxu0 %v2493
      %3334 = vmatpush1.msra.mxu0 %v2492
      %3335 = vmatprep.subr.mxu0 %v2519
      %3336 = vmatpush1.msra.mxu0 %v2518
      %3337 = vmatprep.subr.mxu0 %v2545
      %3338 = vmatpush1.msra.mxu0 %v2544
      %3339 = vmatprep.subr.mxu0 %v2571
      %3340 = vmatpush1.msra.mxu0 %v2570
      %3341 = vmatprep.subr.mxu0 %v2597
      %3342 = vmatpush1.msra.mxu0 %v2596
      %3343 = vmatprep.subr.mxu0 %v2623
      %3344 = vmatpush1.msra.mxu0 %v2622
      %3345 = vmatprep.subr.mxu0 %v2649
      %3346 = vmatpush1.msra.mxu0 %v2648
      %3347 = vmatprep.subr.mxu0 %v2675
      %3348 = vmatpush1.msra.mxu0 %v2674
      %3349 = vmatprep.subr.mxu0 0.0
      %3350 = vmatpush1.msra.mxu0 0.0
      %3351 = vmatprep.subr.mxu0 0.0
      %3352 = vmatpush1.msra.mxu0 0.0
      %3353 = vmatprep.subr.mxu0 0.0
      %3354 = vmatpush1.msra.mxu0 0.0
      %3355 = vmatprep.subr.mxu0 0.0
      %3356 = vmatpush1.msra.mxu0 0.0
      %3357 = vmatprep.subr.mxu0 0.0
      %3358 = vmatpush1.msra.mxu0 0.0
      %3359 = vmatprep.subr.mxu0 0.0
      %3360 = vmatpush1.msra.mxu0 0.0
      %3361 = vmatprep.subr.mxu0 0.0
      %3362 = vmatpush1.msra.mxu0 0.0
      %3363 = vmatprep.subr.mxu0 0.0
      %3364 = vmatpush1.msra.mxu0 0.0
      %3365 = vmatprep.subr.mxu0 0.0
      %3366 = vmatpush1.msra.mxu0 0.0
      %3367 = vmatprep.subr.mxu0 0.0
      %3368 = vmatpush1.msra.mxu0 0.0
      %3369 = vmatprep.subr.mxu0 0.0
      %3370 = vmatpush1.msra.mxu0 0.0
      %3371 = vmatprep.subr.mxu0 0.0
      %3372 = vmatpush1.msra.mxu0 0.0
      %3373 = vmatprep.subr.mxu0 0.0
      %3374 = vmatpush1.msra.mxu0 0.0
      %3375 = vmatprep.subr.mxu0 0.0
      %3376 = vmatpush1.msra.mxu0 0.0
      %3377 = vmatprep.subr.mxu0 0.0
      %3378 = vmatpush1.msra.mxu0 0.0
      %3379 = vmatprep.subr.mxu0 0.0
      %3380 = vmatpush1.msra.mxu0 0.0
      %3381 = vmatprep.subr.mxu0 0.0
      %3382 = vmatpush1.msra.mxu0 0.0
      %3383 = vmatprep.subr.mxu0 0.0
      %3384 = vmatpush1.msra.mxu0 0.0
      %3385 = vmatprep.subr.mxu0 0.0
      %3386 = vmatpush1.msra.mxu0 0.0
      %3387 = vmatprep.subr.mxu0 0.0
      %3388 = vmatpush1.msra.mxu0 0.0
      %3389 = vmatprep.subr.mxu0 0.0
      %3390 = vmatpush1.msra.mxu0 0.0
      %3391 = vmatprep.subr.mxu0 0.0
      %3392 = vmatpush1.msra.mxu0 0.0
      %3393 = vmatprep.subr.mxu0 0.0
      %3394 = vmatpush1.msra.mxu0 0.0
      %3395 = vmatprep.mubr.f32.mxu0 0.0
      %3396 = vmatmul.mubr.f32.gmra.mrb[0].mxu0 %v2690
      %v3397 = vpop.f32.mrb[0].mxu0
      %v3398 = vadd.f32 %v2686, %v3397
      %v3399 = vpop.f32.mrb[0].mxu0
      %v3400 = vadd.f32 %v2686, %v3399
      %3401 = vdwg.mxu0
      %3402 = vmatprep.subr.mxu0 %v2469
      %3403 = vmatpush1.msra.mxu0 %v2468
      %3404 = vmatprep.subr.mxu0 %v2495
      %3405 = vmatpush1.msra.mxu0 %v2494
      %3406 = vmatprep.subr.mxu0 %v2521
      %3407 = vmatpush1.msra.mxu0 %v2520
      %3408 = vmatprep.subr.mxu0 %v2547
      %3409 = vmatpush1.msra.mxu0 %v2546
      %3410 = vmatprep.subr.mxu0 %v2573
      %3411 = vmatpush1.msra.mxu0 %v2572
      %3412 = vmatprep.subr.mxu0 %v2599
      %3413 = vmatpush1.msra.mxu0 %v2598
      %3414 = vmatprep.subr.mxu0 %v2625
      %3415 = vmatpush1.msra.mxu0 %v2624
      %3416 = vmatprep.subr.mxu0 %v2651
      %3417 = vmatpush1.msra.mxu0 %v2650
      %3418 = vmatprep.subr.mxu0 %v2677
      %3419 = vmatpush1.msra.mxu0 %v2676
      %3420 = vmatprep.subr.mxu0 0.0
      %3421 = vmatpush1.msra.mxu0 0.0
      %3422 = vmatprep.subr.mxu0 0.0
      %3423 = vmatpush1.msra.mxu0 0.0
      %3424 = vmatprep.subr.mxu0 0.0
      %3425 = vmatpush1.msra.mxu0 0.0
      %3426 = vmatprep.subr.mxu0 0.0
      %3427 = vmatpush1.msra.mxu0 0.0
      %3428 = vmatprep.subr.mxu0 0.0
      %3429 = vmatpush1.msra.mxu0 0.0
      %3430 = vmatprep.subr.mxu0 0.0
      %3431 = vmatpush1.msra.mxu0 0.0
      %3432 = vmatprep.subr.mxu0 0.0
      %3433 = vmatpush1.msra.mxu0 0.0
      %3434 = vmatprep.subr.mxu0 0.0
      %3435 = vmatpush1.msra.mxu0 0.0
      %3436 = vmatprep.subr.mxu0 0.0
      %3437 = vmatpush1.msra.mxu0 0.0
      %3438 = vmatprep.subr.mxu0 0.0
      %3439 = vmatpush1.msra.mxu0 0.0
      %3440 = vmatprep.subr.mxu0 0.0
      %3441 = vmatpush1.msra.mxu0 0.0
      %3442 = vmatprep.subr.mxu0 0.0
      %3443 = vmatpush1.msra.mxu0 0.0
      %3444 = vmatprep.subr.mxu0 0.0
      %3445 = vmatpush1.msra.mxu0 0.0
      %3446 = vmatprep.subr.mxu0 0.0
      %3447 = vmatpush1.msra.mxu0 0.0
      %3448 = vmatprep.subr.mxu0 0.0
      %3449 = vmatpush1.msra.mxu0 0.0
      %3450 = vmatprep.subr.mxu0 0.0
      %3451 = vmatpush1.msra.mxu0 0.0
      %3452 = vmatprep.subr.mxu0 0.0
      %3453 = vmatpush1.msra.mxu0 0.0
      %3454 = vmatprep.subr.mxu0 0.0
      %3455 = vmatpush1.msra.mxu0 0.0
      %3456 = vmatprep.subr.mxu0 0.0
      %3457 = vmatpush1.msra.mxu0 0.0
      %3458 = vmatprep.subr.mxu0 0.0
      %3459 = vmatpush1.msra.mxu0 0.0
      %3460 = vmatprep.subr.mxu0 0.0
      %3461 = vmatpush1.msra.mxu0 0.0
      %3462 = vmatprep.subr.mxu0 0.0
      %3463 = vmatpush1.msra.mxu0 0.0
      %3464 = vmatprep.subr.mxu0 0.0
      %3465 = vmatpush1.msra.mxu0 0.0
      %3466 = vmatprep.mubr.f32.mxu0 0.0
      %3467 = vmatmul.mubr.f32.gmra.mrb[0].mxu0 %v2690
      %v3468 = vpop.f32.mrb[0].mxu0
      %v3469 = vadd.f32 %v2686, %v3468
      %v3470 = vpop.f32.mrb[0].mxu0
      %v3471 = vadd.f32 %v2686, %v3470
      %3472 = vdwg.mxu0
      %3473 = vmatprep.subr.mxu0 %v2471
      %3474 = vmatpush1.msra.mxu0 %v2470
      %3475 = vmatprep.subr.mxu0 %v2497
      %3476 = vmatpush1.msra.mxu0 %v2496
      %3477 = vmatprep.subr.mxu0 %v2523
      %3478 = vmatpush1.msra.mxu0 %v2522
      %3479 = vmatprep.subr.mxu0 %v2549
      %3480 = vmatpush1.msra.mxu0 %v2548
      %3481 = vmatprep.subr.mxu0 %v2575
      %3482 = vmatpush1.msra.mxu0 %v2574
      %3483 = vmatprep.subr.mxu0 %v2601
      %3484 = vmatpush1.msra.mxu0 %v2600
      %3485 = vmatprep.subr.mxu0 %v2627
      %3486 = vmatpush1.msra.mxu0 %v2626
      %3487 = vmatprep.subr.mxu0 %v2653
      %3488 = vmatpush1.msra.mxu0 %v2652
      %3489 = vmatprep.subr.mxu0 %v2679
      %3490 = vmatpush1.msra.mxu0 %v2678
      %3491 = vmatprep.subr.mxu0 0.0
      %3492 = vmatpush1.msra.mxu0 0.0
      %3493 = vmatprep.subr.mxu0 0.0
      %3494 = vmatpush1.msra.mxu0 0.0
      %3495 = vmatprep.subr.mxu0 0.0
      %3496 = vmatpush1.msra.mxu0 0.0
      %3497 = vmatprep.subr.mxu0 0.0
      %3498 = vmatpush1.msra.mxu0 0.0
      %3499 = vmatprep.subr.mxu0 0.0
      %3500 = vmatpush1.msra.mxu0 0.0
      %3501 = vmatprep.subr.mxu0 0.0
      %3502 = vmatpush1.msra.mxu0 0.0
      %3503 = vmatprep.subr.mxu0 0.0
      %3504 = vmatpush1.msra.mxu0 0.0
      %3505 = vmatprep.subr.mxu0 0.0
      %3506 = vmatpush1.msra.mxu0 0.0
      %3507 = vmatprep.subr.mxu0 0.0
      %3508 = vmatpush1.msra.mxu0 0.0
      %3509 = vmatprep.subr.mxu0 0.0
      %3510 = vmatpush1.msra.mxu0 0.0
      %3511 = vmatprep.subr.mxu0 0.0
      %3512 = vmatpush1.msra.mxu0 0.0
      %3513 = vmatprep.subr.mxu0 0.0
      %3514 = vmatpush1.msra.mxu0 0.0
      %3515 = vmatprep.subr.mxu0 0.0
      %3516 = vmatpush1.msra.mxu0 0.0
      %3517 = vmatprep.subr.mxu0 0.0
      %3518 = vmatpush1.msra.mxu0 0.0
      %3519 = vmatprep.subr.mxu0 0.0
      %3520 = vmatpush1.msra.mxu0 0.0
      %3521 = vmatprep.subr.mxu0 0.0
      %3522 = vmatpush1.msra.mxu0 0.0
      %3523 = vmatprep.subr.mxu0 0.0
      %3524 = vmatpush1.msra.mxu0 0.0
      %3525 = vmatprep.subr.mxu0 0.0
      %3526 = vmatpush1.msra.mxu0 0.0
      %3527 = vmatprep.subr.mxu0 0.0
      %3528 = vmatpush1.msra.mxu0 0.0
      %3529 = vmatprep.subr.mxu0 0.0
      %3530 = vmatpush1.msra.mxu0 0.0
      %3531 = vmatprep.subr.mxu0 0.0
      %3532 = vmatpush1.msra.mxu0 0.0
      %3533 = vmatprep.subr.mxu0 0.0
      %3534 = vmatpush1.msra.mxu0 0.0
      %3535 = vmatprep.subr.mxu0 0.0
      %3536 = vmatpush1.msra.mxu0 0.0
      %3537 = vmatprep.mubr.f32.mxu0 0.0
      %3538 = vmatmul.mubr.f32.gmra.mrb[0].mxu0 %v2690
      %v3539 = vpop.f32.mrb[0].mxu0
      %v3540 = vadd.f32 %v2686, %v3539
      %v3541 = vpop.f32.mrb[0].mxu0
      %v3542 = vadd.f32 %v2686, %v3541
      %3543 = vdwg.mxu0
      %3544 = vmatprep.subr.mxu0 %v2473
      %3545 = vmatpush1.msra.mxu0 %v2472
      %3546 = vmatprep.subr.mxu0 %v2499
      %3547 = vmatpush1.msra.mxu0 %v2498
      %3548 = vmatprep.subr.mxu0 %v2525
      %3549 = vmatpush1.msra.mxu0 %v2524
      %3550 = vmatprep.subr.mxu0 %v2551
      %3551 = vmatpush1.msra.mxu0 %v2550
      %3552 = vmatprep.subr.mxu0 %v2577
      %3553 = vmatpush1.msra.mxu0 %v2576
      %3554 = vmatprep.subr.mxu0 %v2603
      %3555 = vmatpush1.msra.mxu0 %v2602
      %3556 = vmatprep.subr.mxu0 %v2629
      %3557 = vmatpush1.msra.mxu0 %v2628
      %3558 = vmatprep.subr.mxu0 %v2655
      %3559 = vmatpush1.msra.mxu0 %v2654
      %3560 = vmatprep.subr.mxu0 %v2681
      %3561 = vmatpush1.msra.mxu0 %v2680
      %3562 = vmatprep.subr.mxu0 0.0
      %3563 = vmatpush1.msra.mxu0 0.0
      %3564 = vmatprep.subr.mxu0 0.0
      %3565 = vmatpush1.msra.mxu0 0.0
      %3566 = vmatprep.subr.mxu0 0.0
      %3567 = vmatpush1.msra.mxu0 0.0
      %3568 = vmatprep.subr.mxu0 0.0
      %3569 = vmatpush1.msra.mxu0 0.0
      %3570 = vmatprep.subr.mxu0 0.0
      %3571 = vmatpush1.msra.mxu0 0.0
      %3572 = vmatprep.subr.mxu0 0.0
      %3573 = vmatpush1.msra.mxu0 0.0
      %3574 = vmatprep.subr.mxu0 0.0
      %3575 = vmatpush1.msra.mxu0 0.0
      %3576 = vmatprep.subr.mxu0 0.0
      %3577 = vmatpush1.msra.mxu0 0.0
      %3578 = vmatprep.subr.mxu0 0.0
      %3579 = vmatpush1.msra.mxu0 0.0
      %3580 = vmatprep.subr.mxu0 0.0
      %3581 = vmatpush1.msra.mxu0 0.0
      %3582 = vmatprep.subr.mxu0 0.0
      %3583 = vmatpush1.msra.mxu0 0.0
      %3584 = vmatprep.subr.mxu0 0.0
      %3585 = vmatpush1.msra.mxu0 0.0
      %3586 = vmatprep.subr.mxu0 0.0
      %3587 = vmatpush1.msra.mxu0 0.0
      %3588 = vmatprep.subr.mxu0 0.0
      %3589 = vmatpush1.msra.mxu0 0.0
      %3590 = vmatprep.subr.mxu0 0.0
      %3591 = vmatpush1.msra.mxu0 0.0
      %3592 = vmatprep.subr.mxu0 0.0
      %3593 = vmatpush1.msra.mxu0 0.0
      %3594 = vmatprep.subr.mxu0 0.0
      %3595 = vmatpush1.msra.mxu0 0.0
      %3596 = vmatprep.subr.mxu0 0.0
      %3597 = vmatpush1.msra.mxu0 0.0
      %3598 = vmatprep.subr.mxu0 0.0
      %3599 = vmatpush1.msra.mxu0 0.0
      %3600 = vmatprep.subr.mxu0 0.0
      %3601 = vmatpush1.msra.mxu0 0.0
      %3602 = vmatprep.subr.mxu0 0.0
      %3603 = vmatpush1.msra.mxu0 0.0
      %3604 = vmatprep.subr.mxu0 0.0
      %3605 = vmatpush1.msra.mxu0 0.0
      %3606 = vmatprep.subr.mxu0 0.0
      %3607 = vmatpush1.msra.mxu0 0.0
      %3608 = vmatprep.mubr.f32.mxu0 0.0
      %3609 = vmatmul.mubr.f32.gmra.mrb[0].mxu0 %v2690
      %v3610 = vpop.f32.mrb[0].mxu0
      %v3611 = vadd.f32 %v2686, %v3610
      %v3612 = vpop.f32.mrb[0].mxu0
      %v3613 = vadd.f32 %v2686, %v3612
      %3614 = vdwg.mxu0
      %v3615 = vmax.f32 %v2759, 0.0
      %v3616 = vmax.f32 %v2761, 0.0
      %v3617 = vmax.f32 %v2830, 0.0
      %v3618 = vmax.f32 %v2832, 0.0
      %v3619 = vmax.f32 %v2901, 0.0
      %v3620 = vmax.f32 %v2903, 0.0
      %v3621 = vmax.f32 %v2972, 0.0
      %v3622 = vmax.f32 %v2974, 0.0
      %v3623 = vmax.f32 %v3043, 0.0
      %v3624 = vmax.f32 %v3045, 0.0
      %v3625 = vmax.f32 %v3114, 0.0
      %v3626 = vmax.f32 %v3116, 0.0
      %v3627 = vmax.f32 %v3185, 0.0
      %v3628 = vmax.f32 %v3187, 0.0
      %v3629 = vmax.f32 %v3256, 0.0
      %v3630 = vmax.f32 %v3258, 0.0
      %v3631 = vmax.f32 %v3327, 0.0
      %v3632 = vmax.f32 %v3329, 0.0
      %v3633 = vmax.f32 %v3398, 0.0
      %v3634 = vmax.f32 %v3400, 0.0
      %v3635 = vmax.f32 %v3469, 0.0
      %v3636 = vmax.f32 %v3471, 0.0
      %v3637 = vmax.f32 %v3540, 0.0
      %v3638 = vmax.f32 %v3542, 0.0
      %v3639 = vmax.f32 %v3611, 0.0
      %v3640 = vmax.f32 %v3613, 0.0
      %v3641 = vpack.c.bf16 %v3615, %v3615
      %v3642 = vpack.c.bf16 %v3616, %v3616
      %v3643 = vpack.c.bf16 %v3617, %v3617
      %v3644 = vpack.c.bf16 %v3618, %v3618
      %v3645 = vpack.c.bf16 %v3619, %v3619
      %v3646 = vpack.c.bf16 %v3620, %v3620
      %v3647 = vpack.c.bf16 %v3621, %v3621
      %v3648 = vpack.c.bf16 %v3622, %v3622
      %v3649 = vpack.c.bf16 %v3623, %v3623
      %v3650 = vpack.c.bf16 %v3624, %v3624
      %v3651 = vpack.c.bf16 %v3625, %v3625
      %v3652 = vpack.c.bf16 %v3626, %v3626
      %v3653 = vpack.c.bf16 %v3627, %v3627
      %v3654 = vpack.c.bf16 %v3628, %v3628
      %v3655 = vpack.c.bf16 %v3629, %v3629
      %v3656 = vpack.c.bf16 %v3630, %v3630
      %v3657 = vpack.c.bf16 %v3631, %v3631
      %v3658 = vpack.c.bf16 %v3632, %v3632
      %v3659 = vpack.c.bf16 %v3633, %v3633
      %v3660 = vpack.c.bf16 %v3634, %v3634
      %v3661 = vpack.c.bf16 %v3635, %v3635
      %v3662 = vpack.c.bf16 %v3636, %v3636
      %v3663 = vpack.c.bf16 %v3637, %v3637
      %v3664 = vpack.c.bf16 %v3638, %v3638
      %v3665 = vpack.c.bf16 %v3639, %v3639
      %v3666 = vpack.c.bf16 %v3640, %v3640
      %v3693 = vunpack.c.l.b16 %v3641
      %v3694 = vunpack.c.l.b16 %v3642
      %v3695 = vunpack.c.l.b16 %v3643
      %v3696 = vunpack.c.l.b16 %v3644
      %v3697 = vunpack.c.l.b16 %v3645
      %v3698 = vunpack.c.l.b16 %v3646
      %v3699 = vunpack.c.l.b16 %v3647
      %v3700 = vunpack.c.l.b16 %v3648
      %v3701 = vunpack.c.l.b16 %v3649
      %v3702 = vunpack.c.l.b16 %v3650
      %v3703 = vunpack.c.l.b16 %v3651
      %v3704 = vunpack.c.l.b16 %v3652
      %v3705 = vunpack.c.l.b16 %v3653
      %v3706 = vunpack.c.l.b16 %v3654
      %v3707 = vunpack.c.l.b16 %v3655
      %v3708 = vunpack.c.l.b16 %v3656
      %v3709 = vunpack.c.l.b16 %v3657
      %v3710 = vunpack.c.l.b16 %v3658
      %v3711 = vunpack.c.l.b16 %v3659
      %v3712 = vunpack.c.l.b16 %v3660
      %v3713 = vunpack.c.l.b16 %v3661
      %v3714 = vunpack.c.l.b16 %v3662
      %v3715 = vunpack.c.l.b16 %v3663
      %v3716 = vunpack.c.l.b16 %v3664
      %v3717 = vunpack.c.l.b16 %v3665
      %v3718 = vunpack.c.l.b16 %v3666
      %v3719 = vpack.c.b16 %v3694, %v3693
      %v3720 = vpack.c.b16 %v3696, %v3695
      %v3721 = vpack.c.b16 %v3698, %v3697
      %v3722 = vpack.c.b16 %v3700, %v3699
      %v3723 = vpack.c.b16 %v3702, %v3701
      %v3724 = vpack.c.b16 %v3704, %v3703
      %v3725 = vpack.c.b16 %v3706, %v3705
      %v3726 = vpack.c.b16 %v3708, %v3707
      %v3727 = vpack.c.b16 %v3710, %v3709
      %v3728 = vpack.c.b16 %v3712, %v3711
      %v3729 = vpack.c.b16 %v3714, %v3713
      %v3730 = vpack.c.b16 %v3716, %v3715
      %v3731 = vpack.c.b16 %v3718, %v3717
      %3745 = vst [vmem:[%s172] sm:$0x77] %v3719
      %3746 = vst [vmem:[%s172 + $0x8] sm:$0x77] %v3720
      %3747 = vst [vmem:[%s172 + $0x10] sm:$0x77] %v3721
      %3748 = vst [vmem:[%s172 + $0x18] sm:$0x77] %v3722
      %3749 = vst [vmem:[%s172 + $0x20] sm:$0x77] %v3723
      %3750 = vst [vmem:[%s172 + $0x28] sm:$0x77] %v3724
      %3751 = vst [vmem:[%s172 + $0x30] sm:$0x77] %v3725
      %3752 = vst [vmem:[%s172 + $0x38] sm:$0x77] %v3726
      %3753 = vst [vmem:[%s172 + $0x40] sm:$0x77] %v3727
      %3754 = vst [vmem:[%s172 + $0x48] sm:$0x77] %v3728
      %3755 = vst [vmem:[%s172 + $0x50] sm:$0x77] %v3729
      %3756 = vst [vmem:[%s172 + $0x58] sm:$0x77] %v3730
      %3757 = vst [vmem:[%s172 + $0x60] sm:$0x77] %v3731
      %s3758 = smul.u32 26, %s14
      %p3759 = scmp.lt.s32.totalorder %s3758, 51
      %s3760 = scalar_select %p3759, %s3758, 51
      %s3761 = smul.addr %s3760, 4
      %s3762 = scalar_lea.vmem %s3, %s3761
      // Predicated region
      $region33: #{segmentation_encoder.5} parent=31 // pred_check
        %p3763 = pneg %p100
      $region34: #{segmentation_encoder.5} parent=31 // pred_check_branch
        %3765 = sbr.rel (%p3763) target = $region36
      $region35: #{segmentation_encoder.5} parent=31 // pred_region
        %s3766 = smul.u32 26, %s14
      $region36: #{segmentation_encoder.5} parent=31 // pred_fallthru
        _
    $region32: #{segmentation_encoder.5} parent=5 // pred_fallthru
      _
    %p3767 = scmp.le.s32.totalorder 2, %s9
    // Predicated region
    $region37: #{segmentation_encoder.5} parent=5 // pred_check
      %p3768 = pneg %p3767
    $region38: #{segmentation_encoder.5} parent=5 // pred_check_branch
      %3770 = sbr.rel (%p3768) target = $region40
    $region39: #{segmentation_encoder.5} parent=5 // pred_region
      %s3771 = ssub.s32 %s9, 2
      // Predicated region
      $region41: #{segmentation_encoder.5} parent=39 // pred_check
        %p3772 = pneg %p106
      $region42: #{segmentation_encoder.5} parent=39 // pred_check_branch
        %3774 = sbr.rel (%p3772) target = $region44
      $region43: #{segmentation_encoder.5} parent=39 // pred_region
        %s3775 = smul.u32 26, %s15
        %p3776 = scmp.lt.s32.totalorder %s3775, 51
        %s3777 = scalar_select %p3776, %s3775, 51
        %s3778 = smul.addr %s3777, 4
        %s3779 = scalar_lea.vmem %s3, %s3778
      $region44: #{segmentation_encoder.5} parent=39 // pred_fallthru
        _
    $region40: #{segmentation_encoder.5} parent=5 // pred_fallthru
      _
  $region6: #{segmentation_encoder.5} parent=0 // loop_footer
    %s13 = sadd.s32 1, %s9
  $region7: #{segmentation_encoder.5} parent=0 // loop_footer_branch
    %8 = sbr.rel target = $region3
  $region8: #{segmentation_encoder.5} parent=0 // loop_exit
    _

// kernel: segmentation_encoder.6
$region0: #{segmentation_encoder.6}
  #allocation0 [shape = 'u32[]', space=smem, size = 0x4, offset = 0x4, fixed_abs, tag = 'smem constant byte address 0x4 - core index']
  #allocation1 [shape = 'u32[144,128]{1,0:T(1,128)}', space=vmem, size = 0x12000, scoped, tag = 'internal scratch']
  %s0 = inlined_call_operand.vmem [shape: bf16[6,12], index: 0, kind: input, shape index: {}]
  %s1 = inlined_call_operand.vmem [shape: f32[6,1], index: 1, kind: input, shape index: {}]
  %s2 = inlined_call_operand.vmem [shape: bf16[12,512], index: 2, kind: input, shape index: {}]
  %s3 = inlined_call_operand.vmem [shape: bf16[6,512], index: 3, kind: output, shape index: {}]
  %s4 = sld [smem:[#allocation0]]
  $region86: #{segmentation_encoder.6} parent=0
    _
  %s6 = ssub.s32 1, %s4
  %s7 = scalar_select 0, %s6, %s4
  $region1: #{segmentation_encoder.6} parent=0
    #allocation2 [shape = 'u8[8192]{0}', space=vmem, size = 0x2000, scoped, tag = 'input window, operand 2']
    loop: start=0, step=1, limit=6
    $region2: #{segmentation_encoder.6} parent=1 // loop_pre_header
      _
    $region3: #{segmentation_encoder.6} parent=1 // loop_header
      %s9 = sphi 0, %s13
      %p10 = scmp.ge.s32.totalorder %s9, 6
      %s17 = sphi 0, %s17
      %s19 = sphi 0, %s17
      %s20 = sphi 0, %s19
      %s34 = sphi 0, %s20
      %s38 = sphi 0, %s38
      %s40 = sphi 0, %s38
      %s41 = sphi 0, %s40
      %s55 = sphi 0, %s41
      %s61 = sphi 0, %s63
      %s64 = sphi 0, %s61
      %s65 = sphi 0, %s64
      %s81 = sphi 0, %s65
      %s87 = sphi 0, %s89
      %s90 = sphi 0, %s87
      %s91 = sphi 0, %s90
      %s107 = sphi 0, %s91
    $region4: #{segmentation_encoder.6} parent=1 // loop_header_branch
      %12 = sbr.rel (%p10) target = $region8
    $region5: #{segmentation_encoder.6} parent=1 // loop_body
      %s14 = ssub.s32 %s9, 1
      %s15 = ssub.s32 %s9, 2
      %s16 = sadd.s32 %s9, 1
      %s18 = sadd.s32 %s17, 1
      %p21 = scmp.eq.s32.totalorder %s9, 3
      %p22 = scmp.ne.s32.totalorder %s17, %s19
      %p23 = scmp.eq.s32.totalorder %s9, 0
      %p24 = por %p22, %p23
      %p25 = scmp.ne.s32.totalorder %s17, %s19
      %p26 = scmp.eq.s32.totalorder %s14, 3
      %p27 = por %p25, %p26
      %p28 = scmp.ne.s32.totalorder %s19, %s20
      %p29 = scmp.eq.s32.totalorder %s14, 0
      %p30 = por %p28, %p29
      %p31 = scmp.ne.s32.totalorder %s19, %s20
      %p32 = scmp.eq.s32.totalorder %s15, 3
      %p33 = por %p31, %p32
      %p35 = scmp.ne.s32.totalorder %s20, %s34
      %p36 = scmp.eq.s32.totalorder %s15, 0
      %p37 = por %p35, %p36
      %s39 = sadd.s32 %s38, 1
      %p42 = scmp.eq.s32.totalorder %s9, 3
      %p43 = scmp.ne.s32.totalorder %s38, %s40
      %p44 = scmp.eq.s32.totalorder %s9, 0
      %p45 = por %p43, %p44
      %p46 = scmp.ne.s32.totalorder %s38, %s40
      %p47 = scmp.eq.s32.totalorder %s14, 3
      %p48 = por %p46, %p47
      %p49 = scmp.ne.s32.totalorder %s40, %s41
      %p50 = scmp.eq.s32.totalorder %s14, 0
      %p51 = por %p49, %p50
      %p52 = scmp.ne.s32.totalorder %s40, %s41
      %p53 = scmp.eq.s32.totalorder %s15, 3
      %p54 = por %p52, %p53
      %p56 = scmp.ne.s32.totalorder %s41, %s55
      %p57 = scmp.eq.s32.totalorder %s15, 0
      %p58 = por %p56, %p57
      %s59 = ssub.s32 %s9, %s16
      %p60 = scmp.eq.s32.totalorder %s59, 0
      %s62 = sadd.s32 %s61, 1
      %s63 = scalar_select %p60, %s61, %s62
      %p66 = pneg %p60
      %p67 = scmp.eq.s32.totalorder %s9, 3
      %p68 = por %p66, %p67
      %p69 = scmp.ne.s32.totalorder %s61, %s64
      %p70 = scmp.eq.s32.totalorder %s9, 0
      %p71 = por %p69, %p70
      %p72 = scmp.ne.s32.totalorder %s61, %s64
      %p73 = scmp.eq.s32.totalorder %s14, 3
      %p74 = por %p72, %p73
      %p75 = scmp.ne.s32.totalorder %s64, %s65
      %p76 = scmp.eq.s32.totalorder %s14, 0
      %p77 = por %p75, %p76
      %p78 = scmp.ne.s32.totalorder %s64, %s65
      %p79 = scmp.eq.s32.totalorder %s15, 3
      %p80 = por %p78, %p79
      %p82 = scmp.ne.s32.totalorder %s65, %s81
      %p83 = scmp.eq.s32.totalorder %s15, 0
      %p84 = por %p82, %p83
      %s85 = ssub.s32 %s9, %s16
      %p86 = scmp.eq.s32.totalorder %s85, 0
      %s88 = sadd.s32 %s87, 1
      %s89 = scalar_select %p86, %s87, %s88
      %p92 = pneg %p86
      %p93 = scmp.eq.s32.totalorder %s9, 3
      %p94 = por %p92, %p93
      %p95 = scmp.ne.s32.totalorder %s87, %s90
      %p96 = scmp.eq.s32.totalorder %s9, 0
      %p97 = por %p95, %p96
      %p98 = scmp.ne.s32.totalorder %s87, %s90
      %p99 = scmp.eq.s32.totalorder %s14, 3
      %p100 = por %p98, %p99
      %p101 = scmp.ne.s32.totalorder %s90, %s91
      %p102 = scmp.eq.s32.totalorder %s14, 0
      %p103 = por %p101, %p102
      %p104 = scmp.ne.s32.totalorder %s90, %s91
      %p105 = scmp.eq.s32.totalorder %s15, 3
      %p106 = por %p104, %p105
      %p108 = scmp.ne.s32.totalorder %s91, %s107
      %p109 = scmp.eq.s32.totalorder %s15, 0
      %p110 = por %p108, %p109
      %p111 = scmp.le.s32.totalorder 1, %s9
      %p112 = scmp.lt.s32.totalorder %s9, 5
      %p113 = pnand %p111, %p112
      %p114 = pneg %p113
      // Predicated region
      $region9: #{segmentation_encoder.6} parent=5 // pred_check
        _
      $region10: #{segmentation_encoder.6} parent=5 // pred_check_branch
        %116 = sbr.rel (%p113) target = $region12
      $region11: #{segmentation_encoder.6} parent=5 // pred_region
        %s117 = ssub.s32 %s9, 1
        // Predicated region
        $region13: #{segmentation_encoder.6} parent=11 // pred_check
          %p118 = pneg %p30
        $region14: #{segmentation_encoder.6} parent=11 // pred_check_branch
          %120 = sbr.rel (%p118) target = $region16
        $region15: #{segmentation_encoder.6} parent=11 // pred_region
          _
        $region16: #{segmentation_encoder.6} parent=11 // pred_fallthru
          _
        // Predicated region
        $region17: #{segmentation_encoder.6} parent=11 // pred_check
          %p121 = pneg %p51
        $region18: #{segmentation_encoder.6} parent=11 // pred_check_branch
          %123 = sbr.rel (%p121) target = $region20
        $region19: #{segmentation_encoder.6} parent=11 // pred_region
          _
        $region20: #{segmentation_encoder.6} parent=11 // pred_fallthru
          _
      $region12: #{segmentation_encoder.6} parent=5 // pred_fallthru
        _
      %p124 = scmp.lt.s32.totalorder %s9, 4
      // Predicated region
      $region21: #{segmentation_encoder.6} parent=5 // pred_check
        %p125 = pneg %p124
      $region22: #{segmentation_encoder.6} parent=5 // pred_check_branch
        %127 = sbr.rel (%p125) target = $region24
      $region23: #{segmentation_encoder.6} parent=5 // pred_region
        // Predicated region
        $region25: #{segmentation_encoder.6} parent=23 // pred_check
          %p128 = pneg %p71
        $region26: #{segmentation_encoder.6} parent=23 // pred_check_branch
          %130 = sbr.rel (%p128) target = $region28
        $region27: #{segmentation_encoder.6} parent=23 // pred_region
          %s131 = sand.u32 %s61, 1
          %s132 = sand.u32 %s61, 1
          %s133 = smul.addr %s132, 8
          %s134 = scalar_lea.vmem [#allocation2], %s133
          %s135 = smul.addr %s9, 4
          %s136 = scalar_lea.vmem %s2, %s135
          // Predicated region
          $region29: #{segmentation_encoder.6} parent=27 // pred_check
            _
          $region30: #{segmentation_encoder.6} parent=27 // pred_check_branch
            %138 = sbr.rel (0) target = $region32
          $region31: #{segmentation_encoder.6} parent=27 // pred_region
            // Predicated region
            $region33: #{segmentation_encoder.6} parent=31 // pred_check
              _
            $region34: #{segmentation_encoder.6} parent=31 // pred_check_branch
              %140 = sbr.rel target = $region36
            $region35: #{segmentation_encoder.6} parent=31 // pred_region
              // Predicated region
              $region48: #{segmentation_encoder.6} parent=35 // pred_check
                _
              $region49: #{segmentation_encoder.6} parent=35 // pred_check_branch
                %157 = sbr.rel (0) target = $region51
              $region50: #{segmentation_encoder.6} parent=35 // pred_region
                loop: start=0, step=1, limit=1
                $region52: #{segmentation_encoder.6} parent=50 // loop_pre_header
                  _
                $region53: #{segmentation_encoder.6} parent=50 // loop_header
                  %s159 = sphi 0, %s163
                  %p160 = scmp.ge.s32.totalorder %s159, 1
                  %s164 = sphi %s136, %s136
                  %s165 = sphi %s134, %s134
                $region54: #{segmentation_encoder.6} parent=50 // loop_header_branch
                  %162 = sbr.rel (%p160) target = $region58
                $region55: #{segmentation_encoder.6} parent=50 // loop_body
                  _
                $region56: #{segmentation_encoder.6} parent=50 // loop_footer
                  %s163 = sadd.s32 1, %s159
                $region57: #{segmentation_encoder.6} parent=50 // loop_footer_branch
                  %158 = sbr.rel target = $region53
                $region58: #{segmentation_encoder.6} parent=50 // loop_exit
                  _
                loop: start=0, step=1, limit=1
                $region59: #{segmentation_encoder.6} parent=50 // loop_pre_header
                  _
                $region60: #{segmentation_encoder.6} parent=50 // loop_header
                  %s168 = sphi 0, %s172
                  %p169 = scmp.ge.s32.totalorder %s168, 1
                  %s173 = sphi %s136, %s136
                  %s174 = sphi %s134, %s134
                $region61: #{segmentation_encoder.6} parent=50 // loop_header_branch
                  %171 = sbr.rel (%p169) target = $region65
                $region62: #{segmentation_encoder.6} parent=50 // loop_body
                  %v175 = vld [vmem:[%s173] sm:$0xf]
                  %176 = vst [vmem:[%s174] sm:$0xf] %v175
                  %v177 = vld [vmem:[%s173 + $0x10] sm:$0xf]
                  %178 = vst [vmem:[%s174 + $0x4] sm:$0xf] %v177
                $region63: #{segmentation_encoder.6} parent=50 // loop_footer
                  %s172 = sadd.s32 1, %s168
                $region64: #{segmentation_encoder.6} parent=50 // loop_footer_branch
                  %167 = sbr.rel target = $region60
                $region65: #{segmentation_encoder.6} parent=50 // loop_exit
                  _
              $region51: #{segmentation_encoder.6} parent=35 // pred_fallthru
                _
            $region36: #{segmentation_encoder.6} parent=31 // pred_fallthru
              _
            // Predicated region
            $region37: #{segmentation_encoder.6} parent=31 // pred_check
              _
            $region38: #{segmentation_encoder.6} parent=31 // pred_check_branch
              %142 = sbr.rel (0) target = $region40
            $region39: #{segmentation_encoder.6} parent=31 // pred_region
              loop: start=0, step=1, limit=1
              $region41: #{segmentation_encoder.6} parent=39 // loop_pre_header
                _
              $region42: #{segmentation_encoder.6} parent=39 // loop_header
                %s145 = sphi 0, %s149
                %p146 = scmp.ge.s32.totalorder %s145, 1
                %s150 = sphi %s136, %s136
                %s151 = sphi %s134, %s134
              $region43: #{segmentation_encoder.6} parent=39 // loop_header_branch
                %148 = sbr.rel (%p146) target = $region47
              $region44: #{segmentation_encoder.6} parent=39 // loop_body
                %v152 = vld [vmem:[%s150] sm:$0xf]
                %153 = vst [vmem:[%s151] sm:$0xf] %v152
                %v154 = vld [vmem:[%s150 + $0x10] sm:$0xf]
                %155 = vst [vmem:[%s151 + $0x4] sm:$0xf] %v154
              $region45: #{segmentation_encoder.6} parent=39 // loop_footer
                %s149 = sadd.s32 1, %s145
              $region46: #{segmentation_encoder.6} parent=39 // loop_footer_branch
                %144 = sbr.rel target = $region42
              $region47: #{segmentation_encoder.6} parent=39 // loop_exit
                _
            $region40: #{segmentation_encoder.6} parent=31 // pred_fallthru
              _
          $region32: #{segmentation_encoder.6} parent=27 // pred_fallthru
            _
          %179 = vnop
        $region28: #{segmentation_encoder.6} parent=23 // pred_fallthru
          _
      $region24: #{segmentation_encoder.6} parent=5 // pred_fallthru
        _
      %p180 = scmp.le.s32.totalorder 1, %s9
      %p181 = scmp.lt.s32.totalorder %s9, 5
      %p182 = pnand %p180, %p181
      %p183 = pneg %p182
      // Predicated region
      $region66: #{segmentation_encoder.6} parent=5 // pred_check
        _
      $region67: #{segmentation_encoder.6} parent=5 // pred_check_branch
        %185 = sbr.rel (%p182) target = $region69
      $region68: #{segmentation_encoder.6} parent=5 // pred_region
        %s186 = ssub.s32 %s9, 1
        %s187 = sand.u32 %s64, 1
        %s188 = sand.u32 %s64, 1
        %s189 = smul.addr %s188, 8
        %s190 = scalar_lea.vmem [#allocation2], %s189
        // Predicated region
        $region70: #{segmentation_encoder.6} parent=68 // pred_check
          %p191 = pneg %p77
        $region71: #{segmentation_encoder.6} parent=68 // pred_check_branch
          %193 = sbr.rel (%p191) target = $region73
        $region72: #{segmentation_encoder.6} parent=68 // pred_region
          _
        $region73: #{segmentation_encoder.6} parent=68 // pred_fallthru
          _
        %p194 = pneg %p30
        %p195 = pneg %p27
        %p196 = pneg %p51
        %p197 = pneg %p48
        %s198 = sand.u32 %s64, 1
        %s199 = sand.u32 %s64, 1
        %s200 = smul.addr %s199, 8
        %s201 = scalar_lea.vmem [#allocation2], %s200
        %p202 = pneg %p77
        %p203 = pneg %p74
        %p204 = pneg %p103
        %p205 = pneg %p100
        %p206 = scmp.lt.s32.totalorder %s14, 3
        %s207 = scalar_select %p206, %s14, 3
        %s208 = smul.addr %s207, 4
        %s209 = scalar_lea.vmem %s3, %s208
        %p210 = scmp.lt.s32.totalorder %s14, 3
        %s211 = scalar_select %p210, %s14, 3
        %s212 = smul.addr %s211, 4
        %s213 = scalar_lea.vmem %s3, %s212
        %v215 = vld [vmem:[%s0] sm:$0x7]
        %v216 = vld [vmem:[%s190] sm:$0xf]
        %v217 = vld [vmem:[%s190 + $0x4] sm:$0x3]
        %v218 = vld [vmem:[%s1] sm:$0x3f]
        %220 = vset.pattern.permute.xlu0 0
        %221 = vperm.xlu0 %220, %v218
        %v222 = vpop.permute.xlu0 %221
        %v226 = vunpack.c.l.b16 %v216
        %v227 = vunpack.c.l.b16 %v217
        %v228 = vpack.c.b16 %v227, %v226
        %vm229 = vcmask 97280
        %v231 = vsel %vm229, %v215, 0
        %vm233 = vcmask 1045504
        %v235 = vsel %vm233, %v228, 0
        %237 = vmatprep.subr.bf16.mxu0 0
        %238 = vmatpush1.bf16.msra.mxu0 %v235
        %239 = vmatprep.subr.bf16.mxu0 0
        %240 = vmatpush1.bf16.msra.mxu0 0
        %241 = vmatprep.subr.bf16.mxu0 0
        %242 = vmatpush1.bf16.msra.mxu0 0
        %243 = vmatprep.subr.bf16.mxu0 0
        %244 = vmatpush1.bf16.msra.mxu0 0
        %245 = vmatprep.subr.bf16.mxu0 0
        %246 = vmatpush1.bf16.msra.mxu0 0
        %247 = vmatprep.subr.bf16.mxu0 0
        %248 = vmatpush1.bf16.msra.mxu0 0
        %249 = vmatprep.subr.bf16.mxu0 0
        %250 = vmatpush1.bf16.msra.mxu0 0
        %251 = vmatprep.subr.bf16.mxu0 0
        %252 = vmatpush1.bf16.msra.mxu0 0
        %253 = vmatprep.subr.bf16.mxu0 0
        %254 = vmatpush1.bf16.msra.mxu0 0
        %255 = vmatprep.subr.bf16.mxu0 0
        %256 = vmatpush1.bf16.msra.mxu0 0
        %257 = vmatprep.subr.bf16.mxu0 0
        %258 = vmatpush1.bf16.msra.mxu0 0
        %259 = vmatprep.subr.bf16.mxu0 0
        %260 = vmatpush1.bf16.msra.mxu0 0
        %261 = vmatprep.subr.bf16.mxu0 0
        %262 = vmatpush1.bf16.msra.mxu0 0
        %263 = vmatprep.subr.bf16.mxu0 0
        %264 = vmatpush1.bf16.msra.mxu0 0
        %265 = vmatprep.subr.bf16.mxu0 0
        %266 = vmatpush1.bf16.msra.mxu0 0
        %267 = vmatprep.subr.bf16.mxu0 0
        %268 = vmatpush1.bf16.msra.mxu0 0
        %269 = vmatprep.mubr.bf16.mxu0 0
        %270 = vmatmul.mubr.bf16.gmra.mrb[0].mxu0 %v231
        %v271 = vpop.f32.mrb[0].mxu0
        %v272 = vadd.f32 %v222, %v271
        %v273 = vpop.f32.mrb[0].mxu0
        %v274 = vpop.f32.mrb[0].mxu0
        %v275 = vpop.f32.mrb[0].mxu0
        %276 = vdwg.mxu0
        %v277 = vmax.f32 %v272, 0.0
        %v278 = vpack.c.bf16 %v277, %v277
        %279 = vst [vmem:[%s213] sm:$0x7] %v278
        %p280 = scmp.lt.s32.totalorder %s14, 3
        %s281 = scalar_select %p280, %s14, 3
        %s282 = smul.addr %s281, 4
        %s283 = scalar_lea.vmem %s3, %s282
        // Predicated region
        $region74: #{segmentation_encoder.6} parent=68 // pred_check
          %p284 = pneg %p100
        $region75: #{segmentation_encoder.6} parent=68 // pred_check_branch
          %286 = sbr.rel (%p284) target = $region77
        $region76: #{segmentation_encoder.6} parent=68 // pred_region
          _
        $region77: #{segmentation_encoder.6} parent=68 // pred_fallthru
          _
      $region69: #{segmentation_encoder.6} parent=5 // pred_fallthru
        _
      %p287 = scmp.le.s32.totalorder 2, %s9
      // Predicated region
      $region78: #{segmentation_encoder.6} parent=5 // pred_check
        %p288 = pneg %p287
      $region79: #{segmentation_encoder.6} parent=5 // pred_check_branch
        %290 = sbr.rel (%p288) target = $region81
      $region80: #{segmentation_encoder.6} parent=5 // pred_region
        %s291 = ssub.s32 %s9, 2
        // Predicated region
        $region82: #{segmentation_encoder.6} parent=80 // pred_check
          %p292 = pneg %p106
        $region83: #{segmentation_encoder.6} parent=80 // pred_check_branch
          %294 = sbr.rel (%p292) target = $region85
        $region84: #{segmentation_encoder.6} parent=80 // pred_region
          %p295 = scmp.lt.s32.totalorder %s15, 3
          %s296 = scalar_select %p295, %s15, 3
          %s297 = smul.addr %s296, 4
          %s298 = scalar_lea.vmem %s3, %s297
        $region85: #{segmentation_encoder.6} parent=80 // pred_fallthru
          _
      $region81: #{segmentation_encoder.6} parent=5 // pred_fallthru
        _
    $region6: #{segmentation_encoder.6} parent=1 // loop_footer
      %s13 = sadd.s32 1, %s9
    $region7: #{segmentation_encoder.6} parent=1 // loop_footer_branch
      %8 = sbr.rel target = $region3
    $region8: #{segmentation_encoder.6} parent=1 // loop_exit
      _

// kernel: segmentation_encoder.7
$region0: #{segmentation_encoder.7}
  #allocation0 [shape = 'u32[]', space=smem, size = 0x4, offset = 0x4, fixed_abs, tag = 'smem constant byte address 0x4 - core index']
  #allocation1 [shape = 'u32[144,128]{1,0:T(1,128)}', space=vmem, size = 0x12000, scoped, tag = 'internal scratch']
  #allocation2 [shape = 'f32[72,640]{1,0:T(8,128)}', space=vmem, size = 0x2d000, scoped, tag = 'scratch operand']
  %s0 = inlined_call_operand.vmem [shape: f32[6,72], index: 0, kind: input, shape index: {}]
  %s1 = inlined_call_operand.vmem [shape: f32[6,1], index: 1, kind: input, shape index: {}]
  %s2 = inlined_call_operand.vmem [shape: bf16[6,1280], index: 2, kind: input, shape index: {}]
  %s3 = inlined_call_operand.vmem [shape: bf16[6,1280], index: 3, kind: output, shape index: {}]
  %s4 = sld [smem:[#allocation0]]
  $region45: #{segmentation_encoder.7} parent=0
    _
  %s6 = ssub.s32 1, %s4
  %s7 = scalar_select 0, %s6, %s4
  loop: start=0, step=1, limit=4
  $region2: #{segmentation_encoder.7} parent=0 // loop_pre_header
    _
  $region3: #{segmentation_encoder.7} parent=0 // loop_header
    %s9 = sphi 0, %s13
    %p10 = scmp.ge.s32.totalorder %s9, 4
    %s17 = sphi 0, %s17
    %s19 = sphi 0, %s17
    %s20 = sphi 0, %s19
    %s34 = sphi 0, %s20
    %s38 = sphi 0, %s38
    %s40 = sphi 0, %s38
    %s41 = sphi 0, %s40
    %s55 = sphi 0, %s41
    %s61 = sphi 0, %s63
    %s64 = sphi 0, %s61
    %s65 = sphi 0, %s64
    %s81 = sphi 0, %s65
    %s87 = sphi 0, %s89
    %s90 = sphi 0, %s87
    %s91 = sphi 0, %s90
    %s107 = sphi 0, %s91
  $region4: #{segmentation_encoder.7} parent=0 // loop_header_branch
    %12 = sbr.rel (%p10) target = $region8
  $region5: #{segmentation_encoder.7} parent=0 // loop_body
    %s14 = ssub.s32 %s9, 1
    %s15 = ssub.s32 %s9, 2
    %s16 = sadd.s32 %s9, 1
    %s18 = sadd.s32 %s17, 1
    %p21 = scmp.eq.s32.totalorder %s9, 1
    %p22 = scmp.ne.s32.totalorder %s17, %s19
    %p23 = scmp.eq.s32.totalorder %s9, 0
    %p24 = por %p22, %p23
    %p25 = scmp.ne.s32.totalorder %s17, %s19
    %p26 = scmp.eq.s32.totalorder %s14, 1
    %p27 = por %p25, %p26
    %p28 = scmp.ne.s32.totalorder %s19, %s20
    %p29 = scmp.eq.s32.totalorder %s14, 0
    %p30 = por %p28, %p29
    %p31 = scmp.ne.s32.totalorder %s19, %s20
    %p32 = scmp.eq.s32.totalorder %s15, 1
    %p33 = por %p31, %p32
    %p35 = scmp.ne.s32.totalorder %s20, %s34
    %p36 = scmp.eq.s32.totalorder %s15, 0
    %p37 = por %p35, %p36
    %s39 = sadd.s32 %s38, 1
    %p42 = scmp.eq.s32.totalorder %s9, 1
    %p43 = scmp.ne.s32.totalorder %s38, %s40
    %p44 = scmp.eq.s32.totalorder %s9, 0
    %p45 = por %p43, %p44
    %p46 = scmp.ne.s32.totalorder %s38, %s40
    %p47 = scmp.eq.s32.totalorder %s14, 1
    %p48 = por %p46, %p47
    %p49 = scmp.ne.s32.totalorder %s40, %s41
    %p50 = scmp.eq.s32.totalorder %s14, 0
    %p51 = por %p49, %p50
    %p52 = scmp.ne.s32.totalorder %s40, %s41
    %p53 = scmp.eq.s32.totalorder %s15, 1
    %p54 = por %p52, %p53
    %p56 = scmp.ne.s32.totalorder %s41, %s55
    %p57 = scmp.eq.s32.totalorder %s15, 0
    %p58 = por %p56, %p57
    %s59 = ssub.s32 %s9, %s16
    %p60 = scmp.eq.s32.totalorder %s59, 0
    %s62 = sadd.s32 %s61, 1
    %s63 = scalar_select %p60, %s61, %s62
    %p66 = pneg %p60
    %p67 = scmp.eq.s32.totalorder %s9, 1
    %p68 = por %p66, %p67
    %p69 = scmp.ne.s32.totalorder %s61, %s64
    %p70 = scmp.eq.s32.totalorder %s9, 0
    %p71 = por %p69, %p70
    %p72 = scmp.ne.s32.totalorder %s61, %s64
    %p73 = scmp.eq.s32.totalorder %s14, 1
    %p74 = por %p72, %p73
    %p75 = scmp.ne.s32.totalorder %s64, %s65
    %p76 = scmp.eq.s32.totalorder %s14, 0
    %p77 = por %p75, %p76
    %p78 = scmp.ne.s32.totalorder %s64, %s65
    %p79 = scmp.eq.s32.totalorder %s15, 1
    %p80 = por %p78, %p79
    %p82 = scmp.ne.s32.totalorder %s65, %s81
    %p83 = scmp.eq.s32.totalorder %s15, 0
    %p84 = por %p82, %p83
    %s85 = ssub.s32 %s9, %s16
    %p86 = scmp.eq.s32.totalorder %s85, 0
    %s88 = sadd.s32 %s87, 1
    %s89 = scalar_select %p86, %s87, %s88
    %p92 = pneg %p86
    %p93 = scmp.eq.s32.totalorder %s9, 1
    %p94 = por %p92, %p93
    %p95 = scmp.ne.s32.totalorder %s87, %s90
    %p96 = scmp.eq.s32.totalorder %s9, 0
    %p97 = por %p95, %p96
    %p98 = scmp.ne.s32.totalorder %s87, %s90
    %p99 = scmp.eq.s32.totalorder %s14, 1
    %p100 = por %p98, %p99
    %p101 = scmp.ne.s32.totalorder %s90, %s91
    %p102 = scmp.eq.s32.totalorder %s14, 0
    %p103 = por %p101, %p102
    %p104 = scmp.ne.s32.totalorder %s90, %s91
    %p105 = scmp.eq.s32.totalorder %s15, 1
    %p106 = por %p104, %p105
    %p108 = scmp.ne.s32.totalorder %s91, %s107
    %p109 = scmp.eq.s32.totalorder %s15, 0
    %p110 = por %p108, %p109
    %p111 = scmp.le.s32.totalorder 1, %s9
    %p112 = scmp.lt.s32.totalorder %s9, 3
    %p113 = pnand %p111, %p112
    %p114 = pneg %p113
    // Predicated region
    $region9: #{segmentation_encoder.7} parent=5 // pred_check
      _
    $region10: #{segmentation_encoder.7} parent=5 // pred_check_branch
      %116 = sbr.rel (%p113) target = $region12
    $region11: #{segmentation_encoder.7} parent=5 // pred_region
      %s117 = ssub.s32 %s9, 1
      // Predicated region
      $region13: #{segmentation_encoder.7} parent=11 // pred_check
        %p118 = pneg %p30
      $region14: #{segmentation_encoder.7} parent=11 // pred_check_branch
        %120 = sbr.rel (%p118) target = $region16
      $region15: #{segmentation_encoder.7} parent=11 // pred_region
        _
      $region16: #{segmentation_encoder.7} parent=11 // pred_fallthru
        _
      // Predicated region
      $region17: #{segmentation_encoder.7} parent=11 // pred_check
        %p121 = pneg %p51
      $region18: #{segmentation_encoder.7} parent=11 // pred_check_branch
        %123 = sbr.rel (%p121) target = $region20
      $region19: #{segmentation_encoder.7} parent=11 // pred_region
        _
      $region20: #{segmentation_encoder.7} parent=11 // pred_fallthru
        _
    $region12: #{segmentation_encoder.7} parent=5 // pred_fallthru
      _
    %p124 = scmp.lt.s32.totalorder %s9, 2
    // Predicated region
    $region21: #{segmentation_encoder.7} parent=5 // pred_check
      %p125 = pneg %p124
    $region22: #{segmentation_encoder.7} parent=5 // pred_check_branch
      %127 = sbr.rel (%p125) target = $region24
    $region23: #{segmentation_encoder.7} parent=5 // pred_region
      // Predicated region
      $region25: #{segmentation_encoder.7} parent=23 // pred_check
        %p128 = pneg %p71
      $region26: #{segmentation_encoder.7} parent=23 // pred_check_branch
        %130 = sbr.rel (%p128) target = $region28
      $region27: #{segmentation_encoder.7} parent=23 // pred_region
        %s131 = smul.u32 5, %s9
        %p132 = scmp.lt.s32.totalorder %s131, 9
        %s133 = scalar_select %p132, %s131, 9
        %s134 = smul.addr %s133, 4
        %s135 = scalar_lea.vmem %s2, %s134
        %s136 = smul.u32 5, %s9
      $region28: #{segmentation_encoder.7} parent=23 // pred_fallthru
        _
    $region24: #{segmentation_encoder.7} parent=5 // pred_fallthru
      _
    %p137 = scmp.le.s32.totalorder 1, %s9
    %p138 = scmp.lt.s32.totalorder %s9, 3
    %p139 = pnand %p137, %p138
    %p140 = pneg %p139
    // Predicated region
    $region29: #{segmentation_encoder.7} parent=5 // pred_check
      _
    $region30: #{segmentation_encoder.7} parent=5 // pred_check_branch
      %142 = sbr.rel (%p139) target = $region32
    $region31: #{segmentation_encoder.7} parent=5 // pred_region
      %s143 = ssub.s32 %s9, 1
      %p144 = pneg %p30
      %p145 = pneg %p27
      %p146 = pneg %p51
      %p147 = pneg %p48
      %s148 = smul.u32 5, %s14
      %p149 = scmp.lt.s32.totalorder %s148, 9
      %s150 = scalar_select %p149, %s148, 9
      %s151 = smul.addr %s150, 4
      %s152 = scalar_lea.vmem %s2, %s151
      %p153 = pneg %p77
      %p154 = pneg %p74
      %p155 = pneg %p103
      %p156 = pneg %p100
      %s157 = smul.u32 5, %s14
      %p158 = scmp.lt.s32.totalorder %s157, 9
      %s159 = scalar_select %p158, %s157, 9
      %s160 = smul.addr %s159, 4
      %s161 = scalar_lea.vmem %s3, %s160
      %s162 = smul.u32 5, %s14
      %p163 = scmp.lt.s32.totalorder %s162, 9
      %s164 = scalar_select %p163, %s162, 9
      %s165 = smul.addr %s164, 4
      %s166 = scalar_lea.vmem %s2, %s165
      %s167 = smul.u32 5, %s14
      %s168 = smul.u32 5, %s14
      %p169 = scmp.lt.s32.totalorder %s168, 9
      %s170 = scalar_select %p169, %s168, 9
      %s171 = smul.addr %s170, 4
      %s172 = scalar_lea.vmem %s3, %s171
      %s173 = smul.u32 5, %s14
      %v174 = vld [vmem:[%s166] sm:$0x77]
      %v175 = vld [vmem:[%s166 + $0x8] sm:$0x77]
      %v176 = vld [vmem:[%s166 + $0x10] sm:$0x7]
      %v177 = vunpack.c.l.bf16 %v174
      %v178 = vunpack.c.h.bf16 %v174
      %v179 = vunpack.c.l.bf16 %v175
      %v180 = vunpack.c.h.bf16 %v175
      %v181 = vunpack.c.l.bf16 %v176
      %187 = vrot.lane.b32.xlu0 %v177, 28
      %v188 = vpop.permute.xlu0 %187
      %189 = vrot.lane.b32.xlu0 %v178, 28
      %v190 = vpop.permute.xlu0 %189
      %191 = vrot.lane.b32.xlu0 %v179, 28
      %v192 = vpop.permute.xlu0 %191
      %193 = vrot.lane.b32.xlu0 %v180, 28
      %v194 = vpop.permute.xlu0 %193
      %195 = vrot.lane.b32.xlu0 %v181, 28
      %v196 = vpop.permute.xlu0 %195
      %vm197 = vcmask 228352
      %v198 = vsel %vm197, %v188, %v190
      %v199 = vsel %vm197, %v190, %v192
      %v200 = vsel %vm197, %v192, %v194
      %v201 = vsel %vm197, %v194, %v196
      %206 = vst [vmem:[#allocation2] sm:$0x3f] %v198
      %207 = vst [vmem:[#allocation2 + $0x8] sm:$0x3f] %v199
      %208 = vst [vmem:[#allocation2 + $0x10] sm:$0x3f] %v200
      %vm209 = vcmask 365568
      %210 = vst.msk [vmem:[#allocation2 + $0x18] sm:$0x3f] %vm209, %v201
      %v211 = vld [vmem:[%s166] sm:$0x77]
      %v212 = vld [vmem:[%s166 + $0x8] sm:$0x77]
      %v213 = vld [vmem:[%s166 + $0x10] sm:$0x7]
      %v214 = vunpack.c.l.bf16 %v211
      %v215 = vunpack.c.h.bf16 %v211
      %v216 = vunpack.c.l.bf16 %v212
      %v217 = vunpack.c.h.bf16 %v212
      %v218 = vunpack.c.l.bf16 %v213
      %v224 = vrot.slane %v214, 2
      %v225 = vrot.slane %v215, 2
      %v226 = vrot.slane %v216, 2
      %v227 = vrot.slane %v217, 2
      %v228 = vrot.slane %v218, 2
      %229 = vrot.lane.b32.xlu0 %v224, 27
      %v230 = vpop.permute.xlu0 %229
      %231 = vrot.lane.b32.xlu0 %v225, 27
      %v232 = vpop.permute.xlu0 %231
      %233 = vrot.lane.b32.xlu0 %v226, 27
      %v234 = vpop.permute.xlu0 %233
      %235 = vrot.lane.b32.xlu0 %v227, 27
      %v236 = vpop.permute.xlu0 %235
      %237 = vrot.lane.b32.xlu0 %v228, 27
      %v238 = vpop.permute.xlu0 %237
      %vm239 = vcmask 220160
      %v240 = vsel %vm239, %v230, %v232
      %v241 = vsel %vm239, %v232, %v234
      %v242 = vsel %vm239, %v234, %v236
      %v243 = vsel %vm239, %v236, %v238
      %248 = vst [vmem:[#allocation2] sm:$0xc0] %v240
      %249 = vst [vmem:[#allocation2 + $0x8] sm:$0xc0] %v241
      %250 = vst [vmem:[#allocation2 + $0x10] sm:$0xc0] %v242
      %vm251 = vcmask 367622
      %252 = vst.msk [vmem:[#allocation2 + $0x18] sm:$0xc0] %vm251, %v243
      %253 = vst [vmem:[#allocation2 + $0x28] sm:$0xf] %v240
      %254 = vst [vmem:[#allocation2 + $0x30] sm:$0xf] %v241
      %255 = vst [vmem:[#allocation2 + $0x38] sm:$0xf] %v242
      %vm256 = vcmask 363520
      %257 = vst.msk [vmem:[#allocation2 + $0x40] sm:$0xf] %vm256, %v243
      %v258 = vld [vmem:[%s166] sm:$0x77]
      %v259 = vld [vmem:[%s166 + $0x8] sm:$0x77]
      %v260 = vld [vmem:[%s166 + $0x10] sm:$0x7]
      %v261 = vunpack.c.l.bf16 %v258
      %v262 = vunpack.c.h.bf16 %v258
      %v263 = vunpack.c.l.bf16 %v259
      %v264 = vunpack.c.h.bf16 %v259
      %v265 = vunpack.c.l.bf16 %v260
      %v271 = vrot.slane %v261, 4
      %v272 = vrot.slane %v262, 4
      %v273 = vrot.slane %v263, 4
      %v274 = vrot.slane %v264, 4
      %v275 = vrot.slane %v265, 4
      %276 = vrot.lane.b32.xlu0 %v271, 26
      %v277 = vpop.permute.xlu0 %276
      %278 = vrot.lane.b32.xlu0 %v272, 26
      %v279 = vpop.permute.xlu0 %278
      %280 = vrot.lane.b32.xlu0 %v273, 26
      %v281 = vpop.permute.xlu0 %280
      %282 = vrot.lane.b32.xlu0 %v274, 26
      %v283 = vpop.permute.xlu0 %282
      %284 = vrot.lane.b32.xlu0 %v275, 26
      %v285 = vpop.permute.xlu0 %284
      %vm286 = vcmask 211968
      %v287 = vsel %vm286, %v277, %v279
      %v288 = vsel %vm286, %v279, %v281
      %v289 = vsel %vm286, %v281, %v283
      %v290 = vsel %vm286, %v283, %v285
      %295 = vst [vmem:[#allocation2 + $0x28] sm:$0xf0] %v287
      %296 = vst [vmem:[#allocation2 + $0x30] sm:$0xf0] %v288
      %297 = vst [vmem:[#allocation2 + $0x38] sm:$0xf0] %v289
      %vm298 = vcmask 367620
      %299 = vst.msk [vmem:[#allocation2 + $0x40] sm:$0xf0] %vm298, %v290
      %300 = vst [vmem:[#allocation2 + $0x50] sm:$0x3] %v287
      %301 = vst [vmem:[#allocation2 + $0x58] sm:$0x3] %v288
      %302 = vst [vmem:[#allocation2 + $0x60] sm:$0x3] %v289
      %vm303 = vcmask 361472
      %304 = vst.msk [vmem:[#allocation2 + $0x68] sm:$0x3] %vm303, %v290
      %v305 = vld [vmem:[%s166] sm:$0x77]
      %v306 = vld [vmem:[%s166 + $0x8] sm:$0x77]
      %v307 = vld [vmem:[%s166 + $0x10] sm:$0x7]
      %v308 = vunpack.c.l.bf16 %v305
      %v309 = vunpack.c.h.bf16 %v305
      %v310 = vunpack.c.l.bf16 %v306
      %v311 = vunpack.c.h.bf16 %v306
      %v312 = vunpack.c.l.bf16 %v307
      %v318 = vrot.slane %v308, 6
      %v319 = vrot.slane %v309, 6
      %v320 = vrot.slane %v310, 6
      %v321 = vrot.slane %v311, 6
      %v322 = vrot.slane %v312, 6
      %323 = vrot.lane.b32.xlu0 %v318, 18
      %v324 = vpop.permute.xlu0 %323
      %325 = vrot.lane.b32.xlu0 %v319, 18
      %v326 = vpop.permute.xlu0 %325
      %327 = vrot.lane.b32.xlu0 %v320, 18
      %v328 = vpop.permute.xlu0 %327
      %329 = vrot.lane.b32.xlu0 %v321, 18
      %v330 = vpop.permute.xlu0 %329
      %331 = vrot.lane.b32.xlu0 %v322, 18
      %v332 = vpop.permute.xlu0 %331
      %vm333 = vcmask 146432
      %v334 = vsel %vm333, %v324, %v326
      %v335 = vsel %vm333, %v326, %v328
      %v336 = vsel %vm333, %v328, %v330
      %v337 = vsel %vm333, %v330, %v332
      %342 = vst [vmem:[#allocation2 + $0x50] sm:$0xfc] %v334
      %343 = vst [vmem:[#allocation2 + $0x58] sm:$0xfc] %v335
      %344 = vst [vmem:[#allocation2 + $0x60] sm:$0xfc] %v336
      %vm345 = vcmask 367618
      %346 = vst.msk [vmem:[#allocation2 + $0x68] sm:$0xfc] %vm345, %v337
      %v347 = vld [vmem:[%s166] sm:$0x77]
      %v348 = vld [vmem:[%s166 + $0x8] sm:$0x77]
      %v349 = vld [vmem:[%s166 + $0x10] sm:$0x7]
      %v350 = vunpack.c.l.bf16 %v347
      %v351 = vunpack.c.h.bf16 %v347
      %v352 = vunpack.c.l.bf16 %v348
      %v353 = vunpack.c.h.bf16 %v348
      %v354 = vunpack.c.l.bf16 %v349
      %360 = vrot.lane.b32.xlu0 %v350, 17
      %v361 = vpop.permute.xlu0 %360
      %362 = vrot.lane.b32.xlu0 %v351, 17
      %v363 = vpop.permute.xlu0 %362
      %364 = vrot.lane.b32.xlu0 %v352, 17
      %v365 = vpop.permute.xlu0 %364
      %366 = vrot.lane.b32.xlu0 %v353, 17
      %v367 = vpop.permute.xlu0 %366
      %368 = vrot.lane.b32.xlu0 %v354, 17
      %v369 = vpop.permute.xlu0 %368
      %vm370 = vcmask 138240
      %v371 = vsel %vm370, %v361, %v363
      %v372 = vsel %vm370, %v363, %v365
      %v373 = vsel %vm370, %v365, %v367
      %v374 = vsel %vm370, %v367, %v369
      %379 = vst [vmem:[#allocation2 + $0x78] sm:$0x3f] %v371
      %380 = vst [vmem:[#allocation2 + $0x80] sm:$0x3f] %v372
      %381 = vst [vmem:[#allocation2 + $0x88] sm:$0x3f] %v373
      %382 = vst.msk [vmem:[#allocation2 + $0x90] sm:$0x3f] %vm209, %v374
      %v383 = vld [vmem:[%s166] sm:$0x77]
      %v384 = vld [vmem:[%s166 + $0x8] sm:$0x77]
      %v385 = vld [vmem:[%s166 + $0x10] sm:$0x7]
      %v386 = vunpack.c.l.bf16 %v383
      %v387 = vunpack.c.h.bf16 %v383
      %v388 = vunpack.c.l.bf16 %v384
      %v389 = vunpack.c.h.bf16 %v384
      %v390 = vunpack.c.l.bf16 %v385
      %v396 = vrot.slane %v386, 2
      %v397 = vrot.slane %v387, 2
      %v398 = vrot.slane %v388, 2
      %v399 = vrot.slane %v389, 2
      %v400 = vrot.slane %v390, 2
      %401 = vrot.lane.b32.xlu0 %v396, 16
      %v402 = vpop.permute.xlu0 %401
      %403 = vrot.lane.b32.xlu0 %v397, 16
      %v404 = vpop.permute.xlu0 %403
      %405 = vrot.lane.b32.xlu0 %v398, 16
      %v406 = vpop.permute.xlu0 %405
      %407 = vrot.lane.b32.xlu0 %v399, 16
      %v408 = vpop.permute.xlu0 %407
      %409 = vrot.lane.b32.xlu0 %v400, 16
      %v410 = vpop.permute.xlu0 %409
      %vm411 = vcmask 130048
      %v412 = vsel %vm411, %v402, %v404
      %v413 = vsel %vm411, %v404, %v406
      %v414 = vsel %vm411, %v406, %v408
      %v415 = vsel %vm411, %v408, %v410
      %420 = vst [vmem:[#allocation2 + $0x78] sm:$0xc0] %v412
      %421 = vst [vmem:[#allocation2 + $0x80] sm:$0xc0] %v413
      %422 = vst [vmem:[#allocation2 + $0x88] sm:$0xc0] %v414
      %423 = vst.msk [vmem:[#allocation2 + $0x90] sm:$0xc0] %vm251, %v415
      %424 = vst [vmem:[#allocation2 + $0xa0] sm:$0xf] %v412
      %425 = vst [vmem:[#allocation2 + $0xa8] sm:$0xf] %v413
      %426 = vst [vmem:[#allocation2 + $0xb0] sm:$0xf] %v414
      %427 = vst.msk [vmem:[#allocation2 + $0xb8] sm:$0xf] %vm256, %v415
      %v428 = vld [vmem:[%s166] sm:$0x77]
      %v429 = vld [vmem:[%s166 + $0x8] sm:$0x77]
      %v430 = vld [vmem:[%s166 + $0x10] sm:$0x7]
      %v431 = vunpack.c.l.bf16 %v428
      %v432 = vunpack.c.h.bf16 %v428
      %v433 = vunpack.c.l.bf16 %v429
      %v434 = vunpack.c.h.bf16 %v429
      %v435 = vunpack.c.l.bf16 %v430
      %v441 = vrot.slane %v431, 4
      %v442 = vrot.slane %v432, 4
      %v443 = vrot.slane %v433, 4
      %v444 = vrot.slane %v434, 4
      %v445 = vrot.slane %v435, 4
      %446 = vrot.lane.b32.xlu0 %v441, 8
      %v447 = vpop.permute.xlu0 %446
      %448 = vrot.lane.b32.xlu0 %v442, 8
      %v449 = vpop.permute.xlu0 %448
      %450 = vrot.lane.b32.xlu0 %v443, 8
      %v451 = vpop.permute.xlu0 %450
      %452 = vrot.lane.b32.xlu0 %v444, 8
      %v453 = vpop.permute.xlu0 %452
      %454 = vrot.lane.b32.xlu0 %v445, 8
      %v455 = vpop.permute.xlu0 %454
      %vm456 = vcmask 64512
      %v457 = vsel %vm456, %v447, %v449
      %v458 = vsel %vm456, %v449, %v451
      %v459 = vsel %vm456, %v451, %v453
      %v460 = vsel %vm456, %v453, %v455
      %465 = vst [vmem:[#allocation2 + $0xa0] sm:$0xf0] %v457
      %466 = vst [vmem:[#allocation2 + $0xa8] sm:$0xf0] %v458
      %467 = vst [vmem:[#allocation2 + $0xb0] sm:$0xf0] %v459
      %468 = vst.msk [vmem:[#allocation2 + $0xb8] sm:$0xf0] %vm298, %v460
      %469 = vst [vmem:[#allocation2 + $0xc8] sm:$0x3] %v457
      %470 = vst [vmem:[#allocation2 + $0xd0] sm:$0x3] %v458
      %471 = vst [vmem:[#allocation2 + $0xd8] sm:$0x3] %v459
      %472 = vst.msk [vmem:[#allocation2 + $0xe0] sm:$0x3] %vm303, %v460
      %v473 = vld [vmem:[%s166] sm:$0x77]
      %v474 = vld [vmem:[%s166 + $0x8] sm:$0x77]
      %v475 = vld [vmem:[%s166 + $0x10] sm:$0x7]
      %v476 = vunpack.c.l.bf16 %v473
      %v477 = vunpack.c.h.bf16 %v473
      %v478 = vunpack.c.l.bf16 %v474
      %v479 = vunpack.c.h.bf16 %v474
      %v480 = vunpack.c.l.bf16 %v475
      %v486 = vrot.slane %v476, 6
      %v487 = vrot.slane %v477, 6
      %v488 = vrot.slane %v478, 6
      %v489 = vrot.slane %v479, 6
      %v490 = vrot.slane %v480, 6
      %491 = vrot.lane.b32.xlu0 %v486, 7
      %v492 = vpop.permute.xlu0 %491
      %493 = vrot.lane.b32.xlu0 %v487, 7
      %v494 = vpop.permute.xlu0 %493
      %495 = vrot.lane.b32.xlu0 %v488, 7
      %v496 = vpop.permute.xlu0 %495
      %497 = vrot.lane.b32.xlu0 %v489, 7
      %v498 = vpop.permute.xlu0 %497
      %499 = vrot.lane.b32.xlu0 %v490, 7
      %v500 = vpop.permute.xlu0 %499
      %vm501 = vcmask 56320
      %v502 = vsel %vm501, %v492, %v494
      %v503 = vsel %vm501, %v494, %v496
      %v504 = vsel %vm501, %v496, %v498
      %v505 = vsel %vm501, %v498, %v500
      %510 = vst [vmem:[#allocation2 + $0xc8] sm:$0xfc] %v502
      %511 = vst [vmem:[#allocation2 + $0xd0] sm:$0xfc] %v503
      %512 = vst [vmem:[#allocation2 + $0xd8] sm:$0xfc] %v504
      %513 = vst.msk [vmem:[#allocation2 + $0xe0] sm:$0xfc] %vm345, %v505
      %v514 = vld [vmem:[%s166] sm:$0x77]
      %v515 = vld [vmem:[%s166 + $0x8] sm:$0x77]
      %v516 = vld [vmem:[%s166 + $0x10] sm:$0x7]
      %v517 = vunpack.c.l.bf16 %v514
      %v518 = vunpack.c.h.bf16 %v514
      %v519 = vunpack.c.l.bf16 %v515
      %v520 = vunpack.c.h.bf16 %v515
      %v521 = vunpack.c.l.bf16 %v516
      %527 = vrot.lane.b32.xlu0 %v517, 6
      %v528 = vpop.permute.xlu0 %527
      %529 = vrot.lane.b32.xlu0 %v518, 6
      %v530 = vpop.permute.xlu0 %529
      %531 = vrot.lane.b32.xlu0 %v519, 6
      %v532 = vpop.permute.xlu0 %531
      %533 = vrot.lane.b32.xlu0 %v520, 6
      %v534 = vpop.permute.xlu0 %533
      %535 = vrot.lane.b32.xlu0 %v521, 6
      %v536 = vpop.permute.xlu0 %535
      %vm537 = vcmask 48128
      %v538 = vsel %vm537, %v528, %v530
      %v539 = vsel %vm537, %v530, %v532
      %v540 = vsel %vm537, %v532, %v534
      %v541 = vsel %vm537, %v534, %v536
      %546 = vst [vmem:[#allocation2 + $0xf0] sm:$0x3f] %v538
      %547 = vst [vmem:[#allocation2 + $0xf8] sm:$0x3f] %v539
      %548 = vst [vmem:[#allocation2 + $0x100] sm:$0x3f] %v540
      %549 = vst.msk [vmem:[#allocation2 + $0x108] sm:$0x3f] %vm209, %v541
      %v550 = vld [vmem:[%s166] sm:$0x77]
      %v551 = vld [vmem:[%s166 + $0x8] sm:$0x77]
      %v552 = vunpack.c.l.bf16 %v550
      %v553 = vunpack.c.h.bf16 %v550
      %v554 = vunpack.c.l.bf16 %v551
      %v555 = vunpack.c.h.bf16 %v551
      %v560 = vrot.slane %v552, 2
      %v561 = vrot.slane %v553, 2
      %v562 = vrot.slane %v554, 2
      %v563 = vrot.slane %v555, 2
      %564 = vrot.lane.b32.xlu0 %v560, 117
      %v565 = vpop.permute.xlu0 %564
      %566 = vrot.lane.b32.xlu0 %v561, 117
      %v567 = vpop.permute.xlu0 %566
      %568 = vrot.lane.b32.xlu0 %v562, 117
      %v569 = vpop.permute.xlu0 %568
      %570 = vrot.lane.b32.xlu0 %v563, 117
      %v571 = vpop.permute.xlu0 %570
      %vm572 = vcmask 957440
      %v573 = vsel %vm572, %v565, %v567
      %v574 = vsel %vm572, %v567, %v569
      %v575 = vsel %vm572, %v569, %v571
      %580 = vst [vmem:[#allocation2 + $0xf0] sm:$0xc0] %v573
      %581 = vst [vmem:[#allocation2 + $0xf8] sm:$0xc0] %v574
      %582 = vst [vmem:[#allocation2 + $0x100] sm:$0xc0] %v575
      %583 = vst.msk [vmem:[#allocation2 + $0x108] sm:$0xc0] %vm251, %v571
      %584 = vst [vmem:[#allocation2 + $0x118] sm:$0xf] %v573
      %585 = vst [vmem:[#allocation2 + $0x120] sm:$0xf] %v574
      %586 = vst [vmem:[#allocation2 + $0x128] sm:$0xf] %v575
      %587 = vst.msk [vmem:[#allocation2 + $0x130] sm:$0xf] %vm256, %v571
      %v588 = vld [vmem:[%s166] sm:$0x77]
      %v589 = vld [vmem:[%s166 + $0x8] sm:$0x77]
      %v590 = vld [vmem:[%s166 + $0x10] sm:$0x7]
      %v591 = vunpack.c.l.bf16 %v588
      %v592 = vunpack.c.h.bf16 %v588
      %v593 = vunpack.c.l.bf16 %v589
      %v594 = vunpack.c.h.bf16 %v589
      %v595 = vunpack.c.l.bf16 %v590
      %v601 = vrot.slane %v591, 4
      %v602 = vrot.slane %v592, 4
      %v603 = vrot.slane %v593, 4
      %v604 = vrot.slane %v594, 4
      %v605 = vrot.slane %v595, 4
      %606 = vrot.lane.b32.xlu0 %v601, 17
      %v607 = vpop.permute.xlu0 %606
      %608 = vrot.lane.b32.xlu0 %v602, 17
      %v609 = vpop.permute.xlu0 %608
      %610 = vrot.lane.b32.xlu0 %v603, 17
      %v611 = vpop.permute.xlu0 %610
      %612 = vrot.lane.b32.xlu0 %v604, 17
      %v613 = vpop.permute.xlu0 %612
      %614 = vrot.lane.b32.xlu0 %v605, 17
      %v615 = vpop.permute.xlu0 %614
      %v616 = vsel %vm370, %v607, %v609
      %v617 = vsel %vm370, %v609, %v611
      %v618 = vsel %vm370, %v611, %v613
      %v619 = vsel %vm370, %v613, %v615
      %624 = vst [vmem:[#allocation2 + $0x118] sm:$0xf0] %v616
      %625 = vst [vmem:[#allocation2 + $0x120] sm:$0xf0] %v617
      %626 = vst [vmem:[#allocation2 + $0x128] sm:$0xf0] %v618
      %627 = vst.msk [vmem:[#allocation2 + $0x130] sm:$0xf0] %vm298, %v619
      %628 = vst [vmem:[#allocation2 + $0x140] sm:$0x3] %v616
      %629 = vst [vmem:[#allocation2 + $0x148] sm:$0x3] %v617
      %630 = vst [vmem:[#allocation2 + $0x150] sm:$0x3] %v618
      %631 = vst.msk [vmem:[#allocation2 + $0x158] sm:$0x3] %vm303, %v619
      %v632 = vld [vmem:[%s166 + $0x4] sm:$0x77]
      %v633 = vld [vmem:[%s166 + $0xc] sm:$0x77]
      %v634 = vunpack.c.l.bf16 %v632
      %v635 = vunpack.c.h.bf16 %v632
      %v636 = vunpack.c.l.bf16 %v633
      %v637 = vunpack.c.h.bf16 %v633
      %v642 = vrot.slane %v634, 6
      %v643 = vrot.slane %v635, 6
      %v644 = vrot.slane %v636, 6
      %v645 = vrot.slane %v637, 6
      %646 = vrot.lane.b32.xlu0 %v642, 45
      %v647 = vpop.permute.xlu0 %646
      %648 = vrot.lane.b32.xlu0 %v643, 45
      %v649 = vpop.permute.xlu0 %648
      %650 = vrot.lane.b32.xlu0 %v644, 45
      %v651 = vpop.permute.xlu0 %650
      %652 = vrot.lane.b32.xlu0 %v645, 45
      %v653 = vpop.permute.xlu0 %652
      %vm654 = vcmask 367616
      %v655 = vsel %vm654, %v647, %v649
      %v656 = vsel %vm654, %v649, %v651
      %v657 = vsel %vm654, %v651, %v653
      %662 = vst [vmem:[#allocation2 + $0x140] sm:$0xfc] %v655
      %663 = vst [vmem:[#allocation2 + $0x148] sm:$0xfc] %v656
      %664 = vst [vmem:[#allocation2 + $0x150] sm:$0xfc] %v657
      %665 = vst.msk [vmem:[#allocation2 + $0x158] sm:$0xfc] %vm345, %v653
      %v666 = vld [vmem:[%s0] sm:$0x3f]
      %v667 = vld [vmem:[#allocation2] sm:$0xff]
      %v668 = vld [vmem:[#allocation2 + $0x8] sm:$0xff]
      %v669 = vld [vmem:[#allocation2 + $0x10] sm:$0xff]
      %v670 = vld [vmem:[#allocation2 + $0x18] sm:$0xff]
      %v671 = vld [vmem:[#allocation2 + $0x20] sm:$0xff]
      %v672 = vld [vmem:[#allocation2 + $0x28] sm:$0xff]
      %v673 = vld [vmem:[#allocation2 + $0x30] sm:$0xff]
      %v674 = vld [vmem:[#allocation2 + $0x38] sm:$0xff]
      %v675 = vld [vmem:[#allocation2 + $0x40] sm:$0xff]
      %v676 = vld [vmem:[#allocation2 + $0x48] sm:$0xff]
      %v677 = vld [vmem:[#allocation2 + $0x50] sm:$0xff]
      %v678 = vld [vmem:[#allocation2 + $0x58] sm:$0xff]
      %v679 = vld [vmem:[#allocation2 + $0x60] sm:$0xff]
      %v680 = vld [vmem:[#allocation2 + $0x68] sm:$0xff]
      %v681 = vld [vmem:[#allocation2 + $0x70] sm:$0xff]
      %v682 = vld [vmem:[#allocation2 + $0x78] sm:$0xff]
      %v683 = vld [vmem:[#allocation2 + $0x80] sm:$0xff]
      %v684 = vld [vmem:[#allocation2 + $0x88] sm:$0xff]
      %v685 = vld [vmem:[#allocation2 + $0x90] sm:$0xff]
      %v686 = vld [vmem:[#allocation2 + $0x98] sm:$0xff]
      %v687 = vld [vmem:[#allocation2 + $0xa0] sm:$0xff]
      %v688 = vld [vmem:[#allocation2 + $0xa8] sm:$0xff]
      %v689 = vld [vmem:[#allocation2 + $0xb0] sm:$0xff]
      %v690 = vld [vmem:[#allocation2 + $0xb8] sm:$0xff]
      %v691 = vld [vmem:[#allocation2 + $0xc0] sm:$0xff]
      %v692 = vld [vmem:[#allocation2 + $0xc8] sm:$0xff]
      %v693 = vld [vmem:[#allocation2 + $0xd0] sm:$0xff]
      %v694 = vld [vmem:[#allocation2 + $0xd8] sm:$0xff]
      %v695 = vld [vmem:[#allocation2 + $0xe0] sm:$0xff]
      %v696 = vld [vmem:[#allocation2 + $0xe8] sm:$0xff]
      %v697 = vld [vmem:[#allocation2 + $0xf0] sm:$0xff]
      %v698 = vld [vmem:[#allocation2 + $0xf8] sm:$0xff]
      %v699 = vld [vmem:[#allocation2 + $0x100] sm:$0xff]
      %v700 = vld [vmem:[#allocation2 + $0x108] sm:$0xff]
      %v701 = vld [vmem:[#allocation2 + $0x110] sm:$0xff]
      %v702 = vld [vmem:[#allocation2 + $0x118] sm:$0xff]
      %v703 = vld [vmem:[#allocation2 + $0x120] sm:$0xff]
      %v704 = vld [vmem:[#allocation2 + $0x128] sm:$0xff]
      %v705 = vld [vmem:[#allocation2 + $0x130] sm:$0xff]
      %v706 = vld [vmem:[#allocation2 + $0x138] sm:$0xff]
      %v707 = vld [vmem:[#allocation2 + $0x140] sm:$0xff]
      %v708 = vld [vmem:[#allocation2 + $0x148] sm:$0xff]
      %v709 = vld [vmem:[#allocation2 + $0x150] sm:$0xff]
      %v710 = vld [vmem:[#allocation2 + $0x158] sm:$0xff]
      %v711 = vld [vmem:[#allocation2 + $0x160] sm:$0xff]
      %v712 = vld [vmem:[%s1] sm:$0x3f]
      %714 = vset.pattern.permute.xlu0 0
      %715 = vperm.xlu0 %714, %v712
      %v716 = vpop.permute.xlu0 %715
      %vm718 = vcmask 588800
      %v720 = vsel %vm718, %v666, 0
      %722 = vmatprep.subr.mxu0 %v668
      %723 = vmatpush1.msra.mxu0 %v667
      %724 = vmatprep.subr.mxu0 %v673
      %725 = vmatpush1.msra.mxu0 %v672
      %726 = vmatprep.subr.mxu0 %v678
      %727 = vmatpush1.msra.mxu0 %v677
      %728 = vmatprep.subr.mxu0 %v683
      %729 = vmatpush1.msra.mxu0 %v682
      %730 = vmatprep.subr.mxu0 %v688
      %731 = vmatpush1.msra.mxu0 %v687
      %732 = vmatprep.subr.mxu0 %v693
      %733 = vmatpush1.msra.mxu0 %v692
      %734 = vmatprep.subr.mxu0 %v698
      %735 = vmatpush1.msra.mxu0 %v697
      %736 = vmatprep.subr.mxu0 %v703
      %737 = vmatpush1.msra.mxu0 %v702
      %738 = vmatprep.subr.mxu0 %v708
      %739 = vmatpush1.msra.mxu0 %v707
      %740 = vmatprep.subr.mxu0 0.0
      %741 = vmatpush1.msra.mxu0 0.0
      %742 = vmatprep.subr.mxu0 0.0
      %743 = vmatpush1.msra.mxu0 0.0
      %744 = vmatprep.subr.mxu0 0.0
      %745 = vmatpush1.msra.mxu0 0.0
      %746 = vmatprep.subr.mxu0 0.0
      %747 = vmatpush1.msra.mxu0 0.0
      %748 = vmatprep.subr.mxu0 0.0
      %749 = vmatpush1.msra.mxu0 0.0
      %750 = vmatprep.subr.mxu0 0.0
      %751 = vmatpush1.msra.mxu0 0.0
      %752 = vmatprep.subr.mxu0 0.0
      %753 = vmatpush1.msra.mxu0 0.0
      %754 = vmatprep.subr.mxu0 0.0
      %755 = vmatpush1.msra.mxu0 0.0
      %756 = vmatprep.subr.mxu0 0.0
      %757 = vmatpush1.msra.mxu0 0.0
      %758 = vmatprep.subr.mxu0 0.0
      %759 = vmatpush1.msra.mxu0 0.0
      %760 = vmatprep.subr.mxu0 0.0
      %761 = vmatpush1.msra.mxu0 0.0
      %762 = vmatprep.subr.mxu0 0.0
      %763 = vmatpush1.msra.mxu0 0.0
      %764 = vmatprep.subr.mxu0 0.0
      %765 = vmatpush1.msra.mxu0 0.0
      %766 = vmatprep.subr.mxu0 0.0
      %767 = vmatpush1.msra.mxu0 0.0
      %768 = vmatprep.subr.mxu0 0.0
      %769 = vmatpush1.msra.mxu0 0.0
      %770 = vmatprep.subr.mxu0 0.0
      %771 = vmatpush1.msra.mxu0 0.0
      %772 = vmatprep.subr.mxu0 0.0
      %773 = vmatpush1.msra.mxu0 0.0
      %774 = vmatprep.subr.mxu0 0.0
      %775 = vmatpush1.msra.mxu0 0.0
      %776 = vmatprep.subr.mxu0 0.0
      %777 = vmatpush1.msra.mxu0 0.0
      %778 = vmatprep.subr.mxu0 0.0
      %779 = vmatpush1.msra.mxu0 0.0
      %780 = vmatprep.subr.mxu0 0.0
      %781 = vmatpush1.msra.mxu0 0.0
      %782 = vmatprep.subr.mxu0 0.0
      %783 = vmatpush1.msra.mxu0 0.0
      %784 = vmatprep.subr.mxu0 0.0
      %785 = vmatpush1.msra.mxu0 0.0
      %786 = vmatprep.mubr.f32.mxu0 0.0
      %787 = vmatmul.mubr.f32.gmra.mrb[0].mxu0 %v720
      %v788 = vpop.f32.mrb[0].mxu0
      %v789 = vadd.f32 %v716, %v788
      %v790 = vpop.f32.mrb[0].mxu0
      %v791 = vadd.f32 %v716, %v790
      %792 = vdwg.mxu0
      %793 = vmatprep.subr.mxu0 %v670
      %794 = vmatpush1.msra.mxu0 %v669
      %795 = vmatprep.subr.mxu0 %v675
      %796 = vmatpush1.msra.mxu0 %v674
      %797 = vmatprep.subr.mxu0 %v680
      %798 = vmatpush1.msra.mxu0 %v679
      %799 = vmatprep.subr.mxu0 %v685
      %800 = vmatpush1.msra.mxu0 %v684
      %801 = vmatprep.subr.mxu0 %v690
      %802 = vmatpush1.msra.mxu0 %v689
      %803 = vmatprep.subr.mxu0 %v695
      %804 = vmatpush1.msra.mxu0 %v694
      %805 = vmatprep.subr.mxu0 %v700
      %806 = vmatpush1.msra.mxu0 %v699
      %807 = vmatprep.subr.mxu0 %v705
      %808 = vmatpush1.msra.mxu0 %v704
      %809 = vmatprep.subr.mxu0 %v710
      %810 = vmatpush1.msra.mxu0 %v709
      %811 = vmatprep.subr.mxu0 0.0
      %812 = vmatpush1.msra.mxu0 0.0
      %813 = vmatprep.subr.mxu0 0.0
      %814 = vmatpush1.msra.mxu0 0.0
      %815 = vmatprep.subr.mxu0 0.0
      %816 = vmatpush1.msra.mxu0 0.0
      %817 = vmatprep.subr.mxu0 0.0
      %818 = vmatpush1.msra.mxu0 0.0
      %819 = vmatprep.subr.mxu0 0.0
      %820 = vmatpush1.msra.mxu0 0.0
      %821 = vmatprep.subr.mxu0 0.0
      %822 = vmatpush1.msra.mxu0 0.0
      %823 = vmatprep.subr.mxu0 0.0
      %824 = vmatpush1.msra.mxu0 0.0
      %825 = vmatprep.subr.mxu0 0.0
      %826 = vmatpush1.msra.mxu0 0.0
      %827 = vmatprep.subr.mxu0 0.0
      %828 = vmatpush1.msra.mxu0 0.0
      %829 = vmatprep.subr.mxu0 0.0
      %830 = vmatpush1.msra.mxu0 0.0
      %831 = vmatprep.subr.mxu0 0.0
      %832 = vmatpush1.msra.mxu0 0.0
      %833 = vmatprep.subr.mxu0 0.0
      %834 = vmatpush1.msra.mxu0 0.0
      %835 = vmatprep.subr.mxu0 0.0
      %836 = vmatpush1.msra.mxu0 0.0
      %837 = vmatprep.subr.mxu0 0.0
      %838 = vmatpush1.msra.mxu0 0.0
      %839 = vmatprep.subr.mxu0 0.0
      %840 = vmatpush1.msra.mxu0 0.0
      %841 = vmatprep.subr.mxu0 0.0
      %842 = vmatpush1.msra.mxu0 0.0
      %843 = vmatprep.subr.mxu0 0.0
      %844 = vmatpush1.msra.mxu0 0.0
      %845 = vmatprep.subr.mxu0 0.0
      %846 = vmatpush1.msra.mxu0 0.0
      %847 = vmatprep.subr.mxu0 0.0
      %848 = vmatpush1.msra.mxu0 0.0
      %849 = vmatprep.subr.mxu0 0.0
      %850 = vmatpush1.msra.mxu0 0.0
      %851 = vmatprep.subr.mxu0 0.0
      %852 = vmatpush1.msra.mxu0 0.0
      %853 = vmatprep.subr.mxu0 0.0
      %854 = vmatpush1.msra.mxu0 0.0
      %855 = vmatprep.subr.mxu0 0.0
      %856 = vmatpush1.msra.mxu0 0.0
      %857 = vmatprep.mubr.f32.mxu0 0.0
      %858 = vmatmul.mubr.f32.gmra.mrb[0].mxu0 %v720
      %v859 = vpop.f32.mrb[0].mxu0
      %v860 = vadd.f32 %v716, %v859
      %v861 = vpop.f32.mrb[0].mxu0
      %v862 = vadd.f32 %v716, %v861
      %863 = vdwg.mxu0
      %864 = vmatprep.subr.mxu0 0.0
      %865 = vmatpush1.msra.mxu0 %v671
      %866 = vmatprep.subr.mxu0 0.0
      %867 = vmatpush1.msra.mxu0 %v676
      %868 = vmatprep.subr.mxu0 0.0
      %869 = vmatpush1.msra.mxu0 %v681
      %870 = vmatprep.subr.mxu0 0.0
      %871 = vmatpush1.msra.mxu0 %v686
      %872 = vmatprep.subr.mxu0 0.0
      %873 = vmatpush1.msra.mxu0 %v691
      %874 = vmatprep.subr.mxu0 0.0
      %875 = vmatpush1.msra.mxu0 %v696
      %876 = vmatprep.subr.mxu0 0.0
      %877 = vmatpush1.msra.mxu0 %v701
      %878 = vmatprep.subr.mxu0 0.0
      %879 = vmatpush1.msra.mxu0 %v706
      %880 = vmatprep.subr.mxu0 0.0
      %881 = vmatpush1.msra.mxu0 %v711
      %882 = vmatprep.subr.mxu0 0.0
      %883 = vmatpush1.msra.mxu0 0.0
      %884 = vmatprep.subr.mxu0 0.0
      %885 = vmatpush1.msra.mxu0 0.0
      %886 = vmatprep.subr.mxu0 0.0
      %887 = vmatpush1.msra.mxu0 0.0
      %888 = vmatprep.subr.mxu0 0.0
      %889 = vmatpush1.msra.mxu0 0.0
      %890 = vmatprep.subr.mxu0 0.0
      %891 = vmatpush1.msra.mxu0 0.0
      %892 = vmatprep.subr.mxu0 0.0
      %893 = vmatpush1.msra.mxu0 0.0
      %894 = vmatprep.subr.mxu0 0.0
      %895 = vmatpush1.msra.mxu0 0.0
      %896 = vmatprep.subr.mxu0 0.0
      %897 = vmatpush1.msra.mxu0 0.0
      %898 = vmatprep.subr.mxu0 0.0
      %899 = vmatpush1.msra.mxu0 0.0
      %900 = vmatprep.subr.mxu0 0.0
      %901 = vmatpush1.msra.mxu0 0.0
      %902 = vmatprep.subr.mxu0 0.0
      %903 = vmatpush1.msra.mxu0 0.0
      %904 = vmatprep.subr.mxu0 0.0
      %905 = vmatpush1.msra.mxu0 0.0
      %906 = vmatprep.subr.mxu0 0.0
      %907 = vmatpush1.msra.mxu0 0.0
      %908 = vmatprep.subr.mxu0 0.0
      %909 = vmatpush1.msra.mxu0 0.0
      %910 = vmatprep.subr.mxu0 0.0
      %911 = vmatpush1.msra.mxu0 0.0
      %912 = vmatprep.subr.mxu0 0.0
      %913 = vmatpush1.msra.mxu0 0.0
      %914 = vmatprep.subr.mxu0 0.0
      %915 = vmatpush1.msra.mxu0 0.0
      %916 = vmatprep.subr.mxu0 0.0
      %917 = vmatpush1.msra.mxu0 0.0
      %918 = vmatprep.subr.mxu0 0.0
      %919 = vmatpush1.msra.mxu0 0.0
      %920 = vmatprep.subr.mxu0 0.0
      %921 = vmatpush1.msra.mxu0 0.0
      %922 = vmatprep.subr.mxu0 0.0
      %923 = vmatpush1.msra.mxu0 0.0
      %924 = vmatprep.subr.mxu0 0.0
      %925 = vmatpush1.msra.mxu0 0.0
      %926 = vmatprep.subr.mxu0 0.0
      %927 = vmatpush1.msra.mxu0 0.0
      %928 = vmatprep.mubr.f32.mxu0 0.0
      %929 = vmatmul.mubr.f32.gmra.mrb[0].mxu0 %v720
      %v930 = vpop.f32.mrb[0].mxu0
      %v931 = vadd.f32 %v716, %v930
      %v932 = vpop.f32.mrb[0].mxu0
      %933 = vdwg.mxu0
      %v934 = vmax.f32 %v789, 0.0
      %v935 = vmax.f32 %v791, 0.0
      %v936 = vmax.f32 %v860, 0.0
      %v937 = vmax.f32 %v862, 0.0
      %v938 = vmax.f32 %v931, 0.0
      %v939 = vpack.c.bf16 %v934, %v934
      %v940 = vpack.c.bf16 %v935, %v935
      %v941 = vpack.c.bf16 %v936, %v936
      %v942 = vpack.c.bf16 %v937, %v937
      %v943 = vpack.c.bf16 %v938, %v938
      %v949 = vunpack.c.l.b16 %v939
      %v950 = vunpack.c.l.b16 %v940
      %v951 = vunpack.c.l.b16 %v941
      %v952 = vunpack.c.l.b16 %v942
      %v953 = vunpack.c.l.b16 %v943
      %v954 = vpack.c.b16 %v950, %v949
      %v955 = vpack.c.b16 %v952, %v951
      %v956 = vpack.c.b16 %v953, %v953
      %960 = vst [vmem:[%s172] sm:$0x77] %v954
      %961 = vst [vmem:[%s172 + $0x8] sm:$0x77] %v955
      %962 = vst [vmem:[%s172 + $0x10] sm:$0x7] %v956
      %s963 = smul.u32 5, %s14
      %p964 = scmp.lt.s32.totalorder %s963, 9
      %s965 = scalar_select %p964, %s963, 9
      %s966 = smul.addr %s965, 4
      %s967 = scalar_lea.vmem %s3, %s966
      // Predicated region
      $region33: #{segmentation_encoder.7} parent=31 // pred_check
        %p968 = pneg %p100
      $region34: #{segmentation_encoder.7} parent=31 // pred_check_branch
        %970 = sbr.rel (%p968) target = $region36
      $region35: #{segmentation_encoder.7} parent=31 // pred_region
        %s971 = smul.u32 5, %s14
      $region36: #{segmentation_encoder.7} parent=31 // pred_fallthru
        _
    $region32: #{segmentation_encoder.7} parent=5 // pred_fallthru
      _
    %p972 = scmp.le.s32.totalorder 2, %s9
    // Predicated region
    $region37: #{segmentation_encoder.7} parent=5 // pred_check
      %p973 = pneg %p972
    $region38: #{segmentation_encoder.7} parent=5 // pred_check_branch
      %975 = sbr.rel (%p973) target = $region40
    $region39: #{segmentation_encoder.7} parent=5 // pred_region
      %s976 = ssub.s32 %s9, 2
      // Predicated region
      $region41: #{segmentation_encoder.7} parent=39 // pred_check
        %p977 = pneg %p106
      $region42: #{segmentation_encoder.7} parent=39 // pred_check_branch
        %979 = sbr.rel (%p977) target = $region44
      $region43: #{segmentation_encoder.7} parent=39 // pred_region
        %s980 = smul.u32 5, %s15
        %p981 = scmp.lt.s32.totalorder %s980, 9
        %s982 = scalar_select %p981, %s980, 9
        %s983 = smul.addr %s982, 4
        %s984 = scalar_lea.vmem %s3, %s983
      $region44: #{segmentation_encoder.7} parent=39 // pred_fallthru
        _
    $region40: #{segmentation_encoder.7} parent=5 // pred_fallthru
      _
  $region6: #{segmentation_encoder.7} parent=0 // loop_footer
    %s13 = sadd.s32 1, %s9
  $region7: #{segmentation_encoder.7} parent=0 // loop_footer_branch
    %8 = sbr.rel target = $region3
  $region8: #{segmentation_encoder.7} parent=0 // loop_exit
    _

</llo_original>
